<compile_context>
chip_gen: v6e
topology: v6e:2x2x1
jax: 0.10.0
libtpu: 0.0.40
codegen_flags: <defaults>
</compile_context>

<pallas_src>
import jax
import jax.numpy as jnp
import numpy as np
from jax.experimental import pallas as pl
from jax.experimental.pallas import tpu as pltpu

# ----- hyperparameters (small, consistent with the module's __init__) -------
INPUT_CELL_FEATURE_DIM = 64          # input_cell_feature_dim
CNN_CHANNELS = (4, 8, 8)             # layer_hyperparameter['cnn_channels']
KERNEL_SIZES = (7, 7, 7)             # layer_hyperparameter['kernel_size']
MAXPOOLS     = (2, 2, 2)             # layer_hyperparameter['maxpool1d']
FC1_DIM      = 32                    # fc_1_dim
BATCH        = 16                    # raised from 2 (perf review): fills sublanes
TILE_B       = 8                     # one full f32 sublane group per grid step


def _trace_dims():
    """Replicates the cell_feature_dim bookkeeping from Cell.__init__."""
    l = INPUT_CELL_FEATURE_DIM
    for k, p in zip(KERNEL_SIZES, MAXPOOLS):
        l = int((l - k + 1) / p)
    return l, CNN_CHANNELS[-1]


FINAL_LEN, FINAL_CH = _trace_dims()          # 2, 8
FC_IN = FINAL_LEN * FINAL_CH                 # 16

# Total number of f32 scalars in the packed conv-parameter array.
CONV_PARAM_COUNT = sum(co * ci * k + co for (co, ci, k) in
                       zip(CNN_CHANNELS, (1,) + CNN_CHANNELS[:-1], KERNEL_SIZES))

SCRATCH_W = 128   # lane width of the per-channel activation scratch slabs


# ----------------------------- kernel body ----------------------------------
def cell_kernel(x_ref, cp_ref, fc_ref, out_ref, scr_a, scr_b):
    """x_ref: (TILE_B, L0) VMEM f32 batch tile.
    cp_ref: (CONV_PARAM_COUNT,) SMEM f32 = [w0|b0|w1|b1|w2|b2] in PyTorch
            (Cout, Cin, K) flatten order.
    fc_ref: (FC_IN + 1, FC1_DIM) VMEM f32 (rows 0..FC_IN-1 = W^T, last row = b).
    out_ref: (TILE_B, FC1_DIM) VMEM f32.
    scr_a / scr_b: (C, TILE_B, 128) VMEM scratch for pooled activation slabs."""
    B = x_ref.shape[0]

    def conv_pool_layer(read_tap, cin, cout, K, pool, dil, n_in, w_off, b_off):
        """Conv1d(+bias) -> ReLU -> MaxPool1d on dilated lane slabs.

        `read_tap(c, k, width)` returns the (B, width) tap of input channel c
        starting at lane dil*k (a ref load, so it lands in the vld slot).
        Loop order is (c, k) outer / output channel inner: one tap live at a
        time against `cout` accumulators -> no vreg spills, good VALU ILP."""
        n_out = n_in - K + 1                     # logical length after conv
        w_out = dil * (n_out - 1) + 1            # slab width after conv
        n_p = n_out // pool                      # logical length after pool
        wp = dil * pool * (n_p - 1) + 1          # slab width after pool

        accs = [None] * cout
        for c in range(cin):
            for k in range(K):
                tap = read_tap(c, k, w_out)                      # one offset vld
                for o in range(cout):                            # cout FMA chains
                    w = cp_ref[w_off + (o * cin + c) * K + k]    # SMEM scalar
                    t = w * tap
                    accs[o] = t if accs[o] is None else accs[o] + t

        pooled = []
        for o in range(cout):
            a = jnp.maximum(accs[o] + cp_ref[b_off + o], 0.0)    # bias + ReLU
            # MaxPool1d (floor mode): max of shifted slices; pooled values stay
            # at lanes that are multiples of dil*pool.
            p = a[:, :wp]
            for s in range(1, pool):
                p = jnp.maximum(p, a[:, dil * s: dil * s + wp])
            pooled.append(p)
        return pooled, n_p, wp, dil * pool

    # ----------------- layer 1: x_ref -> scr_a ------------------------------
    off = 0
    c0, k0, p0 = CNN_CHANNELS[0], KERNEL_SIZES[0], MAXPOOLS[0]
    w_off, b_off = off, off + c0 * 1 * k0
    off = b_off + c0
    pooled, n, wp, dil = conv_pool_layer(
        lambda c, k, w: x_ref[:, pl.ds(k, w)],
        cin=1, cout=c0, K=k0, pool=p0, dil=1, n_in=x_ref.shape[1],
        w_off=w_off, b_off=b_off)
    for o in range(c0):
        scr_a[o, :, pl.ds(0, wp)] = pooled[o]

    # ----------------- layer 2: scr_a -> scr_b ------------------------------
    c1, k1, p1 = CNN_CHANNELS[1], KERNEL_SIZES[1], MAXPOOLS[1]
    w_off, b_off = off, off + c1 * c0 * k1
    off = b_off + c1
    dil_in = dil
    pooled, n, wp, dil = conv_pool_layer(
        lambda c, k, w: scr_a[c, :, pl.ds(dil_in * k, w)],
        cin=c0, cout=c1, K=k1, pool=p1, dil=dil_in, n_in=n,
        w_off=w_off, b_off=b_off)
    for o in range(c1):
        scr_b[o, :, pl.ds(0, wp)] = pooled[o]

    # ----------------- layer 3: scr_b -> registers --------------------------
    c2, k2, p2 = CNN_CHANNELS[2], KERNEL_SIZES[2], MAXPOOLS[2]
    w_off, b_off = off, off + c2 * c1 * k2
    off = b_off + c2
    dil_in = dil
    pooled, n, wp, dil = conv_pool_layer(
        lambda c, k, w: scr_b[c, :, pl.ds(dil_in * k, w)],
        cin=c1, cout=c2, K=k2, pool=p2, dil=dil_in, n_in=n,
        w_off=w_off, b_off=b_off)

    assert off == cp_ref.shape[0]            # trace-time sanity check

    # ----------------- FC: gather C*L = 16 columns, one MXU dot -------------
    # PyTorch flatten order is index = c*L + l.
    cols = [pooled[c][:, dil * l: dil * l + 1]       # (B, 1) each
            for c in range(c2) for l in range(n)]
    act = jnp.concatenate(cols, axis=1)              # (B, FC_IN)
    w_fc = fc_ref[0:FC_IN, :]                        # (FC_IN, FC1_DIM)
    b_fc = fc_ref[FC_IN:FC_IN + 1, :]                # (1, FC1_DIM)
    out_ref[...] = jnp.dot(act, w_fc, preferred_element_type=jnp.float32) + b_fc


# ----------------------------- wrapper ---------------------------------------
@jax.jit
def cell_forward(x, conv_flat, fc_packed):
    """x: (B, 1, L) f32 (PyTorch NCL layout), conv_flat: (CONV_PARAM_COUNT,) f32,
    fc_packed: (FC_IN + 1, FC1_DIM) f32."""
    B = x.shape[0]
    L = x.shape[-1]
    assert B % TILE_B == 0
    x2d = x.reshape(B, L)                     # squeeze the Cin=1 channel dim

    grid_spec = pltpu.PrefetchScalarGridSpec(
        num_scalar_prefetch=0,
        grid=(B // TILE_B,),                  # batch tiles; parallel -> 2 TCs on v7x
        in_specs=[
            pl.BlockSpec((TILE_B, L), lambda i: (i, 0)),                 # activations
            pl.BlockSpec(memory_space=pltpu.MemorySpace.SMEM),           # conv params
            pl.BlockSpec((FC_IN + 1, FC1_DIM), lambda i: (0, 0)),        # FC params
        ],
        out_specs=pl.BlockSpec((TILE_B, FC1_DIM), lambda i: (i, 0)),
        scratch_shapes=[
            pltpu.VMEM((CNN_CHANNELS[0], TILE_B, SCRATCH_W), jnp.float32),  # scr_a
            pltpu.VMEM((CNN_CHANNELS[1], TILE_B, SCRATCH_W), jnp.float32),  # scr_b
        ],
    )
    return pl.pallas_call(
        cell_kernel,
        out_shape=jax.ShapeDtypeStruct((B, FC1_DIM), jnp.float32),
        grid_spec=grid_spec,
        compiler_params=pltpu.CompilerParams(
            dimension_semantics=("parallel",)),
    )(x2d, conv_flat, fc_packed)


# ------------------------- deterministic params ------------------------------
def init_params(key):
    ks = jax.random.split(key, 8)
    params = []
    cin = 1
    for i, (cout, k) in enumerate(zip(CNN_CHANNELS, KERNEL_SIZES)):
        w = 0.1 * jax.random.normal(ks[2 * i], (cout, cin, k), jnp.float32)
        b = 0.1 * jax.random.normal(ks[2 * i + 1], (cout,), jnp.float32)
        params += [w, b]
        cin = cout
    # NOTE: this is nn.Linear.weight.T, i.e. (in_features, out_features); when
    # loading a real PyTorch checkpoint, pack linear.weight.T here.
    wf = 0.1 * jax.random.normal(ks[6], (FC_IN, FC1_DIM), jnp.float32)
    bf = 0.1 * jax.random.normal(ks[7], (1, FC1_DIM), jnp.float32)
    params += [wf, bf]
    return params


def pack_params(params):
    """Collapse the 8 parameter arrays into 2 kernel operands."""
    w0, b0, w1, b1, w2, b2, wf, bf = params
    conv_flat = jnp.concatenate([w0.ravel(), b0.ravel(),
                                 w1.ravel(), b1.ravel(),
                                 w2.ravel(), b2.ravel()])
    assert conv_flat.shape == (CONV_PARAM_COUNT,)
    fc_packed = jnp.concatenate([wf, bf], axis=0)    # (FC_IN + 1, FC1_DIM)
    return conv_flat, fc_packed


# ------------------------- pure-JAX reference --------------------------------
def reference_forward(x, params):
    w0, b0, w1, b1, w2, b2, wf, bf = params
    dn = ("NCH", "OIH", "NCH")
    for (w, b, p) in ((w0, b0, MAXPOOLS[0]), (w1, b1, MAXPOOLS[1]), (w2, b2, MAXPOOLS[2])):
        x = jax.lax.conv_general_dilated(x, w, (1,), "VALID", dimension_numbers=dn)
        x = x + b[None, :, None]
        x = jnp.maximum(x, 0.0)
        B, C, L = x.shape
        Lp = L // p
        x = x[:, :, :Lp * p].reshape(B, C, Lp, p).max(axis=-1)
    B, C, L = x.shape
    return x.reshape(B, C * L) @ wf + bf


# ----------------------------------- main ------------------------------------
if __name__ == "__main__":
    key = jax.random.PRNGKey(0)
    kx, kp = jax.random.split(key)
    x = jax.random.normal(kx, (BATCH, 1, INPUT_CELL_FEATURE_DIM), jnp.float32)
    params = init_params(kp)
    conv_flat, fc_packed = pack_params(params)

    out = cell_forward(x, conv_flat, fc_packed)
    jax.block_until_ready(out)

    ref = reference_forward(x, params)
    np.testing.assert_allclose(np.asarray(out), np.asarray(ref), atol=1e-4, rtol=1e-4)

    assert out.shape == (BATCH, FC1_DIM)
    print("KERNEL_OK")
</pallas_src>

<mosaic_0001>
module attributes {stable_mosaic.version = 11 : i64} {
  func.func @cell_kernel(%arg0: i32, %arg1: memref<8x64xf32, #tpu.memory_space<vmem>>, %arg2: memref<720xf32, #tpu.memory_space<smem>>, %arg3: memref<17x32xf32, #tpu.memory_space<vmem>>, %arg4: memref<8x32xf32, #tpu.memory_space<vmem>>, %arg5: memref<4x8x128xf32, #tpu.memory_space<vmem>>, %arg6: memref<8x8x128xf32, #tpu.memory_space<vmem>>) attributes {dimension_semantics = [#tpu.dimension_semantics<parallel>], iteration_bounds = array<i64: 2>, scalar_prefetch = 0 : i64, scratch_operands = 2 : i64, tpu.core_type = #tpu.core_type<tc>, window_params = [{transform_indices = @transform_0, window_bounds = array<i64: 8, 64>}, {transform_indices = @transform_1, window_bounds = array<i64: 720>}, {pipeline_mode = #tpu.pipeline_mode<synchronous>, transform_indices = @transform_2, window_bounds = array<i64: 17, 32>}, {transform_indices = @transform_3, window_bounds = array<i64: 8, 32>}]} {
    %c0 = arith.constant 0 : index
    %c0_0 = arith.constant 0 : index
    %0 = vector.load %arg1[%c0, %c0_0] : memref<8x64xf32, #tpu.memory_space<vmem>>, vector<8x58xf32>
    %c0_1 = arith.constant 0 : index
    %1 = memref.load %arg2[%c0_1] : memref<720xf32, #tpu.memory_space<smem>>
    %2 = vector.broadcast %1 : f32 to vector<8x58xf32>
    %3 = arith.mulf %2, %0 : vector<8x58xf32>
    %c7 = arith.constant 7 : index
    %4 = memref.load %arg2[%c7] : memref<720xf32, #tpu.memory_space<smem>>
    %5 = vector.broadcast %4 : f32 to vector<8x58xf32>
    %6 = arith.mulf %5, %0 : vector<8x58xf32>
    %c14 = arith.constant 14 : index
    %7 = memref.load %arg2[%c14] : memref<720xf32, #tpu.memory_space<smem>>
    %8 = vector.broadcast %7 : f32 to vector<8x58xf32>
    %9 = arith.mulf %8, %0 : vector<8x58xf32>
    %c21 = arith.constant 21 : index
    %10 = memref.load %arg2[%c21] : memref<720xf32, #tpu.memory_space<smem>>
    %11 = vector.broadcast %10 : f32 to vector<8x58xf32>
    %12 = arith.mulf %11, %0 : vector<8x58xf32>
    %c0_2 = arith.constant 0 : index
    %c1 = arith.constant 1 : index
    %13 = vector.load %arg1[%c0_2, %c1] : memref<8x64xf32, #tpu.memory_space<vmem>>, vector<8x58xf32>
    %c1_3 = arith.constant 1 : index
    %14 = memref.load %arg2[%c1_3] : memref<720xf32, #tpu.memory_space<smem>>
    %15 = vector.broadcast %14 : f32 to vector<8x58xf32>
    %16 = arith.mulf %15, %13 : vector<8x58xf32>
    %17 = arith.addf %3, %16 : vector<8x58xf32>
    %c8 = arith.constant 8 : index
    %18 = memref.load %arg2[%c8] : memref<720xf32, #tpu.memory_space<smem>>
    %19 = vector.broadcast %18 : f32 to vector<8x58xf32>
    %20 = arith.mulf %19, %13 : vector<8x58xf32>
    %21 = arith.addf %6, %20 : vector<8x58xf32>
    %c15 = arith.constant 15 : index
    %22 = memref.load %arg2[%c15] : memref<720xf32, #tpu.memory_space<smem>>
    %23 = vector.broadcast %22 : f32 to vector<8x58xf32>
    %24 = arith.mulf %23, %13 : vector<8x58xf32>
    %25 = arith.addf %9, %24 : vector<8x58xf32>
    %c22 = arith.constant 22 : index
    %26 = memref.load %arg2[%c22] : memref<720xf32, #tpu.memory_space<smem>>
    %27 = vector.broadcast %26 : f32 to vector<8x58xf32>
    %28 = arith.mulf %27, %13 : vector<8x58xf32>
    %29 = arith.addf %12, %28 : vector<8x58xf32>
    %c0_4 = arith.constant 0 : index
    %c2 = arith.constant 2 : index
    %30 = vector.load %arg1[%c0_4, %c2] : memref<8x64xf32, #tpu.memory_space<vmem>>, vector<8x58xf32>
    %c2_5 = arith.constant 2 : index
    %31 = memref.load %arg2[%c2_5] : memref<720xf32, #tpu.memory_space<smem>>
    %32 = vector.broadcast %31 : f32 to vector<8x58xf32>
    %33 = arith.mulf %32, %30 : vector<8x58xf32>
    %34 = arith.addf %17, %33 : vector<8x58xf32>
    %c9 = arith.constant 9 : index
    %35 = memref.load %arg2[%c9] : memref<720xf32, #tpu.memory_space<smem>>
    %36 = vector.broadcast %35 : f32 to vector<8x58xf32>
    %37 = arith.mulf %36, %30 : vector<8x58xf32>
    %38 = arith.addf %21, %37 : vector<8x58xf32>
    %c16 = arith.constant 16 : index
    %39 = memref.load %arg2[%c16] : memref<720xf32, #tpu.memory_space<smem>>
    %40 = vector.broadcast %39 : f32 to vector<8x58xf32>
    %41 = arith.mulf %40, %30 : vector<8x58xf32>
    %42 = arith.addf %25, %41 : vector<8x58xf32>
    %c23 = arith.constant 23 : index
    %43 = memref.load %arg2[%c23] : memref<720xf32, #tpu.memory_space<smem>>
    %44 = vector.broadcast %43 : f32 to vector<8x58xf32>
    %45 = arith.mulf %44, %30 : vector<8x58xf32>
    %46 = arith.addf %29, %45 : vector<8x58xf32>
    %c0_6 = arith.constant 0 : index
    %c3 = arith.constant 3 : index
    %47 = vector.load %arg1[%c0_6, %c3] : memref<8x64xf32, #tpu.memory_space<vmem>>, vector<8x58xf32>
    %c3_7 = arith.constant 3 : index
    %48 = memref.load %arg2[%c3_7] : memref<720xf32, #tpu.memory_space<smem>>
    %49 = vector.broadcast %48 : f32 to vector<8x58xf32>
    %50 = arith.mulf %49, %47 : vector<8x58xf32>
    %51 = arith.addf %34, %50 : vector<8x58xf32>
    %c10 = arith.constant 10 : index
    %52 = memref.load %arg2[%c10] : memref<720xf32, #tpu.memory_space<smem>>
    %53 = vector.broadcast %52 : f32 to vector<8x58xf32>
    %54 = arith.mulf %53, %47 : vector<8x58xf32>
    %55 = arith.addf %38, %54 : vector<8x58xf32>
    %c17 = arith.constant 17 : index
    %56 = memref.load %arg2[%c17] : memref<720xf32, #tpu.memory_space<smem>>
    %57 = vector.broadcast %56 : f32 to vector<8x58xf32>
    %58 = arith.mulf %57, %47 : vector<8x58xf32>
    %59 = arith.addf %42, %58 : vector<8x58xf32>
    %c24 = arith.constant 24 : index
    %60 = memref.load %arg2[%c24] : memref<720xf32, #tpu.memory_space<smem>>
    %61 = vector.broadcast %60 : f32 to vector<8x58xf32>
    %62 = arith.mulf %61, %47 : vector<8x58xf32>
    %63 = arith.addf %46, %62 : vector<8x58xf32>
    %c0_8 = arith.constant 0 : index
    %c4 = arith.constant 4 : index
    %64 = vector.load %arg1[%c0_8, %c4] : memref<8x64xf32, #tpu.memory_space<vmem>>, vector<8x58xf32>
    %c4_9 = arith.constant 4 : index
    %65 = memref.load %arg2[%c4_9] : memref<720xf32, #tpu.memory_space<smem>>
    %66 = vector.broadcast %65 : f32 to vector<8x58xf32>
    %67 = arith.mulf %66, %64 : vector<8x58xf32>
    %68 = arith.addf %51, %67 : vector<8x58xf32>
    %c11 = arith.constant 11 : index
    %69 = memref.load %arg2[%c11] : memref<720xf32, #tpu.memory_space<smem>>
    %70 = vector.broadcast %69 : f32 to vector<8x58xf32>
    %71 = arith.mulf %70, %64 : vector<8x58xf32>
    %72 = arith.addf %55, %71 : vector<8x58xf32>
    %c18 = arith.constant 18 : index
    %73 = memref.load %arg2[%c18] : memref<720xf32, #tpu.memory_space<smem>>
    %74 = vector.broadcast %73 : f32 to vector<8x58xf32>
    %75 = arith.mulf %74, %64 : vector<8x58xf32>
    %76 = arith.addf %59, %75 : vector<8x58xf32>
    %c25 = arith.constant 25 : index
    %77 = memref.load %arg2[%c25] : memref<720xf32, #tpu.memory_space<smem>>
    %78 = vector.broadcast %77 : f32 to vector<8x58xf32>
    %79 = arith.mulf %78, %64 : vector<8x58xf32>
    %80 = arith.addf %63, %79 : vector<8x58xf32>
    %c0_10 = arith.constant 0 : index
    %c5 = arith.constant 5 : index
    %81 = vector.load %arg1[%c0_10, %c5] : memref<8x64xf32, #tpu.memory_space<vmem>>, vector<8x58xf32>
    %c5_11 = arith.constant 5 : index
    %82 = memref.load %arg2[%c5_11] : memref<720xf32, #tpu.memory_space<smem>>
    %83 = vector.broadcast %82 : f32 to vector<8x58xf32>
    %84 = arith.mulf %83, %81 : vector<8x58xf32>
    %85 = arith.addf %68, %84 : vector<8x58xf32>
    %c12 = arith.constant 12 : index
    %86 = memref.load %arg2[%c12] : memref<720xf32, #tpu.memory_space<smem>>
    %87 = vector.broadcast %86 : f32 to vector<8x58xf32>
    %88 = arith.mulf %87, %81 : vector<8x58xf32>
    %89 = arith.addf %72, %88 : vector<8x58xf32>
    %c19 = arith.constant 19 : index
    %90 = memref.load %arg2[%c19] : memref<720xf32, #tpu.memory_space<smem>>
    %91 = vector.broadcast %90 : f32 to vector<8x58xf32>
    %92 = arith.mulf %91, %81 : vector<8x58xf32>
    %93 = arith.addf %76, %92 : vector<8x58xf32>
    %c26 = arith.constant 26 : index
    %94 = memref.load %arg2[%c26] : memref<720xf32, #tpu.memory_space<smem>>
    %95 = vector.broadcast %94 : f32 to vector<8x58xf32>
    %96 = arith.mulf %95, %81 : vector<8x58xf32>
    %97 = arith.addf %80, %96 : vector<8x58xf32>
    %c0_12 = arith.constant 0 : index
    %c6 = arith.constant 6 : index
    %98 = vector.load %arg1[%c0_12, %c6] : memref<8x64xf32, #tpu.memory_space<vmem>>, vector<8x58xf32>
    %c6_13 = arith.constant 6 : index
    %99 = memref.load %arg2[%c6_13] : memref<720xf32, #tpu.memory_space<smem>>
    %100 = vector.broadcast %99 : f32 to vector<8x58xf32>
    %101 = arith.mulf %100, %98 : vector<8x58xf32>
    %102 = arith.addf %85, %101 : vector<8x58xf32>
    %c13 = arith.constant 13 : index
    %103 = memref.load %arg2[%c13] : memref<720xf32, #tpu.memory_space<smem>>
    %104 = vector.broadcast %103 : f32 to vector<8x58xf32>
    %105 = arith.mulf %104, %98 : vector<8x58xf32>
    %106 = arith.addf %89, %105 : vector<8x58xf32>
    %c20 = arith.constant 20 : index
    %107 = memref.load %arg2[%c20] : memref<720xf32, #tpu.memory_space<smem>>
    %108 = vector.broadcast %107 : f32 to vector<8x58xf32>
    %109 = arith.mulf %108, %98 : vector<8x58xf32>
    %110 = arith.addf %93, %109 : vector<8x58xf32>
    %c27 = arith.constant 27 : index
    %111 = memref.load %arg2[%c27] : memref<720xf32, #tpu.memory_space<smem>>
    %112 = vector.broadcast %111 : f32 to vector<8x58xf32>
    %113 = arith.mulf %112, %98 : vector<8x58xf32>
    %114 = arith.addf %97, %113 : vector<8x58xf32>
    %c28 = arith.constant 28 : index
    %115 = memref.load %arg2[%c28] : memref<720xf32, #tpu.memory_space<smem>>
    %116 = vector.broadcast %115 : f32 to vector<8x58xf32>
    %117 = arith.addf %102, %116 : vector<8x58xf32>
    %cst = arith.constant 0.000000e+00 : f32
    %118 = vector.broadcast %cst : f32 to vector<8x58xf32>
    %119 = arith.maximumf %117, %118 : vector<8x58xf32>
    %120 = vector.extract_strided_slice %119 {offsets = [0, 0], sizes = [8, 57], strides = [1, 1]} : vector<8x58xf32> to vector<8x57xf32>
    %121 = vector.extract_strided_slice %119 {offsets = [0, 1], sizes = [8, 57], strides = [1, 1]} : vector<8x58xf32> to vector<8x57xf32>
    %122 = arith.maximumf %120, %121 : vector<8x57xf32>
    %c29 = arith.constant 29 : index
    %123 = memref.load %arg2[%c29] : memref<720xf32, #tpu.memory_space<smem>>
    %124 = vector.broadcast %123 : f32 to vector<8x58xf32>
    %125 = arith.addf %106, %124 : vector<8x58xf32>
    %cst_14 = arith.constant 0.000000e+00 : f32
    %126 = vector.broadcast %cst_14 : f32 to vector<8x58xf32>
    %127 = arith.maximumf %125, %126 : vector<8x58xf32>
    %128 = vector.extract_strided_slice %127 {offsets = [0, 0], sizes = [8, 57], strides = [1, 1]} : vector<8x58xf32> to vector<8x57xf32>
    %129 = vector.extract_strided_slice %127 {offsets = [0, 1], sizes = [8, 57], strides = [1, 1]} : vector<8x58xf32> to vector<8x57xf32>
    %130 = arith.maximumf %128, %129 : vector<8x57xf32>
    %c30 = arith.constant 30 : index
    %131 = memref.load %arg2[%c30] : memref<720xf32, #tpu.memory_space<smem>>
    %132 = vector.broadcast %131 : f32 to vector<8x58xf32>
    %133 = arith.addf %110, %132 : vector<8x58xf32>
    %cst_15 = arith.constant 0.000000e+00 : f32
    %134 = vector.broadcast %cst_15 : f32 to vector<8x58xf32>
    %135 = arith.maximumf %133, %134 : vector<8x58xf32>
    %136 = vector.extract_strided_slice %135 {offsets = [0, 0], sizes = [8, 57], strides = [1, 1]} : vector<8x58xf32> to vector<8x57xf32>
    %137 = vector.extract_strided_slice %135 {offsets = [0, 1], sizes = [8, 57], strides = [1, 1]} : vector<8x58xf32> to vector<8x57xf32>
    %138 = arith.maximumf %136, %137 : vector<8x57xf32>
    %c31 = arith.constant 31 : index
    %139 = memref.load %arg2[%c31] : memref<720xf32, #tpu.memory_space<smem>>
    %140 = vector.broadcast %139 : f32 to vector<8x58xf32>
    %141 = arith.addf %114, %140 : vector<8x58xf32>
    %cst_16 = arith.constant 0.000000e+00 : f32
    %142 = vector.broadcast %cst_16 : f32 to vector<8x58xf32>
    %143 = arith.maximumf %141, %142 : vector<8x58xf32>
    %144 = vector.extract_strided_slice %143 {offsets = [0, 0], sizes = [8, 57], strides = [1, 1]} : vector<8x58xf32> to vector<8x57xf32>
    %145 = vector.extract_strided_slice %143 {offsets = [0, 1], sizes = [8, 57], strides = [1, 1]} : vector<8x58xf32> to vector<8x57xf32>
    %146 = arith.maximumf %144, %145 : vector<8x57xf32>
    %c0_17 = arith.constant 0 : index
    %c0_18 = arith.constant 0 : index
    %c0_19 = arith.constant 0 : index
    %147 = vector.load %arg5[%c0_17, %c0_18, %c0_19] : memref<4x8x128xf32, #tpu.memory_space<vmem>>, vector<1x8x57xf32>
    %148 = vector.shape_cast %147 : vector<1x8x57xf32> to vector<8x57xf32>
    %149 = vector.shape_cast %122 : vector<8x57xf32> to vector<1x8x57xf32>
    tpu.vector_store %arg5[%c0_17, %c0_18, %c0_19], %149 {strides = array<i32>} : memref<4x8x128xf32, #tpu.memory_space<vmem>>, vector<1x8x57xf32>,
    %c1_20 = arith.constant 1 : index
    %c0_21 = arith.constant 0 : index
    %c0_22 = arith.constant 0 : index
    %150 = vector.load %arg5[%c1_20, %c0_21, %c0_22] : memref<4x8x128xf32, #tpu.memory_space<vmem>>, vector<1x8x57xf32>
    %151 = vector.shape_cast %150 : vector<1x8x57xf32> to vector<8x57xf32>
    %152 = vector.shape_cast %130 : vector<8x57xf32> to vector<1x8x57xf32>
    tpu.vector_store %arg5[%c1_20, %c0_21, %c0_22], %152 {strides = array<i32>} : memref<4x8x128xf32, #tpu.memory_space<vmem>>, vector<1x8x57xf32>,
    %c2_23 = arith.constant 2 : index
    %c0_24 = arith.constant 0 : index
    %c0_25 = arith.constant 0 : index
    %153 = vector.load %arg5[%c2_23, %c0_24, %c0_25] : memref<4x8x128xf32, #tpu.memory_space<vmem>>, vector<1x8x57xf32>
    %154 = vector.shape_cast %153 : vector<1x8x57xf32> to vector<8x57xf32>
    %155 = vector.shape_cast %138 : vector<8x57xf32> to vector<1x8x57xf32>
    tpu.vector_store %arg5[%c2_23, %c0_24, %c0_25], %155 {strides = array<i32>} : memref<4x8x128xf32, #tpu.memory_space<vmem>>, vector<1x8x57xf32>,
    %c3_26 = arith.constant 3 : index
    %c0_27 = arith.constant 0 : index
    %c0_28 = arith.constant 0 : index
    %156 = vector.load %arg5[%c3_26, %c0_27, %c0_28] : memref<4x8x128xf32, #tpu.memory_space<vmem>>, vector<1x8x57xf32>
    %157 = vector.shape_cast %156 : vector<1x8x57xf32> to vector<8x57xf32>
    %158 = vector.shape_cast %146 : vector<8x57xf32> to vector<1x8x57xf32>
    tpu.vector_store %arg5[%c3_26, %c0_27, %c0_28], %158 {strides = array<i32>} : memref<4x8x128xf32, #tpu.memory_space<vmem>>, vector<1x8x57xf32>,
    %c0_29 = arith.constant 0 : index
    %c0_30 = arith.constant 0 : index
    %c0_31 = arith.constant 0 : index
    %159 = vector.load %arg5[%c0_29, %c0_30, %c0_31] : memref<4x8x128xf32, #tpu.memory_space<vmem>>, vector<1x8x45xf32>
    %160 = vector.shape_cast %159 : vector<1x8x45xf32> to vector<8x45xf32>
    %c32 = arith.constant 32 : index
    %161 = memref.load %arg2[%c32] : memref<720xf32, #tpu.memory_space<smem>>
    %162 = vector.broadcast %161 : f32 to vector<8x45xf32>
    %163 = arith.mulf %162, %160 : vector<8x45xf32>
    %c60 = arith.constant 60 : index
    %164 = memref.load %arg2[%c60] : memref<720xf32, #tpu.memory_space<smem>>
    %165 = vector.broadcast %164 : f32 to vector<8x45xf32>
    %166 = arith.mulf %165, %160 : vector<8x45xf32>
    %c88 = arith.constant 88 : index
    %167 = memref.load %arg2[%c88] : memref<720xf32, #tpu.memory_space<smem>>
    %168 = vector.broadcast %167 : f32 to vector<8x45xf32>
    %169 = arith.mulf %168, %160 : vector<8x45xf32>
    %c116 = arith.constant 116 : index
    %170 = memref.load %arg2[%c116] : memref<720xf32, #tpu.memory_space<smem>>
    %171 = vector.broadcast %170 : f32 to vector<8x45xf32>
    %172 = arith.mulf %171, %160 : vector<8x45xf32>
    %c144 = arith.constant 144 : index
    %173 = memref.load %arg2[%c144] : memref<720xf32, #tpu.memory_space<smem>>
    %174 = vector.broadcast %173 : f32 to vector<8x45xf32>
    %175 = arith.mulf %174, %160 : vector<8x45xf32>
    %c172 = arith.constant 172 : index
    %176 = memref.load %arg2[%c172] : memref<720xf32, #tpu.memory_space<smem>>
    %177 = vector.broadcast %176 : f32 to vector<8x45xf32>
    %178 = arith.mulf %177, %160 : vector<8x45xf32>
    %c200 = arith.constant 200 : index
    %179 = memref.load %arg2[%c200] : memref<720xf32, #tpu.memory_space<smem>>
    %180 = vector.broadcast %179 : f32 to vector<8x45xf32>
    %181 = arith.mulf %180, %160 : vector<8x45xf32>
    %c228 = arith.constant 228 : index
    %182 = memref.load %arg2[%c228] : memref<720xf32, #tpu.memory_space<smem>>
    %183 = vector.broadcast %182 : f32 to vector<8x45xf32>
    %184 = arith.mulf %183, %160 : vector<8x45xf32>
    %c0_32 = arith.constant 0 : index
    %c0_33 = arith.constant 0 : index
    %c2_34 = arith.constant 2 : index
    %185 = vector.load %arg5[%c0_32, %c0_33, %c2_34] : memref<4x8x128xf32, #tpu.memory_space<vmem>>, vector<1x8x45xf32>
    %186 = vector.shape_cast %185 : vector<1x8x45xf32> to vector<8x45xf32>
    %c33 = arith.constant 33 : index
    %187 = memref.load %arg2[%c33] : memref<720xf32, #tpu.memory_space<smem>>
    %188 = vector.broadcast %187 : f32 to vector<8x45xf32>
    %189 = arith.mulf %188, %186 : vector<8x45xf32>
    %190 = arith.addf %163, %189 : vector<8x45xf32>
    %c61 = arith.constant 61 : index
    %191 = memref.load %arg2[%c61] : memref<720xf32, #tpu.memory_space<smem>>
    %192 = vector.broadcast %191 : f32 to vector<8x45xf32>
    %193 = arith.mulf %192, %186 : vector<8x45xf32>
    %194 = arith.addf %166, %193 : vector<8x45xf32>
    %c89 = arith.constant 89 : index
    %195 = memref.load %arg2[%c89] : memref<720xf32, #tpu.memory_space<smem>>
    %196 = vector.broadcast %195 : f32 to vector<8x45xf32>
    %197 = arith.mulf %196, %186 : vector<8x45xf32>
    %198 = arith.addf %169, %197 : vector<8x45xf32>
    %c117 = arith.constant 117 : index
    %199 = memref.load %arg2[%c117] : memref<720xf32, #tpu.memory_space<smem>>
    %200 = vector.broadcast %199 : f32 to vector<8x45xf32>
    %201 = arith.mulf %200, %186 : vector<8x45xf32>
    %202 = arith.addf %172, %201 : vector<8x45xf32>
    %c145 = arith.constant 145 : index
    %203 = memref.load %arg2[%c145] : memref<720xf32, #tpu.memory_space<smem>>
    %204 = vector.broadcast %203 : f32 to vector<8x45xf32>
    %205 = arith.mulf %204, %186 : vector<8x45xf32>
    %206 = arith.addf %175, %205 : vector<8x45xf32>
    %c173 = arith.constant 173 : index
    %207 = memref.load %arg2[%c173] : memref<720xf32, #tpu.memory_space<smem>>
    %208 = vector.broadcast %207 : f32 to vector<8x45xf32>
    %209 = arith.mulf %208, %186 : vector<8x45xf32>
    %210 = arith.addf %178, %209 : vector<8x45xf32>
    %c201 = arith.constant 201 : index
    %211 = memref.load %arg2[%c201] : memref<720xf32, #tpu.memory_space<smem>>
    %212 = vector.broadcast %211 : f32 to vector<8x45xf32>
    %213 = arith.mulf %212, %186 : vector<8x45xf32>
    %214 = arith.addf %181, %213 : vector<8x45xf32>
    %c229 = arith.constant 229 : index
    %215 = memref.load %arg2[%c229] : memref<720xf32, #tpu.memory_space<smem>>
    %216 = vector.broadcast %215 : f32 to vector<8x45xf32>
    %217 = arith.mulf %216, %186 : vector<8x45xf32>
    %218 = arith.addf %184, %217 : vector<8x45xf32>
    %c0_35 = arith.constant 0 : index
    %c0_36 = arith.constant 0 : index
    %c4_37 = arith.constant 4 : index
    %219 = vector.load %arg5[%c0_35, %c0_36, %c4_37] : memref<4x8x128xf32, #tpu.memory_space<vmem>>, vector<1x8x45xf32>
    %220 = vector.shape_cast %219 : vector<1x8x45xf32> to vector<8x45xf32>
    %c34 = arith.constant 34 : index
    %221 = memref.load %arg2[%c34] : memref<720xf32, #tpu.memory_space<smem>>
    %222 = vector.broadcast %221 : f32 to vector<8x45xf32>
    %223 = arith.mulf %222, %220 : vector<8x45xf32>
    %224 = arith.addf %190, %223 : vector<8x45xf32>
    %c62 = arith.constant 62 : index
    %225 = memref.load %arg2[%c62] : memref<720xf32, #tpu.memory_space<smem>>
    %226 = vector.broadcast %225 : f32 to vector<8x45xf32>
    %227 = arith.mulf %226, %220 : vector<8x45xf32>
    %228 = arith.addf %194, %227 : vector<8x45xf32>
    %c90 = arith.constant 90 : index
    %229 = memref.load %arg2[%c90] : memref<720xf32, #tpu.memory_space<smem>>
    %230 = vector.broadcast %229 : f32 to vector<8x45xf32>
    %231 = arith.mulf %230, %220 : vector<8x45xf32>
    %232 = arith.addf %198, %231 : vector<8x45xf32>
    %c118 = arith.constant 118 : index
    %233 = memref.load %arg2[%c118] : memref<720xf32, #tpu.memory_space<smem>>
    %234 = vector.broadcast %233 : f32 to vector<8x45xf32>
    %235 = arith.mulf %234, %220 : vector<8x45xf32>
    %236 = arith.addf %202, %235 : vector<8x45xf32>
    %c146 = arith.constant 146 : index
    %237 = memref.load %arg2[%c146] : memref<720xf32, #tpu.memory_space<smem>>
    %238 = vector.broadcast %237 : f32 to vector<8x45xf32>
    %239 = arith.mulf %238, %220 : vector<8x45xf32>
    %240 = arith.addf %206, %239 : vector<8x45xf32>
    %c174 = arith.constant 174 : index
    %241 = memref.load %arg2[%c174] : memref<720xf32, #tpu.memory_space<smem>>
    %242 = vector.broadcast %241 : f32 to vector<8x45xf32>
    %243 = arith.mulf %242, %220 : vector<8x45xf32>
    %244 = arith.addf %210, %243 : vector<8x45xf32>
    %c202 = arith.constant 202 : index
    %245 = memref.load %arg2[%c202] : memref<720xf32, #tpu.memory_space<smem>>
    %246 = vector.broadcast %245 : f32 to vector<8x45xf32>
    %247 = arith.mulf %246, %220 : vector<8x45xf32>
    %248 = arith.addf %214, %247 : vector<8x45xf32>
    %c230 = arith.constant 230 : index
    %249 = memref.load %arg2[%c230] : memref<720xf32, #tpu.memory_space<smem>>
    %250 = vector.broadcast %249 : f32 to vector<8x45xf32>
    %251 = arith.mulf %250, %220 : vector<8x45xf32>
    %252 = arith.addf %218, %251 : vector<8x45xf32>
    %c0_38 = arith.constant 0 : index
    %c0_39 = arith.constant 0 : index
    %c6_40 = arith.constant 6 : index
    %253 = vector.load %arg5[%c0_38, %c0_39, %c6_40] : memref<4x8x128xf32, #tpu.memory_space<vmem>>, vector<1x8x45xf32>
    %254 = vector.shape_cast %253 : vector<1x8x45xf32> to vector<8x45xf32>
    %c35 = arith.constant 35 : index
    %255 = memref.load %arg2[%c35] : memref<720xf32, #tpu.memory_space<smem>>
    %256 = vector.broadcast %255 : f32 to vector<8x45xf32>
    %257 = arith.mulf %256, %254 : vector<8x45xf32>
    %258 = arith.addf %224, %257 : vector<8x45xf32>
    %c63 = arith.constant 63 : index
    %259 = memref.load %arg2[%c63] : memref<720xf32, #tpu.memory_space<smem>>
    %260 = vector.broadcast %259 : f32 to vector<8x45xf32>
    %261 = arith.mulf %260, %254 : vector<8x45xf32>
    %262 = arith.addf %228, %261 : vector<8x45xf32>
    %c91 = arith.constant 91 : index
    %263 = memref.load %arg2[%c91] : memref<720xf32, #tpu.memory_space<smem>>
    %264 = vector.broadcast %263 : f32 to vector<8x45xf32>
    %265 = arith.mulf %264, %254 : vector<8x45xf32>
    %266 = arith.addf %232, %265 : vector<8x45xf32>
    %c119 = arith.constant 119 : index
    %267 = memref.load %arg2[%c119] : memref<720xf32, #tpu.memory_space<smem>>
    %268 = vector.broadcast %267 : f32 to vector<8x45xf32>
    %269 = arith.mulf %268, %254 : vector<8x45xf32>
    %270 = arith.addf %236, %269 : vector<8x45xf32>
    %c147 = arith.constant 147 : index
    %271 = memref.load %arg2[%c147] : memref<720xf32, #tpu.memory_space<smem>>
    %272 = vector.broadcast %271 : f32 to vector<8x45xf32>
    %273 = arith.mulf %272, %254 : vector<8x45xf32>
    %274 = arith.addf %240, %273 : vector<8x45xf32>
    %c175 = arith.constant 175 : index
    %275 = memref.load %arg2[%c175] : memref<720xf32, #tpu.memory_space<smem>>
    %276 = vector.broadcast %275 : f32 to vector<8x45xf32>
    %277 = arith.mulf %276, %254 : vector<8x45xf32>
    %278 = arith.addf %244, %277 : vector<8x45xf32>
    %c203 = arith.constant 203 : index
    %279 = memref.load %arg2[%c203] : memref<720xf32, #tpu.memory_space<smem>>
    %280 = vector.broadcast %279 : f32 to vector<8x45xf32>
    %281 = arith.mulf %280, %254 : vector<8x45xf32>
    %282 = arith.addf %248, %281 : vector<8x45xf32>
    %c231 = arith.constant 231 : index
    %283 = memref.load %arg2[%c231] : memref<720xf32, #tpu.memory_space<smem>>
    %284 = vector.broadcast %283 : f32 to vector<8x45xf32>
    %285 = arith.mulf %284, %254 : vector<8x45xf32>
    %286 = arith.addf %252, %285 : vector<8x45xf32>
    %c0_41 = arith.constant 0 : index
    %c0_42 = arith.constant 0 : index
    %c8_43 = arith.constant 8 : index
    %287 = vector.load %arg5[%c0_41, %c0_42, %c8_43] : memref<4x8x128xf32, #tpu.memory_space<vmem>>, vector<1x8x45xf32>
    %288 = vector.shape_cast %287 : vector<1x8x45xf32> to vector<8x45xf32>
    %c36 = arith.constant 36 : index
    %289 = memref.load %arg2[%c36] : memref<720xf32, #tpu.memory_space<smem>>
    %290 = vector.broadcast %289 : f32 to vector<8x45xf32>
    %291 = arith.mulf %290, %288 : vector<8x45xf32>
    %292 = arith.addf %258, %291 : vector<8x45xf32>
    %c64 = arith.constant 64 : index
    %293 = memref.load %arg2[%c64] : memref<720xf32, #tpu.memory_space<smem>>
    %294 = vector.broadcast %293 : f32 to vector<8x45xf32>
    %295 = arith.mulf %294, %288 : vector<8x45xf32>
    %296 = arith.addf %262, %295 : vector<8x45xf32>
    %c92 = arith.constant 92 : index
    %297 = memref.load %arg2[%c92] : memref<720xf32, #tpu.memory_space<smem>>
    %298 = vector.broadcast %297 : f32 to vector<8x45xf32>
    %299 = arith.mulf %298, %288 : vector<8x45xf32>
    %300 = arith.addf %266, %299 : vector<8x45xf32>
    %c120 = arith.constant 120 : index
    %301 = memref.load %arg2[%c120] : memref<720xf32, #tpu.memory_space<smem>>
    %302 = vector.broadcast %301 : f32 to vector<8x45xf32>
    %303 = arith.mulf %302, %288 : vector<8x45xf32>
    %304 = arith.addf %270, %303 : vector<8x45xf32>
    %c148 = arith.constant 148 : index
    %305 = memref.load %arg2[%c148] : memref<720xf32, #tpu.memory_space<smem>>
    %306 = vector.broadcast %305 : f32 to vector<8x45xf32>
    %307 = arith.mulf %306, %288 : vector<8x45xf32>
    %308 = arith.addf %274, %307 : vector<8x45xf32>
    %c176 = arith.constant 176 : index
    %309 = memref.load %arg2[%c176] : memref<720xf32, #tpu.memory_space<smem>>
    %310 = vector.broadcast %309 : f32 to vector<8x45xf32>
    %311 = arith.mulf %310, %288 : vector<8x45xf32>
    %312 = arith.addf %278, %311 : vector<8x45xf32>
    %c204 = arith.constant 204 : index
    %313 = memref.load %arg2[%c204] : memref<720xf32, #tpu.memory_space<smem>>
    %314 = vector.broadcast %313 : f32 to vector<8x45xf32>
    %315 = arith.mulf %314, %288 : vector<8x45xf32>
    %316 = arith.addf %282, %315 : vector<8x45xf32>
    %c232 = arith.constant 232 : index
    %317 = memref.load %arg2[%c232] : memref<720xf32, #tpu.memory_space<smem>>
    %318 = vector.broadcast %317 : f32 to vector<8x45xf32>
    %319 = arith.mulf %318, %288 : vector<8x45xf32>
    %320 = arith.addf %286, %319 : vector<8x45xf32>
    %c0_44 = arith.constant 0 : index
    %c0_45 = arith.constant 0 : index
    %c10_46 = arith.constant 10 : index
    %321 = vector.load %arg5[%c0_44, %c0_45, %c10_46] : memref<4x8x128xf32, #tpu.memory_space<vmem>>, vector<1x8x45xf32>
    %322 = vector.shape_cast %321 : vector<1x8x45xf32> to vector<8x45xf32>
    %c37 = arith.constant 37 : index
    %323 = memref.load %arg2[%c37] : memref<720xf32, #tpu.memory_space<smem>>
    %324 = vector.broadcast %323 : f32 to vector<8x45xf32>
    %325 = arith.mulf %324, %322 : vector<8x45xf32>
    %326 = arith.addf %292, %325 : vector<8x45xf32>
    %c65 = arith.constant 65 : index
    %327 = memref.load %arg2[%c65] : memref<720xf32, #tpu.memory_space<smem>>
    %328 = vector.broadcast %327 : f32 to vector<8x45xf32>
    %329 = arith.mulf %328, %322 : vector<8x45xf32>
    %330 = arith.addf %296, %329 : vector<8x45xf32>
    %c93 = arith.constant 93 : index
    %331 = memref.load %arg2[%c93] : memref<720xf32, #tpu.memory_space<smem>>
    %332 = vector.broadcast %331 : f32 to vector<8x45xf32>
    %333 = arith.mulf %332, %322 : vector<8x45xf32>
    %334 = arith.addf %300, %333 : vector<8x45xf32>
    %c121 = arith.constant 121 : index
    %335 = memref.load %arg2[%c121] : memref<720xf32, #tpu.memory_space<smem>>
    %336 = vector.broadcast %335 : f32 to vector<8x45xf32>
    %337 = arith.mulf %336, %322 : vector<8x45xf32>
    %338 = arith.addf %304, %337 : vector<8x45xf32>
    %c149 = arith.constant 149 : index
    %339 = memref.load %arg2[%c149] : memref<720xf32, #tpu.memory_space<smem>>
    %340 = vector.broadcast %339 : f32 to vector<8x45xf32>
    %341 = arith.mulf %340, %322 : vector<8x45xf32>
    %342 = arith.addf %308, %341 : vector<8x45xf32>
    %c177 = arith.constant 177 : index
    %343 = memref.load %arg2[%c177] : memref<720xf32, #tpu.memory_space<smem>>
    %344 = vector.broadcast %343 : f32 to vector<8x45xf32>
    %345 = arith.mulf %344, %322 : vector<8x45xf32>
    %346 = arith.addf %312, %345 : vector<8x45xf32>
    %c205 = arith.constant 205 : index
    %347 = memref.load %arg2[%c205] : memref<720xf32, #tpu.memory_space<smem>>
    %348 = vector.broadcast %347 : f32 to vector<8x45xf32>
    %349 = arith.mulf %348, %322 : vector<8x45xf32>
    %350 = arith.addf %316, %349 : vector<8x45xf32>
    %c233 = arith.constant 233 : index
    %351 = memref.load %arg2[%c233] : memref<720xf32, #tpu.memory_space<smem>>
    %352 = vector.broadcast %351 : f32 to vector<8x45xf32>
    %353 = arith.mulf %352, %322 : vector<8x45xf32>
    %354 = arith.addf %320, %353 : vector<8x45xf32>
    %c0_47 = arith.constant 0 : index
    %c0_48 = arith.constant 0 : index
    %c12_49 = arith.constant 12 : index
    %355 = vector.load %arg5[%c0_47, %c0_48, %c12_49] : memref<4x8x128xf32, #tpu.memory_space<vmem>>, vector<1x8x45xf32>
    %356 = vector.shape_cast %355 : vector<1x8x45xf32> to vector<8x45xf32>
    %c38 = arith.constant 38 : index
    %357 = memref.load %arg2[%c38] : memref<720xf32, #tpu.memory_space<smem>>
    %358 = vector.broadcast %357 : f32 to vector<8x45xf32>
    %359 = arith.mulf %358, %356 : vector<8x45xf32>
    %360 = arith.addf %326, %359 : vector<8x45xf32>
    %c66 = arith.constant 66 : index
    %361 = memref.load %arg2[%c66] : memref<720xf32, #tpu.memory_space<smem>>
    %362 = vector.broadcast %361 : f32 to vector<8x45xf32>
    %363 = arith.mulf %362, %356 : vector<8x45xf32>
    %364 = arith.addf %330, %363 : vector<8x45xf32>
    %c94 = arith.constant 94 : index
    %365 = memref.load %arg2[%c94] : memref<720xf32, #tpu.memory_space<smem>>
    %366 = vector.broadcast %365 : f32 to vector<8x45xf32>
    %367 = arith.mulf %366, %356 : vector<8x45xf32>
    %368 = arith.addf %334, %367 : vector<8x45xf32>
    %c122 = arith.constant 122 : index
    %369 = memref.load %arg2[%c122] : memref<720xf32, #tpu.memory_space<smem>>
    %370 = vector.broadcast %369 : f32 to vector<8x45xf32>
    %371 = arith.mulf %370, %356 : vector<8x45xf32>
    %372 = arith.addf %338, %371 : vector<8x45xf32>
    %c150 = arith.constant 150 : index
    %373 = memref.load %arg2[%c150] : memref<720xf32, #tpu.memory_space<smem>>
    %374 = vector.broadcast %373 : f32 to vector<8x45xf32>
    %375 = arith.mulf %374, %356 : vector<8x45xf32>
    %376 = arith.addf %342, %375 : vector<8x45xf32>
    %c178 = arith.constant 178 : index
    %377 = memref.load %arg2[%c178] : memref<720xf32, #tpu.memory_space<smem>>
    %378 = vector.broadcast %377 : f32 to vector<8x45xf32>
    %379 = arith.mulf %378, %356 : vector<8x45xf32>
    %380 = arith.addf %346, %379 : vector<8x45xf32>
    %c206 = arith.constant 206 : index
    %381 = memref.load %arg2[%c206] : memref<720xf32, #tpu.memory_space<smem>>
    %382 = vector.broadcast %381 : f32 to vector<8x45xf32>
    %383 = arith.mulf %382, %356 : vector<8x45xf32>
    %384 = arith.addf %350, %383 : vector<8x45xf32>
    %c234 = arith.constant 234 : index
    %385 = memref.load %arg2[%c234] : memref<720xf32, #tpu.memory_space<smem>>
    %386 = vector.broadcast %385 : f32 to vector<8x45xf32>
    %387 = arith.mulf %386, %356 : vector<8x45xf32>
    %388 = arith.addf %354, %387 : vector<8x45xf32>
    %c1_50 = arith.constant 1 : index
    %c0_51 = arith.constant 0 : index
    %c0_52 = arith.constant 0 : index
    %389 = vector.load %arg5[%c1_50, %c0_51, %c0_52] : memref<4x8x128xf32, #tpu.memory_space<vmem>>, vector<1x8x45xf32>
    %390 = vector.shape_cast %389 : vector<1x8x45xf32> to vector<8x45xf32>
    %c39 = arith.constant 39 : index
    %391 = memref.load %arg2[%c39] : memref<720xf32, #tpu.memory_space<smem>>
    %392 = vector.broadcast %391 : f32 to vector<8x45xf32>
    %393 = arith.mulf %392, %390 : vector<8x45xf32>
    %394 = arith.addf %360, %393 : vector<8x45xf32>
    %c67 = arith.constant 67 : index
    %395 = memref.load %arg2[%c67] : memref<720xf32, #tpu.memory_space<smem>>
    %396 = vector.broadcast %395 : f32 to vector<8x45xf32>
    %397 = arith.mulf %396, %390 : vector<8x45xf32>
    %398 = arith.addf %364, %397 : vector<8x45xf32>
    %c95 = arith.constant 95 : index
    %399 = memref.load %arg2[%c95] : memref<720xf32, #tpu.memory_space<smem>>
    %400 = vector.broadcast %399 : f32 to vector<8x45xf32>
    %401 = arith.mulf %400, %390 : vector<8x45xf32>
    %402 = arith.addf %368, %401 : vector<8x45xf32>
    %c123 = arith.constant 123 : index
    %403 = memref.load %arg2[%c123] : memref<720xf32, #tpu.memory_space<smem>>
    %404 = vector.broadcast %403 : f32 to vector<8x45xf32>
    %405 = arith.mulf %404, %390 : vector<8x45xf32>
    %406 = arith.addf %372, %405 : vector<8x45xf32>
    %c151 = arith.constant 151 : index
    %407 = memref.load %arg2[%c151] : memref<720xf32, #tpu.memory_space<smem>>
    %408 = vector.broadcast %407 : f32 to vector<8x45xf32>
    %409 = arith.mulf %408, %390 : vector<8x45xf32>
    %410 = arith.addf %376, %409 : vector<8x45xf32>
    %c179 = arith.constant 179 : index
    %411 = memref.load %arg2[%c179] : memref<720xf32, #tpu.memory_space<smem>>
    %412 = vector.broadcast %411 : f32 to vector<8x45xf32>
    %413 = arith.mulf %412, %390 : vector<8x45xf32>
    %414 = arith.addf %380, %413 : vector<8x45xf32>
    %c207 = arith.constant 207 : index
    %415 = memref.load %arg2[%c207] : memref<720xf32, #tpu.memory_space<smem>>
    %416 = vector.broadcast %415 : f32 to vector<8x45xf32>
    %417 = arith.mulf %416, %390 : vector<8x45xf32>
    %418 = arith.addf %384, %417 : vector<8x45xf32>
    %c235 = arith.constant 235 : index
    %419 = memref.load %arg2[%c235] : memref<720xf32, #tpu.memory_space<smem>>
    %420 = vector.broadcast %419 : f32 to vector<8x45xf32>
    %421 = arith.mulf %420, %390 : vector<8x45xf32>
    %422 = arith.addf %388, %421 : vector<8x45xf32>
    %c1_53 = arith.constant 1 : index
    %c0_54 = arith.constant 0 : index
    %c2_55 = arith.constant 2 : index
    %423 = vector.load %arg5[%c1_53, %c0_54, %c2_55] : memref<4x8x128xf32, #tpu.memory_space<vmem>>, vector<1x8x45xf32>
    %424 = vector.shape_cast %423 : vector<1x8x45xf32> to vector<8x45xf32>
    %c40 = arith.constant 40 : index
    %425 = memref.load %arg2[%c40] : memref<720xf32, #tpu.memory_space<smem>>
    %426 = vector.broadcast %425 : f32 to vector<8x45xf32>
    %427 = arith.mulf %426, %424 : vector<8x45xf32>
    %428 = arith.addf %394, %427 : vector<8x45xf32>
    %c68 = arith.constant 68 : index
    %429 = memref.load %arg2[%c68] : memref<720xf32, #tpu.memory_space<smem>>
    %430 = vector.broadcast %429 : f32 to vector<8x45xf32>
    %431 = arith.mulf %430, %424 : vector<8x45xf32>
    %432 = arith.addf %398, %431 : vector<8x45xf32>
    %c96 = arith.constant 96 : index
    %433 = memref.load %arg2[%c96] : memref<720xf32, #tpu.memory_space<smem>>
    %434 = vector.broadcast %433 : f32 to vector<8x45xf32>
    %435 = arith.mulf %434, %424 : vector<8x45xf32>
    %436 = arith.addf %402, %435 : vector<8x45xf32>
    %c124 = arith.constant 124 : index
    %437 = memref.load %arg2[%c124] : memref<720xf32, #tpu.memory_space<smem>>
    %438 = vector.broadcast %437 : f32 to vector<8x45xf32>
    %439 = arith.mulf %438, %424 : vector<8x45xf32>
    %440 = arith.addf %406, %439 : vector<8x45xf32>
    %c152 = arith.constant 152 : index
    %441 = memref.load %arg2[%c152] : memref<720xf32, #tpu.memory_space<smem>>
    %442 = vector.broadcast %441 : f32 to vector<8x45xf32>
    %443 = arith.mulf %442, %424 : vector<8x45xf32>
    %444 = arith.addf %410, %443 : vector<8x45xf32>
    %c180 = arith.constant 180 : index
    %445 = memref.load %arg2[%c180] : memref<720xf32, #tpu.memory_space<smem>>
    %446 = vector.broadcast %445 : f32 to vector<8x45xf32>
    %447 = arith.mulf %446, %424 : vector<8x45xf32>
    %448 = arith.addf %414, %447 : vector<8x45xf32>
    %c208 = arith.constant 208 : index
    %449 = memref.load %arg2[%c208] : memref<720xf32, #tpu.memory_space<smem>>
    %450 = vector.broadcast %449 : f32 to vector<8x45xf32>
    %451 = arith.mulf %450, %424 : vector<8x45xf32>
    %452 = arith.addf %418, %451 : vector<8x45xf32>
    %c236 = arith.constant 236 : index
    %453 = memref.load %arg2[%c236] : memref<720xf32, #tpu.memory_space<smem>>
    %454 = vector.broadcast %453 : f32 to vector<8x45xf32>
    %455 = arith.mulf %454, %424 : vector<8x45xf32>
    %456 = arith.addf %422, %455 : vector<8x45xf32>
    %c1_56 = arith.constant 1 : index
    %c0_57 = arith.constant 0 : index
    %c4_58 = arith.constant 4 : index
    %457 = vector.load %arg5[%c1_56, %c0_57, %c4_58] : memref<4x8x128xf32, #tpu.memory_space<vmem>>, vector<1x8x45xf32>
    %458 = vector.shape_cast %457 : vector<1x8x45xf32> to vector<8x45xf32>
    %c41 = arith.constant 41 : index
    %459 = memref.load %arg2[%c41] : memref<720xf32, #tpu.memory_space<smem>>
    %460 = vector.broadcast %459 : f32 to vector<8x45xf32>
    %461 = arith.mulf %460, %458 : vector<8x45xf32>
    %462 = arith.addf %428, %461 : vector<8x45xf32>
    %c69 = arith.constant 69 : index
    %463 = memref.load %arg2[%c69] : memref<720xf32, #tpu.memory_space<smem>>
    %464 = vector.broadcast %463 : f32 to vector<8x45xf32>
    %465 = arith.mulf %464, %458 : vector<8x45xf32>
    %466 = arith.addf %432, %465 : vector<8x45xf32>
    %c97 = arith.constant 97 : index
    %467 = memref.load %arg2[%c97] : memref<720xf32, #tpu.memory_space<smem>>
    %468 = vector.broadcast %467 : f32 to vector<8x45xf32>
    %469 = arith.mulf %468, %458 : vector<8x45xf32>
    %470 = arith.addf %436, %469 : vector<8x45xf32>
    %c125 = arith.constant 125 : index
    %471 = memref.load %arg2[%c125] : memref<720xf32, #tpu.memory_space<smem>>
    %472 = vector.broadcast %471 : f32 to vector<8x45xf32>
    %473 = arith.mulf %472, %458 : vector<8x45xf32>
    %474 = arith.addf %440, %473 : vector<8x45xf32>
    %c153 = arith.constant 153 : index
    %475 = memref.load %arg2[%c153] : memref<720xf32, #tpu.memory_space<smem>>
    %476 = vector.broadcast %475 : f32 to vector<8x45xf32>
    %477 = arith.mulf %476, %458 : vector<8x45xf32>
    %478 = arith.addf %444, %477 : vector<8x45xf32>
    %c181 = arith.constant 181 : index
    %479 = memref.load %arg2[%c181] : memref<720xf32, #tpu.memory_space<smem>>
    %480 = vector.broadcast %479 : f32 to vector<8x45xf32>
    %481 = arith.mulf %480, %458 : vector<8x45xf32>
    %482 = arith.addf %448, %481 : vector<8x45xf32>
    %c209 = arith.constant 209 : index
    %483 = memref.load %arg2[%c209] : memref<720xf32, #tpu.memory_space<smem>>
    %484 = vector.broadcast %483 : f32 to vector<8x45xf32>
    %485 = arith.mulf %484, %458 : vector<8x45xf32>
    %486 = arith.addf %452, %485 : vector<8x45xf32>
    %c237 = arith.constant 237 : index
    %487 = memref.load %arg2[%c237] : memref<720xf32, #tpu.memory_space<smem>>
    %488 = vector.broadcast %487 : f32 to vector<8x45xf32>
    %489 = arith.mulf %488, %458 : vector<8x45xf32>
    %490 = arith.addf %456, %489 : vector<8x45xf32>
    %c1_59 = arith.constant 1 : index
    %c0_60 = arith.constant 0 : index
    %c6_61 = arith.constant 6 : index
    %491 = vector.load %arg5[%c1_59, %c0_60, %c6_61] : memref<4x8x128xf32, #tpu.memory_space<vmem>>, vector<1x8x45xf32>
    %492 = vector.shape_cast %491 : vector<1x8x45xf32> to vector<8x45xf32>
    %c42 = arith.constant 42 : index
    %493 = memref.load %arg2[%c42] : memref<720xf32, #tpu.memory_space<smem>>
    %494 = vector.broadcast %493 : f32 to vector<8x45xf32>
    %495 = arith.mulf %494, %492 : vector<8x45xf32>
    %496 = arith.addf %462, %495 : vector<8x45xf32>
    %c70 = arith.constant 70 : index
    %497 = memref.load %arg2[%c70] : memref<720xf32, #tpu.memory_space<smem>>
    %498 = vector.broadcast %497 : f32 to vector<8x45xf32>
    %499 = arith.mulf %498, %492 : vector<8x45xf32>
    %500 = arith.addf %466, %499 : vector<8x45xf32>
    %c98 = arith.constant 98 : index
    %501 = memref.load %arg2[%c98] : memref<720xf32, #tpu.memory_space<smem>>
    %502 = vector.broadcast %501 : f32 to vector<8x45xf32>
    %503 = arith.mulf %502, %492 : vector<8x45xf32>
    %504 = arith.addf %470, %503 : vector<8x45xf32>
    %c126 = arith.constant 126 : index
    %505 = memref.load %arg2[%c126] : memref<720xf32, #tpu.memory_space<smem>>
    %506 = vector.broadcast %505 : f32 to vector<8x45xf32>
    %507 = arith.mulf %506, %492 : vector<8x45xf32>
    %508 = arith.addf %474, %507 : vector<8x45xf32>
    %c154 = arith.constant 154 : index
    %509 = memref.load %arg2[%c154] : memref<720xf32, #tpu.memory_space<smem>>
    %510 = vector.broadcast %509 : f32 to vector<8x45xf32>
    %511 = arith.mulf %510, %492 : vector<8x45xf32>
    %512 = arith.addf %478, %511 : vector<8x45xf32>
    %c182 = arith.constant 182 : index
    %513 = memref.load %arg2[%c182] : memref<720xf32, #tpu.memory_space<smem>>
    %514 = vector.broadcast %513 : f32 to vector<8x45xf32>
    %515 = arith.mulf %514, %492 : vector<8x45xf32>
    %516 = arith.addf %482, %515 : vector<8x45xf32>
    %c210 = arith.constant 210 : index
    %517 = memref.load %arg2[%c210] : memref<720xf32, #tpu.memory_space<smem>>
    %518 = vector.broadcast %517 : f32 to vector<8x45xf32>
    %519 = arith.mulf %518, %492 : vector<8x45xf32>
    %520 = arith.addf %486, %519 : vector<8x45xf32>
    %c238 = arith.constant 238 : index
    %521 = memref.load %arg2[%c238] : memref<720xf32, #tpu.memory_space<smem>>
    %522 = vector.broadcast %521 : f32 to vector<8x45xf32>
    %523 = arith.mulf %522, %492 : vector<8x45xf32>
    %524 = arith.addf %490, %523 : vector<8x45xf32>
    %c1_62 = arith.constant 1 : index
    %c0_63 = arith.constant 0 : index
    %c8_64 = arith.constant 8 : index
    %525 = vector.load %arg5[%c1_62, %c0_63, %c8_64] : memref<4x8x128xf32, #tpu.memory_space<vmem>>, vector<1x8x45xf32>
    %526 = vector.shape_cast %525 : vector<1x8x45xf32> to vector<8x45xf32>
    %c43 = arith.constant 43 : index
    %527 = memref.load %arg2[%c43] : memref<720xf32, #tpu.memory_space<smem>>
    %528 = vector.broadcast %527 : f32 to vector<8x45xf32>
    %529 = arith.mulf %528, %526 : vector<8x45xf32>
    %530 = arith.addf %496, %529 : vector<8x45xf32>
    %c71 = arith.constant 71 : index
    %531 = memref.load %arg2[%c71] : memref<720xf32, #tpu.memory_space<smem>>
    %532 = vector.broadcast %531 : f32 to vector<8x45xf32>
    %533 = arith.mulf %532, %526 : vector<8x45xf32>
    %534 = arith.addf %500, %533 : vector<8x45xf32>
    %c99 = arith.constant 99 : index
    %535 = memref.load %arg2[%c99] : memref<720xf32, #tpu.memory_space<smem>>
    %536 = vector.broadcast %535 : f32 to vector<8x45xf32>
    %537 = arith.mulf %536, %526 : vector<8x45xf32>
    %538 = arith.addf %504, %537 : vector<8x45xf32>
    %c127 = arith.constant 127 : index
    %539 = memref.load %arg2[%c127] : memref<720xf32, #tpu.memory_space<smem>>
    %540 = vector.broadcast %539 : f32 to vector<8x45xf32>
    %541 = arith.mulf %540, %526 : vector<8x45xf32>
    %542 = arith.addf %508, %541 : vector<8x45xf32>
    %c155 = arith.constant 155 : index
    %543 = memref.load %arg2[%c155] : memref<720xf32, #tpu.memory_space<smem>>
    %544 = vector.broadcast %543 : f32 to vector<8x45xf32>
    %545 = arith.mulf %544, %526 : vector<8x45xf32>
    %546 = arith.addf %512, %545 : vector<8x45xf32>
    %c183 = arith.constant 183 : index
    %547 = memref.load %arg2[%c183] : memref<720xf32, #tpu.memory_space<smem>>
    %548 = vector.broadcast %547 : f32 to vector<8x45xf32>
    %549 = arith.mulf %548, %526 : vector<8x45xf32>
    %550 = arith.addf %516, %549 : vector<8x45xf32>
    %c211 = arith.constant 211 : index
    %551 = memref.load %arg2[%c211] : memref<720xf32, #tpu.memory_space<smem>>
    %552 = vector.broadcast %551 : f32 to vector<8x45xf32>
    %553 = arith.mulf %552, %526 : vector<8x45xf32>
    %554 = arith.addf %520, %553 : vector<8x45xf32>
    %c239 = arith.constant 239 : index
    %555 = memref.load %arg2[%c239] : memref<720xf32, #tpu.memory_space<smem>>
    %556 = vector.broadcast %555 : f32 to vector<8x45xf32>
    %557 = arith.mulf %556, %526 : vector<8x45xf32>
    %558 = arith.addf %524, %557 : vector<8x45xf32>
    %c1_65 = arith.constant 1 : index
    %c0_66 = arith.constant 0 : index
    %c10_67 = arith.constant 10 : index
    %559 = vector.load %arg5[%c1_65, %c0_66, %c10_67] : memref<4x8x128xf32, #tpu.memory_space<vmem>>, vector<1x8x45xf32>
    %560 = vector.shape_cast %559 : vector<1x8x45xf32> to vector<8x45xf32>
    %c44 = arith.constant 44 : index
    %561 = memref.load %arg2[%c44] : memref<720xf32, #tpu.memory_space<smem>>
    %562 = vector.broadcast %561 : f32 to vector<8x45xf32>
    %563 = arith.mulf %562, %560 : vector<8x45xf32>
    %564 = arith.addf %530, %563 : vector<8x45xf32>
    %c72 = arith.constant 72 : index
    %565 = memref.load %arg2[%c72] : memref<720xf32, #tpu.memory_space<smem>>
    %566 = vector.broadcast %565 : f32 to vector<8x45xf32>
    %567 = arith.mulf %566, %560 : vector<8x45xf32>
    %568 = arith.addf %534, %567 : vector<8x45xf32>
    %c100 = arith.constant 100 : index
    %569 = memref.load %arg2[%c100] : memref<720xf32, #tpu.memory_space<smem>>
    %570 = vector.broadcast %569 : f32 to vector<8x45xf32>
    %571 = arith.mulf %570, %560 : vector<8x45xf32>
    %572 = arith.addf %538, %571 : vector<8x45xf32>
    %c128 = arith.constant 128 : index
    %573 = memref.load %arg2[%c128] : memref<720xf32, #tpu.memory_space<smem>>
    %574 = vector.broadcast %573 : f32 to vector<8x45xf32>
    %575 = arith.mulf %574, %560 : vector<8x45xf32>
    %576 = arith.addf %542, %575 : vector<8x45xf32>
    %c156 = arith.constant 156 : index
    %577 = memref.load %arg2[%c156] : memref<720xf32, #tpu.memory_space<smem>>
    %578 = vector.broadcast %577 : f32 to vector<8x45xf32>
    %579 = arith.mulf %578, %560 : vector<8x45xf32>
    %580 = arith.addf %546, %579 : vector<8x45xf32>
    %c184 = arith.constant 184 : index
    %581 = memref.load %arg2[%c184] : memref<720xf32, #tpu.memory_space<smem>>
    %582 = vector.broadcast %581 : f32 to vector<8x45xf32>
    %583 = arith.mulf %582, %560 : vector<8x45xf32>
    %584 = arith.addf %550, %583 : vector<8x45xf32>
    %c212 = arith.constant 212 : index
    %585 = memref.load %arg2[%c212] : memref<720xf32, #tpu.memory_space<smem>>
    %586 = vector.broadcast %585 : f32 to vector<8x45xf32>
    %587 = arith.mulf %586, %560 : vector<8x45xf32>
    %588 = arith.addf %554, %587 : vector<8x45xf32>
    %c240 = arith.constant 240 : index
    %589 = memref.load %arg2[%c240] : memref<720xf32, #tpu.memory_space<smem>>
    %590 = vector.broadcast %589 : f32 to vector<8x45xf32>
    %591 = arith.mulf %590, %560 : vector<8x45xf32>
    %592 = arith.addf %558, %591 : vector<8x45xf32>
    %c1_68 = arith.constant 1 : index
    %c0_69 = arith.constant 0 : index
    %c12_70 = arith.constant 12 : index
    %593 = vector.load %arg5[%c1_68, %c0_69, %c12_70] : memref<4x8x128xf32, #tpu.memory_space<vmem>>, vector<1x8x45xf32>
    %594 = vector.shape_cast %593 : vector<1x8x45xf32> to vector<8x45xf32>
    %c45 = arith.constant 45 : index
    %595 = memref.load %arg2[%c45] : memref<720xf32, #tpu.memory_space<smem>>
    %596 = vector.broadcast %595 : f32 to vector<8x45xf32>
    %597 = arith.mulf %596, %594 : vector<8x45xf32>
    %598 = arith.addf %564, %597 : vector<8x45xf32>
    %c73 = arith.constant 73 : index
    %599 = memref.load %arg2[%c73] : memref<720xf32, #tpu.memory_space<smem>>
    %600 = vector.broadcast %599 : f32 to vector<8x45xf32>
    %601 = arith.mulf %600, %594 : vector<8x45xf32>
    %602 = arith.addf %568, %601 : vector<8x45xf32>
    %c101 = arith.constant 101 : index
    %603 = memref.load %arg2[%c101] : memref<720xf32, #tpu.memory_space<smem>>
    %604 = vector.broadcast %603 : f32 to vector<8x45xf32>
    %605 = arith.mulf %604, %594 : vector<8x45xf32>
    %606 = arith.addf %572, %605 : vector<8x45xf32>
    %c129 = arith.constant 129 : index
    %607 = memref.load %arg2[%c129] : memref<720xf32, #tpu.memory_space<smem>>
    %608 = vector.broadcast %607 : f32 to vector<8x45xf32>
    %609 = arith.mulf %608, %594 : vector<8x45xf32>
    %610 = arith.addf %576, %609 : vector<8x45xf32>
    %c157 = arith.constant 157 : index
    %611 = memref.load %arg2[%c157] : memref<720xf32, #tpu.memory_space<smem>>
    %612 = vector.broadcast %611 : f32 to vector<8x45xf32>
    %613 = arith.mulf %612, %594 : vector<8x45xf32>
    %614 = arith.addf %580, %613 : vector<8x45xf32>
    %c185 = arith.constant 185 : index
    %615 = memref.load %arg2[%c185] : memref<720xf32, #tpu.memory_space<smem>>
    %616 = vector.broadcast %615 : f32 to vector<8x45xf32>
    %617 = arith.mulf %616, %594 : vector<8x45xf32>
    %618 = arith.addf %584, %617 : vector<8x45xf32>
    %c213 = arith.constant 213 : index
    %619 = memref.load %arg2[%c213] : memref<720xf32, #tpu.memory_space<smem>>
    %620 = vector.broadcast %619 : f32 to vector<8x45xf32>
    %621 = arith.mulf %620, %594 : vector<8x45xf32>
    %622 = arith.addf %588, %621 : vector<8x45xf32>
    %c241 = arith.constant 241 : index
    %623 = memref.load %arg2[%c241] : memref<720xf32, #tpu.memory_space<smem>>
    %624 = vector.broadcast %623 : f32 to vector<8x45xf32>
    %625 = arith.mulf %624, %594 : vector<8x45xf32>
    %626 = arith.addf %592, %625 : vector<8x45xf32>
    %c2_71 = arith.constant 2 : index
    %c0_72 = arith.constant 0 : index
    %c0_73 = arith.constant 0 : index
    %627 = vector.load %arg5[%c2_71, %c0_72, %c0_73] : memref<4x8x128xf32, #tpu.memory_space<vmem>>, vector<1x8x45xf32>
    %628 = vector.shape_cast %627 : vector<1x8x45xf32> to vector<8x45xf32>
    %c46 = arith.constant 46 : index
    %629 = memref.load %arg2[%c46] : memref<720xf32, #tpu.memory_space<smem>>
    %630 = vector.broadcast %629 : f32 to vector<8x45xf32>
    %631 = arith.mulf %630, %628 : vector<8x45xf32>
    %632 = arith.addf %598, %631 : vector<8x45xf32>
    %c74 = arith.constant 74 : index
    %633 = memref.load %arg2[%c74] : memref<720xf32, #tpu.memory_space<smem>>
    %634 = vector.broadcast %633 : f32 to vector<8x45xf32>
    %635 = arith.mulf %634, %628 : vector<8x45xf32>
    %636 = arith.addf %602, %635 : vector<8x45xf32>
    %c102 = arith.constant 102 : index
    %637 = memref.load %arg2[%c102] : memref<720xf32, #tpu.memory_space<smem>>
    %638 = vector.broadcast %637 : f32 to vector<8x45xf32>
    %639 = arith.mulf %638, %628 : vector<8x45xf32>
    %640 = arith.addf %606, %639 : vector<8x45xf32>
    %c130 = arith.constant 130 : index
    %641 = memref.load %arg2[%c130] : memref<720xf32, #tpu.memory_space<smem>>
    %642 = vector.broadcast %641 : f32 to vector<8x45xf32>
    %643 = arith.mulf %642, %628 : vector<8x45xf32>
    %644 = arith.addf %610, %643 : vector<8x45xf32>
    %c158 = arith.constant 158 : index
    %645 = memref.load %arg2[%c158] : memref<720xf32, #tpu.memory_space<smem>>
    %646 = vector.broadcast %645 : f32 to vector<8x45xf32>
    %647 = arith.mulf %646, %628 : vector<8x45xf32>
    %648 = arith.addf %614, %647 : vector<8x45xf32>
    %c186 = arith.constant 186 : index
    %649 = memref.load %arg2[%c186] : memref<720xf32, #tpu.memory_space<smem>>
    %650 = vector.broadcast %649 : f32 to vector<8x45xf32>
    %651 = arith.mulf %650, %628 : vector<8x45xf32>
    %652 = arith.addf %618, %651 : vector<8x45xf32>
    %c214 = arith.constant 214 : index
    %653 = memref.load %arg2[%c214] : memref<720xf32, #tpu.memory_space<smem>>
    %654 = vector.broadcast %653 : f32 to vector<8x45xf32>
    %655 = arith.mulf %654, %628 : vector<8x45xf32>
    %656 = arith.addf %622, %655 : vector<8x45xf32>
    %c242 = arith.constant 242 : index
    %657 = memref.load %arg2[%c242] : memref<720xf32, #tpu.memory_space<smem>>
    %658 = vector.broadcast %657 : f32 to vector<8x45xf32>
    %659 = arith.mulf %658, %628 : vector<8x45xf32>
    %660 = arith.addf %626, %659 : vector<8x45xf32>
    %c2_74 = arith.constant 2 : index
    %c0_75 = arith.constant 0 : index
    %c2_76 = arith.constant 2 : index
    %661 = vector.load %arg5[%c2_74, %c0_75, %c2_76] : memref<4x8x128xf32, #tpu.memory_space<vmem>>, vector<1x8x45xf32>
    %662 = vector.shape_cast %661 : vector<1x8x45xf32> to vector<8x45xf32>
    %c47 = arith.constant 47 : index
    %663 = memref.load %arg2[%c47] : memref<720xf32, #tpu.memory_space<smem>>
    %664 = vector.broadcast %663 : f32 to vector<8x45xf32>
    %665 = arith.mulf %664, %662 : vector<8x45xf32>
    %666 = arith.addf %632, %665 : vector<8x45xf32>
    %c75 = arith.constant 75 : index
    %667 = memref.load %arg2[%c75] : memref<720xf32, #tpu.memory_space<smem>>
    %668 = vector.broadcast %667 : f32 to vector<8x45xf32>
    %669 = arith.mulf %668, %662 : vector<8x45xf32>
    %670 = arith.addf %636, %669 : vector<8x45xf32>
    %c103 = arith.constant 103 : index
    %671 = memref.load %arg2[%c103] : memref<720xf32, #tpu.memory_space<smem>>
    %672 = vector.broadcast %671 : f32 to vector<8x45xf32>
    %673 = arith.mulf %672, %662 : vector<8x45xf32>
    %674 = arith.addf %640, %673 : vector<8x45xf32>
    %c131 = arith.constant 131 : index
    %675 = memref.load %arg2[%c131] : memref<720xf32, #tpu.memory_space<smem>>
    %676 = vector.broadcast %675 : f32 to vector<8x45xf32>
    %677 = arith.mulf %676, %662 : vector<8x45xf32>
    %678 = arith.addf %644, %677 : vector<8x45xf32>
    %c159 = arith.constant 159 : index
    %679 = memref.load %arg2[%c159] : memref<720xf32, #tpu.memory_space<smem>>
    %680 = vector.broadcast %679 : f32 to vector<8x45xf32>
    %681 = arith.mulf %680, %662 : vector<8x45xf32>
    %682 = arith.addf %648, %681 : vector<8x45xf32>
    %c187 = arith.constant 187 : index
    %683 = memref.load %arg2[%c187] : memref<720xf32, #tpu.memory_space<smem>>
    %684 = vector.broadcast %683 : f32 to vector<8x45xf32>
    %685 = arith.mulf %684, %662 : vector<8x45xf32>
    %686 = arith.addf %652, %685 : vector<8x45xf32>
    %c215 = arith.constant 215 : index
    %687 = memref.load %arg2[%c215] : memref<720xf32, #tpu.memory_space<smem>>
    %688 = vector.broadcast %687 : f32 to vector<8x45xf32>
    %689 = arith.mulf %688, %662 : vector<8x45xf32>
    %690 = arith.addf %656, %689 : vector<8x45xf32>
    %c243 = arith.constant 243 : index
    %691 = memref.load %arg2[%c243] : memref<720xf32, #tpu.memory_space<smem>>
    %692 = vector.broadcast %691 : f32 to vector<8x45xf32>
    %693 = arith.mulf %692, %662 : vector<8x45xf32>
    %694 = arith.addf %660, %693 : vector<8x45xf32>
    %c2_77 = arith.constant 2 : index
    %c0_78 = arith.constant 0 : index
    %c4_79 = arith.constant 4 : index
    %695 = vector.load %arg5[%c2_77, %c0_78, %c4_79] : memref<4x8x128xf32, #tpu.memory_space<vmem>>, vector<1x8x45xf32>
    %696 = vector.shape_cast %695 : vector<1x8x45xf32> to vector<8x45xf32>
    %c48 = arith.constant 48 : index
    %697 = memref.load %arg2[%c48] : memref<720xf32, #tpu.memory_space<smem>>
    %698 = vector.broadcast %697 : f32 to vector<8x45xf32>
    %699 = arith.mulf %698, %696 : vector<8x45xf32>
    %700 = arith.addf %666, %699 : vector<8x45xf32>
    %c76 = arith.constant 76 : index
    %701 = memref.load %arg2[%c76] : memref<720xf32, #tpu.memory_space<smem>>
    %702 = vector.broadcast %701 : f32 to vector<8x45xf32>
    %703 = arith.mulf %702, %696 : vector<8x45xf32>
    %704 = arith.addf %670, %703 : vector<8x45xf32>
    %c104 = arith.constant 104 : index
    %705 = memref.load %arg2[%c104] : memref<720xf32, #tpu.memory_space<smem>>
    %706 = vector.broadcast %705 : f32 to vector<8x45xf32>
    %707 = arith.mulf %706, %696 : vector<8x45xf32>
    %708 = arith.addf %674, %707 : vector<8x45xf32>
    %c132 = arith.constant 132 : index
    %709 = memref.load %arg2[%c132] : memref<720xf32, #tpu.memory_space<smem>>
    %710 = vector.broadcast %709 : f32 to vector<8x45xf32>
    %711 = arith.mulf %710, %696 : vector<8x45xf32>
    %712 = arith.addf %678, %711 : vector<8x45xf32>
    %c160 = arith.constant 160 : index
    %713 = memref.load %arg2[%c160] : memref<720xf32, #tpu.memory_space<smem>>
    %714 = vector.broadcast %713 : f32 to vector<8x45xf32>
    %715 = arith.mulf %714, %696 : vector<8x45xf32>
    %716 = arith.addf %682, %715 : vector<8x45xf32>
    %c188 = arith.constant 188 : index
    %717 = memref.load %arg2[%c188] : memref<720xf32, #tpu.memory_space<smem>>
    %718 = vector.broadcast %717 : f32 to vector<8x45xf32>
    %719 = arith.mulf %718, %696 : vector<8x45xf32>
    %720 = arith.addf %686, %719 : vector<8x45xf32>
    %c216 = arith.constant 216 : index
    %721 = memref.load %arg2[%c216] : memref<720xf32, #tpu.memory_space<smem>>
    %722 = vector.broadcast %721 : f32 to vector<8x45xf32>
    %723 = arith.mulf %722, %696 : vector<8x45xf32>
    %724 = arith.addf %690, %723 : vector<8x45xf32>
    %c244 = arith.constant 244 : index
    %725 = memref.load %arg2[%c244] : memref<720xf32, #tpu.memory_space<smem>>
    %726 = vector.broadcast %725 : f32 to vector<8x45xf32>
    %727 = arith.mulf %726, %696 : vector<8x45xf32>
    %728 = arith.addf %694, %727 : vector<8x45xf32>
    %c2_80 = arith.constant 2 : index
    %c0_81 = arith.constant 0 : index
    %c6_82 = arith.constant 6 : index
    %729 = vector.load %arg5[%c2_80, %c0_81, %c6_82] : memref<4x8x128xf32, #tpu.memory_space<vmem>>, vector<1x8x45xf32>
    %730 = vector.shape_cast %729 : vector<1x8x45xf32> to vector<8x45xf32>
    %c49 = arith.constant 49 : index
    %731 = memref.load %arg2[%c49] : memref<720xf32, #tpu.memory_space<smem>>
    %732 = vector.broadcast %731 : f32 to vector<8x45xf32>
    %733 = arith.mulf %732, %730 : vector<8x45xf32>
    %734 = arith.addf %700, %733 : vector<8x45xf32>
    %c77 = arith.constant 77 : index
    %735 = memref.load %arg2[%c77] : memref<720xf32, #tpu.memory_space<smem>>
    %736 = vector.broadcast %735 : f32 to vector<8x45xf32>
    %737 = arith.mulf %736, %730 : vector<8x45xf32>
    %738 = arith.addf %704, %737 : vector<8x45xf32>
    %c105 = arith.constant 105 : index
    %739 = memref.load %arg2[%c105] : memref<720xf32, #tpu.memory_space<smem>>
    %740 = vector.broadcast %739 : f32 to vector<8x45xf32>
    %741 = arith.mulf %740, %730 : vector<8x45xf32>
    %742 = arith.addf %708, %741 : vector<8x45xf32>
    %c133 = arith.constant 133 : index
    %743 = memref.load %arg2[%c133] : memref<720xf32, #tpu.memory_space<smem>>
    %744 = vector.broadcast %743 : f32 to vector<8x45xf32>
    %745 = arith.mulf %744, %730 : vector<8x45xf32>
    %746 = arith.addf %712, %745 : vector<8x45xf32>
    %c161 = arith.constant 161 : index
    %747 = memref.load %arg2[%c161] : memref<720xf32, #tpu.memory_space<smem>>
    %748 = vector.broadcast %747 : f32 to vector<8x45xf32>
    %749 = arith.mulf %748, %730 : vector<8x45xf32>
    %750 = arith.addf %716, %749 : vector<8x45xf32>
    %c189 = arith.constant 189 : index
    %751 = memref.load %arg2[%c189] : memref<720xf32, #tpu.memory_space<smem>>
    %752 = vector.broadcast %751 : f32 to vector<8x45xf32>
    %753 = arith.mulf %752, %730 : vector<8x45xf32>
    %754 = arith.addf %720, %753 : vector<8x45xf32>
    %c217 = arith.constant 217 : index
    %755 = memref.load %arg2[%c217] : memref<720xf32, #tpu.memory_space<smem>>
    %756 = vector.broadcast %755 : f32 to vector<8x45xf32>
    %757 = arith.mulf %756, %730 : vector<8x45xf32>
    %758 = arith.addf %724, %757 : vector<8x45xf32>
    %c245 = arith.constant 245 : index
    %759 = memref.load %arg2[%c245] : memref<720xf32, #tpu.memory_space<smem>>
    %760 = vector.broadcast %759 : f32 to vector<8x45xf32>
    %761 = arith.mulf %760, %730 : vector<8x45xf32>
    %762 = arith.addf %728, %761 : vector<8x45xf32>
    %c2_83 = arith.constant 2 : index
    %c0_84 = arith.constant 0 : index
    %c8_85 = arith.constant 8 : index
    %763 = vector.load %arg5[%c2_83, %c0_84, %c8_85] : memref<4x8x128xf32, #tpu.memory_space<vmem>>, vector<1x8x45xf32>
    %764 = vector.shape_cast %763 : vector<1x8x45xf32> to vector<8x45xf32>
    %c50 = arith.constant 50 : index
    %765 = memref.load %arg2[%c50] : memref<720xf32, #tpu.memory_space<smem>>
    %766 = vector.broadcast %765 : f32 to vector<8x45xf32>
    %767 = arith.mulf %766, %764 : vector<8x45xf32>
    %768 = arith.addf %734, %767 : vector<8x45xf32>
    %c78 = arith.constant 78 : index
    %769 = memref.load %arg2[%c78] : memref<720xf32, #tpu.memory_space<smem>>
    %770 = vector.broadcast %769 : f32 to vector<8x45xf32>
    %771 = arith.mulf %770, %764 : vector<8x45xf32>
    %772 = arith.addf %738, %771 : vector<8x45xf32>
    %c106 = arith.constant 106 : index
    %773 = memref.load %arg2[%c106] : memref<720xf32, #tpu.memory_space<smem>>
    %774 = vector.broadcast %773 : f32 to vector<8x45xf32>
    %775 = arith.mulf %774, %764 : vector<8x45xf32>
    %776 = arith.addf %742, %775 : vector<8x45xf32>
    %c134 = arith.constant 134 : index
    %777 = memref.load %arg2[%c134] : memref<720xf32, #tpu.memory_space<smem>>
    %778 = vector.broadcast %777 : f32 to vector<8x45xf32>
    %779 = arith.mulf %778, %764 : vector<8x45xf32>
    %780 = arith.addf %746, %779 : vector<8x45xf32>
    %c162 = arith.constant 162 : index
    %781 = memref.load %arg2[%c162] : memref<720xf32, #tpu.memory_space<smem>>
    %782 = vector.broadcast %781 : f32 to vector<8x45xf32>
    %783 = arith.mulf %782, %764 : vector<8x45xf32>
    %784 = arith.addf %750, %783 : vector<8x45xf32>
    %c190 = arith.constant 190 : index
    %785 = memref.load %arg2[%c190] : memref<720xf32, #tpu.memory_space<smem>>
    %786 = vector.broadcast %785 : f32 to vector<8x45xf32>
    %787 = arith.mulf %786, %764 : vector<8x45xf32>
    %788 = arith.addf %754, %787 : vector<8x45xf32>
    %c218 = arith.constant 218 : index
    %789 = memref.load %arg2[%c218] : memref<720xf32, #tpu.memory_space<smem>>
    %790 = vector.broadcast %789 : f32 to vector<8x45xf32>
    %791 = arith.mulf %790, %764 : vector<8x45xf32>
    %792 = arith.addf %758, %791 : vector<8x45xf32>
    %c246 = arith.constant 246 : index
    %793 = memref.load %arg2[%c246] : memref<720xf32, #tpu.memory_space<smem>>
    %794 = vector.broadcast %793 : f32 to vector<8x45xf32>
    %795 = arith.mulf %794, %764 : vector<8x45xf32>
    %796 = arith.addf %762, %795 : vector<8x45xf32>
    %c2_86 = arith.constant 2 : index
    %c0_87 = arith.constant 0 : index
    %c10_88 = arith.constant 10 : index
    %797 = vector.load %arg5[%c2_86, %c0_87, %c10_88] : memref<4x8x128xf32, #tpu.memory_space<vmem>>, vector<1x8x45xf32>
    %798 = vector.shape_cast %797 : vector<1x8x45xf32> to vector<8x45xf32>
    %c51 = arith.constant 51 : index
    %799 = memref.load %arg2[%c51] : memref<720xf32, #tpu.memory_space<smem>>
    %800 = vector.broadcast %799 : f32 to vector<8x45xf32>
    %801 = arith.mulf %800, %798 : vector<8x45xf32>
    %802 = arith.addf %768, %801 : vector<8x45xf32>
    %c79 = arith.constant 79 : index
    %803 = memref.load %arg2[%c79] : memref<720xf32, #tpu.memory_space<smem>>
    %804 = vector.broadcast %803 : f32 to vector<8x45xf32>
    %805 = arith.mulf %804, %798 : vector<8x45xf32>
    %806 = arith.addf %772, %805 : vector<8x45xf32>
    %c107 = arith.constant 107 : index
    %807 = memref.load %arg2[%c107] : memref<720xf32, #tpu.memory_space<smem>>
    %808 = vector.broadcast %807 : f32 to vector<8x45xf32>
    %809 = arith.mulf %808, %798 : vector<8x45xf32>
    %810 = arith.addf %776, %809 : vector<8x45xf32>
    %c135 = arith.constant 135 : index
    %811 = memref.load %arg2[%c135] : memref<720xf32, #tpu.memory_space<smem>>
    %812 = vector.broadcast %811 : f32 to vector<8x45xf32>
    %813 = arith.mulf %812, %798 : vector<8x45xf32>
    %814 = arith.addf %780, %813 : vector<8x45xf32>
    %c163 = arith.constant 163 : index
    %815 = memref.load %arg2[%c163] : memref<720xf32, #tpu.memory_space<smem>>
    %816 = vector.broadcast %815 : f32 to vector<8x45xf32>
    %817 = arith.mulf %816, %798 : vector<8x45xf32>
    %818 = arith.addf %784, %817 : vector<8x45xf32>
    %c191 = arith.constant 191 : index
    %819 = memref.load %arg2[%c191] : memref<720xf32, #tpu.memory_space<smem>>
    %820 = vector.broadcast %819 : f32 to vector<8x45xf32>
    %821 = arith.mulf %820, %798 : vector<8x45xf32>
    %822 = arith.addf %788, %821 : vector<8x45xf32>
    %c219 = arith.constant 219 : index
    %823 = memref.load %arg2[%c219] : memref<720xf32, #tpu.memory_space<smem>>
    %824 = vector.broadcast %823 : f32 to vector<8x45xf32>
    %825 = arith.mulf %824, %798 : vector<8x45xf32>
    %826 = arith.addf %792, %825 : vector<8x45xf32>
    %c247 = arith.constant 247 : index
    %827 = memref.load %arg2[%c247] : memref<720xf32, #tpu.memory_space<smem>>
    %828 = vector.broadcast %827 : f32 to vector<8x45xf32>
    %829 = arith.mulf %828, %798 : vector<8x45xf32>
    %830 = arith.addf %796, %829 : vector<8x45xf32>
    %c2_89 = arith.constant 2 : index
    %c0_90 = arith.constant 0 : index
    %c12_91 = arith.constant 12 : index
    %831 = vector.load %arg5[%c2_89, %c0_90, %c12_91] : memref<4x8x128xf32, #tpu.memory_space<vmem>>, vector<1x8x45xf32>
    %832 = vector.shape_cast %831 : vector<1x8x45xf32> to vector<8x45xf32>
    %c52 = arith.constant 52 : index
    %833 = memref.load %arg2[%c52] : memref<720xf32, #tpu.memory_space<smem>>
    %834 = vector.broadcast %833 : f32 to vector<8x45xf32>
    %835 = arith.mulf %834, %832 : vector<8x45xf32>
    %836 = arith.addf %802, %835 : vector<8x45xf32>
    %c80 = arith.constant 80 : index
    %837 = memref.load %arg2[%c80] : memref<720xf32, #tpu.memory_space<smem>>
    %838 = vector.broadcast %837 : f32 to vector<8x45xf32>
    %839 = arith.mulf %838, %832 : vector<8x45xf32>
    %840 = arith.addf %806, %839 : vector<8x45xf32>
    %c108 = arith.constant 108 : index
    %841 = memref.load %arg2[%c108] : memref<720xf32, #tpu.memory_space<smem>>
    %842 = vector.broadcast %841 : f32 to vector<8x45xf32>
    %843 = arith.mulf %842, %832 : vector<8x45xf32>
    %844 = arith.addf %810, %843 : vector<8x45xf32>
    %c136 = arith.constant 136 : index
    %845 = memref.load %arg2[%c136] : memref<720xf32, #tpu.memory_space<smem>>
    %846 = vector.broadcast %845 : f32 to vector<8x45xf32>
    %847 = arith.mulf %846, %832 : vector<8x45xf32>
    %848 = arith.addf %814, %847 : vector<8x45xf32>
    %c164 = arith.constant 164 : index
    %849 = memref.load %arg2[%c164] : memref<720xf32, #tpu.memory_space<smem>>
    %850 = vector.broadcast %849 : f32 to vector<8x45xf32>
    %851 = arith.mulf %850, %832 : vector<8x45xf32>
    %852 = arith.addf %818, %851 : vector<8x45xf32>
    %c192 = arith.constant 192 : index
    %853 = memref.load %arg2[%c192] : memref<720xf32, #tpu.memory_space<smem>>
    %854 = vector.broadcast %853 : f32 to vector<8x45xf32>
    %855 = arith.mulf %854, %832 : vector<8x45xf32>
    %856 = arith.addf %822, %855 : vector<8x45xf32>
    %c220 = arith.constant 220 : index
    %857 = memref.load %arg2[%c220] : memref<720xf32, #tpu.memory_space<smem>>
    %858 = vector.broadcast %857 : f32 to vector<8x45xf32>
    %859 = arith.mulf %858, %832 : vector<8x45xf32>
    %860 = arith.addf %826, %859 : vector<8x45xf32>
    %c248 = arith.constant 248 : index
    %861 = memref.load %arg2[%c248] : memref<720xf32, #tpu.memory_space<smem>>
    %862 = vector.broadcast %861 : f32 to vector<8x45xf32>
    %863 = arith.mulf %862, %832 : vector<8x45xf32>
    %864 = arith.addf %830, %863 : vector<8x45xf32>
    %c3_92 = arith.constant 3 : index
    %c0_93 = arith.constant 0 : index
    %c0_94 = arith.constant 0 : index
    %865 = vector.load %arg5[%c3_92, %c0_93, %c0_94] : memref<4x8x128xf32, #tpu.memory_space<vmem>>, vector<1x8x45xf32>
    %866 = vector.shape_cast %865 : vector<1x8x45xf32> to vector<8x45xf32>
    %c53 = arith.constant 53 : index
    %867 = memref.load %arg2[%c53] : memref<720xf32, #tpu.memory_space<smem>>
    %868 = vector.broadcast %867 : f32 to vector<8x45xf32>
    %869 = arith.mulf %868, %866 : vector<8x45xf32>
    %870 = arith.addf %836, %869 : vector<8x45xf32>
    %c81 = arith.constant 81 : index
    %871 = memref.load %arg2[%c81] : memref<720xf32, #tpu.memory_space<smem>>
    %872 = vector.broadcast %871 : f32 to vector<8x45xf32>
    %873 = arith.mulf %872, %866 : vector<8x45xf32>
    %874 = arith.addf %840, %873 : vector<8x45xf32>
    %c109 = arith.constant 109 : index
    %875 = memref.load %arg2[%c109] : memref<720xf32, #tpu.memory_space<smem>>
    %876 = vector.broadcast %875 : f32 to vector<8x45xf32>
    %877 = arith.mulf %876, %866 : vector<8x45xf32>
    %878 = arith.addf %844, %877 : vector<8x45xf32>
    %c137 = arith.constant 137 : index
    %879 = memref.load %arg2[%c137] : memref<720xf32, #tpu.memory_space<smem>>
    %880 = vector.broadcast %879 : f32 to vector<8x45xf32>
    %881 = arith.mulf %880, %866 : vector<8x45xf32>
    %882 = arith.addf %848, %881 : vector<8x45xf32>
    %c165 = arith.constant 165 : index
    %883 = memref.load %arg2[%c165] : memref<720xf32, #tpu.memory_space<smem>>
    %884 = vector.broadcast %883 : f32 to vector<8x45xf32>
    %885 = arith.mulf %884, %866 : vector<8x45xf32>
    %886 = arith.addf %852, %885 : vector<8x45xf32>
    %c193 = arith.constant 193 : index
    %887 = memref.load %arg2[%c193] : memref<720xf32, #tpu.memory_space<smem>>
    %888 = vector.broadcast %887 : f32 to vector<8x45xf32>
    %889 = arith.mulf %888, %866 : vector<8x45xf32>
    %890 = arith.addf %856, %889 : vector<8x45xf32>
    %c221 = arith.constant 221 : index
    %891 = memref.load %arg2[%c221] : memref<720xf32, #tpu.memory_space<smem>>
    %892 = vector.broadcast %891 : f32 to vector<8x45xf32>
    %893 = arith.mulf %892, %866 : vector<8x45xf32>
    %894 = arith.addf %860, %893 : vector<8x45xf32>
    %c249 = arith.constant 249 : index
    %895 = memref.load %arg2[%c249] : memref<720xf32, #tpu.memory_space<smem>>
    %896 = vector.broadcast %895 : f32 to vector<8x45xf32>
    %897 = arith.mulf %896, %866 : vector<8x45xf32>
    %898 = arith.addf %864, %897 : vector<8x45xf32>
    %c3_95 = arith.constant 3 : index
    %c0_96 = arith.constant 0 : index
    %c2_97 = arith.constant 2 : index
    %899 = vector.load %arg5[%c3_95, %c0_96, %c2_97] : memref<4x8x128xf32, #tpu.memory_space<vmem>>, vector<1x8x45xf32>
    %900 = vector.shape_cast %899 : vector<1x8x45xf32> to vector<8x45xf32>
    %c54 = arith.constant 54 : index
    %901 = memref.load %arg2[%c54] : memref<720xf32, #tpu.memory_space<smem>>
    %902 = vector.broadcast %901 : f32 to vector<8x45xf32>
    %903 = arith.mulf %902, %900 : vector<8x45xf32>
    %904 = arith.addf %870, %903 : vector<8x45xf32>
    %c82 = arith.constant 82 : index
    %905 = memref.load %arg2[%c82] : memref<720xf32, #tpu.memory_space<smem>>
    %906 = vector.broadcast %905 : f32 to vector<8x45xf32>
    %907 = arith.mulf %906, %900 : vector<8x45xf32>
    %908 = arith.addf %874, %907 : vector<8x45xf32>
    %c110 = arith.constant 110 : index
    %909 = memref.load %arg2[%c110] : memref<720xf32, #tpu.memory_space<smem>>
    %910 = vector.broadcast %909 : f32 to vector<8x45xf32>
    %911 = arith.mulf %910, %900 : vector<8x45xf32>
    %912 = arith.addf %878, %911 : vector<8x45xf32>
    %c138 = arith.constant 138 : index
    %913 = memref.load %arg2[%c138] : memref<720xf32, #tpu.memory_space<smem>>
    %914 = vector.broadcast %913 : f32 to vector<8x45xf32>
    %915 = arith.mulf %914, %900 : vector<8x45xf32>
    %916 = arith.addf %882, %915 : vector<8x45xf32>
    %c166 = arith.constant 166 : index
    %917 = memref.load %arg2[%c166] : memref<720xf32, #tpu.memory_space<smem>>
    %918 = vector.broadcast %917 : f32 to vector<8x45xf32>
    %919 = arith.mulf %918, %900 : vector<8x45xf32>
    %920 = arith.addf %886, %919 : vector<8x45xf32>
    %c194 = arith.constant 194 : index
    %921 = memref.load %arg2[%c194] : memref<720xf32, #tpu.memory_space<smem>>
    %922 = vector.broadcast %921 : f32 to vector<8x45xf32>
    %923 = arith.mulf %922, %900 : vector<8x45xf32>
    %924 = arith.addf %890, %923 : vector<8x45xf32>
    %c222 = arith.constant 222 : index
    %925 = memref.load %arg2[%c222] : memref<720xf32, #tpu.memory_space<smem>>
    %926 = vector.broadcast %925 : f32 to vector<8x45xf32>
    %927 = arith.mulf %926, %900 : vector<8x45xf32>
    %928 = arith.addf %894, %927 : vector<8x45xf32>
    %c250 = arith.constant 250 : index
    %929 = memref.load %arg2[%c250] : memref<720xf32, #tpu.memory_space<smem>>
    %930 = vector.broadcast %929 : f32 to vector<8x45xf32>
    %931 = arith.mulf %930, %900 : vector<8x45xf32>
    %932 = arith.addf %898, %931 : vector<8x45xf32>
    %c3_98 = arith.constant 3 : index
    %c0_99 = arith.constant 0 : index
    %c4_100 = arith.constant 4 : index
    %933 = vector.load %arg5[%c3_98, %c0_99, %c4_100] : memref<4x8x128xf32, #tpu.memory_space<vmem>>, vector<1x8x45xf32>
    %934 = vector.shape_cast %933 : vector<1x8x45xf32> to vector<8x45xf32>
    %c55 = arith.constant 55 : index
    %935 = memref.load %arg2[%c55] : memref<720xf32, #tpu.memory_space<smem>>
    %936 = vector.broadcast %935 : f32 to vector<8x45xf32>
    %937 = arith.mulf %936, %934 : vector<8x45xf32>
    %938 = arith.addf %904, %937 : vector<8x45xf32>
    %c83 = arith.constant 83 : index
    %939 = memref.load %arg2[%c83] : memref<720xf32, #tpu.memory_space<smem>>
    %940 = vector.broadcast %939 : f32 to vector<8x45xf32>
    %941 = arith.mulf %940, %934 : vector<8x45xf32>
    %942 = arith.addf %908, %941 : vector<8x45xf32>
    %c111 = arith.constant 111 : index
    %943 = memref.load %arg2[%c111] : memref<720xf32, #tpu.memory_space<smem>>
    %944 = vector.broadcast %943 : f32 to vector<8x45xf32>
    %945 = arith.mulf %944, %934 : vector<8x45xf32>
    %946 = arith.addf %912, %945 : vector<8x45xf32>
    %c139 = arith.constant 139 : index
    %947 = memref.load %arg2[%c139] : memref<720xf32, #tpu.memory_space<smem>>
    %948 = vector.broadcast %947 : f32 to vector<8x45xf32>
    %949 = arith.mulf %948, %934 : vector<8x45xf32>
    %950 = arith.addf %916, %949 : vector<8x45xf32>
    %c167 = arith.constant 167 : index
    %951 = memref.load %arg2[%c167] : memref<720xf32, #tpu.memory_space<smem>>
    %952 = vector.broadcast %951 : f32 to vector<8x45xf32>
    %953 = arith.mulf %952, %934 : vector<8x45xf32>
    %954 = arith.addf %920, %953 : vector<8x45xf32>
    %c195 = arith.constant 195 : index
    %955 = memref.load %arg2[%c195] : memref<720xf32, #tpu.memory_space<smem>>
    %956 = vector.broadcast %955 : f32 to vector<8x45xf32>
    %957 = arith.mulf %956, %934 : vector<8x45xf32>
    %958 = arith.addf %924, %957 : vector<8x45xf32>
    %c223 = arith.constant 223 : index
    %959 = memref.load %arg2[%c223] : memref<720xf32, #tpu.memory_space<smem>>
    %960 = vector.broadcast %959 : f32 to vector<8x45xf32>
    %961 = arith.mulf %960, %934 : vector<8x45xf32>
    %962 = arith.addf %928, %961 : vector<8x45xf32>
    %c251 = arith.constant 251 : index
    %963 = memref.load %arg2[%c251] : memref<720xf32, #tpu.memory_space<smem>>
    %964 = vector.broadcast %963 : f32 to vector<8x45xf32>
    %965 = arith.mulf %964, %934 : vector<8x45xf32>
    %966 = arith.addf %932, %965 : vector<8x45xf32>
    %c3_101 = arith.constant 3 : index
    %c0_102 = arith.constant 0 : index
    %c6_103 = arith.constant 6 : index
    %967 = vector.load %arg5[%c3_101, %c0_102, %c6_103] : memref<4x8x128xf32, #tpu.memory_space<vmem>>, vector<1x8x45xf32>
    %968 = vector.shape_cast %967 : vector<1x8x45xf32> to vector<8x45xf32>
    %c56 = arith.constant 56 : index
    %969 = memref.load %arg2[%c56] : memref<720xf32, #tpu.memory_space<smem>>
    %970 = vector.broadcast %969 : f32 to vector<8x45xf32>
    %971 = arith.mulf %970, %968 : vector<8x45xf32>
    %972 = arith.addf %938, %971 : vector<8x45xf32>
    %c84 = arith.constant 84 : index
    %973 = memref.load %arg2[%c84] : memref<720xf32, #tpu.memory_space<smem>>
    %974 = vector.broadcast %973 : f32 to vector<8x45xf32>
    %975 = arith.mulf %974, %968 : vector<8x45xf32>
    %976 = arith.addf %942, %975 : vector<8x45xf32>
    %c112 = arith.constant 112 : index
    %977 = memref.load %arg2[%c112] : memref<720xf32, #tpu.memory_space<smem>>
    %978 = vector.broadcast %977 : f32 to vector<8x45xf32>
    %979 = arith.mulf %978, %968 : vector<8x45xf32>
    %980 = arith.addf %946, %979 : vector<8x45xf32>
    %c140 = arith.constant 140 : index
    %981 = memref.load %arg2[%c140] : memref<720xf32, #tpu.memory_space<smem>>
    %982 = vector.broadcast %981 : f32 to vector<8x45xf32>
    %983 = arith.mulf %982, %968 : vector<8x45xf32>
    %984 = arith.addf %950, %983 : vector<8x45xf32>
    %c168 = arith.constant 168 : index
    %985 = memref.load %arg2[%c168] : memref<720xf32, #tpu.memory_space<smem>>
    %986 = vector.broadcast %985 : f32 to vector<8x45xf32>
    %987 = arith.mulf %986, %968 : vector<8x45xf32>
    %988 = arith.addf %954, %987 : vector<8x45xf32>
    %c196 = arith.constant 196 : index
    %989 = memref.load %arg2[%c196] : memref<720xf32, #tpu.memory_space<smem>>
    %990 = vector.broadcast %989 : f32 to vector<8x45xf32>
    %991 = arith.mulf %990, %968 : vector<8x45xf32>
    %992 = arith.addf %958, %991 : vector<8x45xf32>
    %c224 = arith.constant 224 : index
    %993 = memref.load %arg2[%c224] : memref<720xf32, #tpu.memory_space<smem>>
    %994 = vector.broadcast %993 : f32 to vector<8x45xf32>
    %995 = arith.mulf %994, %968 : vector<8x45xf32>
    %996 = arith.addf %962, %995 : vector<8x45xf32>
    %c252 = arith.constant 252 : index
    %997 = memref.load %arg2[%c252] : memref<720xf32, #tpu.memory_space<smem>>
    %998 = vector.broadcast %997 : f32 to vector<8x45xf32>
    %999 = arith.mulf %998, %968 : vector<8x45xf32>
    %1000 = arith.addf %966, %999 : vector<8x45xf32>
    %c3_104 = arith.constant 3 : index
    %c0_105 = arith.constant 0 : index
    %c8_106 = arith.constant 8 : index
    %1001 = vector.load %arg5[%c3_104, %c0_105, %c8_106] : memref<4x8x128xf32, #tpu.memory_space<vmem>>, vector<1x8x45xf32>
    %1002 = vector.shape_cast %1001 : vector<1x8x45xf32> to vector<8x45xf32>
    %c57 = arith.constant 57 : index
    %1003 = memref.load %arg2[%c57] : memref<720xf32, #tpu.memory_space<smem>>
    %1004 = vector.broadcast %1003 : f32 to vector<8x45xf32>
    %1005 = arith.mulf %1004, %1002 : vector<8x45xf32>
    %1006 = arith.addf %972, %1005 : vector<8x45xf32>
    %c85 = arith.constant 85 : index
    %1007 = memref.load %arg2[%c85] : memref<720xf32, #tpu.memory_space<smem>>
    %1008 = vector.broadcast %1007 : f32 to vector<8x45xf32>
    %1009 = arith.mulf %1008, %1002 : vector<8x45xf32>
    %1010 = arith.addf %976, %1009 : vector<8x45xf32>
    %c113 = arith.constant 113 : index
    %1011 = memref.load %arg2[%c113] : memref<720xf32, #tpu.memory_space<smem>>
    %1012 = vector.broadcast %1011 : f32 to vector<8x45xf32>
    %1013 = arith.mulf %1012, %1002 : vector<8x45xf32>
    %1014 = arith.addf %980, %1013 : vector<8x45xf32>
    %c141 = arith.constant 141 : index
    %1015 = memref.load %arg2[%c141] : memref<720xf32, #tpu.memory_space<smem>>
    %1016 = vector.broadcast %1015 : f32 to vector<8x45xf32>
    %1017 = arith.mulf %1016, %1002 : vector<8x45xf32>
    %1018 = arith.addf %984, %1017 : vector<8x45xf32>
    %c169 = arith.constant 169 : index
    %1019 = memref.load %arg2[%c169] : memref<720xf32, #tpu.memory_space<smem>>
    %1020 = vector.broadcast %1019 : f32 to vector<8x45xf32>
    %1021 = arith.mulf %1020, %1002 : vector<8x45xf32>
    %1022 = arith.addf %988, %1021 : vector<8x45xf32>
    %c197 = arith.constant 197 : index
    %1023 = memref.load %arg2[%c197] : memref<720xf32, #tpu.memory_space<smem>>
    %1024 = vector.broadcast %1023 : f32 to vector<8x45xf32>
    %1025 = arith.mulf %1024, %1002 : vector<8x45xf32>
    %1026 = arith.addf %992, %1025 : vector<8x45xf32>
    %c225 = arith.constant 225 : index
    %1027 = memref.load %arg2[%c225] : memref<720xf32, #tpu.memory_space<smem>>
    %1028 = vector.broadcast %1027 : f32 to vector<8x45xf32>
    %1029 = arith.mulf %1028, %1002 : vector<8x45xf32>
    %1030 = arith.addf %996, %1029 : vector<8x45xf32>
    %c253 = arith.constant 253 : index
    %1031 = memref.load %arg2[%c253] : memref<720xf32, #tpu.memory_space<smem>>
    %1032 = vector.broadcast %1031 : f32 to vector<8x45xf32>
    %1033 = arith.mulf %1032, %1002 : vector<8x45xf32>
    %1034 = arith.addf %1000, %1033 : vector<8x45xf32>
    %c3_107 = arith.constant 3 : index
    %c0_108 = arith.constant 0 : index
    %c10_109 = arith.constant 10 : index
    %1035 = vector.load %arg5[%c3_107, %c0_108, %c10_109] : memref<4x8x128xf32, #tpu.memory_space<vmem>>, vector<1x8x45xf32>
    %1036 = vector.shape_cast %1035 : vector<1x8x45xf32> to vector<8x45xf32>
    %c58 = arith.constant 58 : index
    %1037 = memref.load %arg2[%c58] : memref<720xf32, #tpu.memory_space<smem>>
    %1038 = vector.broadcast %1037 : f32 to vector<8x45xf32>
    %1039 = arith.mulf %1038, %1036 : vector<8x45xf32>
    %1040 = arith.addf %1006, %1039 : vector<8x45xf32>
    %c86 = arith.constant 86 : index
    %1041 = memref.load %arg2[%c86] : memref<720xf32, #tpu.memory_space<smem>>
    %1042 = vector.broadcast %1041 : f32 to vector<8x45xf32>
    %1043 = arith.mulf %1042, %1036 : vector<8x45xf32>
    %1044 = arith.addf %1010, %1043 : vector<8x45xf32>
    %c114 = arith.constant 114 : index
    %1045 = memref.load %arg2[%c114] : memref<720xf32, #tpu.memory_space<smem>>
    %1046 = vector.broadcast %1045 : f32 to vector<8x45xf32>
    %1047 = arith.mulf %1046, %1036 : vector<8x45xf32>
    %1048 = arith.addf %1014, %1047 : vector<8x45xf32>
    %c142 = arith.constant 142 : index
    %1049 = memref.load %arg2[%c142] : memref<720xf32, #tpu.memory_space<smem>>
    %1050 = vector.broadcast %1049 : f32 to vector<8x45xf32>
    %1051 = arith.mulf %1050, %1036 : vector<8x45xf32>
    %1052 = arith.addf %1018, %1051 : vector<8x45xf32>
    %c170 = arith.constant 170 : index
    %1053 = memref.load %arg2[%c170] : memref<720xf32, #tpu.memory_space<smem>>
    %1054 = vector.broadcast %1053 : f32 to vector<8x45xf32>
    %1055 = arith.mulf %1054, %1036 : vector<8x45xf32>
    %1056 = arith.addf %1022, %1055 : vector<8x45xf32>
    %c198 = arith.constant 198 : index
    %1057 = memref.load %arg2[%c198] : memref<720xf32, #tpu.memory_space<smem>>
    %1058 = vector.broadcast %1057 : f32 to vector<8x45xf32>
    %1059 = arith.mulf %1058, %1036 : vector<8x45xf32>
    %1060 = arith.addf %1026, %1059 : vector<8x45xf32>
    %c226 = arith.constant 226 : index
    %1061 = memref.load %arg2[%c226] : memref<720xf32, #tpu.memory_space<smem>>
    %1062 = vector.broadcast %1061 : f32 to vector<8x45xf32>
    %1063 = arith.mulf %1062, %1036 : vector<8x45xf32>
    %1064 = arith.addf %1030, %1063 : vector<8x45xf32>
    %c254 = arith.constant 254 : index
    %1065 = memref.load %arg2[%c254] : memref<720xf32, #tpu.memory_space<smem>>
    %1066 = vector.broadcast %1065 : f32 to vector<8x45xf32>
    %1067 = arith.mulf %1066, %1036 : vector<8x45xf32>
    %1068 = arith.addf %1034, %1067 : vector<8x45xf32>
    %c3_110 = arith.constant 3 : index
    %c0_111 = arith.constant 0 : index
    %c12_112 = arith.constant 12 : index
    %1069 = vector.load %arg5[%c3_110, %c0_111, %c12_112] : memref<4x8x128xf32, #tpu.memory_space<vmem>>, vector<1x8x45xf32>
    %1070 = vector.shape_cast %1069 : vector<1x8x45xf32> to vector<8x45xf32>
    %c59 = arith.constant 59 : index
    %1071 = memref.load %arg2[%c59] : memref<720xf32, #tpu.memory_space<smem>>
    %1072 = vector.broadcast %1071 : f32 to vector<8x45xf32>
    %1073 = arith.mulf %1072, %1070 : vector<8x45xf32>
    %1074 = arith.addf %1040, %1073 : vector<8x45xf32>
    %c87 = arith.constant 87 : index
    %1075 = memref.load %arg2[%c87] : memref<720xf32, #tpu.memory_space<smem>>
    %1076 = vector.broadcast %1075 : f32 to vector<8x45xf32>
    %1077 = arith.mulf %1076, %1070 : vector<8x45xf32>
    %1078 = arith.addf %1044, %1077 : vector<8x45xf32>
    %c115 = arith.constant 115 : index
    %1079 = memref.load %arg2[%c115] : memref<720xf32, #tpu.memory_space<smem>>
    %1080 = vector.broadcast %1079 : f32 to vector<8x45xf32>
    %1081 = arith.mulf %1080, %1070 : vector<8x45xf32>
    %1082 = arith.addf %1048, %1081 : vector<8x45xf32>
    %c143 = arith.constant 143 : index
    %1083 = memref.load %arg2[%c143] : memref<720xf32, #tpu.memory_space<smem>>
    %1084 = vector.broadcast %1083 : f32 to vector<8x45xf32>
    %1085 = arith.mulf %1084, %1070 : vector<8x45xf32>
    %1086 = arith.addf %1052, %1085 : vector<8x45xf32>
    %c171 = arith.constant 171 : index
    %1087 = memref.load %arg2[%c171] : memref<720xf32, #tpu.memory_space<smem>>
    %1088 = vector.broadcast %1087 : f32 to vector<8x45xf32>
    %1089 = arith.mulf %1088, %1070 : vector<8x45xf32>
    %1090 = arith.addf %1056, %1089 : vector<8x45xf32>
    %c199 = arith.constant 199 : index
    %1091 = memref.load %arg2[%c199] : memref<720xf32, #tpu.memory_space<smem>>
    %1092 = vector.broadcast %1091 : f32 to vector<8x45xf32>
    %1093 = arith.mulf %1092, %1070 : vector<8x45xf32>
    %1094 = arith.addf %1060, %1093 : vector<8x45xf32>
    %c227 = arith.constant 227 : index
    %1095 = memref.load %arg2[%c227] : memref<720xf32, #tpu.memory_space<smem>>
    %1096 = vector.broadcast %1095 : f32 to vector<8x45xf32>
    %1097 = arith.mulf %1096, %1070 : vector<8x45xf32>
    %1098 = arith.addf %1064, %1097 : vector<8x45xf32>
    %c255 = arith.constant 255 : index
    %1099 = memref.load %arg2[%c255] : memref<720xf32, #tpu.memory_space<smem>>
    %1100 = vector.broadcast %1099 : f32 to vector<8x45xf32>
    %1101 = arith.mulf %1100, %1070 : vector<8x45xf32>
    %1102 = arith.addf %1068, %1101 : vector<8x45xf32>
    %c256 = arith.constant 256 : index
    %1103 = memref.load %arg2[%c256] : memref<720xf32, #tpu.memory_space<smem>>
    %1104 = vector.broadcast %1103 : f32 to vector<8x45xf32>
    %1105 = arith.addf %1074, %1104 : vector<8x45xf32>
    %cst_113 = arith.constant 0.000000e+00 : f32
    %1106 = vector.broadcast %cst_113 : f32 to vector<8x45xf32>
    %1107 = arith.maximumf %1105, %1106 : vector<8x45xf32>
    %1108 = vector.extract_strided_slice %1107 {offsets = [0, 0], sizes = [8, 41], strides = [1, 1]} : vector<8x45xf32> to vector<8x41xf32>
    %1109 = vector.extract_strided_slice %1107 {offsets = [0, 2], sizes = [8, 41], strides = [1, 1]} : vector<8x45xf32> to vector<8x41xf32>
    %1110 = arith.maximumf %1108, %1109 : vector<8x41xf32>
    %c257 = arith.constant 257 : index
    %1111 = memref.load %arg2[%c257] : memref<720xf32, #tpu.memory_space<smem>>
    %1112 = vector.broadcast %1111 : f32 to vector<8x45xf32>
    %1113 = arith.addf %1078, %1112 : vector<8x45xf32>
    %cst_114 = arith.constant 0.000000e+00 : f32
    %1114 = vector.broadcast %cst_114 : f32 to vector<8x45xf32>
    %1115 = arith.maximumf %1113, %1114 : vector<8x45xf32>
    %1116 = vector.extract_strided_slice %1115 {offsets = [0, 0], sizes = [8, 41], strides = [1, 1]} : vector<8x45xf32> to vector<8x41xf32>
    %1117 = vector.extract_strided_slice %1115 {offsets = [0, 2], sizes = [8, 41], strides = [1, 1]} : vector<8x45xf32> to vector<8x41xf32>
    %1118 = arith.maximumf %1116, %1117 : vector<8x41xf32>
    %c258 = arith.constant 258 : index
    %1119 = memref.load %arg2[%c258] : memref<720xf32, #tpu.memory_space<smem>>
    %1120 = vector.broadcast %1119 : f32 to vector<8x45xf32>
    %1121 = arith.addf %1082, %1120 : vector<8x45xf32>
    %cst_115 = arith.constant 0.000000e+00 : f32
    %1122 = vector.broadcast %cst_115 : f32 to vector<8x45xf32>
    %1123 = arith.maximumf %1121, %1122 : vector<8x45xf32>
    %1124 = vector.extract_strided_slice %1123 {offsets = [0, 0], sizes = [8, 41], strides = [1, 1]} : vector<8x45xf32> to vector<8x41xf32>
    %1125 = vector.extract_strided_slice %1123 {offsets = [0, 2], sizes = [8, 41], strides = [1, 1]} : vector<8x45xf32> to vector<8x41xf32>
    %1126 = arith.maximumf %1124, %1125 : vector<8x41xf32>
    %c259 = arith.constant 259 : index
    %1127 = memref.load %arg2[%c259] : memref<720xf32, #tpu.memory_space<smem>>
    %1128 = vector.broadcast %1127 : f32 to vector<8x45xf32>
    %1129 = arith.addf %1086, %1128 : vector<8x45xf32>
    %cst_116 = arith.constant 0.000000e+00 : f32
    %1130 = vector.broadcast %cst_116 : f32 to vector<8x45xf32>
    %1131 = arith.maximumf %1129, %1130 : vector<8x45xf32>
    %1132 = vector.extract_strided_slice %1131 {offsets = [0, 0], sizes = [8, 41], strides = [1, 1]} : vector<8x45xf32> to vector<8x41xf32>
    %1133 = vector.extract_strided_slice %1131 {offsets = [0, 2], sizes = [8, 41], strides = [1, 1]} : vector<8x45xf32> to vector<8x41xf32>
    %1134 = arith.maximumf %1132, %1133 : vector<8x41xf32>
    %c260 = arith.constant 260 : index
    %1135 = memref.load %arg2[%c260] : memref<720xf32, #tpu.memory_space<smem>>
    %1136 = vector.broadcast %1135 : f32 to vector<8x45xf32>
    %1137 = arith.addf %1090, %1136 : vector<8x45xf32>
    %cst_117 = arith.constant 0.000000e+00 : f32
    %1138 = vector.broadcast %cst_117 : f32 to vector<8x45xf32>
    %1139 = arith.maximumf %1137, %1138 : vector<8x45xf32>
    %1140 = vector.extract_strided_slice %1139 {offsets = [0, 0], sizes = [8, 41], strides = [1, 1]} : vector<8x45xf32> to vector<8x41xf32>
    %1141 = vector.extract_strided_slice %1139 {offsets = [0, 2], sizes = [8, 41], strides = [1, 1]} : vector<8x45xf32> to vector<8x41xf32>
    %1142 = arith.maximumf %1140, %1141 : vector<8x41xf32>
    %c261 = arith.constant 261 : index
    %1143 = memref.load %arg2[%c261] : memref<720xf32, #tpu.memory_space<smem>>
    %1144 = vector.broadcast %1143 : f32 to vector<8x45xf32>
    %1145 = arith.addf %1094, %1144 : vector<8x45xf32>
    %cst_118 = arith.constant 0.000000e+00 : f32
    %1146 = vector.broadcast %cst_118 : f32 to vector<8x45xf32>
    %1147 = arith.maximumf %1145, %1146 : vector<8x45xf32>
    %1148 = vector.extract_strided_slice %1147 {offsets = [0, 0], sizes = [8, 41], strides = [1, 1]} : vector<8x45xf32> to vector<8x41xf32>
    %1149 = vector.extract_strided_slice %1147 {offsets = [0, 2], sizes = [8, 41], strides = [1, 1]} : vector<8x45xf32> to vector<8x41xf32>
    %1150 = arith.maximumf %1148, %1149 : vector<8x41xf32>
    %c262 = arith.constant 262 : index
    %1151 = memref.load %arg2[%c262] : memref<720xf32, #tpu.memory_space<smem>>
    %1152 = vector.broadcast %1151 : f32 to vector<8x45xf32>
    %1153 = arith.addf %1098, %1152 : vector<8x45xf32>
    %cst_119 = arith.constant 0.000000e+00 : f32
    %1154 = vector.broadcast %cst_119 : f32 to vector<8x45xf32>
    %1155 = arith.maximumf %1153, %1154 : vector<8x45xf32>
    %1156 = vector.extract_strided_slice %1155 {offsets = [0, 0], sizes = [8, 41], strides = [1, 1]} : vector<8x45xf32> to vector<8x41xf32>
    %1157 = vector.extract_strided_slice %1155 {offsets = [0, 2], sizes = [8, 41], strides = [1, 1]} : vector<8x45xf32> to vector<8x41xf32>
    %1158 = arith.maximumf %1156, %1157 : vector<8x41xf32>
    %c263 = arith.constant 263 : index
    %1159 = memref.load %arg2[%c263] : memref<720xf32, #tpu.memory_space<smem>>
    %1160 = vector.broadcast %1159 : f32 to vector<8x45xf32>
    %1161 = arith.addf %1102, %1160 : vector<8x45xf32>
    %cst_120 = arith.constant 0.000000e+00 : f32
    %1162 = vector.broadcast %cst_120 : f32 to vector<8x45xf32>
    %1163 = arith.maximumf %1161, %1162 : vector<8x45xf32>
    %1164 = vector.extract_strided_slice %1163 {offsets = [0, 0], sizes = [8, 41], strides = [1, 1]} : vector<8x45xf32> to vector<8x41xf32>
    %1165 = vector.extract_strided_slice %1163 {offsets = [0, 2], sizes = [8, 41], strides = [1, 1]} : vector<8x45xf32> to vector<8x41xf32>
    %1166 = arith.maximumf %1164, %1165 : vector<8x41xf32>
    %c0_121 = arith.constant 0 : index
    %c0_122 = arith.constant 0 : index
    %c0_123 = arith.constant 0 : index
    %1167 = vector.load %arg6[%c0_121, %c0_122, %c0_123] : memref<8x8x128xf32, #tpu.memory_space<vmem>>, vector<1x8x41xf32>
    %1168 = vector.shape_cast %1167 : vector<1x8x41xf32> to vector<8x41xf32>
    %1169 = vector.shape_cast %1110 : vector<8x41xf32> to vector<1x8x41xf32>
    tpu.vector_store %arg6[%c0_121, %c0_122, %c0_123], %1169 {strides = array<i32>} : memref<8x8x128xf32, #tpu.memory_space<vmem>>, vector<1x8x41xf32>,
    %c1_124 = arith.constant 1 : index
    %c0_125 = arith.constant 0 : index
    %c0_126 = arith.constant 0 : index
    %1170 = vector.load %arg6[%c1_124, %c0_125, %c0_126] : memref<8x8x128xf32, #tpu.memory_space<vmem>>, vector<1x8x41xf32>
    %1171 = vector.shape_cast %1170 : vector<1x8x41xf32> to vector<8x41xf32>
    %1172 = vector.shape_cast %1118 : vector<8x41xf32> to vector<1x8x41xf32>
    tpu.vector_store %arg6[%c1_124, %c0_125, %c0_126], %1172 {strides = array<i32>} : memref<8x8x128xf32, #tpu.memory_space<vmem>>, vector<1x8x41xf32>,
    %c2_127 = arith.constant 2 : index
    %c0_128 = arith.constant 0 : index
    %c0_129 = arith.constant 0 : index
    %1173 = vector.load %arg6[%c2_127, %c0_128, %c0_129] : memref<8x8x128xf32, #tpu.memory_space<vmem>>, vector<1x8x41xf32>
    %1174 = vector.shape_cast %1173 : vector<1x8x41xf32> to vector<8x41xf32>
    %1175 = vector.shape_cast %1126 : vector<8x41xf32> to vector<1x8x41xf32>
    tpu.vector_store %arg6[%c2_127, %c0_128, %c0_129], %1175 {strides = array<i32>} : memref<8x8x128xf32, #tpu.memory_space<vmem>>, vector<1x8x41xf32>,
    %c3_130 = arith.constant 3 : index
    %c0_131 = arith.constant 0 : index
    %c0_132 = arith.constant 0 : index
    %1176 = vector.load %arg6[%c3_130, %c0_131, %c0_132] : memref<8x8x128xf32, #tpu.memory_space<vmem>>, vector<1x8x41xf32>
    %1177 = vector.shape_cast %1176 : vector<1x8x41xf32> to vector<8x41xf32>
    %1178 = vector.shape_cast %1134 : vector<8x41xf32> to vector<1x8x41xf32>
    tpu.vector_store %arg6[%c3_130, %c0_131, %c0_132], %1178 {strides = array<i32>} : memref<8x8x128xf32, #tpu.memory_space<vmem>>, vector<1x8x41xf32>,
    %c4_133 = arith.constant 4 : index
    %c0_134 = arith.constant 0 : index
    %c0_135 = arith.constant 0 : index
    %1179 = vector.load %arg6[%c4_133, %c0_134, %c0_135] : memref<8x8x128xf32, #tpu.memory_space<vmem>>, vector<1x8x41xf32>
    %1180 = vector.shape_cast %1179 : vector<1x8x41xf32> to vector<8x41xf32>
    %1181 = vector.shape_cast %1142 : vector<8x41xf32> to vector<1x8x41xf32>
    tpu.vector_store %arg6[%c4_133, %c0_134, %c0_135], %1181 {strides = array<i32>} : memref<8x8x128xf32, #tpu.memory_space<vmem>>, vector<1x8x41xf32>,
    %c5_136 = arith.constant 5 : index
    %c0_137 = arith.constant 0 : index
    %c0_138 = arith.constant 0 : index
    %1182 = vector.load %arg6[%c5_136, %c0_137, %c0_138] : memref<8x8x128xf32, #tpu.memory_space<vmem>>, vector<1x8x41xf32>
    %1183 = vector.shape_cast %1182 : vector<1x8x41xf32> to vector<8x41xf32>
    %1184 = vector.shape_cast %1150 : vector<8x41xf32> to vector<1x8x41xf32>
    tpu.vector_store %arg6[%c5_136, %c0_137, %c0_138], %1184 {strides = array<i32>} : memref<8x8x128xf32, #tpu.memory_space<vmem>>, vector<1x8x41xf32>,
    %c6_139 = arith.constant 6 : index
    %c0_140 = arith.constant 0 : index
    %c0_141 = arith.constant 0 : index
    %1185 = vector.load %arg6[%c6_139, %c0_140, %c0_141] : memref<8x8x128xf32, #tpu.memory_space<vmem>>, vector<1x8x41xf32>
    %1186 = vector.shape_cast %1185 : vector<1x8x41xf32> to vector<8x41xf32>
    %1187 = vector.shape_cast %1158 : vector<8x41xf32> to vector<1x8x41xf32>
    tpu.vector_store %arg6[%c6_139, %c0_140, %c0_141], %1187 {strides = array<i32>} : memref<8x8x128xf32, #tpu.memory_space<vmem>>, vector<1x8x41xf32>,
    %c7_142 = arith.constant 7 : index
    %c0_143 = arith.constant 0 : index
    %c0_144 = arith.constant 0 : index
    %1188 = vector.load %arg6[%c7_142, %c0_143, %c0_144] : memref<8x8x128xf32, #tpu.memory_space<vmem>>, vector<1x8x41xf32>
    %1189 = vector.shape_cast %1188 : vector<1x8x41xf32> to vector<8x41xf32>
    %1190 = vector.shape_cast %1166 : vector<8x41xf32> to vector<1x8x41xf32>
    tpu.vector_store %arg6[%c7_142, %c0_143, %c0_144], %1190 {strides = array<i32>} : memref<8x8x128xf32, #tpu.memory_space<vmem>>, vector<1x8x41xf32>,
    %c0_145 = arith.constant 0 : index
    %c0_146 = arith.constant 0 : index
    %c0_147 = arith.constant 0 : index
    %1191 = vector.load %arg6[%c0_145, %c0_146, %c0_147] : memref<8x8x128xf32, #tpu.memory_space<vmem>>, vector<1x8x17xf32>
    %1192 = vector.shape_cast %1191 : vector<1x8x17xf32> to vector<8x17xf32>
    %c264 = arith.constant 264 : index
    %1193 = memref.load %arg2[%c264] : memref<720xf32, #tpu.memory_space<smem>>
    %1194 = vector.broadcast %1193 : f32 to vector<8x17xf32>
    %1195 = arith.mulf %1194, %1192 : vector<8x17xf32>
    %c320 = arith.constant 320 : index
    %1196 = memref.load %arg2[%c320] : memref<720xf32, #tpu.memory_space<smem>>
    %1197 = vector.broadcast %1196 : f32 to vector<8x17xf32>
    %1198 = arith.mulf %1197, %1192 : vector<8x17xf32>
    %c376 = arith.constant 376 : index
    %1199 = memref.load %arg2[%c376] : memref<720xf32, #tpu.memory_space<smem>>
    %1200 = vector.broadcast %1199 : f32 to vector<8x17xf32>
    %1201 = arith.mulf %1200, %1192 : vector<8x17xf32>
    %c432 = arith.constant 432 : index
    %1202 = memref.load %arg2[%c432] : memref<720xf32, #tpu.memory_space<smem>>
    %1203 = vector.broadcast %1202 : f32 to vector<8x17xf32>
    %1204 = arith.mulf %1203, %1192 : vector<8x17xf32>
    %c488 = arith.constant 488 : index
    %1205 = memref.load %arg2[%c488] : memref<720xf32, #tpu.memory_space<smem>>
    %1206 = vector.broadcast %1205 : f32 to vector<8x17xf32>
    %1207 = arith.mulf %1206, %1192 : vector<8x17xf32>
    %c544 = arith.constant 544 : index
    %1208 = memref.load %arg2[%c544] : memref<720xf32, #tpu.memory_space<smem>>
    %1209 = vector.broadcast %1208 : f32 to vector<8x17xf32>
    %1210 = arith.mulf %1209, %1192 : vector<8x17xf32>
    %c600 = arith.constant 600 : index
    %1211 = memref.load %arg2[%c600] : memref<720xf32, #tpu.memory_space<smem>>
    %1212 = vector.broadcast %1211 : f32 to vector<8x17xf32>
    %1213 = arith.mulf %1212, %1192 : vector<8x17xf32>
    %c656 = arith.constant 656 : index
    %1214 = memref.load %arg2[%c656] : memref<720xf32, #tpu.memory_space<smem>>
    %1215 = vector.broadcast %1214 : f32 to vector<8x17xf32>
    %1216 = arith.mulf %1215, %1192 : vector<8x17xf32>
    %c0_148 = arith.constant 0 : index
    %c0_149 = arith.constant 0 : index
    %c4_150 = arith.constant 4 : index
    %1217 = vector.load %arg6[%c0_148, %c0_149, %c4_150] : memref<8x8x128xf32, #tpu.memory_space<vmem>>, vector<1x8x17xf32>
    %1218 = vector.shape_cast %1217 : vector<1x8x17xf32> to vector<8x17xf32>
    %c265 = arith.constant 265 : index
    %1219 = memref.load %arg2[%c265] : memref<720xf32, #tpu.memory_space<smem>>
    %1220 = vector.broadcast %1219 : f32 to vector<8x17xf32>
    %1221 = arith.mulf %1220, %1218 : vector<8x17xf32>
    %1222 = arith.addf %1195, %1221 : vector<8x17xf32>
    %c321 = arith.constant 321 : index
    %1223 = memref.load %arg2[%c321] : memref<720xf32, #tpu.memory_space<smem>>
    %1224 = vector.broadcast %1223 : f32 to vector<8x17xf32>
    %1225 = arith.mulf %1224, %1218 : vector<8x17xf32>
    %1226 = arith.addf %1198, %1225 : vector<8x17xf32>
    %c377 = arith.constant 377 : index
    %1227 = memref.load %arg2[%c377] : memref<720xf32, #tpu.memory_space<smem>>
    %1228 = vector.broadcast %1227 : f32 to vector<8x17xf32>
    %1229 = arith.mulf %1228, %1218 : vector<8x17xf32>
    %1230 = arith.addf %1201, %1229 : vector<8x17xf32>
    %c433 = arith.constant 433 : index
    %1231 = memref.load %arg2[%c433] : memref<720xf32, #tpu.memory_space<smem>>
    %1232 = vector.broadcast %1231 : f32 to vector<8x17xf32>
    %1233 = arith.mulf %1232, %1218 : vector<8x17xf32>
    %1234 = arith.addf %1204, %1233 : vector<8x17xf32>
    %c489 = arith.constant 489 : index
    %1235 = memref.load %arg2[%c489] : memref<720xf32, #tpu.memory_space<smem>>
    %1236 = vector.broadcast %1235 : f32 to vector<8x17xf32>
    %1237 = arith.mulf %1236, %1218 : vector<8x17xf32>
    %1238 = arith.addf %1207, %1237 : vector<8x17xf32>
    %c545 = arith.constant 545 : index
    %1239 = memref.load %arg2[%c545] : memref<720xf32, #tpu.memory_space<smem>>
    %1240 = vector.broadcast %1239 : f32 to vector<8x17xf32>
    %1241 = arith.mulf %1240, %1218 : vector<8x17xf32>
    %1242 = arith.addf %1210, %1241 : vector<8x17xf32>
    %c601 = arith.constant 601 : index
    %1243 = memref.load %arg2[%c601] : memref<720xf32, #tpu.memory_space<smem>>
    %1244 = vector.broadcast %1243 : f32 to vector<8x17xf32>
    %1245 = arith.mulf %1244, %1218 : vector<8x17xf32>
    %1246 = arith.addf %1213, %1245 : vector<8x17xf32>
    %c657 = arith.constant 657 : index
    %1247 = memref.load %arg2[%c657] : memref<720xf32, #tpu.memory_space<smem>>
    %1248 = vector.broadcast %1247 : f32 to vector<8x17xf32>
    %1249 = arith.mulf %1248, %1218 : vector<8x17xf32>
    %1250 = arith.addf %1216, %1249 : vector<8x17xf32>
    %c0_151 = arith.constant 0 : index
    %c0_152 = arith.constant 0 : index
    %c8_153 = arith.constant 8 : index
    %1251 = vector.load %arg6[%c0_151, %c0_152, %c8_153] : memref<8x8x128xf32, #tpu.memory_space<vmem>>, vector<1x8x17xf32>
    %1252 = vector.shape_cast %1251 : vector<1x8x17xf32> to vector<8x17xf32>
    %c266 = arith.constant 266 : index
    %1253 = memref.load %arg2[%c266] : memref<720xf32, #tpu.memory_space<smem>>
    %1254 = vector.broadcast %1253 : f32 to vector<8x17xf32>
    %1255 = arith.mulf %1254, %1252 : vector<8x17xf32>
    %1256 = arith.addf %1222, %1255 : vector<8x17xf32>
    %c322 = arith.constant 322 : index
    %1257 = memref.load %arg2[%c322] : memref<720xf32, #tpu.memory_space<smem>>
    %1258 = vector.broadcast %1257 : f32 to vector<8x17xf32>
    %1259 = arith.mulf %1258, %1252 : vector<8x17xf32>
    %1260 = arith.addf %1226, %1259 : vector<8x17xf32>
    %c378 = arith.constant 378 : index
    %1261 = memref.load %arg2[%c378] : memref<720xf32, #tpu.memory_space<smem>>
    %1262 = vector.broadcast %1261 : f32 to vector<8x17xf32>
    %1263 = arith.mulf %1262, %1252 : vector<8x17xf32>
    %1264 = arith.addf %1230, %1263 : vector<8x17xf32>
    %c434 = arith.constant 434 : index
    %1265 = memref.load %arg2[%c434] : memref<720xf32, #tpu.memory_space<smem>>
    %1266 = vector.broadcast %1265 : f32 to vector<8x17xf32>
    %1267 = arith.mulf %1266, %1252 : vector<8x17xf32>
    %1268 = arith.addf %1234, %1267 : vector<8x17xf32>
    %c490 = arith.constant 490 : index
    %1269 = memref.load %arg2[%c490] : memref<720xf32, #tpu.memory_space<smem>>
    %1270 = vector.broadcast %1269 : f32 to vector<8x17xf32>
    %1271 = arith.mulf %1270, %1252 : vector<8x17xf32>
    %1272 = arith.addf %1238, %1271 : vector<8x17xf32>
    %c546 = arith.constant 546 : index
    %1273 = memref.load %arg2[%c546] : memref<720xf32, #tpu.memory_space<smem>>
    %1274 = vector.broadcast %1273 : f32 to vector<8x17xf32>
    %1275 = arith.mulf %1274, %1252 : vector<8x17xf32>
    %1276 = arith.addf %1242, %1275 : vector<8x17xf32>
    %c602 = arith.constant 602 : index
    %1277 = memref.load %arg2[%c602] : memref<720xf32, #tpu.memory_space<smem>>
    %1278 = vector.broadcast %1277 : f32 to vector<8x17xf32>
    %1279 = arith.mulf %1278, %1252 : vector<8x17xf32>
    %1280 = arith.addf %1246, %1279 : vector<8x17xf32>
    %c658 = arith.constant 658 : index
    %1281 = memref.load %arg2[%c658] : memref<720xf32, #tpu.memory_space<smem>>
    %1282 = vector.broadcast %1281 : f32 to vector<8x17xf32>
    %1283 = arith.mulf %1282, %1252 : vector<8x17xf32>
    %1284 = arith.addf %1250, %1283 : vector<8x17xf32>
    %c0_154 = arith.constant 0 : index
    %c0_155 = arith.constant 0 : index
    %c12_156 = arith.constant 12 : index
    %1285 = vector.load %arg6[%c0_154, %c0_155, %c12_156] : memref<8x8x128xf32, #tpu.memory_space<vmem>>, vector<1x8x17xf32>
    %1286 = vector.shape_cast %1285 : vector<1x8x17xf32> to vector<8x17xf32>
    %c267 = arith.constant 267 : index
    %1287 = memref.load %arg2[%c267] : memref<720xf32, #tpu.memory_space<smem>>
    %1288 = vector.broadcast %1287 : f32 to vector<8x17xf32>
    %1289 = arith.mulf %1288, %1286 : vector<8x17xf32>
    %1290 = arith.addf %1256, %1289 : vector<8x17xf32>
    %c323 = arith.constant 323 : index
    %1291 = memref.load %arg2[%c323] : memref<720xf32, #tpu.memory_space<smem>>
    %1292 = vector.broadcast %1291 : f32 to vector<8x17xf32>
    %1293 = arith.mulf %1292, %1286 : vector<8x17xf32>
    %1294 = arith.addf %1260, %1293 : vector<8x17xf32>
    %c379 = arith.constant 379 : index
    %1295 = memref.load %arg2[%c379] : memref<720xf32, #tpu.memory_space<smem>>
    %1296 = vector.broadcast %1295 : f32 to vector<8x17xf32>
    %1297 = arith.mulf %1296, %1286 : vector<8x17xf32>
    %1298 = arith.addf %1264, %1297 : vector<8x17xf32>
    %c435 = arith.constant 435 : index
    %1299 = memref.load %arg2[%c435] : memref<720xf32, #tpu.memory_space<smem>>
    %1300 = vector.broadcast %1299 : f32 to vector<8x17xf32>
    %1301 = arith.mulf %1300, %1286 : vector<8x17xf32>
    %1302 = arith.addf %1268, %1301 : vector<8x17xf32>
    %c491 = arith.constant 491 : index
    %1303 = memref.load %arg2[%c491] : memref<720xf32, #tpu.memory_space<smem>>
    %1304 = vector.broadcast %1303 : f32 to vector<8x17xf32>
    %1305 = arith.mulf %1304, %1286 : vector<8x17xf32>
    %1306 = arith.addf %1272, %1305 : vector<8x17xf32>
    %c547 = arith.constant 547 : index
    %1307 = memref.load %arg2[%c547] : memref<720xf32, #tpu.memory_space<smem>>
    %1308 = vector.broadcast %1307 : f32 to vector<8x17xf32>
    %1309 = arith.mulf %1308, %1286 : vector<8x17xf32>
    %1310 = arith.addf %1276, %1309 : vector<8x17xf32>
    %c603 = arith.constant 603 : index
    %1311 = memref.load %arg2[%c603] : memref<720xf32, #tpu.memory_space<smem>>
    %1312 = vector.broadcast %1311 : f32 to vector<8x17xf32>
    %1313 = arith.mulf %1312, %1286 : vector<8x17xf32>
    %1314 = arith.addf %1280, %1313 : vector<8x17xf32>
    %c659 = arith.constant 659 : index
    %1315 = memref.load %arg2[%c659] : memref<720xf32, #tpu.memory_space<smem>>
    %1316 = vector.broadcast %1315 : f32 to vector<8x17xf32>
    %1317 = arith.mulf %1316, %1286 : vector<8x17xf32>
    %1318 = arith.addf %1284, %1317 : vector<8x17xf32>
    %c0_157 = arith.constant 0 : index
    %c0_158 = arith.constant 0 : index
    %c16_159 = arith.constant 16 : index
    %1319 = vector.load %arg6[%c0_157, %c0_158, %c16_159] : memref<8x8x128xf32, #tpu.memory_space<vmem>>, vector<1x8x17xf32>
    %1320 = vector.shape_cast %1319 : vector<1x8x17xf32> to vector<8x17xf32>
    %c268 = arith.constant 268 : index
    %1321 = memref.load %arg2[%c268] : memref<720xf32, #tpu.memory_space<smem>>
    %1322 = vector.broadcast %1321 : f32 to vector<8x17xf32>
    %1323 = arith.mulf %1322, %1320 : vector<8x17xf32>
    %1324 = arith.addf %1290, %1323 : vector<8x17xf32>
    %c324 = arith.constant 324 : index
    %1325 = memref.load %arg2[%c324] : memref<720xf32, #tpu.memory_space<smem>>
    %1326 = vector.broadcast %1325 : f32 to vector<8x17xf32>
    %1327 = arith.mulf %1326, %1320 : vector<8x17xf32>
    %1328 = arith.addf %1294, %1327 : vector<8x17xf32>
    %c380 = arith.constant 380 : index
    %1329 = memref.load %arg2[%c380] : memref<720xf32, #tpu.memory_space<smem>>
    %1330 = vector.broadcast %1329 : f32 to vector<8x17xf32>
    %1331 = arith.mulf %1330, %1320 : vector<8x17xf32>
    %1332 = arith.addf %1298, %1331 : vector<8x17xf32>
    %c436 = arith.constant 436 : index
    %1333 = memref.load %arg2[%c436] : memref<720xf32, #tpu.memory_space<smem>>
    %1334 = vector.broadcast %1333 : f32 to vector<8x17xf32>
    %1335 = arith.mulf %1334, %1320 : vector<8x17xf32>
    %1336 = arith.addf %1302, %1335 : vector<8x17xf32>
    %c492 = arith.constant 492 : index
    %1337 = memref.load %arg2[%c492] : memref<720xf32, #tpu.memory_space<smem>>
    %1338 = vector.broadcast %1337 : f32 to vector<8x17xf32>
    %1339 = arith.mulf %1338, %1320 : vector<8x17xf32>
    %1340 = arith.addf %1306, %1339 : vector<8x17xf32>
    %c548 = arith.constant 548 : index
    %1341 = memref.load %arg2[%c548] : memref<720xf32, #tpu.memory_space<smem>>
    %1342 = vector.broadcast %1341 : f32 to vector<8x17xf32>
    %1343 = arith.mulf %1342, %1320 : vector<8x17xf32>
    %1344 = arith.addf %1310, %1343 : vector<8x17xf32>
    %c604 = arith.constant 604 : index
    %1345 = memref.load %arg2[%c604] : memref<720xf32, #tpu.memory_space<smem>>
    %1346 = vector.broadcast %1345 : f32 to vector<8x17xf32>
    %1347 = arith.mulf %1346, %1320 : vector<8x17xf32>
    %1348 = arith.addf %1314, %1347 : vector<8x17xf32>
    %c660 = arith.constant 660 : index
    %1349 = memref.load %arg2[%c660] : memref<720xf32, #tpu.memory_space<smem>>
    %1350 = vector.broadcast %1349 : f32 to vector<8x17xf32>
    %1351 = arith.mulf %1350, %1320 : vector<8x17xf32>
    %1352 = arith.addf %1318, %1351 : vector<8x17xf32>
    %c0_160 = arith.constant 0 : index
    %c0_161 = arith.constant 0 : index
    %c20_162 = arith.constant 20 : index
    %1353 = vector.load %arg6[%c0_160, %c0_161, %c20_162] : memref<8x8x128xf32, #tpu.memory_space<vmem>>, vector<1x8x17xf32>
    %1354 = vector.shape_cast %1353 : vector<1x8x17xf32> to vector<8x17xf32>
    %c269 = arith.constant 269 : index
    %1355 = memref.load %arg2[%c269] : memref<720xf32, #tpu.memory_space<smem>>
    %1356 = vector.broadcast %1355 : f32 to vector<8x17xf32>
    %1357 = arith.mulf %1356, %1354 : vector<8x17xf32>
    %1358 = arith.addf %1324, %1357 : vector<8x17xf32>
    %c325 = arith.constant 325 : index
    %1359 = memref.load %arg2[%c325] : memref<720xf32, #tpu.memory_space<smem>>
    %1360 = vector.broadcast %1359 : f32 to vector<8x17xf32>
    %1361 = arith.mulf %1360, %1354 : vector<8x17xf32>
    %1362 = arith.addf %1328, %1361 : vector<8x17xf32>
    %c381 = arith.constant 381 : index
    %1363 = memref.load %arg2[%c381] : memref<720xf32, #tpu.memory_space<smem>>
    %1364 = vector.broadcast %1363 : f32 to vector<8x17xf32>
    %1365 = arith.mulf %1364, %1354 : vector<8x17xf32>
    %1366 = arith.addf %1332, %1365 : vector<8x17xf32>
    %c437 = arith.constant 437 : index
    %1367 = memref.load %arg2[%c437] : memref<720xf32, #tpu.memory_space<smem>>
    %1368 = vector.broadcast %1367 : f32 to vector<8x17xf32>
    %1369 = arith.mulf %1368, %1354 : vector<8x17xf32>
    %1370 = arith.addf %1336, %1369 : vector<8x17xf32>
    %c493 = arith.constant 493 : index
    %1371 = memref.load %arg2[%c493] : memref<720xf32, #tpu.memory_space<smem>>
    %1372 = vector.broadcast %1371 : f32 to vector<8x17xf32>
    %1373 = arith.mulf %1372, %1354 : vector<8x17xf32>
    %1374 = arith.addf %1340, %1373 : vector<8x17xf32>
    %c549 = arith.constant 549 : index
    %1375 = memref.load %arg2[%c549] : memref<720xf32, #tpu.memory_space<smem>>
    %1376 = vector.broadcast %1375 : f32 to vector<8x17xf32>
    %1377 = arith.mulf %1376, %1354 : vector<8x17xf32>
    %1378 = arith.addf %1344, %1377 : vector<8x17xf32>
    %c605 = arith.constant 605 : index
    %1379 = memref.load %arg2[%c605] : memref<720xf32, #tpu.memory_space<smem>>
    %1380 = vector.broadcast %1379 : f32 to vector<8x17xf32>
    %1381 = arith.mulf %1380, %1354 : vector<8x17xf32>
    %1382 = arith.addf %1348, %1381 : vector<8x17xf32>
    %c661 = arith.constant 661 : index
    %1383 = memref.load %arg2[%c661] : memref<720xf32, #tpu.memory_space<smem>>
    %1384 = vector.broadcast %1383 : f32 to vector<8x17xf32>
    %1385 = arith.mulf %1384, %1354 : vector<8x17xf32>
    %1386 = arith.addf %1352, %1385 : vector<8x17xf32>
    %c0_163 = arith.constant 0 : index
    %c0_164 = arith.constant 0 : index
    %c24_165 = arith.constant 24 : index
    %1387 = vector.load %arg6[%c0_163, %c0_164, %c24_165] : memref<8x8x128xf32, #tpu.memory_space<vmem>>, vector<1x8x17xf32>
    %1388 = vector.shape_cast %1387 : vector<1x8x17xf32> to vector<8x17xf32>
    %c270 = arith.constant 270 : index
    %1389 = memref.load %arg2[%c270] : memref<720xf32, #tpu.memory_space<smem>>
    %1390 = vector.broadcast %1389 : f32 to vector<8x17xf32>
    %1391 = arith.mulf %1390, %1388 : vector<8x17xf32>
    %1392 = arith.addf %1358, %1391 : vector<8x17xf32>
    %c326 = arith.constant 326 : index
    %1393 = memref.load %arg2[%c326] : memref<720xf32, #tpu.memory_space<smem>>
    %1394 = vector.broadcast %1393 : f32 to vector<8x17xf32>
    %1395 = arith.mulf %1394, %1388 : vector<8x17xf32>
    %1396 = arith.addf %1362, %1395 : vector<8x17xf32>
    %c382 = arith.constant 382 : index
    %1397 = memref.load %arg2[%c382] : memref<720xf32, #tpu.memory_space<smem>>
    %1398 = vector.broadcast %1397 : f32 to vector<8x17xf32>
    %1399 = arith.mulf %1398, %1388 : vector<8x17xf32>
    %1400 = arith.addf %1366, %1399 : vector<8x17xf32>
    %c438 = arith.constant 438 : index
    %1401 = memref.load %arg2[%c438] : memref<720xf32, #tpu.memory_space<smem>>
    %1402 = vector.broadcast %1401 : f32 to vector<8x17xf32>
    %1403 = arith.mulf %1402, %1388 : vector<8x17xf32>
    %1404 = arith.addf %1370, %1403 : vector<8x17xf32>
    %c494 = arith.constant 494 : index
    %1405 = memref.load %arg2[%c494] : memref<720xf32, #tpu.memory_space<smem>>
    %1406 = vector.broadcast %1405 : f32 to vector<8x17xf32>
    %1407 = arith.mulf %1406, %1388 : vector<8x17xf32>
    %1408 = arith.addf %1374, %1407 : vector<8x17xf32>
    %c550 = arith.constant 550 : index
    %1409 = memref.load %arg2[%c550] : memref<720xf32, #tpu.memory_space<smem>>
    %1410 = vector.broadcast %1409 : f32 to vector<8x17xf32>
    %1411 = arith.mulf %1410, %1388 : vector<8x17xf32>
    %1412 = arith.addf %1378, %1411 : vector<8x17xf32>
    %c606 = arith.constant 606 : index
    %1413 = memref.load %arg2[%c606] : memref<720xf32, #tpu.memory_space<smem>>
    %1414 = vector.broadcast %1413 : f32 to vector<8x17xf32>
    %1415 = arith.mulf %1414, %1388 : vector<8x17xf32>
    %1416 = arith.addf %1382, %1415 : vector<8x17xf32>
    %c662 = arith.constant 662 : index
    %1417 = memref.load %arg2[%c662] : memref<720xf32, #tpu.memory_space<smem>>
    %1418 = vector.broadcast %1417 : f32 to vector<8x17xf32>
    %1419 = arith.mulf %1418, %1388 : vector<8x17xf32>
    %1420 = arith.addf %1386, %1419 : vector<8x17xf32>
    %c1_166 = arith.constant 1 : index
    %c0_167 = arith.constant 0 : index
    %c0_168 = arith.constant 0 : index
    %1421 = vector.load %arg6[%c1_166, %c0_167, %c0_168] : memref<8x8x128xf32, #tpu.memory_space<vmem>>, vector<1x8x17xf32>
    %1422 = vector.shape_cast %1421 : vector<1x8x17xf32> to vector<8x17xf32>
    %c271 = arith.constant 271 : index
    %1423 = memref.load %arg2[%c271] : memref<720xf32, #tpu.memory_space<smem>>
    %1424 = vector.broadcast %1423 : f32 to vector<8x17xf32>
    %1425 = arith.mulf %1424, %1422 : vector<8x17xf32>
    %1426 = arith.addf %1392, %1425 : vector<8x17xf32>
    %c327 = arith.constant 327 : index
    %1427 = memref.load %arg2[%c327] : memref<720xf32, #tpu.memory_space<smem>>
    %1428 = vector.broadcast %1427 : f32 to vector<8x17xf32>
    %1429 = arith.mulf %1428, %1422 : vector<8x17xf32>
    %1430 = arith.addf %1396, %1429 : vector<8x17xf32>
    %c383 = arith.constant 383 : index
    %1431 = memref.load %arg2[%c383] : memref<720xf32, #tpu.memory_space<smem>>
    %1432 = vector.broadcast %1431 : f32 to vector<8x17xf32>
    %1433 = arith.mulf %1432, %1422 : vector<8x17xf32>
    %1434 = arith.addf %1400, %1433 : vector<8x17xf32>
    %c439 = arith.constant 439 : index
    %1435 = memref.load %arg2[%c439] : memref<720xf32, #tpu.memory_space<smem>>
    %1436 = vector.broadcast %1435 : f32 to vector<8x17xf32>
    %1437 = arith.mulf %1436, %1422 : vector<8x17xf32>
    %1438 = arith.addf %1404, %1437 : vector<8x17xf32>
    %c495 = arith.constant 495 : index
    %1439 = memref.load %arg2[%c495] : memref<720xf32, #tpu.memory_space<smem>>
    %1440 = vector.broadcast %1439 : f32 to vector<8x17xf32>
    %1441 = arith.mulf %1440, %1422 : vector<8x17xf32>
    %1442 = arith.addf %1408, %1441 : vector<8x17xf32>
    %c551 = arith.constant 551 : index
    %1443 = memref.load %arg2[%c551] : memref<720xf32, #tpu.memory_space<smem>>
    %1444 = vector.broadcast %1443 : f32 to vector<8x17xf32>
    %1445 = arith.mulf %1444, %1422 : vector<8x17xf32>
    %1446 = arith.addf %1412, %1445 : vector<8x17xf32>
    %c607 = arith.constant 607 : index
    %1447 = memref.load %arg2[%c607] : memref<720xf32, #tpu.memory_space<smem>>
    %1448 = vector.broadcast %1447 : f32 to vector<8x17xf32>
    %1449 = arith.mulf %1448, %1422 : vector<8x17xf32>
    %1450 = arith.addf %1416, %1449 : vector<8x17xf32>
    %c663 = arith.constant 663 : index
    %1451 = memref.load %arg2[%c663] : memref<720xf32, #tpu.memory_space<smem>>
    %1452 = vector.broadcast %1451 : f32 to vector<8x17xf32>
    %1453 = arith.mulf %1452, %1422 : vector<8x17xf32>
    %1454 = arith.addf %1420, %1453 : vector<8x17xf32>
    %c1_169 = arith.constant 1 : index
    %c0_170 = arith.constant 0 : index
    %c4_171 = arith.constant 4 : index
    %1455 = vector.load %arg6[%c1_169, %c0_170, %c4_171] : memref<8x8x128xf32, #tpu.memory_space<vmem>>, vector<1x8x17xf32>
    %1456 = vector.shape_cast %1455 : vector<1x8x17xf32> to vector<8x17xf32>
    %c272 = arith.constant 272 : index
    %1457 = memref.load %arg2[%c272] : memref<720xf32, #tpu.memory_space<smem>>
    %1458 = vector.broadcast %1457 : f32 to vector<8x17xf32>
    %1459 = arith.mulf %1458, %1456 : vector<8x17xf32>
    %1460 = arith.addf %1426, %1459 : vector<8x17xf32>
    %c328 = arith.constant 328 : index
    %1461 = memref.load %arg2[%c328] : memref<720xf32, #tpu.memory_space<smem>>
    %1462 = vector.broadcast %1461 : f32 to vector<8x17xf32>
    %1463 = arith.mulf %1462, %1456 : vector<8x17xf32>
    %1464 = arith.addf %1430, %1463 : vector<8x17xf32>
    %c384 = arith.constant 384 : index
    %1465 = memref.load %arg2[%c384] : memref<720xf32, #tpu.memory_space<smem>>
    %1466 = vector.broadcast %1465 : f32 to vector<8x17xf32>
    %1467 = arith.mulf %1466, %1456 : vector<8x17xf32>
    %1468 = arith.addf %1434, %1467 : vector<8x17xf32>
    %c440 = arith.constant 440 : index
    %1469 = memref.load %arg2[%c440] : memref<720xf32, #tpu.memory_space<smem>>
    %1470 = vector.broadcast %1469 : f32 to vector<8x17xf32>
    %1471 = arith.mulf %1470, %1456 : vector<8x17xf32>
    %1472 = arith.addf %1438, %1471 : vector<8x17xf32>
    %c496 = arith.constant 496 : index
    %1473 = memref.load %arg2[%c496] : memref<720xf32, #tpu.memory_space<smem>>
    %1474 = vector.broadcast %1473 : f32 to vector<8x17xf32>
    %1475 = arith.mulf %1474, %1456 : vector<8x17xf32>
    %1476 = arith.addf %1442, %1475 : vector<8x17xf32>
    %c552 = arith.constant 552 : index
    %1477 = memref.load %arg2[%c552] : memref<720xf32, #tpu.memory_space<smem>>
    %1478 = vector.broadcast %1477 : f32 to vector<8x17xf32>
    %1479 = arith.mulf %1478, %1456 : vector<8x17xf32>
    %1480 = arith.addf %1446, %1479 : vector<8x17xf32>
    %c608 = arith.constant 608 : index
    %1481 = memref.load %arg2[%c608] : memref<720xf32, #tpu.memory_space<smem>>
    %1482 = vector.broadcast %1481 : f32 to vector<8x17xf32>
    %1483 = arith.mulf %1482, %1456 : vector<8x17xf32>
    %1484 = arith.addf %1450, %1483 : vector<8x17xf32>
    %c664 = arith.constant 664 : index
    %1485 = memref.load %arg2[%c664] : memref<720xf32, #tpu.memory_space<smem>>
    %1486 = vector.broadcast %1485 : f32 to vector<8x17xf32>
    %1487 = arith.mulf %1486, %1456 : vector<8x17xf32>
    %1488 = arith.addf %1454, %1487 : vector<8x17xf32>
    %c1_172 = arith.constant 1 : index
    %c0_173 = arith.constant 0 : index
    %c8_174 = arith.constant 8 : index
    %1489 = vector.load %arg6[%c1_172, %c0_173, %c8_174] : memref<8x8x128xf32, #tpu.memory_space<vmem>>, vector<1x8x17xf32>
    %1490 = vector.shape_cast %1489 : vector<1x8x17xf32> to vector<8x17xf32>
    %c273 = arith.constant 273 : index
    %1491 = memref.load %arg2[%c273] : memref<720xf32, #tpu.memory_space<smem>>
    %1492 = vector.broadcast %1491 : f32 to vector<8x17xf32>
    %1493 = arith.mulf %1492, %1490 : vector<8x17xf32>
    %1494 = arith.addf %1460, %1493 : vector<8x17xf32>
    %c329 = arith.constant 329 : index
    %1495 = memref.load %arg2[%c329] : memref<720xf32, #tpu.memory_space<smem>>
    %1496 = vector.broadcast %1495 : f32 to vector<8x17xf32>
    %1497 = arith.mulf %1496, %1490 : vector<8x17xf32>
    %1498 = arith.addf %1464, %1497 : vector<8x17xf32>
    %c385 = arith.constant 385 : index
    %1499 = memref.load %arg2[%c385] : memref<720xf32, #tpu.memory_space<smem>>
    %1500 = vector.broadcast %1499 : f32 to vector<8x17xf32>
    %1501 = arith.mulf %1500, %1490 : vector<8x17xf32>
    %1502 = arith.addf %1468, %1501 : vector<8x17xf32>
    %c441 = arith.constant 441 : index
    %1503 = memref.load %arg2[%c441] : memref<720xf32, #tpu.memory_space<smem>>
    %1504 = vector.broadcast %1503 : f32 to vector<8x17xf32>
    %1505 = arith.mulf %1504, %1490 : vector<8x17xf32>
    %1506 = arith.addf %1472, %1505 : vector<8x17xf32>
    %c497 = arith.constant 497 : index
    %1507 = memref.load %arg2[%c497] : memref<720xf32, #tpu.memory_space<smem>>
    %1508 = vector.broadcast %1507 : f32 to vector<8x17xf32>
    %1509 = arith.mulf %1508, %1490 : vector<8x17xf32>
    %1510 = arith.addf %1476, %1509 : vector<8x17xf32>
    %c553 = arith.constant 553 : index
    %1511 = memref.load %arg2[%c553] : memref<720xf32, #tpu.memory_space<smem>>
    %1512 = vector.broadcast %1511 : f32 to vector<8x17xf32>
    %1513 = arith.mulf %1512, %1490 : vector<8x17xf32>
    %1514 = arith.addf %1480, %1513 : vector<8x17xf32>
    %c609 = arith.constant 609 : index
    %1515 = memref.load %arg2[%c609] : memref<720xf32, #tpu.memory_space<smem>>
    %1516 = vector.broadcast %1515 : f32 to vector<8x17xf32>
    %1517 = arith.mulf %1516, %1490 : vector<8x17xf32>
    %1518 = arith.addf %1484, %1517 : vector<8x17xf32>
    %c665 = arith.constant 665 : index
    %1519 = memref.load %arg2[%c665] : memref<720xf32, #tpu.memory_space<smem>>
    %1520 = vector.broadcast %1519 : f32 to vector<8x17xf32>
    %1521 = arith.mulf %1520, %1490 : vector<8x17xf32>
    %1522 = arith.addf %1488, %1521 : vector<8x17xf32>
    %c1_175 = arith.constant 1 : index
    %c0_176 = arith.constant 0 : index
    %c12_177 = arith.constant 12 : index
    %1523 = vector.load %arg6[%c1_175, %c0_176, %c12_177] : memref<8x8x128xf32, #tpu.memory_space<vmem>>, vector<1x8x17xf32>
    %1524 = vector.shape_cast %1523 : vector<1x8x17xf32> to vector<8x17xf32>
    %c274 = arith.constant 274 : index
    %1525 = memref.load %arg2[%c274] : memref<720xf32, #tpu.memory_space<smem>>
    %1526 = vector.broadcast %1525 : f32 to vector<8x17xf32>
    %1527 = arith.mulf %1526, %1524 : vector<8x17xf32>
    %1528 = arith.addf %1494, %1527 : vector<8x17xf32>
    %c330 = arith.constant 330 : index
    %1529 = memref.load %arg2[%c330] : memref<720xf32, #tpu.memory_space<smem>>
    %1530 = vector.broadcast %1529 : f32 to vector<8x17xf32>
    %1531 = arith.mulf %1530, %1524 : vector<8x17xf32>
    %1532 = arith.addf %1498, %1531 : vector<8x17xf32>
    %c386 = arith.constant 386 : index
    %1533 = memref.load %arg2[%c386] : memref<720xf32, #tpu.memory_space<smem>>
    %1534 = vector.broadcast %1533 : f32 to vector<8x17xf32>
    %1535 = arith.mulf %1534, %1524 : vector<8x17xf32>
    %1536 = arith.addf %1502, %1535 : vector<8x17xf32>
    %c442 = arith.constant 442 : index
    %1537 = memref.load %arg2[%c442] : memref<720xf32, #tpu.memory_space<smem>>
    %1538 = vector.broadcast %1537 : f32 to vector<8x17xf32>
    %1539 = arith.mulf %1538, %1524 : vector<8x17xf32>
    %1540 = arith.addf %1506, %1539 : vector<8x17xf32>
    %c498 = arith.constant 498 : index
    %1541 = memref.load %arg2[%c498] : memref<720xf32, #tpu.memory_space<smem>>
    %1542 = vector.broadcast %1541 : f32 to vector<8x17xf32>
    %1543 = arith.mulf %1542, %1524 : vector<8x17xf32>
    %1544 = arith.addf %1510, %1543 : vector<8x17xf32>
    %c554 = arith.constant 554 : index
    %1545 = memref.load %arg2[%c554] : memref<720xf32, #tpu.memory_space<smem>>
    %1546 = vector.broadcast %1545 : f32 to vector<8x17xf32>
    %1547 = arith.mulf %1546, %1524 : vector<8x17xf32>
    %1548 = arith.addf %1514, %1547 : vector<8x17xf32>
    %c610 = arith.constant 610 : index
    %1549 = memref.load %arg2[%c610] : memref<720xf32, #tpu.memory_space<smem>>
    %1550 = vector.broadcast %1549 : f32 to vector<8x17xf32>
    %1551 = arith.mulf %1550, %1524 : vector<8x17xf32>
    %1552 = arith.addf %1518, %1551 : vector<8x17xf32>
    %c666 = arith.constant 666 : index
    %1553 = memref.load %arg2[%c666] : memref<720xf32, #tpu.memory_space<smem>>
    %1554 = vector.broadcast %1553 : f32 to vector<8x17xf32>
    %1555 = arith.mulf %1554, %1524 : vector<8x17xf32>
    %1556 = arith.addf %1522, %1555 : vector<8x17xf32>
    %c1_178 = arith.constant 1 : index
    %c0_179 = arith.constant 0 : index
    %c16_180 = arith.constant 16 : index
    %1557 = vector.load %arg6[%c1_178, %c0_179, %c16_180] : memref<8x8x128xf32, #tpu.memory_space<vmem>>, vector<1x8x17xf32>
    %1558 = vector.shape_cast %1557 : vector<1x8x17xf32> to vector<8x17xf32>
    %c275 = arith.constant 275 : index
    %1559 = memref.load %arg2[%c275] : memref<720xf32, #tpu.memory_space<smem>>
    %1560 = vector.broadcast %1559 : f32 to vector<8x17xf32>
    %1561 = arith.mulf %1560, %1558 : vector<8x17xf32>
    %1562 = arith.addf %1528, %1561 : vector<8x17xf32>
    %c331 = arith.constant 331 : index
    %1563 = memref.load %arg2[%c331] : memref<720xf32, #tpu.memory_space<smem>>
    %1564 = vector.broadcast %1563 : f32 to vector<8x17xf32>
    %1565 = arith.mulf %1564, %1558 : vector<8x17xf32>
    %1566 = arith.addf %1532, %1565 : vector<8x17xf32>
    %c387 = arith.constant 387 : index
    %1567 = memref.load %arg2[%c387] : memref<720xf32, #tpu.memory_space<smem>>
    %1568 = vector.broadcast %1567 : f32 to vector<8x17xf32>
    %1569 = arith.mulf %1568, %1558 : vector<8x17xf32>
    %1570 = arith.addf %1536, %1569 : vector<8x17xf32>
    %c443 = arith.constant 443 : index
    %1571 = memref.load %arg2[%c443] : memref<720xf32, #tpu.memory_space<smem>>
    %1572 = vector.broadcast %1571 : f32 to vector<8x17xf32>
    %1573 = arith.mulf %1572, %1558 : vector<8x17xf32>
    %1574 = arith.addf %1540, %1573 : vector<8x17xf32>
    %c499 = arith.constant 499 : index
    %1575 = memref.load %arg2[%c499] : memref<720xf32, #tpu.memory_space<smem>>
    %1576 = vector.broadcast %1575 : f32 to vector<8x17xf32>
    %1577 = arith.mulf %1576, %1558 : vector<8x17xf32>
    %1578 = arith.addf %1544, %1577 : vector<8x17xf32>
    %c555 = arith.constant 555 : index
    %1579 = memref.load %arg2[%c555] : memref<720xf32, #tpu.memory_space<smem>>
    %1580 = vector.broadcast %1579 : f32 to vector<8x17xf32>
    %1581 = arith.mulf %1580, %1558 : vector<8x17xf32>
    %1582 = arith.addf %1548, %1581 : vector<8x17xf32>
    %c611 = arith.constant 611 : index
    %1583 = memref.load %arg2[%c611] : memref<720xf32, #tpu.memory_space<smem>>
    %1584 = vector.broadcast %1583 : f32 to vector<8x17xf32>
    %1585 = arith.mulf %1584, %1558 : vector<8x17xf32>
    %1586 = arith.addf %1552, %1585 : vector<8x17xf32>
    %c667 = arith.constant 667 : index
    %1587 = memref.load %arg2[%c667] : memref<720xf32, #tpu.memory_space<smem>>
    %1588 = vector.broadcast %1587 : f32 to vector<8x17xf32>
    %1589 = arith.mulf %1588, %1558 : vector<8x17xf32>
    %1590 = arith.addf %1556, %1589 : vector<8x17xf32>
    %c1_181 = arith.constant 1 : index
    %c0_182 = arith.constant 0 : index
    %c20_183 = arith.constant 20 : index
    %1591 = vector.load %arg6[%c1_181, %c0_182, %c20_183] : memref<8x8x128xf32, #tpu.memory_space<vmem>>, vector<1x8x17xf32>
    %1592 = vector.shape_cast %1591 : vector<1x8x17xf32> to vector<8x17xf32>
    %c276 = arith.constant 276 : index
    %1593 = memref.load %arg2[%c276] : memref<720xf32, #tpu.memory_space<smem>>
    %1594 = vector.broadcast %1593 : f32 to vector<8x17xf32>
    %1595 = arith.mulf %1594, %1592 : vector<8x17xf32>
    %1596 = arith.addf %1562, %1595 : vector<8x17xf32>
    %c332 = arith.constant 332 : index
    %1597 = memref.load %arg2[%c332] : memref<720xf32, #tpu.memory_space<smem>>
    %1598 = vector.broadcast %1597 : f32 to vector<8x17xf32>
    %1599 = arith.mulf %1598, %1592 : vector<8x17xf32>
    %1600 = arith.addf %1566, %1599 : vector<8x17xf32>
    %c388 = arith.constant 388 : index
    %1601 = memref.load %arg2[%c388] : memref<720xf32, #tpu.memory_space<smem>>
    %1602 = vector.broadcast %1601 : f32 to vector<8x17xf32>
    %1603 = arith.mulf %1602, %1592 : vector<8x17xf32>
    %1604 = arith.addf %1570, %1603 : vector<8x17xf32>
    %c444 = arith.constant 444 : index
    %1605 = memref.load %arg2[%c444] : memref<720xf32, #tpu.memory_space<smem>>
    %1606 = vector.broadcast %1605 : f32 to vector<8x17xf32>
    %1607 = arith.mulf %1606, %1592 : vector<8x17xf32>
    %1608 = arith.addf %1574, %1607 : vector<8x17xf32>
    %c500 = arith.constant 500 : index
    %1609 = memref.load %arg2[%c500] : memref<720xf32, #tpu.memory_space<smem>>
    %1610 = vector.broadcast %1609 : f32 to vector<8x17xf32>
    %1611 = arith.mulf %1610, %1592 : vector<8x17xf32>
    %1612 = arith.addf %1578, %1611 : vector<8x17xf32>
    %c556 = arith.constant 556 : index
    %1613 = memref.load %arg2[%c556] : memref<720xf32, #tpu.memory_space<smem>>
    %1614 = vector.broadcast %1613 : f32 to vector<8x17xf32>
    %1615 = arith.mulf %1614, %1592 : vector<8x17xf32>
    %1616 = arith.addf %1582, %1615 : vector<8x17xf32>
    %c612 = arith.constant 612 : index
    %1617 = memref.load %arg2[%c612] : memref<720xf32, #tpu.memory_space<smem>>
    %1618 = vector.broadcast %1617 : f32 to vector<8x17xf32>
    %1619 = arith.mulf %1618, %1592 : vector<8x17xf32>
    %1620 = arith.addf %1586, %1619 : vector<8x17xf32>
    %c668 = arith.constant 668 : index
    %1621 = memref.load %arg2[%c668] : memref<720xf32, #tpu.memory_space<smem>>
    %1622 = vector.broadcast %1621 : f32 to vector<8x17xf32>
    %1623 = arith.mulf %1622, %1592 : vector<8x17xf32>
    %1624 = arith.addf %1590, %1623 : vector<8x17xf32>
    %c1_184 = arith.constant 1 : index
    %c0_185 = arith.constant 0 : index
    %c24_186 = arith.constant 24 : index
    %1625 = vector.load %arg6[%c1_184, %c0_185, %c24_186] : memref<8x8x128xf32, #tpu.memory_space<vmem>>, vector<1x8x17xf32>
    %1626 = vector.shape_cast %1625 : vector<1x8x17xf32> to vector<8x17xf32>
    %c277 = arith.constant 277 : index
    %1627 = memref.load %arg2[%c277] : memref<720xf32, #tpu.memory_space<smem>>
    %1628 = vector.broadcast %1627 : f32 to vector<8x17xf32>
    %1629 = arith.mulf %1628, %1626 : vector<8x17xf32>
    %1630 = arith.addf %1596, %1629 : vector<8x17xf32>
    %c333 = arith.constant 333 : index
    %1631 = memref.load %arg2[%c333] : memref<720xf32, #tpu.memory_space<smem>>
    %1632 = vector.broadcast %1631 : f32 to vector<8x17xf32>
    %1633 = arith.mulf %1632, %1626 : vector<8x17xf32>
    %1634 = arith.addf %1600, %1633 : vector<8x17xf32>
    %c389 = arith.constant 389 : index
    %1635 = memref.load %arg2[%c389] : memref<720xf32, #tpu.memory_space<smem>>
    %1636 = vector.broadcast %1635 : f32 to vector<8x17xf32>
    %1637 = arith.mulf %1636, %1626 : vector<8x17xf32>
    %1638 = arith.addf %1604, %1637 : vector<8x17xf32>
    %c445 = arith.constant 445 : index
    %1639 = memref.load %arg2[%c445] : memref<720xf32, #tpu.memory_space<smem>>
    %1640 = vector.broadcast %1639 : f32 to vector<8x17xf32>
    %1641 = arith.mulf %1640, %1626 : vector<8x17xf32>
    %1642 = arith.addf %1608, %1641 : vector<8x17xf32>
    %c501 = arith.constant 501 : index
    %1643 = memref.load %arg2[%c501] : memref<720xf32, #tpu.memory_space<smem>>
    %1644 = vector.broadcast %1643 : f32 to vector<8x17xf32>
    %1645 = arith.mulf %1644, %1626 : vector<8x17xf32>
    %1646 = arith.addf %1612, %1645 : vector<8x17xf32>
    %c557 = arith.constant 557 : index
    %1647 = memref.load %arg2[%c557] : memref<720xf32, #tpu.memory_space<smem>>
    %1648 = vector.broadcast %1647 : f32 to vector<8x17xf32>
    %1649 = arith.mulf %1648, %1626 : vector<8x17xf32>
    %1650 = arith.addf %1616, %1649 : vector<8x17xf32>
    %c613 = arith.constant 613 : index
    %1651 = memref.load %arg2[%c613] : memref<720xf32, #tpu.memory_space<smem>>
    %1652 = vector.broadcast %1651 : f32 to vector<8x17xf32>
    %1653 = arith.mulf %1652, %1626 : vector<8x17xf32>
    %1654 = arith.addf %1620, %1653 : vector<8x17xf32>
    %c669 = arith.constant 669 : index
    %1655 = memref.load %arg2[%c669] : memref<720xf32, #tpu.memory_space<smem>>
    %1656 = vector.broadcast %1655 : f32 to vector<8x17xf32>
    %1657 = arith.mulf %1656, %1626 : vector<8x17xf32>
    %1658 = arith.addf %1624, %1657 : vector<8x17xf32>
    %c2_187 = arith.constant 2 : index
    %c0_188 = arith.constant 0 : index
    %c0_189 = arith.constant 0 : index
    %1659 = vector.load %arg6[%c2_187, %c0_188, %c0_189] : memref<8x8x128xf32, #tpu.memory_space<vmem>>, vector<1x8x17xf32>
    %1660 = vector.shape_cast %1659 : vector<1x8x17xf32> to vector<8x17xf32>
    %c278 = arith.constant 278 : index
    %1661 = memref.load %arg2[%c278] : memref<720xf32, #tpu.memory_space<smem>>
    %1662 = vector.broadcast %1661 : f32 to vector<8x17xf32>
    %1663 = arith.mulf %1662, %1660 : vector<8x17xf32>
    %1664 = arith.addf %1630, %1663 : vector<8x17xf32>
    %c334 = arith.constant 334 : index
    %1665 = memref.load %arg2[%c334] : memref<720xf32, #tpu.memory_space<smem>>
    %1666 = vector.broadcast %1665 : f32 to vector<8x17xf32>
    %1667 = arith.mulf %1666, %1660 : vector<8x17xf32>
    %1668 = arith.addf %1634, %1667 : vector<8x17xf32>
    %c390 = arith.constant 390 : index
    %1669 = memref.load %arg2[%c390] : memref<720xf32, #tpu.memory_space<smem>>
    %1670 = vector.broadcast %1669 : f32 to vector<8x17xf32>
    %1671 = arith.mulf %1670, %1660 : vector<8x17xf32>
    %1672 = arith.addf %1638, %1671 : vector<8x17xf32>
    %c446 = arith.constant 446 : index
    %1673 = memref.load %arg2[%c446] : memref<720xf32, #tpu.memory_space<smem>>
    %1674 = vector.broadcast %1673 : f32 to vector<8x17xf32>
    %1675 = arith.mulf %1674, %1660 : vector<8x17xf32>
    %1676 = arith.addf %1642, %1675 : vector<8x17xf32>
    %c502 = arith.constant 502 : index
    %1677 = memref.load %arg2[%c502] : memref<720xf32, #tpu.memory_space<smem>>
    %1678 = vector.broadcast %1677 : f32 to vector<8x17xf32>
    %1679 = arith.mulf %1678, %1660 : vector<8x17xf32>
    %1680 = arith.addf %1646, %1679 : vector<8x17xf32>
    %c558 = arith.constant 558 : index
    %1681 = memref.load %arg2[%c558] : memref<720xf32, #tpu.memory_space<smem>>
    %1682 = vector.broadcast %1681 : f32 to vector<8x17xf32>
    %1683 = arith.mulf %1682, %1660 : vector<8x17xf32>
    %1684 = arith.addf %1650, %1683 : vector<8x17xf32>
    %c614 = arith.constant 614 : index
    %1685 = memref.load %arg2[%c614] : memref<720xf32, #tpu.memory_space<smem>>
    %1686 = vector.broadcast %1685 : f32 to vector<8x17xf32>
    %1687 = arith.mulf %1686, %1660 : vector<8x17xf32>
    %1688 = arith.addf %1654, %1687 : vector<8x17xf32>
    %c670 = arith.constant 670 : index
    %1689 = memref.load %arg2[%c670] : memref<720xf32, #tpu.memory_space<smem>>
    %1690 = vector.broadcast %1689 : f32 to vector<8x17xf32>
    %1691 = arith.mulf %1690, %1660 : vector<8x17xf32>
    %1692 = arith.addf %1658, %1691 : vector<8x17xf32>
    %c2_190 = arith.constant 2 : index
    %c0_191 = arith.constant 0 : index
    %c4_192 = arith.constant 4 : index
    %1693 = vector.load %arg6[%c2_190, %c0_191, %c4_192] : memref<8x8x128xf32, #tpu.memory_space<vmem>>, vector<1x8x17xf32>
    %1694 = vector.shape_cast %1693 : vector<1x8x17xf32> to vector<8x17xf32>
    %c279 = arith.constant 279 : index
    %1695 = memref.load %arg2[%c279] : memref<720xf32, #tpu.memory_space<smem>>
    %1696 = vector.broadcast %1695 : f32 to vector<8x17xf32>
    %1697 = arith.mulf %1696, %1694 : vector<8x17xf32>
    %1698 = arith.addf %1664, %1697 : vector<8x17xf32>
    %c335 = arith.constant 335 : index
    %1699 = memref.load %arg2[%c335] : memref<720xf32, #tpu.memory_space<smem>>
    %1700 = vector.broadcast %1699 : f32 to vector<8x17xf32>
    %1701 = arith.mulf %1700, %1694 : vector<8x17xf32>
    %1702 = arith.addf %1668, %1701 : vector<8x17xf32>
    %c391 = arith.constant 391 : index
    %1703 = memref.load %arg2[%c391] : memref<720xf32, #tpu.memory_space<smem>>
    %1704 = vector.broadcast %1703 : f32 to vector<8x17xf32>
    %1705 = arith.mulf %1704, %1694 : vector<8x17xf32>
    %1706 = arith.addf %1672, %1705 : vector<8x17xf32>
    %c447 = arith.constant 447 : index
    %1707 = memref.load %arg2[%c447] : memref<720xf32, #tpu.memory_space<smem>>
    %1708 = vector.broadcast %1707 : f32 to vector<8x17xf32>
    %1709 = arith.mulf %1708, %1694 : vector<8x17xf32>
    %1710 = arith.addf %1676, %1709 : vector<8x17xf32>
    %c503 = arith.constant 503 : index
    %1711 = memref.load %arg2[%c503] : memref<720xf32, #tpu.memory_space<smem>>
    %1712 = vector.broadcast %1711 : f32 to vector<8x17xf32>
    %1713 = arith.mulf %1712, %1694 : vector<8x17xf32>
    %1714 = arith.addf %1680, %1713 : vector<8x17xf32>
    %c559 = arith.constant 559 : index
    %1715 = memref.load %arg2[%c559] : memref<720xf32, #tpu.memory_space<smem>>
    %1716 = vector.broadcast %1715 : f32 to vector<8x17xf32>
    %1717 = arith.mulf %1716, %1694 : vector<8x17xf32>
    %1718 = arith.addf %1684, %1717 : vector<8x17xf32>
    %c615 = arith.constant 615 : index
    %1719 = memref.load %arg2[%c615] : memref<720xf32, #tpu.memory_space<smem>>
    %1720 = vector.broadcast %1719 : f32 to vector<8x17xf32>
    %1721 = arith.mulf %1720, %1694 : vector<8x17xf32>
    %1722 = arith.addf %1688, %1721 : vector<8x17xf32>
    %c671 = arith.constant 671 : index
    %1723 = memref.load %arg2[%c671] : memref<720xf32, #tpu.memory_space<smem>>
    %1724 = vector.broadcast %1723 : f32 to vector<8x17xf32>
    %1725 = arith.mulf %1724, %1694 : vector<8x17xf32>
    %1726 = arith.addf %1692, %1725 : vector<8x17xf32>
    %c2_193 = arith.constant 2 : index
    %c0_194 = arith.constant 0 : index
    %c8_195 = arith.constant 8 : index
    %1727 = vector.load %arg6[%c2_193, %c0_194, %c8_195] : memref<8x8x128xf32, #tpu.memory_space<vmem>>, vector<1x8x17xf32>
    %1728 = vector.shape_cast %1727 : vector<1x8x17xf32> to vector<8x17xf32>
    %c280 = arith.constant 280 : index
    %1729 = memref.load %arg2[%c280] : memref<720xf32, #tpu.memory_space<smem>>
    %1730 = vector.broadcast %1729 : f32 to vector<8x17xf32>
    %1731 = arith.mulf %1730, %1728 : vector<8x17xf32>
    %1732 = arith.addf %1698, %1731 : vector<8x17xf32>
    %c336 = arith.constant 336 : index
    %1733 = memref.load %arg2[%c336] : memref<720xf32, #tpu.memory_space<smem>>
    %1734 = vector.broadcast %1733 : f32 to vector<8x17xf32>
    %1735 = arith.mulf %1734, %1728 : vector<8x17xf32>
    %1736 = arith.addf %1702, %1735 : vector<8x17xf32>
    %c392 = arith.constant 392 : index
    %1737 = memref.load %arg2[%c392] : memref<720xf32, #tpu.memory_space<smem>>
    %1738 = vector.broadcast %1737 : f32 to vector<8x17xf32>
    %1739 = arith.mulf %1738, %1728 : vector<8x17xf32>
    %1740 = arith.addf %1706, %1739 : vector<8x17xf32>
    %c448 = arith.constant 448 : index
    %1741 = memref.load %arg2[%c448] : memref<720xf32, #tpu.memory_space<smem>>
    %1742 = vector.broadcast %1741 : f32 to vector<8x17xf32>
    %1743 = arith.mulf %1742, %1728 : vector<8x17xf32>
    %1744 = arith.addf %1710, %1743 : vector<8x17xf32>
    %c504 = arith.constant 504 : index
    %1745 = memref.load %arg2[%c504] : memref<720xf32, #tpu.memory_space<smem>>
    %1746 = vector.broadcast %1745 : f32 to vector<8x17xf32>
    %1747 = arith.mulf %1746, %1728 : vector<8x17xf32>
    %1748 = arith.addf %1714, %1747 : vector<8x17xf32>
    %c560 = arith.constant 560 : index
    %1749 = memref.load %arg2[%c560] : memref<720xf32, #tpu.memory_space<smem>>
    %1750 = vector.broadcast %1749 : f32 to vector<8x17xf32>
    %1751 = arith.mulf %1750, %1728 : vector<8x17xf32>
    %1752 = arith.addf %1718, %1751 : vector<8x17xf32>
    %c616 = arith.constant 616 : index
    %1753 = memref.load %arg2[%c616] : memref<720xf32, #tpu.memory_space<smem>>
    %1754 = vector.broadcast %1753 : f32 to vector<8x17xf32>
    %1755 = arith.mulf %1754, %1728 : vector<8x17xf32>
    %1756 = arith.addf %1722, %1755 : vector<8x17xf32>
    %c672 = arith.constant 672 : index
    %1757 = memref.load %arg2[%c672] : memref<720xf32, #tpu.memory_space<smem>>
    %1758 = vector.broadcast %1757 : f32 to vector<8x17xf32>
    %1759 = arith.mulf %1758, %1728 : vector<8x17xf32>
    %1760 = arith.addf %1726, %1759 : vector<8x17xf32>
    %c2_196 = arith.constant 2 : index
    %c0_197 = arith.constant 0 : index
    %c12_198 = arith.constant 12 : index
    %1761 = vector.load %arg6[%c2_196, %c0_197, %c12_198] : memref<8x8x128xf32, #tpu.memory_space<vmem>>, vector<1x8x17xf32>
    %1762 = vector.shape_cast %1761 : vector<1x8x17xf32> to vector<8x17xf32>
    %c281 = arith.constant 281 : index
    %1763 = memref.load %arg2[%c281] : memref<720xf32, #tpu.memory_space<smem>>
    %1764 = vector.broadcast %1763 : f32 to vector<8x17xf32>
    %1765 = arith.mulf %1764, %1762 : vector<8x17xf32>
    %1766 = arith.addf %1732, %1765 : vector<8x17xf32>
    %c337 = arith.constant 337 : index
    %1767 = memref.load %arg2[%c337] : memref<720xf32, #tpu.memory_space<smem>>
    %1768 = vector.broadcast %1767 : f32 to vector<8x17xf32>
    %1769 = arith.mulf %1768, %1762 : vector<8x17xf32>
    %1770 = arith.addf %1736, %1769 : vector<8x17xf32>
    %c393 = arith.constant 393 : index
    %1771 = memref.load %arg2[%c393] : memref<720xf32, #tpu.memory_space<smem>>
    %1772 = vector.broadcast %1771 : f32 to vector<8x17xf32>
    %1773 = arith.mulf %1772, %1762 : vector<8x17xf32>
    %1774 = arith.addf %1740, %1773 : vector<8x17xf32>
    %c449 = arith.constant 449 : index
    %1775 = memref.load %arg2[%c449] : memref<720xf32, #tpu.memory_space<smem>>
    %1776 = vector.broadcast %1775 : f32 to vector<8x17xf32>
    %1777 = arith.mulf %1776, %1762 : vector<8x17xf32>
    %1778 = arith.addf %1744, %1777 : vector<8x17xf32>
    %c505 = arith.constant 505 : index
    %1779 = memref.load %arg2[%c505] : memref<720xf32, #tpu.memory_space<smem>>
    %1780 = vector.broadcast %1779 : f32 to vector<8x17xf32>
    %1781 = arith.mulf %1780, %1762 : vector<8x17xf32>
    %1782 = arith.addf %1748, %1781 : vector<8x17xf32>
    %c561 = arith.constant 561 : index
    %1783 = memref.load %arg2[%c561] : memref<720xf32, #tpu.memory_space<smem>>
    %1784 = vector.broadcast %1783 : f32 to vector<8x17xf32>
    %1785 = arith.mulf %1784, %1762 : vector<8x17xf32>
    %1786 = arith.addf %1752, %1785 : vector<8x17xf32>
    %c617 = arith.constant 617 : index
    %1787 = memref.load %arg2[%c617] : memref<720xf32, #tpu.memory_space<smem>>
    %1788 = vector.broadcast %1787 : f32 to vector<8x17xf32>
    %1789 = arith.mulf %1788, %1762 : vector<8x17xf32>
    %1790 = arith.addf %1756, %1789 : vector<8x17xf32>
    %c673 = arith.constant 673 : index
    %1791 = memref.load %arg2[%c673] : memref<720xf32, #tpu.memory_space<smem>>
    %1792 = vector.broadcast %1791 : f32 to vector<8x17xf32>
    %1793 = arith.mulf %1792, %1762 : vector<8x17xf32>
    %1794 = arith.addf %1760, %1793 : vector<8x17xf32>
    %c2_199 = arith.constant 2 : index
    %c0_200 = arith.constant 0 : index
    %c16_201 = arith.constant 16 : index
    %1795 = vector.load %arg6[%c2_199, %c0_200, %c16_201] : memref<8x8x128xf32, #tpu.memory_space<vmem>>, vector<1x8x17xf32>
    %1796 = vector.shape_cast %1795 : vector<1x8x17xf32> to vector<8x17xf32>
    %c282 = arith.constant 282 : index
    %1797 = memref.load %arg2[%c282] : memref<720xf32, #tpu.memory_space<smem>>
    %1798 = vector.broadcast %1797 : f32 to vector<8x17xf32>
    %1799 = arith.mulf %1798, %1796 : vector<8x17xf32>
    %1800 = arith.addf %1766, %1799 : vector<8x17xf32>
    %c338 = arith.constant 338 : index
    %1801 = memref.load %arg2[%c338] : memref<720xf32, #tpu.memory_space<smem>>
    %1802 = vector.broadcast %1801 : f32 to vector<8x17xf32>
    %1803 = arith.mulf %1802, %1796 : vector<8x17xf32>
    %1804 = arith.addf %1770, %1803 : vector<8x17xf32>
    %c394 = arith.constant 394 : index
    %1805 = memref.load %arg2[%c394] : memref<720xf32, #tpu.memory_space<smem>>
    %1806 = vector.broadcast %1805 : f32 to vector<8x17xf32>
    %1807 = arith.mulf %1806, %1796 : vector<8x17xf32>
    %1808 = arith.addf %1774, %1807 : vector<8x17xf32>
    %c450 = arith.constant 450 : index
    %1809 = memref.load %arg2[%c450] : memref<720xf32, #tpu.memory_space<smem>>
    %1810 = vector.broadcast %1809 : f32 to vector<8x17xf32>
    %1811 = arith.mulf %1810, %1796 : vector<8x17xf32>
    %1812 = arith.addf %1778, %1811 : vector<8x17xf32>
    %c506 = arith.constant 506 : index
    %1813 = memref.load %arg2[%c506] : memref<720xf32, #tpu.memory_space<smem>>
    %1814 = vector.broadcast %1813 : f32 to vector<8x17xf32>
    %1815 = arith.mulf %1814, %1796 : vector<8x17xf32>
    %1816 = arith.addf %1782, %1815 : vector<8x17xf32>
    %c562 = arith.constant 562 : index
    %1817 = memref.load %arg2[%c562] : memref<720xf32, #tpu.memory_space<smem>>
    %1818 = vector.broadcast %1817 : f32 to vector<8x17xf32>
    %1819 = arith.mulf %1818, %1796 : vector<8x17xf32>
    %1820 = arith.addf %1786, %1819 : vector<8x17xf32>
    %c618 = arith.constant 618 : index
    %1821 = memref.load %arg2[%c618] : memref<720xf32, #tpu.memory_space<smem>>
    %1822 = vector.broadcast %1821 : f32 to vector<8x17xf32>
    %1823 = arith.mulf %1822, %1796 : vector<8x17xf32>
    %1824 = arith.addf %1790, %1823 : vector<8x17xf32>
    %c674 = arith.constant 674 : index
    %1825 = memref.load %arg2[%c674] : memref<720xf32, #tpu.memory_space<smem>>
    %1826 = vector.broadcast %1825 : f32 to vector<8x17xf32>
    %1827 = arith.mulf %1826, %1796 : vector<8x17xf32>
    %1828 = arith.addf %1794, %1827 : vector<8x17xf32>
    %c2_202 = arith.constant 2 : index
    %c0_203 = arith.constant 0 : index
    %c20_204 = arith.constant 20 : index
    %1829 = vector.load %arg6[%c2_202, %c0_203, %c20_204] : memref<8x8x128xf32, #tpu.memory_space<vmem>>, vector<1x8x17xf32>
    %1830 = vector.shape_cast %1829 : vector<1x8x17xf32> to vector<8x17xf32>
    %c283 = arith.constant 283 : index
    %1831 = memref.load %arg2[%c283] : memref<720xf32, #tpu.memory_space<smem>>
    %1832 = vector.broadcast %1831 : f32 to vector<8x17xf32>
    %1833 = arith.mulf %1832, %1830 : vector<8x17xf32>
    %1834 = arith.addf %1800, %1833 : vector<8x17xf32>
    %c339 = arith.constant 339 : index
    %1835 = memref.load %arg2[%c339] : memref<720xf32, #tpu.memory_space<smem>>
    %1836 = vector.broadcast %1835 : f32 to vector<8x17xf32>
    %1837 = arith.mulf %1836, %1830 : vector<8x17xf32>
    %1838 = arith.addf %1804, %1837 : vector<8x17xf32>
    %c395 = arith.constant 395 : index
    %1839 = memref.load %arg2[%c395] : memref<720xf32, #tpu.memory_space<smem>>
    %1840 = vector.broadcast %1839 : f32 to vector<8x17xf32>
    %1841 = arith.mulf %1840, %1830 : vector<8x17xf32>
    %1842 = arith.addf %1808, %1841 : vector<8x17xf32>
    %c451 = arith.constant 451 : index
    %1843 = memref.load %arg2[%c451] : memref<720xf32, #tpu.memory_space<smem>>
    %1844 = vector.broadcast %1843 : f32 to vector<8x17xf32>
    %1845 = arith.mulf %1844, %1830 : vector<8x17xf32>
    %1846 = arith.addf %1812, %1845 : vector<8x17xf32>
    %c507 = arith.constant 507 : index
    %1847 = memref.load %arg2[%c507] : memref<720xf32, #tpu.memory_space<smem>>
    %1848 = vector.broadcast %1847 : f32 to vector<8x17xf32>
    %1849 = arith.mulf %1848, %1830 : vector<8x17xf32>
    %1850 = arith.addf %1816, %1849 : vector<8x17xf32>
    %c563 = arith.constant 563 : index
    %1851 = memref.load %arg2[%c563] : memref<720xf32, #tpu.memory_space<smem>>
    %1852 = vector.broadcast %1851 : f32 to vector<8x17xf32>
    %1853 = arith.mulf %1852, %1830 : vector<8x17xf32>
    %1854 = arith.addf %1820, %1853 : vector<8x17xf32>
    %c619 = arith.constant 619 : index
    %1855 = memref.load %arg2[%c619] : memref<720xf32, #tpu.memory_space<smem>>
    %1856 = vector.broadcast %1855 : f32 to vector<8x17xf32>
    %1857 = arith.mulf %1856, %1830 : vector<8x17xf32>
    %1858 = arith.addf %1824, %1857 : vector<8x17xf32>
    %c675 = arith.constant 675 : index
    %1859 = memref.load %arg2[%c675] : memref<720xf32, #tpu.memory_space<smem>>
    %1860 = vector.broadcast %1859 : f32 to vector<8x17xf32>
    %1861 = arith.mulf %1860, %1830 : vector<8x17xf32>
    %1862 = arith.addf %1828, %1861 : vector<8x17xf32>
    %c2_205 = arith.constant 2 : index
    %c0_206 = arith.constant 0 : index
    %c24_207 = arith.constant 24 : index
    %1863 = vector.load %arg6[%c2_205, %c0_206, %c24_207] : memref<8x8x128xf32, #tpu.memory_space<vmem>>, vector<1x8x17xf32>
    %1864 = vector.shape_cast %1863 : vector<1x8x17xf32> to vector<8x17xf32>
    %c284 = arith.constant 284 : index
    %1865 = memref.load %arg2[%c284] : memref<720xf32, #tpu.memory_space<smem>>
    %1866 = vector.broadcast %1865 : f32 to vector<8x17xf32>
    %1867 = arith.mulf %1866, %1864 : vector<8x17xf32>
    %1868 = arith.addf %1834, %1867 : vector<8x17xf32>
    %c340 = arith.constant 340 : index
    %1869 = memref.load %arg2[%c340] : memref<720xf32, #tpu.memory_space<smem>>
    %1870 = vector.broadcast %1869 : f32 to vector<8x17xf32>
    %1871 = arith.mulf %1870, %1864 : vector<8x17xf32>
    %1872 = arith.addf %1838, %1871 : vector<8x17xf32>
    %c396 = arith.constant 396 : index
    %1873 = memref.load %arg2[%c396] : memref<720xf32, #tpu.memory_space<smem>>
    %1874 = vector.broadcast %1873 : f32 to vector<8x17xf32>
    %1875 = arith.mulf %1874, %1864 : vector<8x17xf32>
    %1876 = arith.addf %1842, %1875 : vector<8x17xf32>
    %c452 = arith.constant 452 : index
    %1877 = memref.load %arg2[%c452] : memref<720xf32, #tpu.memory_space<smem>>
    %1878 = vector.broadcast %1877 : f32 to vector<8x17xf32>
    %1879 = arith.mulf %1878, %1864 : vector<8x17xf32>
    %1880 = arith.addf %1846, %1879 : vector<8x17xf32>
    %c508 = arith.constant 508 : index
    %1881 = memref.load %arg2[%c508] : memref<720xf32, #tpu.memory_space<smem>>
    %1882 = vector.broadcast %1881 : f32 to vector<8x17xf32>
    %1883 = arith.mulf %1882, %1864 : vector<8x17xf32>
    %1884 = arith.addf %1850, %1883 : vector<8x17xf32>
    %c564 = arith.constant 564 : index
    %1885 = memref.load %arg2[%c564] : memref<720xf32, #tpu.memory_space<smem>>
    %1886 = vector.broadcast %1885 : f32 to vector<8x17xf32>
    %1887 = arith.mulf %1886, %1864 : vector<8x17xf32>
    %1888 = arith.addf %1854, %1887 : vector<8x17xf32>
    %c620 = arith.constant 620 : index
    %1889 = memref.load %arg2[%c620] : memref<720xf32, #tpu.memory_space<smem>>
    %1890 = vector.broadcast %1889 : f32 to vector<8x17xf32>
    %1891 = arith.mulf %1890, %1864 : vector<8x17xf32>
    %1892 = arith.addf %1858, %1891 : vector<8x17xf32>
    %c676 = arith.constant 676 : index
    %1893 = memref.load %arg2[%c676] : memref<720xf32, #tpu.memory_space<smem>>
    %1894 = vector.broadcast %1893 : f32 to vector<8x17xf32>
    %1895 = arith.mulf %1894, %1864 : vector<8x17xf32>
    %1896 = arith.addf %1862, %1895 : vector<8x17xf32>
    %c3_208 = arith.constant 3 : index
    %c0_209 = arith.constant 0 : index
    %c0_210 = arith.constant 0 : index
    %1897 = vector.load %arg6[%c3_208, %c0_209, %c0_210] : memref<8x8x128xf32, #tpu.memory_space<vmem>>, vector<1x8x17xf32>
    %1898 = vector.shape_cast %1897 : vector<1x8x17xf32> to vector<8x17xf32>
    %c285 = arith.constant 285 : index
    %1899 = memref.load %arg2[%c285] : memref<720xf32, #tpu.memory_space<smem>>
    %1900 = vector.broadcast %1899 : f32 to vector<8x17xf32>
    %1901 = arith.mulf %1900, %1898 : vector<8x17xf32>
    %1902 = arith.addf %1868, %1901 : vector<8x17xf32>
    %c341 = arith.constant 341 : index
    %1903 = memref.load %arg2[%c341] : memref<720xf32, #tpu.memory_space<smem>>
    %1904 = vector.broadcast %1903 : f32 to vector<8x17xf32>
    %1905 = arith.mulf %1904, %1898 : vector<8x17xf32>
    %1906 = arith.addf %1872, %1905 : vector<8x17xf32>
    %c397 = arith.constant 397 : index
    %1907 = memref.load %arg2[%c397] : memref<720xf32, #tpu.memory_space<smem>>
    %1908 = vector.broadcast %1907 : f32 to vector<8x17xf32>
    %1909 = arith.mulf %1908, %1898 : vector<8x17xf32>
    %1910 = arith.addf %1876, %1909 : vector<8x17xf32>
    %c453 = arith.constant 453 : index
    %1911 = memref.load %arg2[%c453] : memref<720xf32, #tpu.memory_space<smem>>
    %1912 = vector.broadcast %1911 : f32 to vector<8x17xf32>
    %1913 = arith.mulf %1912, %1898 : vector<8x17xf32>
    %1914 = arith.addf %1880, %1913 : vector<8x17xf32>
    %c509 = arith.constant 509 : index
    %1915 = memref.load %arg2[%c509] : memref<720xf32, #tpu.memory_space<smem>>
    %1916 = vector.broadcast %1915 : f32 to vector<8x17xf32>
    %1917 = arith.mulf %1916, %1898 : vector<8x17xf32>
    %1918 = arith.addf %1884, %1917 : vector<8x17xf32>
    %c565 = arith.constant 565 : index
    %1919 = memref.load %arg2[%c565] : memref<720xf32, #tpu.memory_space<smem>>
    %1920 = vector.broadcast %1919 : f32 to vector<8x17xf32>
    %1921 = arith.mulf %1920, %1898 : vector<8x17xf32>
    %1922 = arith.addf %1888, %1921 : vector<8x17xf32>
    %c621 = arith.constant 621 : index
    %1923 = memref.load %arg2[%c621] : memref<720xf32, #tpu.memory_space<smem>>
    %1924 = vector.broadcast %1923 : f32 to vector<8x17xf32>
    %1925 = arith.mulf %1924, %1898 : vector<8x17xf32>
    %1926 = arith.addf %1892, %1925 : vector<8x17xf32>
    %c677 = arith.constant 677 : index
    %1927 = memref.load %arg2[%c677] : memref<720xf32, #tpu.memory_space<smem>>
    %1928 = vector.broadcast %1927 : f32 to vector<8x17xf32>
    %1929 = arith.mulf %1928, %1898 : vector<8x17xf32>
    %1930 = arith.addf %1896, %1929 : vector<8x17xf32>
    %c3_211 = arith.constant 3 : index
    %c0_212 = arith.constant 0 : index
    %c4_213 = arith.constant 4 : index
    %1931 = vector.load %arg6[%c3_211, %c0_212, %c4_213] : memref<8x8x128xf32, #tpu.memory_space<vmem>>, vector<1x8x17xf32>
    %1932 = vector.shape_cast %1931 : vector<1x8x17xf32> to vector<8x17xf32>
    %c286 = arith.constant 286 : index
    %1933 = memref.load %arg2[%c286] : memref<720xf32, #tpu.memory_space<smem>>
    %1934 = vector.broadcast %1933 : f32 to vector<8x17xf32>
    %1935 = arith.mulf %1934, %1932 : vector<8x17xf32>
    %1936 = arith.addf %1902, %1935 : vector<8x17xf32>
    %c342 = arith.constant 342 : index
    %1937 = memref.load %arg2[%c342] : memref<720xf32, #tpu.memory_space<smem>>
    %1938 = vector.broadcast %1937 : f32 to vector<8x17xf32>
    %1939 = arith.mulf %1938, %1932 : vector<8x17xf32>
    %1940 = arith.addf %1906, %1939 : vector<8x17xf32>
    %c398 = arith.constant 398 : index
    %1941 = memref.load %arg2[%c398] : memref<720xf32, #tpu.memory_space<smem>>
    %1942 = vector.broadcast %1941 : f32 to vector<8x17xf32>
    %1943 = arith.mulf %1942, %1932 : vector<8x17xf32>
    %1944 = arith.addf %1910, %1943 : vector<8x17xf32>
    %c454 = arith.constant 454 : index
    %1945 = memref.load %arg2[%c454] : memref<720xf32, #tpu.memory_space<smem>>
    %1946 = vector.broadcast %1945 : f32 to vector<8x17xf32>
    %1947 = arith.mulf %1946, %1932 : vector<8x17xf32>
    %1948 = arith.addf %1914, %1947 : vector<8x17xf32>
    %c510 = arith.constant 510 : index
    %1949 = memref.load %arg2[%c510] : memref<720xf32, #tpu.memory_space<smem>>
    %1950 = vector.broadcast %1949 : f32 to vector<8x17xf32>
    %1951 = arith.mulf %1950, %1932 : vector<8x17xf32>
    %1952 = arith.addf %1918, %1951 : vector<8x17xf32>
    %c566 = arith.constant 566 : index
    %1953 = memref.load %arg2[%c566] : memref<720xf32, #tpu.memory_space<smem>>
    %1954 = vector.broadcast %1953 : f32 to vector<8x17xf32>
    %1955 = arith.mulf %1954, %1932 : vector<8x17xf32>
    %1956 = arith.addf %1922, %1955 : vector<8x17xf32>
    %c622 = arith.constant 622 : index
    %1957 = memref.load %arg2[%c622] : memref<720xf32, #tpu.memory_space<smem>>
    %1958 = vector.broadcast %1957 : f32 to vector<8x17xf32>
    %1959 = arith.mulf %1958, %1932 : vector<8x17xf32>
    %1960 = arith.addf %1926, %1959 : vector<8x17xf32>
    %c678 = arith.constant 678 : index
    %1961 = memref.load %arg2[%c678] : memref<720xf32, #tpu.memory_space<smem>>
    %1962 = vector.broadcast %1961 : f32 to vector<8x17xf32>
    %1963 = arith.mulf %1962, %1932 : vector<8x17xf32>
    %1964 = arith.addf %1930, %1963 : vector<8x17xf32>
    %c3_214 = arith.constant 3 : index
    %c0_215 = arith.constant 0 : index
    %c8_216 = arith.constant 8 : index
    %1965 = vector.load %arg6[%c3_214, %c0_215, %c8_216] : memref<8x8x128xf32, #tpu.memory_space<vmem>>, vector<1x8x17xf32>
    %1966 = vector.shape_cast %1965 : vector<1x8x17xf32> to vector<8x17xf32>
    %c287 = arith.constant 287 : index
    %1967 = memref.load %arg2[%c287] : memref<720xf32, #tpu.memory_space<smem>>
    %1968 = vector.broadcast %1967 : f32 to vector<8x17xf32>
    %1969 = arith.mulf %1968, %1966 : vector<8x17xf32>
    %1970 = arith.addf %1936, %1969 : vector<8x17xf32>
    %c343 = arith.constant 343 : index
    %1971 = memref.load %arg2[%c343] : memref<720xf32, #tpu.memory_space<smem>>
    %1972 = vector.broadcast %1971 : f32 to vector<8x17xf32>
    %1973 = arith.mulf %1972, %1966 : vector<8x17xf32>
    %1974 = arith.addf %1940, %1973 : vector<8x17xf32>
    %c399 = arith.constant 399 : index
    %1975 = memref.load %arg2[%c399] : memref<720xf32, #tpu.memory_space<smem>>
    %1976 = vector.broadcast %1975 : f32 to vector<8x17xf32>
    %1977 = arith.mulf %1976, %1966 : vector<8x17xf32>
    %1978 = arith.addf %1944, %1977 : vector<8x17xf32>
    %c455 = arith.constant 455 : index
    %1979 = memref.load %arg2[%c455] : memref<720xf32, #tpu.memory_space<smem>>
    %1980 = vector.broadcast %1979 : f32 to vector<8x17xf32>
    %1981 = arith.mulf %1980, %1966 : vector<8x17xf32>
    %1982 = arith.addf %1948, %1981 : vector<8x17xf32>
    %c511 = arith.constant 511 : index
    %1983 = memref.load %arg2[%c511] : memref<720xf32, #tpu.memory_space<smem>>
    %1984 = vector.broadcast %1983 : f32 to vector<8x17xf32>
    %1985 = arith.mulf %1984, %1966 : vector<8x17xf32>
    %1986 = arith.addf %1952, %1985 : vector<8x17xf32>
    %c567 = arith.constant 567 : index
    %1987 = memref.load %arg2[%c567] : memref<720xf32, #tpu.memory_space<smem>>
    %1988 = vector.broadcast %1987 : f32 to vector<8x17xf32>
    %1989 = arith.mulf %1988, %1966 : vector<8x17xf32>
    %1990 = arith.addf %1956, %1989 : vector<8x17xf32>
    %c623 = arith.constant 623 : index
    %1991 = memref.load %arg2[%c623] : memref<720xf32, #tpu.memory_space<smem>>
    %1992 = vector.broadcast %1991 : f32 to vector<8x17xf32>
    %1993 = arith.mulf %1992, %1966 : vector<8x17xf32>
    %1994 = arith.addf %1960, %1993 : vector<8x17xf32>
    %c679 = arith.constant 679 : index
    %1995 = memref.load %arg2[%c679] : memref<720xf32, #tpu.memory_space<smem>>
    %1996 = vector.broadcast %1995 : f32 to vector<8x17xf32>
    %1997 = arith.mulf %1996, %1966 : vector<8x17xf32>
    %1998 = arith.addf %1964, %1997 : vector<8x17xf32>
    %c3_217 = arith.constant 3 : index
    %c0_218 = arith.constant 0 : index
    %c12_219 = arith.constant 12 : index
    %1999 = vector.load %arg6[%c3_217, %c0_218, %c12_219] : memref<8x8x128xf32, #tpu.memory_space<vmem>>, vector<1x8x17xf32>
    %2000 = vector.shape_cast %1999 : vector<1x8x17xf32> to vector<8x17xf32>
    %c288 = arith.constant 288 : index
    %2001 = memref.load %arg2[%c288] : memref<720xf32, #tpu.memory_space<smem>>
    %2002 = vector.broadcast %2001 : f32 to vector<8x17xf32>
    %2003 = arith.mulf %2002, %2000 : vector<8x17xf32>
    %2004 = arith.addf %1970, %2003 : vector<8x17xf32>
    %c344 = arith.constant 344 : index
    %2005 = memref.load %arg2[%c344] : memref<720xf32, #tpu.memory_space<smem>>
    %2006 = vector.broadcast %2005 : f32 to vector<8x17xf32>
    %2007 = arith.mulf %2006, %2000 : vector<8x17xf32>
    %2008 = arith.addf %1974, %2007 : vector<8x17xf32>
    %c400 = arith.constant 400 : index
    %2009 = memref.load %arg2[%c400] : memref<720xf32, #tpu.memory_space<smem>>
    %2010 = vector.broadcast %2009 : f32 to vector<8x17xf32>
    %2011 = arith.mulf %2010, %2000 : vector<8x17xf32>
    %2012 = arith.addf %1978, %2011 : vector<8x17xf32>
    %c456 = arith.constant 456 : index
    %2013 = memref.load %arg2[%c456] : memref<720xf32, #tpu.memory_space<smem>>
    %2014 = vector.broadcast %2013 : f32 to vector<8x17xf32>
    %2015 = arith.mulf %2014, %2000 : vector<8x17xf32>
    %2016 = arith.addf %1982, %2015 : vector<8x17xf32>
    %c512 = arith.constant 512 : index
    %2017 = memref.load %arg2[%c512] : memref<720xf32, #tpu.memory_space<smem>>
    %2018 = vector.broadcast %2017 : f32 to vector<8x17xf32>
    %2019 = arith.mulf %2018, %2000 : vector<8x17xf32>
    %2020 = arith.addf %1986, %2019 : vector<8x17xf32>
    %c568 = arith.constant 568 : index
    %2021 = memref.load %arg2[%c568] : memref<720xf32, #tpu.memory_space<smem>>
    %2022 = vector.broadcast %2021 : f32 to vector<8x17xf32>
    %2023 = arith.mulf %2022, %2000 : vector<8x17xf32>
    %2024 = arith.addf %1990, %2023 : vector<8x17xf32>
    %c624 = arith.constant 624 : index
    %2025 = memref.load %arg2[%c624] : memref<720xf32, #tpu.memory_space<smem>>
    %2026 = vector.broadcast %2025 : f32 to vector<8x17xf32>
    %2027 = arith.mulf %2026, %2000 : vector<8x17xf32>
    %2028 = arith.addf %1994, %2027 : vector<8x17xf32>
    %c680 = arith.constant 680 : index
    %2029 = memref.load %arg2[%c680] : memref<720xf32, #tpu.memory_space<smem>>
    %2030 = vector.broadcast %2029 : f32 to vector<8x17xf32>
    %2031 = arith.mulf %2030, %2000 : vector<8x17xf32>
    %2032 = arith.addf %1998, %2031 : vector<8x17xf32>
    %c3_220 = arith.constant 3 : index
    %c0_221 = arith.constant 0 : index
    %c16_222 = arith.constant 16 : index
    %2033 = vector.load %arg6[%c3_220, %c0_221, %c16_222] : memref<8x8x128xf32, #tpu.memory_space<vmem>>, vector<1x8x17xf32>
    %2034 = vector.shape_cast %2033 : vector<1x8x17xf32> to vector<8x17xf32>
    %c289 = arith.constant 289 : index
    %2035 = memref.load %arg2[%c289] : memref<720xf32, #tpu.memory_space<smem>>
    %2036 = vector.broadcast %2035 : f32 to vector<8x17xf32>
    %2037 = arith.mulf %2036, %2034 : vector<8x17xf32>
    %2038 = arith.addf %2004, %2037 : vector<8x17xf32>
    %c345 = arith.constant 345 : index
    %2039 = memref.load %arg2[%c345] : memref<720xf32, #tpu.memory_space<smem>>
    %2040 = vector.broadcast %2039 : f32 to vector<8x17xf32>
    %2041 = arith.mulf %2040, %2034 : vector<8x17xf32>
    %2042 = arith.addf %2008, %2041 : vector<8x17xf32>
    %c401 = arith.constant 401 : index
    %2043 = memref.load %arg2[%c401] : memref<720xf32, #tpu.memory_space<smem>>
    %2044 = vector.broadcast %2043 : f32 to vector<8x17xf32>
    %2045 = arith.mulf %2044, %2034 : vector<8x17xf32>
    %2046 = arith.addf %2012, %2045 : vector<8x17xf32>
    %c457 = arith.constant 457 : index
    %2047 = memref.load %arg2[%c457] : memref<720xf32, #tpu.memory_space<smem>>
    %2048 = vector.broadcast %2047 : f32 to vector<8x17xf32>
    %2049 = arith.mulf %2048, %2034 : vector<8x17xf32>
    %2050 = arith.addf %2016, %2049 : vector<8x17xf32>
    %c513 = arith.constant 513 : index
    %2051 = memref.load %arg2[%c513] : memref<720xf32, #tpu.memory_space<smem>>
    %2052 = vector.broadcast %2051 : f32 to vector<8x17xf32>
    %2053 = arith.mulf %2052, %2034 : vector<8x17xf32>
    %2054 = arith.addf %2020, %2053 : vector<8x17xf32>
    %c569 = arith.constant 569 : index
    %2055 = memref.load %arg2[%c569] : memref<720xf32, #tpu.memory_space<smem>>
    %2056 = vector.broadcast %2055 : f32 to vector<8x17xf32>
    %2057 = arith.mulf %2056, %2034 : vector<8x17xf32>
    %2058 = arith.addf %2024, %2057 : vector<8x17xf32>
    %c625 = arith.constant 625 : index
    %2059 = memref.load %arg2[%c625] : memref<720xf32, #tpu.memory_space<smem>>
    %2060 = vector.broadcast %2059 : f32 to vector<8x17xf32>
    %2061 = arith.mulf %2060, %2034 : vector<8x17xf32>
    %2062 = arith.addf %2028, %2061 : vector<8x17xf32>
    %c681 = arith.constant 681 : index
    %2063 = memref.load %arg2[%c681] : memref<720xf32, #tpu.memory_space<smem>>
    %2064 = vector.broadcast %2063 : f32 to vector<8x17xf32>
    %2065 = arith.mulf %2064, %2034 : vector<8x17xf32>
    %2066 = arith.addf %2032, %2065 : vector<8x17xf32>
    %c3_223 = arith.constant 3 : index
    %c0_224 = arith.constant 0 : index
    %c20_225 = arith.constant 20 : index
    %2067 = vector.load %arg6[%c3_223, %c0_224, %c20_225] : memref<8x8x128xf32, #tpu.memory_space<vmem>>, vector<1x8x17xf32>
    %2068 = vector.shape_cast %2067 : vector<1x8x17xf32> to vector<8x17xf32>
    %c290 = arith.constant 290 : index
    %2069 = memref.load %arg2[%c290] : memref<720xf32, #tpu.memory_space<smem>>
    %2070 = vector.broadcast %2069 : f32 to vector<8x17xf32>
    %2071 = arith.mulf %2070, %2068 : vector<8x17xf32>
    %2072 = arith.addf %2038, %2071 : vector<8x17xf32>
    %c346 = arith.constant 346 : index
    %2073 = memref.load %arg2[%c346] : memref<720xf32, #tpu.memory_space<smem>>
    %2074 = vector.broadcast %2073 : f32 to vector<8x17xf32>
    %2075 = arith.mulf %2074, %2068 : vector<8x17xf32>
    %2076 = arith.addf %2042, %2075 : vector<8x17xf32>
    %c402 = arith.constant 402 : index
    %2077 = memref.load %arg2[%c402] : memref<720xf32, #tpu.memory_space<smem>>
    %2078 = vector.broadcast %2077 : f32 to vector<8x17xf32>
    %2079 = arith.mulf %2078, %2068 : vector<8x17xf32>
    %2080 = arith.addf %2046, %2079 : vector<8x17xf32>
    %c458 = arith.constant 458 : index
    %2081 = memref.load %arg2[%c458] : memref<720xf32, #tpu.memory_space<smem>>
    %2082 = vector.broadcast %2081 : f32 to vector<8x17xf32>
    %2083 = arith.mulf %2082, %2068 : vector<8x17xf32>
    %2084 = arith.addf %2050, %2083 : vector<8x17xf32>
    %c514 = arith.constant 514 : index
    %2085 = memref.load %arg2[%c514] : memref<720xf32, #tpu.memory_space<smem>>
    %2086 = vector.broadcast %2085 : f32 to vector<8x17xf32>
    %2087 = arith.mulf %2086, %2068 : vector<8x17xf32>
    %2088 = arith.addf %2054, %2087 : vector<8x17xf32>
    %c570 = arith.constant 570 : index
    %2089 = memref.load %arg2[%c570] : memref<720xf32, #tpu.memory_space<smem>>
    %2090 = vector.broadcast %2089 : f32 to vector<8x17xf32>
    %2091 = arith.mulf %2090, %2068 : vector<8x17xf32>
    %2092 = arith.addf %2058, %2091 : vector<8x17xf32>
    %c626 = arith.constant 626 : index
    %2093 = memref.load %arg2[%c626] : memref<720xf32, #tpu.memory_space<smem>>
    %2094 = vector.broadcast %2093 : f32 to vector<8x17xf32>
    %2095 = arith.mulf %2094, %2068 : vector<8x17xf32>
    %2096 = arith.addf %2062, %2095 : vector<8x17xf32>
    %c682 = arith.constant 682 : index
    %2097 = memref.load %arg2[%c682] : memref<720xf32, #tpu.memory_space<smem>>
    %2098 = vector.broadcast %2097 : f32 to vector<8x17xf32>
    %2099 = arith.mulf %2098, %2068 : vector<8x17xf32>
    %2100 = arith.addf %2066, %2099 : vector<8x17xf32>
    %c3_226 = arith.constant 3 : index
    %c0_227 = arith.constant 0 : index
    %c24_228 = arith.constant 24 : index
    %2101 = vector.load %arg6[%c3_226, %c0_227, %c24_228] : memref<8x8x128xf32, #tpu.memory_space<vmem>>, vector<1x8x17xf32>
    %2102 = vector.shape_cast %2101 : vector<1x8x17xf32> to vector<8x17xf32>
    %c291 = arith.constant 291 : index
    %2103 = memref.load %arg2[%c291] : memref<720xf32, #tpu.memory_space<smem>>
    %2104 = vector.broadcast %2103 : f32 to vector<8x17xf32>
    %2105 = arith.mulf %2104, %2102 : vector<8x17xf32>
    %2106 = arith.addf %2072, %2105 : vector<8x17xf32>
    %c347 = arith.constant 347 : index
    %2107 = memref.load %arg2[%c347] : memref<720xf32, #tpu.memory_space<smem>>
    %2108 = vector.broadcast %2107 : f32 to vector<8x17xf32>
    %2109 = arith.mulf %2108, %2102 : vector<8x17xf32>
    %2110 = arith.addf %2076, %2109 : vector<8x17xf32>
    %c403 = arith.constant 403 : index
    %2111 = memref.load %arg2[%c403] : memref<720xf32, #tpu.memory_space<smem>>
    %2112 = vector.broadcast %2111 : f32 to vector<8x17xf32>
    %2113 = arith.mulf %2112, %2102 : vector<8x17xf32>
    %2114 = arith.addf %2080, %2113 : vector<8x17xf32>
    %c459 = arith.constant 459 : index
    %2115 = memref.load %arg2[%c459] : memref<720xf32, #tpu.memory_space<smem>>
    %2116 = vector.broadcast %2115 : f32 to vector<8x17xf32>
    %2117 = arith.mulf %2116, %2102 : vector<8x17xf32>
    %2118 = arith.addf %2084, %2117 : vector<8x17xf32>
    %c515 = arith.constant 515 : index
    %2119 = memref.load %arg2[%c515] : memref<720xf32, #tpu.memory_space<smem>>
    %2120 = vector.broadcast %2119 : f32 to vector<8x17xf32>
    %2121 = arith.mulf %2120, %2102 : vector<8x17xf32>
    %2122 = arith.addf %2088, %2121 : vector<8x17xf32>
    %c571 = arith.constant 571 : index
    %2123 = memref.load %arg2[%c571] : memref<720xf32, #tpu.memory_space<smem>>
    %2124 = vector.broadcast %2123 : f32 to vector<8x17xf32>
    %2125 = arith.mulf %2124, %2102 : vector<8x17xf32>
    %2126 = arith.addf %2092, %2125 : vector<8x17xf32>
    %c627 = arith.constant 627 : index
    %2127 = memref.load %arg2[%c627] : memref<720xf32, #tpu.memory_space<smem>>
    %2128 = vector.broadcast %2127 : f32 to vector<8x17xf32>
    %2129 = arith.mulf %2128, %2102 : vector<8x17xf32>
    %2130 = arith.addf %2096, %2129 : vector<8x17xf32>
    %c683 = arith.constant 683 : index
    %2131 = memref.load %arg2[%c683] : memref<720xf32, #tpu.memory_space<smem>>
    %2132 = vector.broadcast %2131 : f32 to vector<8x17xf32>
    %2133 = arith.mulf %2132, %2102 : vector<8x17xf32>
    %2134 = arith.addf %2100, %2133 : vector<8x17xf32>
    %c4_229 = arith.constant 4 : index
    %c0_230 = arith.constant 0 : index
    %c0_231 = arith.constant 0 : index
    %2135 = vector.load %arg6[%c4_229, %c0_230, %c0_231] : memref<8x8x128xf32, #tpu.memory_space<vmem>>, vector<1x8x17xf32>
    %2136 = vector.shape_cast %2135 : vector<1x8x17xf32> to vector<8x17xf32>
    %c292 = arith.constant 292 : index
    %2137 = memref.load %arg2[%c292] : memref<720xf32, #tpu.memory_space<smem>>
    %2138 = vector.broadcast %2137 : f32 to vector<8x17xf32>
    %2139 = arith.mulf %2138, %2136 : vector<8x17xf32>
    %2140 = arith.addf %2106, %2139 : vector<8x17xf32>
    %c348 = arith.constant 348 : index
    %2141 = memref.load %arg2[%c348] : memref<720xf32, #tpu.memory_space<smem>>
    %2142 = vector.broadcast %2141 : f32 to vector<8x17xf32>
    %2143 = arith.mulf %2142, %2136 : vector<8x17xf32>
    %2144 = arith.addf %2110, %2143 : vector<8x17xf32>
    %c404 = arith.constant 404 : index
    %2145 = memref.load %arg2[%c404] : memref<720xf32, #tpu.memory_space<smem>>
    %2146 = vector.broadcast %2145 : f32 to vector<8x17xf32>
    %2147 = arith.mulf %2146, %2136 : vector<8x17xf32>
    %2148 = arith.addf %2114, %2147 : vector<8x17xf32>
    %c460 = arith.constant 460 : index
    %2149 = memref.load %arg2[%c460] : memref<720xf32, #tpu.memory_space<smem>>
    %2150 = vector.broadcast %2149 : f32 to vector<8x17xf32>
    %2151 = arith.mulf %2150, %2136 : vector<8x17xf32>
    %2152 = arith.addf %2118, %2151 : vector<8x17xf32>
    %c516 = arith.constant 516 : index
    %2153 = memref.load %arg2[%c516] : memref<720xf32, #tpu.memory_space<smem>>
    %2154 = vector.broadcast %2153 : f32 to vector<8x17xf32>
    %2155 = arith.mulf %2154, %2136 : vector<8x17xf32>
    %2156 = arith.addf %2122, %2155 : vector<8x17xf32>
    %c572 = arith.constant 572 : index
    %2157 = memref.load %arg2[%c572] : memref<720xf32, #tpu.memory_space<smem>>
    %2158 = vector.broadcast %2157 : f32 to vector<8x17xf32>
    %2159 = arith.mulf %2158, %2136 : vector<8x17xf32>
    %2160 = arith.addf %2126, %2159 : vector<8x17xf32>
    %c628 = arith.constant 628 : index
    %2161 = memref.load %arg2[%c628] : memref<720xf32, #tpu.memory_space<smem>>
    %2162 = vector.broadcast %2161 : f32 to vector<8x17xf32>
    %2163 = arith.mulf %2162, %2136 : vector<8x17xf32>
    %2164 = arith.addf %2130, %2163 : vector<8x17xf32>
    %c684 = arith.constant 684 : index
    %2165 = memref.load %arg2[%c684] : memref<720xf32, #tpu.memory_space<smem>>
    %2166 = vector.broadcast %2165 : f32 to vector<8x17xf32>
    %2167 = arith.mulf %2166, %2136 : vector<8x17xf32>
    %2168 = arith.addf %2134, %2167 : vector<8x17xf32>
    %c4_232 = arith.constant 4 : index
    %c0_233 = arith.constant 0 : index
    %c4_234 = arith.constant 4 : index
    %2169 = vector.load %arg6[%c4_232, %c0_233, %c4_234] : memref<8x8x128xf32, #tpu.memory_space<vmem>>, vector<1x8x17xf32>
    %2170 = vector.shape_cast %2169 : vector<1x8x17xf32> to vector<8x17xf32>
    %c293 = arith.constant 293 : index
    %2171 = memref.load %arg2[%c293] : memref<720xf32, #tpu.memory_space<smem>>
    %2172 = vector.broadcast %2171 : f32 to vector<8x17xf32>
    %2173 = arith.mulf %2172, %2170 : vector<8x17xf32>
    %2174 = arith.addf %2140, %2173 : vector<8x17xf32>
    %c349 = arith.constant 349 : index
    %2175 = memref.load %arg2[%c349] : memref<720xf32, #tpu.memory_space<smem>>
    %2176 = vector.broadcast %2175 : f32 to vector<8x17xf32>
    %2177 = arith.mulf %2176, %2170 : vector<8x17xf32>
    %2178 = arith.addf %2144, %2177 : vector<8x17xf32>
    %c405 = arith.constant 405 : index
    %2179 = memref.load %arg2[%c405] : memref<720xf32, #tpu.memory_space<smem>>
    %2180 = vector.broadcast %2179 : f32 to vector<8x17xf32>
    %2181 = arith.mulf %2180, %2170 : vector<8x17xf32>
    %2182 = arith.addf %2148, %2181 : vector<8x17xf32>
    %c461 = arith.constant 461 : index
    %2183 = memref.load %arg2[%c461] : memref<720xf32, #tpu.memory_space<smem>>
    %2184 = vector.broadcast %2183 : f32 to vector<8x17xf32>
    %2185 = arith.mulf %2184, %2170 : vector<8x17xf32>
    %2186 = arith.addf %2152, %2185 : vector<8x17xf32>
    %c517 = arith.constant 517 : index
    %2187 = memref.load %arg2[%c517] : memref<720xf32, #tpu.memory_space<smem>>
    %2188 = vector.broadcast %2187 : f32 to vector<8x17xf32>
    %2189 = arith.mulf %2188, %2170 : vector<8x17xf32>
    %2190 = arith.addf %2156, %2189 : vector<8x17xf32>
    %c573 = arith.constant 573 : index
    %2191 = memref.load %arg2[%c573] : memref<720xf32, #tpu.memory_space<smem>>
    %2192 = vector.broadcast %2191 : f32 to vector<8x17xf32>
    %2193 = arith.mulf %2192, %2170 : vector<8x17xf32>
    %2194 = arith.addf %2160, %2193 : vector<8x17xf32>
    %c629 = arith.constant 629 : index
    %2195 = memref.load %arg2[%c629] : memref<720xf32, #tpu.memory_space<smem>>
    %2196 = vector.broadcast %2195 : f32 to vector<8x17xf32>
    %2197 = arith.mulf %2196, %2170 : vector<8x17xf32>
    %2198 = arith.addf %2164, %2197 : vector<8x17xf32>
    %c685 = arith.constant 685 : index
    %2199 = memref.load %arg2[%c685] : memref<720xf32, #tpu.memory_space<smem>>
    %2200 = vector.broadcast %2199 : f32 to vector<8x17xf32>
    %2201 = arith.mulf %2200, %2170 : vector<8x17xf32>
    %2202 = arith.addf %2168, %2201 : vector<8x17xf32>
    %c4_235 = arith.constant 4 : index
    %c0_236 = arith.constant 0 : index
    %c8_237 = arith.constant 8 : index
    %2203 = vector.load %arg6[%c4_235, %c0_236, %c8_237] : memref<8x8x128xf32, #tpu.memory_space<vmem>>, vector<1x8x17xf32>
    %2204 = vector.shape_cast %2203 : vector<1x8x17xf32> to vector<8x17xf32>
    %c294 = arith.constant 294 : index
    %2205 = memref.load %arg2[%c294] : memref<720xf32, #tpu.memory_space<smem>>
    %2206 = vector.broadcast %2205 : f32 to vector<8x17xf32>
    %2207 = arith.mulf %2206, %2204 : vector<8x17xf32>
    %2208 = arith.addf %2174, %2207 : vector<8x17xf32>
    %c350 = arith.constant 350 : index
    %2209 = memref.load %arg2[%c350] : memref<720xf32, #tpu.memory_space<smem>>
    %2210 = vector.broadcast %2209 : f32 to vector<8x17xf32>
    %2211 = arith.mulf %2210, %2204 : vector<8x17xf32>
    %2212 = arith.addf %2178, %2211 : vector<8x17xf32>
    %c406 = arith.constant 406 : index
    %2213 = memref.load %arg2[%c406] : memref<720xf32, #tpu.memory_space<smem>>
    %2214 = vector.broadcast %2213 : f32 to vector<8x17xf32>
    %2215 = arith.mulf %2214, %2204 : vector<8x17xf32>
    %2216 = arith.addf %2182, %2215 : vector<8x17xf32>
    %c462 = arith.constant 462 : index
    %2217 = memref.load %arg2[%c462] : memref<720xf32, #tpu.memory_space<smem>>
    %2218 = vector.broadcast %2217 : f32 to vector<8x17xf32>
    %2219 = arith.mulf %2218, %2204 : vector<8x17xf32>
    %2220 = arith.addf %2186, %2219 : vector<8x17xf32>
    %c518 = arith.constant 518 : index
    %2221 = memref.load %arg2[%c518] : memref<720xf32, #tpu.memory_space<smem>>
    %2222 = vector.broadcast %2221 : f32 to vector<8x17xf32>
    %2223 = arith.mulf %2222, %2204 : vector<8x17xf32>
    %2224 = arith.addf %2190, %2223 : vector<8x17xf32>
    %c574 = arith.constant 574 : index
    %2225 = memref.load %arg2[%c574] : memref<720xf32, #tpu.memory_space<smem>>
    %2226 = vector.broadcast %2225 : f32 to vector<8x17xf32>
    %2227 = arith.mulf %2226, %2204 : vector<8x17xf32>
    %2228 = arith.addf %2194, %2227 : vector<8x17xf32>
    %c630 = arith.constant 630 : index
    %2229 = memref.load %arg2[%c630] : memref<720xf32, #tpu.memory_space<smem>>
    %2230 = vector.broadcast %2229 : f32 to vector<8x17xf32>
    %2231 = arith.mulf %2230, %2204 : vector<8x17xf32>
    %2232 = arith.addf %2198, %2231 : vector<8x17xf32>
    %c686 = arith.constant 686 : index
    %2233 = memref.load %arg2[%c686] : memref<720xf32, #tpu.memory_space<smem>>
    %2234 = vector.broadcast %2233 : f32 to vector<8x17xf32>
    %2235 = arith.mulf %2234, %2204 : vector<8x17xf32>
    %2236 = arith.addf %2202, %2235 : vector<8x17xf32>
    %c4_238 = arith.constant 4 : index
    %c0_239 = arith.constant 0 : index
    %c12_240 = arith.constant 12 : index
    %2237 = vector.load %arg6[%c4_238, %c0_239, %c12_240] : memref<8x8x128xf32, #tpu.memory_space<vmem>>, vector<1x8x17xf32>
    %2238 = vector.shape_cast %2237 : vector<1x8x17xf32> to vector<8x17xf32>
    %c295 = arith.constant 295 : index
    %2239 = memref.load %arg2[%c295] : memref<720xf32, #tpu.memory_space<smem>>
    %2240 = vector.broadcast %2239 : f32 to vector<8x17xf32>
    %2241 = arith.mulf %2240, %2238 : vector<8x17xf32>
    %2242 = arith.addf %2208, %2241 : vector<8x17xf32>
    %c351 = arith.constant 351 : index
    %2243 = memref.load %arg2[%c351] : memref<720xf32, #tpu.memory_space<smem>>
    %2244 = vector.broadcast %2243 : f32 to vector<8x17xf32>
    %2245 = arith.mulf %2244, %2238 : vector<8x17xf32>
    %2246 = arith.addf %2212, %2245 : vector<8x17xf32>
    %c407 = arith.constant 407 : index
    %2247 = memref.load %arg2[%c407] : memref<720xf32, #tpu.memory_space<smem>>
    %2248 = vector.broadcast %2247 : f32 to vector<8x17xf32>
    %2249 = arith.mulf %2248, %2238 : vector<8x17xf32>
    %2250 = arith.addf %2216, %2249 : vector<8x17xf32>
    %c463 = arith.constant 463 : index
    %2251 = memref.load %arg2[%c463] : memref<720xf32, #tpu.memory_space<smem>>
    %2252 = vector.broadcast %2251 : f32 to vector<8x17xf32>
    %2253 = arith.mulf %2252, %2238 : vector<8x17xf32>
    %2254 = arith.addf %2220, %2253 : vector<8x17xf32>
    %c519 = arith.constant 519 : index
    %2255 = memref.load %arg2[%c519] : memref<720xf32, #tpu.memory_space<smem>>
    %2256 = vector.broadcast %2255 : f32 to vector<8x17xf32>
    %2257 = arith.mulf %2256, %2238 : vector<8x17xf32>
    %2258 = arith.addf %2224, %2257 : vector<8x17xf32>
    %c575 = arith.constant 575 : index
    %2259 = memref.load %arg2[%c575] : memref<720xf32, #tpu.memory_space<smem>>
    %2260 = vector.broadcast %2259 : f32 to vector<8x17xf32>
    %2261 = arith.mulf %2260, %2238 : vector<8x17xf32>
    %2262 = arith.addf %2228, %2261 : vector<8x17xf32>
    %c631 = arith.constant 631 : index
    %2263 = memref.load %arg2[%c631] : memref<720xf32, #tpu.memory_space<smem>>
    %2264 = vector.broadcast %2263 : f32 to vector<8x17xf32>
    %2265 = arith.mulf %2264, %2238 : vector<8x17xf32>
    %2266 = arith.addf %2232, %2265 : vector<8x17xf32>
    %c687 = arith.constant 687 : index
    %2267 = memref.load %arg2[%c687] : memref<720xf32, #tpu.memory_space<smem>>
    %2268 = vector.broadcast %2267 : f32 to vector<8x17xf32>
    %2269 = arith.mulf %2268, %2238 : vector<8x17xf32>
    %2270 = arith.addf %2236, %2269 : vector<8x17xf32>
    %c4_241 = arith.constant 4 : index
    %c0_242 = arith.constant 0 : index
    %c16_243 = arith.constant 16 : index
    %2271 = vector.load %arg6[%c4_241, %c0_242, %c16_243] : memref<8x8x128xf32, #tpu.memory_space<vmem>>, vector<1x8x17xf32>
    %2272 = vector.shape_cast %2271 : vector<1x8x17xf32> to vector<8x17xf32>
    %c296 = arith.constant 296 : index
    %2273 = memref.load %arg2[%c296] : memref<720xf32, #tpu.memory_space<smem>>
    %2274 = vector.broadcast %2273 : f32 to vector<8x17xf32>
    %2275 = arith.mulf %2274, %2272 : vector<8x17xf32>
    %2276 = arith.addf %2242, %2275 : vector<8x17xf32>
    %c352 = arith.constant 352 : index
    %2277 = memref.load %arg2[%c352] : memref<720xf32, #tpu.memory_space<smem>>
    %2278 = vector.broadcast %2277 : f32 to vector<8x17xf32>
    %2279 = arith.mulf %2278, %2272 : vector<8x17xf32>
    %2280 = arith.addf %2246, %2279 : vector<8x17xf32>
    %c408 = arith.constant 408 : index
    %2281 = memref.load %arg2[%c408] : memref<720xf32, #tpu.memory_space<smem>>
    %2282 = vector.broadcast %2281 : f32 to vector<8x17xf32>
    %2283 = arith.mulf %2282, %2272 : vector<8x17xf32>
    %2284 = arith.addf %2250, %2283 : vector<8x17xf32>
    %c464 = arith.constant 464 : index
    %2285 = memref.load %arg2[%c464] : memref<720xf32, #tpu.memory_space<smem>>
    %2286 = vector.broadcast %2285 : f32 to vector<8x17xf32>
    %2287 = arith.mulf %2286, %2272 : vector<8x17xf32>
    %2288 = arith.addf %2254, %2287 : vector<8x17xf32>
    %c520 = arith.constant 520 : index
    %2289 = memref.load %arg2[%c520] : memref<720xf32, #tpu.memory_space<smem>>
    %2290 = vector.broadcast %2289 : f32 to vector<8x17xf32>
    %2291 = arith.mulf %2290, %2272 : vector<8x17xf32>
    %2292 = arith.addf %2258, %2291 : vector<8x17xf32>
    %c576 = arith.constant 576 : index
    %2293 = memref.load %arg2[%c576] : memref<720xf32, #tpu.memory_space<smem>>
    %2294 = vector.broadcast %2293 : f32 to vector<8x17xf32>
    %2295 = arith.mulf %2294, %2272 : vector<8x17xf32>
    %2296 = arith.addf %2262, %2295 : vector<8x17xf32>
    %c632 = arith.constant 632 : index
    %2297 = memref.load %arg2[%c632] : memref<720xf32, #tpu.memory_space<smem>>
    %2298 = vector.broadcast %2297 : f32 to vector<8x17xf32>
    %2299 = arith.mulf %2298, %2272 : vector<8x17xf32>
    %2300 = arith.addf %2266, %2299 : vector<8x17xf32>
    %c688 = arith.constant 688 : index
    %2301 = memref.load %arg2[%c688] : memref<720xf32, #tpu.memory_space<smem>>
    %2302 = vector.broadcast %2301 : f32 to vector<8x17xf32>
    %2303 = arith.mulf %2302, %2272 : vector<8x17xf32>
    %2304 = arith.addf %2270, %2303 : vector<8x17xf32>
    %c4_244 = arith.constant 4 : index
    %c0_245 = arith.constant 0 : index
    %c20_246 = arith.constant 20 : index
    %2305 = vector.load %arg6[%c4_244, %c0_245, %c20_246] : memref<8x8x128xf32, #tpu.memory_space<vmem>>, vector<1x8x17xf32>
    %2306 = vector.shape_cast %2305 : vector<1x8x17xf32> to vector<8x17xf32>
    %c297 = arith.constant 297 : index
    %2307 = memref.load %arg2[%c297] : memref<720xf32, #tpu.memory_space<smem>>
    %2308 = vector.broadcast %2307 : f32 to vector<8x17xf32>
    %2309 = arith.mulf %2308, %2306 : vector<8x17xf32>
    %2310 = arith.addf %2276, %2309 : vector<8x17xf32>
    %c353 = arith.constant 353 : index
    %2311 = memref.load %arg2[%c353] : memref<720xf32, #tpu.memory_space<smem>>
    %2312 = vector.broadcast %2311 : f32 to vector<8x17xf32>
    %2313 = arith.mulf %2312, %2306 : vector<8x17xf32>
    %2314 = arith.addf %2280, %2313 : vector<8x17xf32>
    %c409 = arith.constant 409 : index
    %2315 = memref.load %arg2[%c409] : memref<720xf32, #tpu.memory_space<smem>>
    %2316 = vector.broadcast %2315 : f32 to vector<8x17xf32>
    %2317 = arith.mulf %2316, %2306 : vector<8x17xf32>
    %2318 = arith.addf %2284, %2317 : vector<8x17xf32>
    %c465 = arith.constant 465 : index
    %2319 = memref.load %arg2[%c465] : memref<720xf32, #tpu.memory_space<smem>>
    %2320 = vector.broadcast %2319 : f32 to vector<8x17xf32>
    %2321 = arith.mulf %2320, %2306 : vector<8x17xf32>
    %2322 = arith.addf %2288, %2321 : vector<8x17xf32>
    %c521 = arith.constant 521 : index
    %2323 = memref.load %arg2[%c521] : memref<720xf32, #tpu.memory_space<smem>>
    %2324 = vector.broadcast %2323 : f32 to vector<8x17xf32>
    %2325 = arith.mulf %2324, %2306 : vector<8x17xf32>
    %2326 = arith.addf %2292, %2325 : vector<8x17xf32>
    %c577 = arith.constant 577 : index
    %2327 = memref.load %arg2[%c577] : memref<720xf32, #tpu.memory_space<smem>>
    %2328 = vector.broadcast %2327 : f32 to vector<8x17xf32>
    %2329 = arith.mulf %2328, %2306 : vector<8x17xf32>
    %2330 = arith.addf %2296, %2329 : vector<8x17xf32>
    %c633 = arith.constant 633 : index
    %2331 = memref.load %arg2[%c633] : memref<720xf32, #tpu.memory_space<smem>>
    %2332 = vector.broadcast %2331 : f32 to vector<8x17xf32>
    %2333 = arith.mulf %2332, %2306 : vector<8x17xf32>
    %2334 = arith.addf %2300, %2333 : vector<8x17xf32>
    %c689 = arith.constant 689 : index
    %2335 = memref.load %arg2[%c689] : memref<720xf32, #tpu.memory_space<smem>>
    %2336 = vector.broadcast %2335 : f32 to vector<8x17xf32>
    %2337 = arith.mulf %2336, %2306 : vector<8x17xf32>
    %2338 = arith.addf %2304, %2337 : vector<8x17xf32>
    %c4_247 = arith.constant 4 : index
    %c0_248 = arith.constant 0 : index
    %c24_249 = arith.constant 24 : index
    %2339 = vector.load %arg6[%c4_247, %c0_248, %c24_249] : memref<8x8x128xf32, #tpu.memory_space<vmem>>, vector<1x8x17xf32>
    %2340 = vector.shape_cast %2339 : vector<1x8x17xf32> to vector<8x17xf32>
    %c298 = arith.constant 298 : index
    %2341 = memref.load %arg2[%c298] : memref<720xf32, #tpu.memory_space<smem>>
    %2342 = vector.broadcast %2341 : f32 to vector<8x17xf32>
    %2343 = arith.mulf %2342, %2340 : vector<8x17xf32>
    %2344 = arith.addf %2310, %2343 : vector<8x17xf32>
    %c354 = arith.constant 354 : index
    %2345 = memref.load %arg2[%c354] : memref<720xf32, #tpu.memory_space<smem>>
    %2346 = vector.broadcast %2345 : f32 to vector<8x17xf32>
    %2347 = arith.mulf %2346, %2340 : vector<8x17xf32>
    %2348 = arith.addf %2314, %2347 : vector<8x17xf32>
    %c410 = arith.constant 410 : index
    %2349 = memref.load %arg2[%c410] : memref<720xf32, #tpu.memory_space<smem>>
    %2350 = vector.broadcast %2349 : f32 to vector<8x17xf32>
    %2351 = arith.mulf %2350, %2340 : vector<8x17xf32>
    %2352 = arith.addf %2318, %2351 : vector<8x17xf32>
    %c466 = arith.constant 466 : index
    %2353 = memref.load %arg2[%c466] : memref<720xf32, #tpu.memory_space<smem>>
    %2354 = vector.broadcast %2353 : f32 to vector<8x17xf32>
    %2355 = arith.mulf %2354, %2340 : vector<8x17xf32>
    %2356 = arith.addf %2322, %2355 : vector<8x17xf32>
    %c522 = arith.constant 522 : index
    %2357 = memref.load %arg2[%c522] : memref<720xf32, #tpu.memory_space<smem>>
    %2358 = vector.broadcast %2357 : f32 to vector<8x17xf32>
    %2359 = arith.mulf %2358, %2340 : vector<8x17xf32>
    %2360 = arith.addf %2326, %2359 : vector<8x17xf32>
    %c578 = arith.constant 578 : index
    %2361 = memref.load %arg2[%c578] : memref<720xf32, #tpu.memory_space<smem>>
    %2362 = vector.broadcast %2361 : f32 to vector<8x17xf32>
    %2363 = arith.mulf %2362, %2340 : vector<8x17xf32>
    %2364 = arith.addf %2330, %2363 : vector<8x17xf32>
    %c634 = arith.constant 634 : index
    %2365 = memref.load %arg2[%c634] : memref<720xf32, #tpu.memory_space<smem>>
    %2366 = vector.broadcast %2365 : f32 to vector<8x17xf32>
    %2367 = arith.mulf %2366, %2340 : vector<8x17xf32>
    %2368 = arith.addf %2334, %2367 : vector<8x17xf32>
    %c690 = arith.constant 690 : index
    %2369 = memref.load %arg2[%c690] : memref<720xf32, #tpu.memory_space<smem>>
    %2370 = vector.broadcast %2369 : f32 to vector<8x17xf32>
    %2371 = arith.mulf %2370, %2340 : vector<8x17xf32>
    %2372 = arith.addf %2338, %2371 : vector<8x17xf32>
    %c5_250 = arith.constant 5 : index
    %c0_251 = arith.constant 0 : index
    %c0_252 = arith.constant 0 : index
    %2373 = vector.load %arg6[%c5_250, %c0_251, %c0_252] : memref<8x8x128xf32, #tpu.memory_space<vmem>>, vector<1x8x17xf32>
    %2374 = vector.shape_cast %2373 : vector<1x8x17xf32> to vector<8x17xf32>
    %c299 = arith.constant 299 : index
    %2375 = memref.load %arg2[%c299] : memref<720xf32, #tpu.memory_space<smem>>
    %2376 = vector.broadcast %2375 : f32 to vector<8x17xf32>
    %2377 = arith.mulf %2376, %2374 : vector<8x17xf32>
    %2378 = arith.addf %2344, %2377 : vector<8x17xf32>
    %c355 = arith.constant 355 : index
    %2379 = memref.load %arg2[%c355] : memref<720xf32, #tpu.memory_space<smem>>
    %2380 = vector.broadcast %2379 : f32 to vector<8x17xf32>
    %2381 = arith.mulf %2380, %2374 : vector<8x17xf32>
    %2382 = arith.addf %2348, %2381 : vector<8x17xf32>
    %c411 = arith.constant 411 : index
    %2383 = memref.load %arg2[%c411] : memref<720xf32, #tpu.memory_space<smem>>
    %2384 = vector.broadcast %2383 : f32 to vector<8x17xf32>
    %2385 = arith.mulf %2384, %2374 : vector<8x17xf32>
    %2386 = arith.addf %2352, %2385 : vector<8x17xf32>
    %c467 = arith.constant 467 : index
    %2387 = memref.load %arg2[%c467] : memref<720xf32, #tpu.memory_space<smem>>
    %2388 = vector.broadcast %2387 : f32 to vector<8x17xf32>
    %2389 = arith.mulf %2388, %2374 : vector<8x17xf32>
    %2390 = arith.addf %2356, %2389 : vector<8x17xf32>
    %c523 = arith.constant 523 : index
    %2391 = memref.load %arg2[%c523] : memref<720xf32, #tpu.memory_space<smem>>
    %2392 = vector.broadcast %2391 : f32 to vector<8x17xf32>
    %2393 = arith.mulf %2392, %2374 : vector<8x17xf32>
    %2394 = arith.addf %2360, %2393 : vector<8x17xf32>
    %c579 = arith.constant 579 : index
    %2395 = memref.load %arg2[%c579] : memref<720xf32, #tpu.memory_space<smem>>
    %2396 = vector.broadcast %2395 : f32 to vector<8x17xf32>
    %2397 = arith.mulf %2396, %2374 : vector<8x17xf32>
    %2398 = arith.addf %2364, %2397 : vector<8x17xf32>
    %c635 = arith.constant 635 : index
    %2399 = memref.load %arg2[%c635] : memref<720xf32, #tpu.memory_space<smem>>
    %2400 = vector.broadcast %2399 : f32 to vector<8x17xf32>
    %2401 = arith.mulf %2400, %2374 : vector<8x17xf32>
    %2402 = arith.addf %2368, %2401 : vector<8x17xf32>
    %c691 = arith.constant 691 : index
    %2403 = memref.load %arg2[%c691] : memref<720xf32, #tpu.memory_space<smem>>
    %2404 = vector.broadcast %2403 : f32 to vector<8x17xf32>
    %2405 = arith.mulf %2404, %2374 : vector<8x17xf32>
    %2406 = arith.addf %2372, %2405 : vector<8x17xf32>
    %c5_253 = arith.constant 5 : index
    %c0_254 = arith.constant 0 : index
    %c4_255 = arith.constant 4 : index
    %2407 = vector.load %arg6[%c5_253, %c0_254, %c4_255] : memref<8x8x128xf32, #tpu.memory_space<vmem>>, vector<1x8x17xf32>
    %2408 = vector.shape_cast %2407 : vector<1x8x17xf32> to vector<8x17xf32>
    %c300 = arith.constant 300 : index
    %2409 = memref.load %arg2[%c300] : memref<720xf32, #tpu.memory_space<smem>>
    %2410 = vector.broadcast %2409 : f32 to vector<8x17xf32>
    %2411 = arith.mulf %2410, %2408 : vector<8x17xf32>
    %2412 = arith.addf %2378, %2411 : vector<8x17xf32>
    %c356 = arith.constant 356 : index
    %2413 = memref.load %arg2[%c356] : memref<720xf32, #tpu.memory_space<smem>>
    %2414 = vector.broadcast %2413 : f32 to vector<8x17xf32>
    %2415 = arith.mulf %2414, %2408 : vector<8x17xf32>
    %2416 = arith.addf %2382, %2415 : vector<8x17xf32>
    %c412 = arith.constant 412 : index
    %2417 = memref.load %arg2[%c412] : memref<720xf32, #tpu.memory_space<smem>>
    %2418 = vector.broadcast %2417 : f32 to vector<8x17xf32>
    %2419 = arith.mulf %2418, %2408 : vector<8x17xf32>
    %2420 = arith.addf %2386, %2419 : vector<8x17xf32>
    %c468 = arith.constant 468 : index
    %2421 = memref.load %arg2[%c468] : memref<720xf32, #tpu.memory_space<smem>>
    %2422 = vector.broadcast %2421 : f32 to vector<8x17xf32>
    %2423 = arith.mulf %2422, %2408 : vector<8x17xf32>
    %2424 = arith.addf %2390, %2423 : vector<8x17xf32>
    %c524 = arith.constant 524 : index
    %2425 = memref.load %arg2[%c524] : memref<720xf32, #tpu.memory_space<smem>>
    %2426 = vector.broadcast %2425 : f32 to vector<8x17xf32>
    %2427 = arith.mulf %2426, %2408 : vector<8x17xf32>
    %2428 = arith.addf %2394, %2427 : vector<8x17xf32>
    %c580 = arith.constant 580 : index
    %2429 = memref.load %arg2[%c580] : memref<720xf32, #tpu.memory_space<smem>>
    %2430 = vector.broadcast %2429 : f32 to vector<8x17xf32>
    %2431 = arith.mulf %2430, %2408 : vector<8x17xf32>
    %2432 = arith.addf %2398, %2431 : vector<8x17xf32>
    %c636 = arith.constant 636 : index
    %2433 = memref.load %arg2[%c636] : memref<720xf32, #tpu.memory_space<smem>>
    %2434 = vector.broadcast %2433 : f32 to vector<8x17xf32>
    %2435 = arith.mulf %2434, %2408 : vector<8x17xf32>
    %2436 = arith.addf %2402, %2435 : vector<8x17xf32>
    %c692 = arith.constant 692 : index
    %2437 = memref.load %arg2[%c692] : memref<720xf32, #tpu.memory_space<smem>>
    %2438 = vector.broadcast %2437 : f32 to vector<8x17xf32>
    %2439 = arith.mulf %2438, %2408 : vector<8x17xf32>
    %2440 = arith.addf %2406, %2439 : vector<8x17xf32>
    %c5_256 = arith.constant 5 : index
    %c0_257 = arith.constant 0 : index
    %c8_258 = arith.constant 8 : index
    %2441 = vector.load %arg6[%c5_256, %c0_257, %c8_258] : memref<8x8x128xf32, #tpu.memory_space<vmem>>, vector<1x8x17xf32>
    %2442 = vector.shape_cast %2441 : vector<1x8x17xf32> to vector<8x17xf32>
    %c301 = arith.constant 301 : index
    %2443 = memref.load %arg2[%c301] : memref<720xf32, #tpu.memory_space<smem>>
    %2444 = vector.broadcast %2443 : f32 to vector<8x17xf32>
    %2445 = arith.mulf %2444, %2442 : vector<8x17xf32>
    %2446 = arith.addf %2412, %2445 : vector<8x17xf32>
    %c357 = arith.constant 357 : index
    %2447 = memref.load %arg2[%c357] : memref<720xf32, #tpu.memory_space<smem>>
    %2448 = vector.broadcast %2447 : f32 to vector<8x17xf32>
    %2449 = arith.mulf %2448, %2442 : vector<8x17xf32>
    %2450 = arith.addf %2416, %2449 : vector<8x17xf32>
    %c413 = arith.constant 413 : index
    %2451 = memref.load %arg2[%c413] : memref<720xf32, #tpu.memory_space<smem>>
    %2452 = vector.broadcast %2451 : f32 to vector<8x17xf32>
    %2453 = arith.mulf %2452, %2442 : vector<8x17xf32>
    %2454 = arith.addf %2420, %2453 : vector<8x17xf32>
    %c469 = arith.constant 469 : index
    %2455 = memref.load %arg2[%c469] : memref<720xf32, #tpu.memory_space<smem>>
    %2456 = vector.broadcast %2455 : f32 to vector<8x17xf32>
    %2457 = arith.mulf %2456, %2442 : vector<8x17xf32>
    %2458 = arith.addf %2424, %2457 : vector<8x17xf32>
    %c525 = arith.constant 525 : index
    %2459 = memref.load %arg2[%c525] : memref<720xf32, #tpu.memory_space<smem>>
    %2460 = vector.broadcast %2459 : f32 to vector<8x17xf32>
    %2461 = arith.mulf %2460, %2442 : vector<8x17xf32>
    %2462 = arith.addf %2428, %2461 : vector<8x17xf32>
    %c581 = arith.constant 581 : index
    %2463 = memref.load %arg2[%c581] : memref<720xf32, #tpu.memory_space<smem>>
    %2464 = vector.broadcast %2463 : f32 to vector<8x17xf32>
    %2465 = arith.mulf %2464, %2442 : vector<8x17xf32>
    %2466 = arith.addf %2432, %2465 : vector<8x17xf32>
    %c637 = arith.constant 637 : index
    %2467 = memref.load %arg2[%c637] : memref<720xf32, #tpu.memory_space<smem>>
    %2468 = vector.broadcast %2467 : f32 to vector<8x17xf32>
    %2469 = arith.mulf %2468, %2442 : vector<8x17xf32>
    %2470 = arith.addf %2436, %2469 : vector<8x17xf32>
    %c693 = arith.constant 693 : index
    %2471 = memref.load %arg2[%c693] : memref<720xf32, #tpu.memory_space<smem>>
    %2472 = vector.broadcast %2471 : f32 to vector<8x17xf32>
    %2473 = arith.mulf %2472, %2442 : vector<8x17xf32>
    %2474 = arith.addf %2440, %2473 : vector<8x17xf32>
    %c5_259 = arith.constant 5 : index
    %c0_260 = arith.constant 0 : index
    %c12_261 = arith.constant 12 : index
    %2475 = vector.load %arg6[%c5_259, %c0_260, %c12_261] : memref<8x8x128xf32, #tpu.memory_space<vmem>>, vector<1x8x17xf32>
    %2476 = vector.shape_cast %2475 : vector<1x8x17xf32> to vector<8x17xf32>
    %c302 = arith.constant 302 : index
    %2477 = memref.load %arg2[%c302] : memref<720xf32, #tpu.memory_space<smem>>
    %2478 = vector.broadcast %2477 : f32 to vector<8x17xf32>
    %2479 = arith.mulf %2478, %2476 : vector<8x17xf32>
    %2480 = arith.addf %2446, %2479 : vector<8x17xf32>
    %c358 = arith.constant 358 : index
    %2481 = memref.load %arg2[%c358] : memref<720xf32, #tpu.memory_space<smem>>
    %2482 = vector.broadcast %2481 : f32 to vector<8x17xf32>
    %2483 = arith.mulf %2482, %2476 : vector<8x17xf32>
    %2484 = arith.addf %2450, %2483 : vector<8x17xf32>
    %c414 = arith.constant 414 : index
    %2485 = memref.load %arg2[%c414] : memref<720xf32, #tpu.memory_space<smem>>
    %2486 = vector.broadcast %2485 : f32 to vector<8x17xf32>
    %2487 = arith.mulf %2486, %2476 : vector<8x17xf32>
    %2488 = arith.addf %2454, %2487 : vector<8x17xf32>
    %c470 = arith.constant 470 : index
    %2489 = memref.load %arg2[%c470] : memref<720xf32, #tpu.memory_space<smem>>
    %2490 = vector.broadcast %2489 : f32 to vector<8x17xf32>
    %2491 = arith.mulf %2490, %2476 : vector<8x17xf32>
    %2492 = arith.addf %2458, %2491 : vector<8x17xf32>
    %c526 = arith.constant 526 : index
    %2493 = memref.load %arg2[%c526] : memref<720xf32, #tpu.memory_space<smem>>
    %2494 = vector.broadcast %2493 : f32 to vector<8x17xf32>
    %2495 = arith.mulf %2494, %2476 : vector<8x17xf32>
    %2496 = arith.addf %2462, %2495 : vector<8x17xf32>
    %c582 = arith.constant 582 : index
    %2497 = memref.load %arg2[%c582] : memref<720xf32, #tpu.memory_space<smem>>
    %2498 = vector.broadcast %2497 : f32 to vector<8x17xf32>
    %2499 = arith.mulf %2498, %2476 : vector<8x17xf32>
    %2500 = arith.addf %2466, %2499 : vector<8x17xf32>
    %c638 = arith.constant 638 : index
    %2501 = memref.load %arg2[%c638] : memref<720xf32, #tpu.memory_space<smem>>
    %2502 = vector.broadcast %2501 : f32 to vector<8x17xf32>
    %2503 = arith.mulf %2502, %2476 : vector<8x17xf32>
    %2504 = arith.addf %2470, %2503 : vector<8x17xf32>
    %c694 = arith.constant 694 : index
    %2505 = memref.load %arg2[%c694] : memref<720xf32, #tpu.memory_space<smem>>
    %2506 = vector.broadcast %2505 : f32 to vector<8x17xf32>
    %2507 = arith.mulf %2506, %2476 : vector<8x17xf32>
    %2508 = arith.addf %2474, %2507 : vector<8x17xf32>
    %c5_262 = arith.constant 5 : index
    %c0_263 = arith.constant 0 : index
    %c16_264 = arith.constant 16 : index
    %2509 = vector.load %arg6[%c5_262, %c0_263, %c16_264] : memref<8x8x128xf32, #tpu.memory_space<vmem>>, vector<1x8x17xf32>
    %2510 = vector.shape_cast %2509 : vector<1x8x17xf32> to vector<8x17xf32>
    %c303 = arith.constant 303 : index
    %2511 = memref.load %arg2[%c303] : memref<720xf32, #tpu.memory_space<smem>>
    %2512 = vector.broadcast %2511 : f32 to vector<8x17xf32>
    %2513 = arith.mulf %2512, %2510 : vector<8x17xf32>
    %2514 = arith.addf %2480, %2513 : vector<8x17xf32>
    %c359 = arith.constant 359 : index
    %2515 = memref.load %arg2[%c359] : memref<720xf32, #tpu.memory_space<smem>>
    %2516 = vector.broadcast %2515 : f32 to vector<8x17xf32>
    %2517 = arith.mulf %2516, %2510 : vector<8x17xf32>
    %2518 = arith.addf %2484, %2517 : vector<8x17xf32>
    %c415 = arith.constant 415 : index
    %2519 = memref.load %arg2[%c415] : memref<720xf32, #tpu.memory_space<smem>>
    %2520 = vector.broadcast %2519 : f32 to vector<8x17xf32>
    %2521 = arith.mulf %2520, %2510 : vector<8x17xf32>
    %2522 = arith.addf %2488, %2521 : vector<8x17xf32>
    %c471 = arith.constant 471 : index
    %2523 = memref.load %arg2[%c471] : memref<720xf32, #tpu.memory_space<smem>>
    %2524 = vector.broadcast %2523 : f32 to vector<8x17xf32>
    %2525 = arith.mulf %2524, %2510 : vector<8x17xf32>
    %2526 = arith.addf %2492, %2525 : vector<8x17xf32>
    %c527 = arith.constant 527 : index
    %2527 = memref.load %arg2[%c527] : memref<720xf32, #tpu.memory_space<smem>>
    %2528 = vector.broadcast %2527 : f32 to vector<8x17xf32>
    %2529 = arith.mulf %2528, %2510 : vector<8x17xf32>
    %2530 = arith.addf %2496, %2529 : vector<8x17xf32>
    %c583 = arith.constant 583 : index
    %2531 = memref.load %arg2[%c583] : memref<720xf32, #tpu.memory_space<smem>>
    %2532 = vector.broadcast %2531 : f32 to vector<8x17xf32>
    %2533 = arith.mulf %2532, %2510 : vector<8x17xf32>
    %2534 = arith.addf %2500, %2533 : vector<8x17xf32>
    %c639 = arith.constant 639 : index
    %2535 = memref.load %arg2[%c639] : memref<720xf32, #tpu.memory_space<smem>>
    %2536 = vector.broadcast %2535 : f32 to vector<8x17xf32>
    %2537 = arith.mulf %2536, %2510 : vector<8x17xf32>
    %2538 = arith.addf %2504, %2537 : vector<8x17xf32>
    %c695 = arith.constant 695 : index
    %2539 = memref.load %arg2[%c695] : memref<720xf32, #tpu.memory_space<smem>>
    %2540 = vector.broadcast %2539 : f32 to vector<8x17xf32>
    %2541 = arith.mulf %2540, %2510 : vector<8x17xf32>
    %2542 = arith.addf %2508, %2541 : vector<8x17xf32>
    %c5_265 = arith.constant 5 : index
    %c0_266 = arith.constant 0 : index
    %c20_267 = arith.constant 20 : index
    %2543 = vector.load %arg6[%c5_265, %c0_266, %c20_267] : memref<8x8x128xf32, #tpu.memory_space<vmem>>, vector<1x8x17xf32>
    %2544 = vector.shape_cast %2543 : vector<1x8x17xf32> to vector<8x17xf32>
    %c304 = arith.constant 304 : index
    %2545 = memref.load %arg2[%c304] : memref<720xf32, #tpu.memory_space<smem>>
    %2546 = vector.broadcast %2545 : f32 to vector<8x17xf32>
    %2547 = arith.mulf %2546, %2544 : vector<8x17xf32>
    %2548 = arith.addf %2514, %2547 : vector<8x17xf32>
    %c360 = arith.constant 360 : index
    %2549 = memref.load %arg2[%c360] : memref<720xf32, #tpu.memory_space<smem>>
    %2550 = vector.broadcast %2549 : f32 to vector<8x17xf32>
    %2551 = arith.mulf %2550, %2544 : vector<8x17xf32>
    %2552 = arith.addf %2518, %2551 : vector<8x17xf32>
    %c416 = arith.constant 416 : index
    %2553 = memref.load %arg2[%c416] : memref<720xf32, #tpu.memory_space<smem>>
    %2554 = vector.broadcast %2553 : f32 to vector<8x17xf32>
    %2555 = arith.mulf %2554, %2544 : vector<8x17xf32>
    %2556 = arith.addf %2522, %2555 : vector<8x17xf32>
    %c472 = arith.constant 472 : index
    %2557 = memref.load %arg2[%c472] : memref<720xf32, #tpu.memory_space<smem>>
    %2558 = vector.broadcast %2557 : f32 to vector<8x17xf32>
    %2559 = arith.mulf %2558, %2544 : vector<8x17xf32>
    %2560 = arith.addf %2526, %2559 : vector<8x17xf32>
    %c528 = arith.constant 528 : index
    %2561 = memref.load %arg2[%c528] : memref<720xf32, #tpu.memory_space<smem>>
    %2562 = vector.broadcast %2561 : f32 to vector<8x17xf32>
    %2563 = arith.mulf %2562, %2544 : vector<8x17xf32>
    %2564 = arith.addf %2530, %2563 : vector<8x17xf32>
    %c584 = arith.constant 584 : index
    %2565 = memref.load %arg2[%c584] : memref<720xf32, #tpu.memory_space<smem>>
    %2566 = vector.broadcast %2565 : f32 to vector<8x17xf32>
    %2567 = arith.mulf %2566, %2544 : vector<8x17xf32>
    %2568 = arith.addf %2534, %2567 : vector<8x17xf32>
    %c640 = arith.constant 640 : index
    %2569 = memref.load %arg2[%c640] : memref<720xf32, #tpu.memory_space<smem>>
    %2570 = vector.broadcast %2569 : f32 to vector<8x17xf32>
    %2571 = arith.mulf %2570, %2544 : vector<8x17xf32>
    %2572 = arith.addf %2538, %2571 : vector<8x17xf32>
    %c696 = arith.constant 696 : index
    %2573 = memref.load %arg2[%c696] : memref<720xf32, #tpu.memory_space<smem>>
    %2574 = vector.broadcast %2573 : f32 to vector<8x17xf32>
    %2575 = arith.mulf %2574, %2544 : vector<8x17xf32>
    %2576 = arith.addf %2542, %2575 : vector<8x17xf32>
    %c5_268 = arith.constant 5 : index
    %c0_269 = arith.constant 0 : index
    %c24_270 = arith.constant 24 : index
    %2577 = vector.load %arg6[%c5_268, %c0_269, %c24_270] : memref<8x8x128xf32, #tpu.memory_space<vmem>>, vector<1x8x17xf32>
    %2578 = vector.shape_cast %2577 : vector<1x8x17xf32> to vector<8x17xf32>
    %c305 = arith.constant 305 : index
    %2579 = memref.load %arg2[%c305] : memref<720xf32, #tpu.memory_space<smem>>
    %2580 = vector.broadcast %2579 : f32 to vector<8x17xf32>
    %2581 = arith.mulf %2580, %2578 : vector<8x17xf32>
    %2582 = arith.addf %2548, %2581 : vector<8x17xf32>
    %c361 = arith.constant 361 : index
    %2583 = memref.load %arg2[%c361] : memref<720xf32, #tpu.memory_space<smem>>
    %2584 = vector.broadcast %2583 : f32 to vector<8x17xf32>
    %2585 = arith.mulf %2584, %2578 : vector<8x17xf32>
    %2586 = arith.addf %2552, %2585 : vector<8x17xf32>
    %c417 = arith.constant 417 : index
    %2587 = memref.load %arg2[%c417] : memref<720xf32, #tpu.memory_space<smem>>
    %2588 = vector.broadcast %2587 : f32 to vector<8x17xf32>
    %2589 = arith.mulf %2588, %2578 : vector<8x17xf32>
    %2590 = arith.addf %2556, %2589 : vector<8x17xf32>
    %c473 = arith.constant 473 : index
    %2591 = memref.load %arg2[%c473] : memref<720xf32, #tpu.memory_space<smem>>
    %2592 = vector.broadcast %2591 : f32 to vector<8x17xf32>
    %2593 = arith.mulf %2592, %2578 : vector<8x17xf32>
    %2594 = arith.addf %2560, %2593 : vector<8x17xf32>
    %c529 = arith.constant 529 : index
    %2595 = memref.load %arg2[%c529] : memref<720xf32, #tpu.memory_space<smem>>
    %2596 = vector.broadcast %2595 : f32 to vector<8x17xf32>
    %2597 = arith.mulf %2596, %2578 : vector<8x17xf32>
    %2598 = arith.addf %2564, %2597 : vector<8x17xf32>
    %c585 = arith.constant 585 : index
    %2599 = memref.load %arg2[%c585] : memref<720xf32, #tpu.memory_space<smem>>
    %2600 = vector.broadcast %2599 : f32 to vector<8x17xf32>
    %2601 = arith.mulf %2600, %2578 : vector<8x17xf32>
    %2602 = arith.addf %2568, %2601 : vector<8x17xf32>
    %c641 = arith.constant 641 : index
    %2603 = memref.load %arg2[%c641] : memref<720xf32, #tpu.memory_space<smem>>
    %2604 = vector.broadcast %2603 : f32 to vector<8x17xf32>
    %2605 = arith.mulf %2604, %2578 : vector<8x17xf32>
    %2606 = arith.addf %2572, %2605 : vector<8x17xf32>
    %c697 = arith.constant 697 : index
    %2607 = memref.load %arg2[%c697] : memref<720xf32, #tpu.memory_space<smem>>
    %2608 = vector.broadcast %2607 : f32 to vector<8x17xf32>
    %2609 = arith.mulf %2608, %2578 : vector<8x17xf32>
    %2610 = arith.addf %2576, %2609 : vector<8x17xf32>
    %c6_271 = arith.constant 6 : index
    %c0_272 = arith.constant 0 : index
    %c0_273 = arith.constant 0 : index
    %2611 = vector.load %arg6[%c6_271, %c0_272, %c0_273] : memref<8x8x128xf32, #tpu.memory_space<vmem>>, vector<1x8x17xf32>
    %2612 = vector.shape_cast %2611 : vector<1x8x17xf32> to vector<8x17xf32>
    %c306 = arith.constant 306 : index
    %2613 = memref.load %arg2[%c306] : memref<720xf32, #tpu.memory_space<smem>>
    %2614 = vector.broadcast %2613 : f32 to vector<8x17xf32>
    %2615 = arith.mulf %2614, %2612 : vector<8x17xf32>
    %2616 = arith.addf %2582, %2615 : vector<8x17xf32>
    %c362 = arith.constant 362 : index
    %2617 = memref.load %arg2[%c362] : memref<720xf32, #tpu.memory_space<smem>>
    %2618 = vector.broadcast %2617 : f32 to vector<8x17xf32>
    %2619 = arith.mulf %2618, %2612 : vector<8x17xf32>
    %2620 = arith.addf %2586, %2619 : vector<8x17xf32>
    %c418 = arith.constant 418 : index
    %2621 = memref.load %arg2[%c418] : memref<720xf32, #tpu.memory_space<smem>>
    %2622 = vector.broadcast %2621 : f32 to vector<8x17xf32>
    %2623 = arith.mulf %2622, %2612 : vector<8x17xf32>
    %2624 = arith.addf %2590, %2623 : vector<8x17xf32>
    %c474 = arith.constant 474 : index
    %2625 = memref.load %arg2[%c474] : memref<720xf32, #tpu.memory_space<smem>>
    %2626 = vector.broadcast %2625 : f32 to vector<8x17xf32>
    %2627 = arith.mulf %2626, %2612 : vector<8x17xf32>
    %2628 = arith.addf %2594, %2627 : vector<8x17xf32>
    %c530 = arith.constant 530 : index
    %2629 = memref.load %arg2[%c530] : memref<720xf32, #tpu.memory_space<smem>>
    %2630 = vector.broadcast %2629 : f32 to vector<8x17xf32>
    %2631 = arith.mulf %2630, %2612 : vector<8x17xf32>
    %2632 = arith.addf %2598, %2631 : vector<8x17xf32>
    %c586 = arith.constant 586 : index
    %2633 = memref.load %arg2[%c586] : memref<720xf32, #tpu.memory_space<smem>>
    %2634 = vector.broadcast %2633 : f32 to vector<8x17xf32>
    %2635 = arith.mulf %2634, %2612 : vector<8x17xf32>
    %2636 = arith.addf %2602, %2635 : vector<8x17xf32>
    %c642 = arith.constant 642 : index
    %2637 = memref.load %arg2[%c642] : memref<720xf32, #tpu.memory_space<smem>>
    %2638 = vector.broadcast %2637 : f32 to vector<8x17xf32>
    %2639 = arith.mulf %2638, %2612 : vector<8x17xf32>
    %2640 = arith.addf %2606, %2639 : vector<8x17xf32>
    %c698 = arith.constant 698 : index
    %2641 = memref.load %arg2[%c698] : memref<720xf32, #tpu.memory_space<smem>>
    %2642 = vector.broadcast %2641 : f32 to vector<8x17xf32>
    %2643 = arith.mulf %2642, %2612 : vector<8x17xf32>
    %2644 = arith.addf %2610, %2643 : vector<8x17xf32>
    %c6_274 = arith.constant 6 : index
    %c0_275 = arith.constant 0 : index
    %c4_276 = arith.constant 4 : index
    %2645 = vector.load %arg6[%c6_274, %c0_275, %c4_276] : memref<8x8x128xf32, #tpu.memory_space<vmem>>, vector<1x8x17xf32>
    %2646 = vector.shape_cast %2645 : vector<1x8x17xf32> to vector<8x17xf32>
    %c307 = arith.constant 307 : index
    %2647 = memref.load %arg2[%c307] : memref<720xf32, #tpu.memory_space<smem>>
    %2648 = vector.broadcast %2647 : f32 to vector<8x17xf32>
    %2649 = arith.mulf %2648, %2646 : vector<8x17xf32>
    %2650 = arith.addf %2616, %2649 : vector<8x17xf32>
    %c363 = arith.constant 363 : index
    %2651 = memref.load %arg2[%c363] : memref<720xf32, #tpu.memory_space<smem>>
    %2652 = vector.broadcast %2651 : f32 to vector<8x17xf32>
    %2653 = arith.mulf %2652, %2646 : vector<8x17xf32>
    %2654 = arith.addf %2620, %2653 : vector<8x17xf32>
    %c419 = arith.constant 419 : index
    %2655 = memref.load %arg2[%c419] : memref<720xf32, #tpu.memory_space<smem>>
    %2656 = vector.broadcast %2655 : f32 to vector<8x17xf32>
    %2657 = arith.mulf %2656, %2646 : vector<8x17xf32>
    %2658 = arith.addf %2624, %2657 : vector<8x17xf32>
    %c475 = arith.constant 475 : index
    %2659 = memref.load %arg2[%c475] : memref<720xf32, #tpu.memory_space<smem>>
    %2660 = vector.broadcast %2659 : f32 to vector<8x17xf32>
    %2661 = arith.mulf %2660, %2646 : vector<8x17xf32>
    %2662 = arith.addf %2628, %2661 : vector<8x17xf32>
    %c531 = arith.constant 531 : index
    %2663 = memref.load %arg2[%c531] : memref<720xf32, #tpu.memory_space<smem>>
    %2664 = vector.broadcast %2663 : f32 to vector<8x17xf32>
    %2665 = arith.mulf %2664, %2646 : vector<8x17xf32>
    %2666 = arith.addf %2632, %2665 : vector<8x17xf32>
    %c587 = arith.constant 587 : index
    %2667 = memref.load %arg2[%c587] : memref<720xf32, #tpu.memory_space<smem>>
    %2668 = vector.broadcast %2667 : f32 to vector<8x17xf32>
    %2669 = arith.mulf %2668, %2646 : vector<8x17xf32>
    %2670 = arith.addf %2636, %2669 : vector<8x17xf32>
    %c643 = arith.constant 643 : index
    %2671 = memref.load %arg2[%c643] : memref<720xf32, #tpu.memory_space<smem>>
    %2672 = vector.broadcast %2671 : f32 to vector<8x17xf32>
    %2673 = arith.mulf %2672, %2646 : vector<8x17xf32>
    %2674 = arith.addf %2640, %2673 : vector<8x17xf32>
    %c699 = arith.constant 699 : index
    %2675 = memref.load %arg2[%c699] : memref<720xf32, #tpu.memory_space<smem>>
    %2676 = vector.broadcast %2675 : f32 to vector<8x17xf32>
    %2677 = arith.mulf %2676, %2646 : vector<8x17xf32>
    %2678 = arith.addf %2644, %2677 : vector<8x17xf32>
    %c6_277 = arith.constant 6 : index
    %c0_278 = arith.constant 0 : index
    %c8_279 = arith.constant 8 : index
    %2679 = vector.load %arg6[%c6_277, %c0_278, %c8_279] : memref<8x8x128xf32, #tpu.memory_space<vmem>>, vector<1x8x17xf32>
    %2680 = vector.shape_cast %2679 : vector<1x8x17xf32> to vector<8x17xf32>
    %c308 = arith.constant 308 : index
    %2681 = memref.load %arg2[%c308] : memref<720xf32, #tpu.memory_space<smem>>
    %2682 = vector.broadcast %2681 : f32 to vector<8x17xf32>
    %2683 = arith.mulf %2682, %2680 : vector<8x17xf32>
    %2684 = arith.addf %2650, %2683 : vector<8x17xf32>
    %c364 = arith.constant 364 : index
    %2685 = memref.load %arg2[%c364] : memref<720xf32, #tpu.memory_space<smem>>
    %2686 = vector.broadcast %2685 : f32 to vector<8x17xf32>
    %2687 = arith.mulf %2686, %2680 : vector<8x17xf32>
    %2688 = arith.addf %2654, %2687 : vector<8x17xf32>
    %c420 = arith.constant 420 : index
    %2689 = memref.load %arg2[%c420] : memref<720xf32, #tpu.memory_space<smem>>
    %2690 = vector.broadcast %2689 : f32 to vector<8x17xf32>
    %2691 = arith.mulf %2690, %2680 : vector<8x17xf32>
    %2692 = arith.addf %2658, %2691 : vector<8x17xf32>
    %c476 = arith.constant 476 : index
    %2693 = memref.load %arg2[%c476] : memref<720xf32, #tpu.memory_space<smem>>
    %2694 = vector.broadcast %2693 : f32 to vector<8x17xf32>
    %2695 = arith.mulf %2694, %2680 : vector<8x17xf32>
    %2696 = arith.addf %2662, %2695 : vector<8x17xf32>
    %c532 = arith.constant 532 : index
    %2697 = memref.load %arg2[%c532] : memref<720xf32, #tpu.memory_space<smem>>
    %2698 = vector.broadcast %2697 : f32 to vector<8x17xf32>
    %2699 = arith.mulf %2698, %2680 : vector<8x17xf32>
    %2700 = arith.addf %2666, %2699 : vector<8x17xf32>
    %c588 = arith.constant 588 : index
    %2701 = memref.load %arg2[%c588] : memref<720xf32, #tpu.memory_space<smem>>
    %2702 = vector.broadcast %2701 : f32 to vector<8x17xf32>
    %2703 = arith.mulf %2702, %2680 : vector<8x17xf32>
    %2704 = arith.addf %2670, %2703 : vector<8x17xf32>
    %c644 = arith.constant 644 : index
    %2705 = memref.load %arg2[%c644] : memref<720xf32, #tpu.memory_space<smem>>
    %2706 = vector.broadcast %2705 : f32 to vector<8x17xf32>
    %2707 = arith.mulf %2706, %2680 : vector<8x17xf32>
    %2708 = arith.addf %2674, %2707 : vector<8x17xf32>
    %c700 = arith.constant 700 : index
    %2709 = memref.load %arg2[%c700] : memref<720xf32, #tpu.memory_space<smem>>
    %2710 = vector.broadcast %2709 : f32 to vector<8x17xf32>
    %2711 = arith.mulf %2710, %2680 : vector<8x17xf32>
    %2712 = arith.addf %2678, %2711 : vector<8x17xf32>
    %c6_280 = arith.constant 6 : index
    %c0_281 = arith.constant 0 : index
    %c12_282 = arith.constant 12 : index
    %2713 = vector.load %arg6[%c6_280, %c0_281, %c12_282] : memref<8x8x128xf32, #tpu.memory_space<vmem>>, vector<1x8x17xf32>
    %2714 = vector.shape_cast %2713 : vector<1x8x17xf32> to vector<8x17xf32>
    %c309 = arith.constant 309 : index
    %2715 = memref.load %arg2[%c309] : memref<720xf32, #tpu.memory_space<smem>>
    %2716 = vector.broadcast %2715 : f32 to vector<8x17xf32>
    %2717 = arith.mulf %2716, %2714 : vector<8x17xf32>
    %2718 = arith.addf %2684, %2717 : vector<8x17xf32>
    %c365 = arith.constant 365 : index
    %2719 = memref.load %arg2[%c365] : memref<720xf32, #tpu.memory_space<smem>>
    %2720 = vector.broadcast %2719 : f32 to vector<8x17xf32>
    %2721 = arith.mulf %2720, %2714 : vector<8x17xf32>
    %2722 = arith.addf %2688, %2721 : vector<8x17xf32>
    %c421 = arith.constant 421 : index
    %2723 = memref.load %arg2[%c421] : memref<720xf32, #tpu.memory_space<smem>>
    %2724 = vector.broadcast %2723 : f32 to vector<8x17xf32>
    %2725 = arith.mulf %2724, %2714 : vector<8x17xf32>
    %2726 = arith.addf %2692, %2725 : vector<8x17xf32>
    %c477 = arith.constant 477 : index
    %2727 = memref.load %arg2[%c477] : memref<720xf32, #tpu.memory_space<smem>>
    %2728 = vector.broadcast %2727 : f32 to vector<8x17xf32>
    %2729 = arith.mulf %2728, %2714 : vector<8x17xf32>
    %2730 = arith.addf %2696, %2729 : vector<8x17xf32>
    %c533 = arith.constant 533 : index
    %2731 = memref.load %arg2[%c533] : memref<720xf32, #tpu.memory_space<smem>>
    %2732 = vector.broadcast %2731 : f32 to vector<8x17xf32>
    %2733 = arith.mulf %2732, %2714 : vector<8x17xf32>
    %2734 = arith.addf %2700, %2733 : vector<8x17xf32>
    %c589 = arith.constant 589 : index
    %2735 = memref.load %arg2[%c589] : memref<720xf32, #tpu.memory_space<smem>>
    %2736 = vector.broadcast %2735 : f32 to vector<8x17xf32>
    %2737 = arith.mulf %2736, %2714 : vector<8x17xf32>
    %2738 = arith.addf %2704, %2737 : vector<8x17xf32>
    %c645 = arith.constant 645 : index
    %2739 = memref.load %arg2[%c645] : memref<720xf32, #tpu.memory_space<smem>>
    %2740 = vector.broadcast %2739 : f32 to vector<8x17xf32>
    %2741 = arith.mulf %2740, %2714 : vector<8x17xf32>
    %2742 = arith.addf %2708, %2741 : vector<8x17xf32>
    %c701 = arith.constant 701 : index
    %2743 = memref.load %arg2[%c701] : memref<720xf32, #tpu.memory_space<smem>>
    %2744 = vector.broadcast %2743 : f32 to vector<8x17xf32>
    %2745 = arith.mulf %2744, %2714 : vector<8x17xf32>
    %2746 = arith.addf %2712, %2745 : vector<8x17xf32>
    %c6_283 = arith.constant 6 : index
    %c0_284 = arith.constant 0 : index
    %c16_285 = arith.constant 16 : index
    %2747 = vector.load %arg6[%c6_283, %c0_284, %c16_285] : memref<8x8x128xf32, #tpu.memory_space<vmem>>, vector<1x8x17xf32>
    %2748 = vector.shape_cast %2747 : vector<1x8x17xf32> to vector<8x17xf32>
    %c310 = arith.constant 310 : index
    %2749 = memref.load %arg2[%c310] : memref<720xf32, #tpu.memory_space<smem>>
    %2750 = vector.broadcast %2749 : f32 to vector<8x17xf32>
    %2751 = arith.mulf %2750, %2748 : vector<8x17xf32>
    %2752 = arith.addf %2718, %2751 : vector<8x17xf32>
    %c366 = arith.constant 366 : index
    %2753 = memref.load %arg2[%c366] : memref<720xf32, #tpu.memory_space<smem>>
    %2754 = vector.broadcast %2753 : f32 to vector<8x17xf32>
    %2755 = arith.mulf %2754, %2748 : vector<8x17xf32>
    %2756 = arith.addf %2722, %2755 : vector<8x17xf32>
    %c422 = arith.constant 422 : index
    %2757 = memref.load %arg2[%c422] : memref<720xf32, #tpu.memory_space<smem>>
    %2758 = vector.broadcast %2757 : f32 to vector<8x17xf32>
    %2759 = arith.mulf %2758, %2748 : vector<8x17xf32>
    %2760 = arith.addf %2726, %2759 : vector<8x17xf32>
    %c478 = arith.constant 478 : index
    %2761 = memref.load %arg2[%c478] : memref<720xf32, #tpu.memory_space<smem>>
    %2762 = vector.broadcast %2761 : f32 to vector<8x17xf32>
    %2763 = arith.mulf %2762, %2748 : vector<8x17xf32>
    %2764 = arith.addf %2730, %2763 : vector<8x17xf32>
    %c534 = arith.constant 534 : index
    %2765 = memref.load %arg2[%c534] : memref<720xf32, #tpu.memory_space<smem>>
    %2766 = vector.broadcast %2765 : f32 to vector<8x17xf32>
    %2767 = arith.mulf %2766, %2748 : vector<8x17xf32>
    %2768 = arith.addf %2734, %2767 : vector<8x17xf32>
    %c590 = arith.constant 590 : index
    %2769 = memref.load %arg2[%c590] : memref<720xf32, #tpu.memory_space<smem>>
    %2770 = vector.broadcast %2769 : f32 to vector<8x17xf32>
    %2771 = arith.mulf %2770, %2748 : vector<8x17xf32>
    %2772 = arith.addf %2738, %2771 : vector<8x17xf32>
    %c646 = arith.constant 646 : index
    %2773 = memref.load %arg2[%c646] : memref<720xf32, #tpu.memory_space<smem>>
    %2774 = vector.broadcast %2773 : f32 to vector<8x17xf32>
    %2775 = arith.mulf %2774, %2748 : vector<8x17xf32>
    %2776 = arith.addf %2742, %2775 : vector<8x17xf32>
    %c702 = arith.constant 702 : index
    %2777 = memref.load %arg2[%c702] : memref<720xf32, #tpu.memory_space<smem>>
    %2778 = vector.broadcast %2777 : f32 to vector<8x17xf32>
    %2779 = arith.mulf %2778, %2748 : vector<8x17xf32>
    %2780 = arith.addf %2746, %2779 : vector<8x17xf32>
    %c6_286 = arith.constant 6 : index
    %c0_287 = arith.constant 0 : index
    %c20_288 = arith.constant 20 : index
    %2781 = vector.load %arg6[%c6_286, %c0_287, %c20_288] : memref<8x8x128xf32, #tpu.memory_space<vmem>>, vector<1x8x17xf32>
    %2782 = vector.shape_cast %2781 : vector<1x8x17xf32> to vector<8x17xf32>
    %c311 = arith.constant 311 : index
    %2783 = memref.load %arg2[%c311] : memref<720xf32, #tpu.memory_space<smem>>
    %2784 = vector.broadcast %2783 : f32 to vector<8x17xf32>
    %2785 = arith.mulf %2784, %2782 : vector<8x17xf32>
    %2786 = arith.addf %2752, %2785 : vector<8x17xf32>
    %c367 = arith.constant 367 : index
    %2787 = memref.load %arg2[%c367] : memref<720xf32, #tpu.memory_space<smem>>
    %2788 = vector.broadcast %2787 : f32 to vector<8x17xf32>
    %2789 = arith.mulf %2788, %2782 : vector<8x17xf32>
    %2790 = arith.addf %2756, %2789 : vector<8x17xf32>
    %c423 = arith.constant 423 : index
    %2791 = memref.load %arg2[%c423] : memref<720xf32, #tpu.memory_space<smem>>
    %2792 = vector.broadcast %2791 : f32 to vector<8x17xf32>
    %2793 = arith.mulf %2792, %2782 : vector<8x17xf32>
    %2794 = arith.addf %2760, %2793 : vector<8x17xf32>
    %c479 = arith.constant 479 : index
    %2795 = memref.load %arg2[%c479] : memref<720xf32, #tpu.memory_space<smem>>
    %2796 = vector.broadcast %2795 : f32 to vector<8x17xf32>
    %2797 = arith.mulf %2796, %2782 : vector<8x17xf32>
    %2798 = arith.addf %2764, %2797 : vector<8x17xf32>
    %c535 = arith.constant 535 : index
    %2799 = memref.load %arg2[%c535] : memref<720xf32, #tpu.memory_space<smem>>
    %2800 = vector.broadcast %2799 : f32 to vector<8x17xf32>
    %2801 = arith.mulf %2800, %2782 : vector<8x17xf32>
    %2802 = arith.addf %2768, %2801 : vector<8x17xf32>
    %c591 = arith.constant 591 : index
    %2803 = memref.load %arg2[%c591] : memref<720xf32, #tpu.memory_space<smem>>
    %2804 = vector.broadcast %2803 : f32 to vector<8x17xf32>
    %2805 = arith.mulf %2804, %2782 : vector<8x17xf32>
    %2806 = arith.addf %2772, %2805 : vector<8x17xf32>
    %c647 = arith.constant 647 : index
    %2807 = memref.load %arg2[%c647] : memref<720xf32, #tpu.memory_space<smem>>
    %2808 = vector.broadcast %2807 : f32 to vector<8x17xf32>
    %2809 = arith.mulf %2808, %2782 : vector<8x17xf32>
    %2810 = arith.addf %2776, %2809 : vector<8x17xf32>
    %c703 = arith.constant 703 : index
    %2811 = memref.load %arg2[%c703] : memref<720xf32, #tpu.memory_space<smem>>
    %2812 = vector.broadcast %2811 : f32 to vector<8x17xf32>
    %2813 = arith.mulf %2812, %2782 : vector<8x17xf32>
    %2814 = arith.addf %2780, %2813 : vector<8x17xf32>
    %c6_289 = arith.constant 6 : index
    %c0_290 = arith.constant 0 : index
    %c24_291 = arith.constant 24 : index
    %2815 = vector.load %arg6[%c6_289, %c0_290, %c24_291] : memref<8x8x128xf32, #tpu.memory_space<vmem>>, vector<1x8x17xf32>
    %2816 = vector.shape_cast %2815 : vector<1x8x17xf32> to vector<8x17xf32>
    %c312 = arith.constant 312 : index
    %2817 = memref.load %arg2[%c312] : memref<720xf32, #tpu.memory_space<smem>>
    %2818 = vector.broadcast %2817 : f32 to vector<8x17xf32>
    %2819 = arith.mulf %2818, %2816 : vector<8x17xf32>
    %2820 = arith.addf %2786, %2819 : vector<8x17xf32>
    %c368 = arith.constant 368 : index
    %2821 = memref.load %arg2[%c368] : memref<720xf32, #tpu.memory_space<smem>>
    %2822 = vector.broadcast %2821 : f32 to vector<8x17xf32>
    %2823 = arith.mulf %2822, %2816 : vector<8x17xf32>
    %2824 = arith.addf %2790, %2823 : vector<8x17xf32>
    %c424 = arith.constant 424 : index
    %2825 = memref.load %arg2[%c424] : memref<720xf32, #tpu.memory_space<smem>>
    %2826 = vector.broadcast %2825 : f32 to vector<8x17xf32>
    %2827 = arith.mulf %2826, %2816 : vector<8x17xf32>
    %2828 = arith.addf %2794, %2827 : vector<8x17xf32>
    %c480 = arith.constant 480 : index
    %2829 = memref.load %arg2[%c480] : memref<720xf32, #tpu.memory_space<smem>>
    %2830 = vector.broadcast %2829 : f32 to vector<8x17xf32>
    %2831 = arith.mulf %2830, %2816 : vector<8x17xf32>
    %2832 = arith.addf %2798, %2831 : vector<8x17xf32>
    %c536 = arith.constant 536 : index
    %2833 = memref.load %arg2[%c536] : memref<720xf32, #tpu.memory_space<smem>>
    %2834 = vector.broadcast %2833 : f32 to vector<8x17xf32>
    %2835 = arith.mulf %2834, %2816 : vector<8x17xf32>
    %2836 = arith.addf %2802, %2835 : vector<8x17xf32>
    %c592 = arith.constant 592 : index
    %2837 = memref.load %arg2[%c592] : memref<720xf32, #tpu.memory_space<smem>>
    %2838 = vector.broadcast %2837 : f32 to vector<8x17xf32>
    %2839 = arith.mulf %2838, %2816 : vector<8x17xf32>
    %2840 = arith.addf %2806, %2839 : vector<8x17xf32>
    %c648 = arith.constant 648 : index
    %2841 = memref.load %arg2[%c648] : memref<720xf32, #tpu.memory_space<smem>>
    %2842 = vector.broadcast %2841 : f32 to vector<8x17xf32>
    %2843 = arith.mulf %2842, %2816 : vector<8x17xf32>
    %2844 = arith.addf %2810, %2843 : vector<8x17xf32>
    %c704 = arith.constant 704 : index
    %2845 = memref.load %arg2[%c704] : memref<720xf32, #tpu.memory_space<smem>>
    %2846 = vector.broadcast %2845 : f32 to vector<8x17xf32>
    %2847 = arith.mulf %2846, %2816 : vector<8x17xf32>
    %2848 = arith.addf %2814, %2847 : vector<8x17xf32>
    %c7_292 = arith.constant 7 : index
    %c0_293 = arith.constant 0 : index
    %c0_294 = arith.constant 0 : index
    %2849 = vector.load %arg6[%c7_292, %c0_293, %c0_294] : memref<8x8x128xf32, #tpu.memory_space<vmem>>, vector<1x8x17xf32>
    %2850 = vector.shape_cast %2849 : vector<1x8x17xf32> to vector<8x17xf32>
    %c313 = arith.constant 313 : index
    %2851 = memref.load %arg2[%c313] : memref<720xf32, #tpu.memory_space<smem>>
    %2852 = vector.broadcast %2851 : f32 to vector<8x17xf32>
    %2853 = arith.mulf %2852, %2850 : vector<8x17xf32>
    %2854 = arith.addf %2820, %2853 : vector<8x17xf32>
    %c369 = arith.constant 369 : index
    %2855 = memref.load %arg2[%c369] : memref<720xf32, #tpu.memory_space<smem>>
    %2856 = vector.broadcast %2855 : f32 to vector<8x17xf32>
    %2857 = arith.mulf %2856, %2850 : vector<8x17xf32>
    %2858 = arith.addf %2824, %2857 : vector<8x17xf32>
    %c425 = arith.constant 425 : index
    %2859 = memref.load %arg2[%c425] : memref<720xf32, #tpu.memory_space<smem>>
    %2860 = vector.broadcast %2859 : f32 to vector<8x17xf32>
    %2861 = arith.mulf %2860, %2850 : vector<8x17xf32>
    %2862 = arith.addf %2828, %2861 : vector<8x17xf32>
    %c481 = arith.constant 481 : index
    %2863 = memref.load %arg2[%c481] : memref<720xf32, #tpu.memory_space<smem>>
    %2864 = vector.broadcast %2863 : f32 to vector<8x17xf32>
    %2865 = arith.mulf %2864, %2850 : vector<8x17xf32>
    %2866 = arith.addf %2832, %2865 : vector<8x17xf32>
    %c537 = arith.constant 537 : index
    %2867 = memref.load %arg2[%c537] : memref<720xf32, #tpu.memory_space<smem>>
    %2868 = vector.broadcast %2867 : f32 to vector<8x17xf32>
    %2869 = arith.mulf %2868, %2850 : vector<8x17xf32>
    %2870 = arith.addf %2836, %2869 : vector<8x17xf32>
    %c593 = arith.constant 593 : index
    %2871 = memref.load %arg2[%c593] : memref<720xf32, #tpu.memory_space<smem>>
    %2872 = vector.broadcast %2871 : f32 to vector<8x17xf32>
    %2873 = arith.mulf %2872, %2850 : vector<8x17xf32>
    %2874 = arith.addf %2840, %2873 : vector<8x17xf32>
    %c649 = arith.constant 649 : index
    %2875 = memref.load %arg2[%c649] : memref<720xf32, #tpu.memory_space<smem>>
    %2876 = vector.broadcast %2875 : f32 to vector<8x17xf32>
    %2877 = arith.mulf %2876, %2850 : vector<8x17xf32>
    %2878 = arith.addf %2844, %2877 : vector<8x17xf32>
    %c705 = arith.constant 705 : index
    %2879 = memref.load %arg2[%c705] : memref<720xf32, #tpu.memory_space<smem>>
    %2880 = vector.broadcast %2879 : f32 to vector<8x17xf32>
    %2881 = arith.mulf %2880, %2850 : vector<8x17xf32>
    %2882 = arith.addf %2848, %2881 : vector<8x17xf32>
    %c7_295 = arith.constant 7 : index
    %c0_296 = arith.constant 0 : index
    %c4_297 = arith.constant 4 : index
    %2883 = vector.load %arg6[%c7_295, %c0_296, %c4_297] : memref<8x8x128xf32, #tpu.memory_space<vmem>>, vector<1x8x17xf32>
    %2884 = vector.shape_cast %2883 : vector<1x8x17xf32> to vector<8x17xf32>
    %c314 = arith.constant 314 : index
    %2885 = memref.load %arg2[%c314] : memref<720xf32, #tpu.memory_space<smem>>
    %2886 = vector.broadcast %2885 : f32 to vector<8x17xf32>
    %2887 = arith.mulf %2886, %2884 : vector<8x17xf32>
    %2888 = arith.addf %2854, %2887 : vector<8x17xf32>
    %c370 = arith.constant 370 : index
    %2889 = memref.load %arg2[%c370] : memref<720xf32, #tpu.memory_space<smem>>
    %2890 = vector.broadcast %2889 : f32 to vector<8x17xf32>
    %2891 = arith.mulf %2890, %2884 : vector<8x17xf32>
    %2892 = arith.addf %2858, %2891 : vector<8x17xf32>
    %c426 = arith.constant 426 : index
    %2893 = memref.load %arg2[%c426] : memref<720xf32, #tpu.memory_space<smem>>
    %2894 = vector.broadcast %2893 : f32 to vector<8x17xf32>
    %2895 = arith.mulf %2894, %2884 : vector<8x17xf32>
    %2896 = arith.addf %2862, %2895 : vector<8x17xf32>
    %c482 = arith.constant 482 : index
    %2897 = memref.load %arg2[%c482] : memref<720xf32, #tpu.memory_space<smem>>
    %2898 = vector.broadcast %2897 : f32 to vector<8x17xf32>
    %2899 = arith.mulf %2898, %2884 : vector<8x17xf32>
    %2900 = arith.addf %2866, %2899 : vector<8x17xf32>
    %c538 = arith.constant 538 : index
    %2901 = memref.load %arg2[%c538] : memref<720xf32, #tpu.memory_space<smem>>
    %2902 = vector.broadcast %2901 : f32 to vector<8x17xf32>
    %2903 = arith.mulf %2902, %2884 : vector<8x17xf32>
    %2904 = arith.addf %2870, %2903 : vector<8x17xf32>
    %c594 = arith.constant 594 : index
    %2905 = memref.load %arg2[%c594] : memref<720xf32, #tpu.memory_space<smem>>
    %2906 = vector.broadcast %2905 : f32 to vector<8x17xf32>
    %2907 = arith.mulf %2906, %2884 : vector<8x17xf32>
    %2908 = arith.addf %2874, %2907 : vector<8x17xf32>
    %c650 = arith.constant 650 : index
    %2909 = memref.load %arg2[%c650] : memref<720xf32, #tpu.memory_space<smem>>
    %2910 = vector.broadcast %2909 : f32 to vector<8x17xf32>
    %2911 = arith.mulf %2910, %2884 : vector<8x17xf32>
    %2912 = arith.addf %2878, %2911 : vector<8x17xf32>
    %c706 = arith.constant 706 : index
    %2913 = memref.load %arg2[%c706] : memref<720xf32, #tpu.memory_space<smem>>
    %2914 = vector.broadcast %2913 : f32 to vector<8x17xf32>
    %2915 = arith.mulf %2914, %2884 : vector<8x17xf32>
    %2916 = arith.addf %2882, %2915 : vector<8x17xf32>
    %c7_298 = arith.constant 7 : index
    %c0_299 = arith.constant 0 : index
    %c8_300 = arith.constant 8 : index
    %2917 = vector.load %arg6[%c7_298, %c0_299, %c8_300] : memref<8x8x128xf32, #tpu.memory_space<vmem>>, vector<1x8x17xf32>
    %2918 = vector.shape_cast %2917 : vector<1x8x17xf32> to vector<8x17xf32>
    %c315 = arith.constant 315 : index
    %2919 = memref.load %arg2[%c315] : memref<720xf32, #tpu.memory_space<smem>>
    %2920 = vector.broadcast %2919 : f32 to vector<8x17xf32>
    %2921 = arith.mulf %2920, %2918 : vector<8x17xf32>
    %2922 = arith.addf %2888, %2921 : vector<8x17xf32>
    %c371 = arith.constant 371 : index
    %2923 = memref.load %arg2[%c371] : memref<720xf32, #tpu.memory_space<smem>>
    %2924 = vector.broadcast %2923 : f32 to vector<8x17xf32>
    %2925 = arith.mulf %2924, %2918 : vector<8x17xf32>
    %2926 = arith.addf %2892, %2925 : vector<8x17xf32>
    %c427 = arith.constant 427 : index
    %2927 = memref.load %arg2[%c427] : memref<720xf32, #tpu.memory_space<smem>>
    %2928 = vector.broadcast %2927 : f32 to vector<8x17xf32>
    %2929 = arith.mulf %2928, %2918 : vector<8x17xf32>
    %2930 = arith.addf %2896, %2929 : vector<8x17xf32>
    %c483 = arith.constant 483 : index
    %2931 = memref.load %arg2[%c483] : memref<720xf32, #tpu.memory_space<smem>>
    %2932 = vector.broadcast %2931 : f32 to vector<8x17xf32>
    %2933 = arith.mulf %2932, %2918 : vector<8x17xf32>
    %2934 = arith.addf %2900, %2933 : vector<8x17xf32>
    %c539 = arith.constant 539 : index
    %2935 = memref.load %arg2[%c539] : memref<720xf32, #tpu.memory_space<smem>>
    %2936 = vector.broadcast %2935 : f32 to vector<8x17xf32>
    %2937 = arith.mulf %2936, %2918 : vector<8x17xf32>
    %2938 = arith.addf %2904, %2937 : vector<8x17xf32>
    %c595 = arith.constant 595 : index
    %2939 = memref.load %arg2[%c595] : memref<720xf32, #tpu.memory_space<smem>>
    %2940 = vector.broadcast %2939 : f32 to vector<8x17xf32>
    %2941 = arith.mulf %2940, %2918 : vector<8x17xf32>
    %2942 = arith.addf %2908, %2941 : vector<8x17xf32>
    %c651 = arith.constant 651 : index
    %2943 = memref.load %arg2[%c651] : memref<720xf32, #tpu.memory_space<smem>>
    %2944 = vector.broadcast %2943 : f32 to vector<8x17xf32>
    %2945 = arith.mulf %2944, %2918 : vector<8x17xf32>
    %2946 = arith.addf %2912, %2945 : vector<8x17xf32>
    %c707 = arith.constant 707 : index
    %2947 = memref.load %arg2[%c707] : memref<720xf32, #tpu.memory_space<smem>>
    %2948 = vector.broadcast %2947 : f32 to vector<8x17xf32>
    %2949 = arith.mulf %2948, %2918 : vector<8x17xf32>
    %2950 = arith.addf %2916, %2949 : vector<8x17xf32>
    %c7_301 = arith.constant 7 : index
    %c0_302 = arith.constant 0 : index
    %c12_303 = arith.constant 12 : index
    %2951 = vector.load %arg6[%c7_301, %c0_302, %c12_303] : memref<8x8x128xf32, #tpu.memory_space<vmem>>, vector<1x8x17xf32>
    %2952 = vector.shape_cast %2951 : vector<1x8x17xf32> to vector<8x17xf32>
    %c316 = arith.constant 316 : index
    %2953 = memref.load %arg2[%c316] : memref<720xf32, #tpu.memory_space<smem>>
    %2954 = vector.broadcast %2953 : f32 to vector<8x17xf32>
    %2955 = arith.mulf %2954, %2952 : vector<8x17xf32>
    %2956 = arith.addf %2922, %2955 : vector<8x17xf32>
    %c372 = arith.constant 372 : index
    %2957 = memref.load %arg2[%c372] : memref<720xf32, #tpu.memory_space<smem>>
    %2958 = vector.broadcast %2957 : f32 to vector<8x17xf32>
    %2959 = arith.mulf %2958, %2952 : vector<8x17xf32>
    %2960 = arith.addf %2926, %2959 : vector<8x17xf32>
    %c428 = arith.constant 428 : index
    %2961 = memref.load %arg2[%c428] : memref<720xf32, #tpu.memory_space<smem>>
    %2962 = vector.broadcast %2961 : f32 to vector<8x17xf32>
    %2963 = arith.mulf %2962, %2952 : vector<8x17xf32>
    %2964 = arith.addf %2930, %2963 : vector<8x17xf32>
    %c484 = arith.constant 484 : index
    %2965 = memref.load %arg2[%c484] : memref<720xf32, #tpu.memory_space<smem>>
    %2966 = vector.broadcast %2965 : f32 to vector<8x17xf32>
    %2967 = arith.mulf %2966, %2952 : vector<8x17xf32>
    %2968 = arith.addf %2934, %2967 : vector<8x17xf32>
    %c540 = arith.constant 540 : index
    %2969 = memref.load %arg2[%c540] : memref<720xf32, #tpu.memory_space<smem>>
    %2970 = vector.broadcast %2969 : f32 to vector<8x17xf32>
    %2971 = arith.mulf %2970, %2952 : vector<8x17xf32>
    %2972 = arith.addf %2938, %2971 : vector<8x17xf32>
    %c596 = arith.constant 596 : index
    %2973 = memref.load %arg2[%c596] : memref<720xf32, #tpu.memory_space<smem>>
    %2974 = vector.broadcast %2973 : f32 to vector<8x17xf32>
    %2975 = arith.mulf %2974, %2952 : vector<8x17xf32>
    %2976 = arith.addf %2942, %2975 : vector<8x17xf32>
    %c652 = arith.constant 652 : index
    %2977 = memref.load %arg2[%c652] : memref<720xf32, #tpu.memory_space<smem>>
    %2978 = vector.broadcast %2977 : f32 to vector<8x17xf32>
    %2979 = arith.mulf %2978, %2952 : vector<8x17xf32>
    %2980 = arith.addf %2946, %2979 : vector<8x17xf32>
    %c708 = arith.constant 708 : index
    %2981 = memref.load %arg2[%c708] : memref<720xf32, #tpu.memory_space<smem>>
    %2982 = vector.broadcast %2981 : f32 to vector<8x17xf32>
    %2983 = arith.mulf %2982, %2952 : vector<8x17xf32>
    %2984 = arith.addf %2950, %2983 : vector<8x17xf32>
    %c7_304 = arith.constant 7 : index
    %c0_305 = arith.constant 0 : index
    %c16_306 = arith.constant 16 : index
    %2985 = vector.load %arg6[%c7_304, %c0_305, %c16_306] : memref<8x8x128xf32, #tpu.memory_space<vmem>>, vector<1x8x17xf32>
    %2986 = vector.shape_cast %2985 : vector<1x8x17xf32> to vector<8x17xf32>
    %c317 = arith.constant 317 : index
    %2987 = memref.load %arg2[%c317] : memref<720xf32, #tpu.memory_space<smem>>
    %2988 = vector.broadcast %2987 : f32 to vector<8x17xf32>
    %2989 = arith.mulf %2988, %2986 : vector<8x17xf32>
    %2990 = arith.addf %2956, %2989 : vector<8x17xf32>
    %c373 = arith.constant 373 : index
    %2991 = memref.load %arg2[%c373] : memref<720xf32, #tpu.memory_space<smem>>
    %2992 = vector.broadcast %2991 : f32 to vector<8x17xf32>
    %2993 = arith.mulf %2992, %2986 : vector<8x17xf32>
    %2994 = arith.addf %2960, %2993 : vector<8x17xf32>
    %c429 = arith.constant 429 : index
    %2995 = memref.load %arg2[%c429] : memref<720xf32, #tpu.memory_space<smem>>
    %2996 = vector.broadcast %2995 : f32 to vector<8x17xf32>
    %2997 = arith.mulf %2996, %2986 : vector<8x17xf32>
    %2998 = arith.addf %2964, %2997 : vector<8x17xf32>
    %c485 = arith.constant 485 : index
    %2999 = memref.load %arg2[%c485] : memref<720xf32, #tpu.memory_space<smem>>
    %3000 = vector.broadcast %2999 : f32 to vector<8x17xf32>
    %3001 = arith.mulf %3000, %2986 : vector<8x17xf32>
    %3002 = arith.addf %2968, %3001 : vector<8x17xf32>
    %c541 = arith.constant 541 : index
    %3003 = memref.load %arg2[%c541] : memref<720xf32, #tpu.memory_space<smem>>
    %3004 = vector.broadcast %3003 : f32 to vector<8x17xf32>
    %3005 = arith.mulf %3004, %2986 : vector<8x17xf32>
    %3006 = arith.addf %2972, %3005 : vector<8x17xf32>
    %c597 = arith.constant 597 : index
    %3007 = memref.load %arg2[%c597] : memref<720xf32, #tpu.memory_space<smem>>
    %3008 = vector.broadcast %3007 : f32 to vector<8x17xf32>
    %3009 = arith.mulf %3008, %2986 : vector<8x17xf32>
    %3010 = arith.addf %2976, %3009 : vector<8x17xf32>
    %c653 = arith.constant 653 : index
    %3011 = memref.load %arg2[%c653] : memref<720xf32, #tpu.memory_space<smem>>
    %3012 = vector.broadcast %3011 : f32 to vector<8x17xf32>
    %3013 = arith.mulf %3012, %2986 : vector<8x17xf32>
    %3014 = arith.addf %2980, %3013 : vector<8x17xf32>
    %c709 = arith.constant 709 : index
    %3015 = memref.load %arg2[%c709] : memref<720xf32, #tpu.memory_space<smem>>
    %3016 = vector.broadcast %3015 : f32 to vector<8x17xf32>
    %3017 = arith.mulf %3016, %2986 : vector<8x17xf32>
    %3018 = arith.addf %2984, %3017 : vector<8x17xf32>
    %c7_307 = arith.constant 7 : index
    %c0_308 = arith.constant 0 : index
    %c20_309 = arith.constant 20 : index
    %3019 = vector.load %arg6[%c7_307, %c0_308, %c20_309] : memref<8x8x128xf32, #tpu.memory_space<vmem>>, vector<1x8x17xf32>
    %3020 = vector.shape_cast %3019 : vector<1x8x17xf32> to vector<8x17xf32>
    %c318 = arith.constant 318 : index
    %3021 = memref.load %arg2[%c318] : memref<720xf32, #tpu.memory_space<smem>>
    %3022 = vector.broadcast %3021 : f32 to vector<8x17xf32>
    %3023 = arith.mulf %3022, %3020 : vector<8x17xf32>
    %3024 = arith.addf %2990, %3023 : vector<8x17xf32>
    %c374 = arith.constant 374 : index
    %3025 = memref.load %arg2[%c374] : memref<720xf32, #tpu.memory_space<smem>>
    %3026 = vector.broadcast %3025 : f32 to vector<8x17xf32>
    %3027 = arith.mulf %3026, %3020 : vector<8x17xf32>
    %3028 = arith.addf %2994, %3027 : vector<8x17xf32>
    %c430 = arith.constant 430 : index
    %3029 = memref.load %arg2[%c430] : memref<720xf32, #tpu.memory_space<smem>>
    %3030 = vector.broadcast %3029 : f32 to vector<8x17xf32>
    %3031 = arith.mulf %3030, %3020 : vector<8x17xf32>
    %3032 = arith.addf %2998, %3031 : vector<8x17xf32>
    %c486 = arith.constant 486 : index
    %3033 = memref.load %arg2[%c486] : memref<720xf32, #tpu.memory_space<smem>>
    %3034 = vector.broadcast %3033 : f32 to vector<8x17xf32>
    %3035 = arith.mulf %3034, %3020 : vector<8x17xf32>
    %3036 = arith.addf %3002, %3035 : vector<8x17xf32>
    %c542 = arith.constant 542 : index
    %3037 = memref.load %arg2[%c542] : memref<720xf32, #tpu.memory_space<smem>>
    %3038 = vector.broadcast %3037 : f32 to vector<8x17xf32>
    %3039 = arith.mulf %3038, %3020 : vector<8x17xf32>
    %3040 = arith.addf %3006, %3039 : vector<8x17xf32>
    %c598 = arith.constant 598 : index
    %3041 = memref.load %arg2[%c598] : memref<720xf32, #tpu.memory_space<smem>>
    %3042 = vector.broadcast %3041 : f32 to vector<8x17xf32>
    %3043 = arith.mulf %3042, %3020 : vector<8x17xf32>
    %3044 = arith.addf %3010, %3043 : vector<8x17xf32>
    %c654 = arith.constant 654 : index
    %3045 = memref.load %arg2[%c654] : memref<720xf32, #tpu.memory_space<smem>>
    %3046 = vector.broadcast %3045 : f32 to vector<8x17xf32>
    %3047 = arith.mulf %3046, %3020 : vector<8x17xf32>
    %3048 = arith.addf %3014, %3047 : vector<8x17xf32>
    %c710 = arith.constant 710 : index
    %3049 = memref.load %arg2[%c710] : memref<720xf32, #tpu.memory_space<smem>>
    %3050 = vector.broadcast %3049 : f32 to vector<8x17xf32>
    %3051 = arith.mulf %3050, %3020 : vector<8x17xf32>
    %3052 = arith.addf %3018, %3051 : vector<8x17xf32>
    %c7_310 = arith.constant 7 : index
    %c0_311 = arith.constant 0 : index
    %c24_312 = arith.constant 24 : index
    %3053 = vector.load %arg6[%c7_310, %c0_311, %c24_312] : memref<8x8x128xf32, #tpu.memory_space<vmem>>, vector<1x8x17xf32>
    %3054 = vector.shape_cast %3053 : vector<1x8x17xf32> to vector<8x17xf32>
    %c319 = arith.constant 319 : index
    %3055 = memref.load %arg2[%c319] : memref<720xf32, #tpu.memory_space<smem>>
    %3056 = vector.broadcast %3055 : f32 to vector<8x17xf32>
    %3057 = arith.mulf %3056, %3054 : vector<8x17xf32>
    %3058 = arith.addf %3024, %3057 : vector<8x17xf32>
    %c375 = arith.constant 375 : index
    %3059 = memref.load %arg2[%c375] : memref<720xf32, #tpu.memory_space<smem>>
    %3060 = vector.broadcast %3059 : f32 to vector<8x17xf32>
    %3061 = arith.mulf %3060, %3054 : vector<8x17xf32>
    %3062 = arith.addf %3028, %3061 : vector<8x17xf32>
    %c431 = arith.constant 431 : index
    %3063 = memref.load %arg2[%c431] : memref<720xf32, #tpu.memory_space<smem>>
    %3064 = vector.broadcast %3063 : f32 to vector<8x17xf32>
    %3065 = arith.mulf %3064, %3054 : vector<8x17xf32>
    %3066 = arith.addf %3032, %3065 : vector<8x17xf32>
    %c487 = arith.constant 487 : index
    %3067 = memref.load %arg2[%c487] : memref<720xf32, #tpu.memory_space<smem>>
    %3068 = vector.broadcast %3067 : f32 to vector<8x17xf32>
    %3069 = arith.mulf %3068, %3054 : vector<8x17xf32>
    %3070 = arith.addf %3036, %3069 : vector<8x17xf32>
    %c543 = arith.constant 543 : index
    %3071 = memref.load %arg2[%c543] : memref<720xf32, #tpu.memory_space<smem>>
    %3072 = vector.broadcast %3071 : f32 to vector<8x17xf32>
    %3073 = arith.mulf %3072, %3054 : vector<8x17xf32>
    %3074 = arith.addf %3040, %3073 : vector<8x17xf32>
    %c599 = arith.constant 599 : index
    %3075 = memref.load %arg2[%c599] : memref<720xf32, #tpu.memory_space<smem>>
    %3076 = vector.broadcast %3075 : f32 to vector<8x17xf32>
    %3077 = arith.mulf %3076, %3054 : vector<8x17xf32>
    %3078 = arith.addf %3044, %3077 : vector<8x17xf32>
    %c655 = arith.constant 655 : index
    %3079 = memref.load %arg2[%c655] : memref<720xf32, #tpu.memory_space<smem>>
    %3080 = vector.broadcast %3079 : f32 to vector<8x17xf32>
    %3081 = arith.mulf %3080, %3054 : vector<8x17xf32>
    %3082 = arith.addf %3048, %3081 : vector<8x17xf32>
    %c711 = arith.constant 711 : index
    %3083 = memref.load %arg2[%c711] : memref<720xf32, #tpu.memory_space<smem>>
    %3084 = vector.broadcast %3083 : f32 to vector<8x17xf32>
    %3085 = arith.mulf %3084, %3054 : vector<8x17xf32>
    %3086 = arith.addf %3052, %3085 : vector<8x17xf32>
    %c712 = arith.constant 712 : index
    %3087 = memref.load %arg2[%c712] : memref<720xf32, #tpu.memory_space<smem>>
    %3088 = vector.broadcast %3087 : f32 to vector<8x17xf32>
    %3089 = arith.addf %3058, %3088 : vector<8x17xf32>
    %cst_313 = arith.constant 0.000000e+00 : f32
    %3090 = vector.broadcast %cst_313 : f32 to vector<8x17xf32>
    %3091 = arith.maximumf %3089, %3090 : vector<8x17xf32>
    %3092 = vector.extract_strided_slice %3091 {offsets = [0, 0], sizes = [8, 9], strides = [1, 1]} : vector<8x17xf32> to vector<8x9xf32>
    %3093 = vector.extract_strided_slice %3091 {offsets = [0, 4], sizes = [8, 9], strides = [1, 1]} : vector<8x17xf32> to vector<8x9xf32>
    %3094 = arith.maximumf %3092, %3093 : vector<8x9xf32>
    %c713 = arith.constant 713 : index
    %3095 = memref.load %arg2[%c713] : memref<720xf32, #tpu.memory_space<smem>>
    %3096 = vector.broadcast %3095 : f32 to vector<8x17xf32>
    %3097 = arith.addf %3062, %3096 : vector<8x17xf32>
    %cst_314 = arith.constant 0.000000e+00 : f32
    %3098 = vector.broadcast %cst_314 : f32 to vector<8x17xf32>
    %3099 = arith.maximumf %3097, %3098 : vector<8x17xf32>
    %3100 = vector.extract_strided_slice %3099 {offsets = [0, 0], sizes = [8, 9], strides = [1, 1]} : vector<8x17xf32> to vector<8x9xf32>
    %3101 = vector.extract_strided_slice %3099 {offsets = [0, 4], sizes = [8, 9], strides = [1, 1]} : vector<8x17xf32> to vector<8x9xf32>
    %3102 = arith.maximumf %3100, %3101 : vector<8x9xf32>
    %c714 = arith.constant 714 : index
    %3103 = memref.load %arg2[%c714] : memref<720xf32, #tpu.memory_space<smem>>
    %3104 = vector.broadcast %3103 : f32 to vector<8x17xf32>
    %3105 = arith.addf %3066, %3104 : vector<8x17xf32>
    %cst_315 = arith.constant 0.000000e+00 : f32
    %3106 = vector.broadcast %cst_315 : f32 to vector<8x17xf32>
    %3107 = arith.maximumf %3105, %3106 : vector<8x17xf32>
    %3108 = vector.extract_strided_slice %3107 {offsets = [0, 0], sizes = [8, 9], strides = [1, 1]} : vector<8x17xf32> to vector<8x9xf32>
    %3109 = vector.extract_strided_slice %3107 {offsets = [0, 4], sizes = [8, 9], strides = [1, 1]} : vector<8x17xf32> to vector<8x9xf32>
    %3110 = arith.maximumf %3108, %3109 : vector<8x9xf32>
    %c715 = arith.constant 715 : index
    %3111 = memref.load %arg2[%c715] : memref<720xf32, #tpu.memory_space<smem>>
    %3112 = vector.broadcast %3111 : f32 to vector<8x17xf32>
    %3113 = arith.addf %3070, %3112 : vector<8x17xf32>
    %cst_316 = arith.constant 0.000000e+00 : f32
    %3114 = vector.broadcast %cst_316 : f32 to vector<8x17xf32>
    %3115 = arith.maximumf %3113, %3114 : vector<8x17xf32>
    %3116 = vector.extract_strided_slice %3115 {offsets = [0, 0], sizes = [8, 9], strides = [1, 1]} : vector<8x17xf32> to vector<8x9xf32>
    %3117 = vector.extract_strided_slice %3115 {offsets = [0, 4], sizes = [8, 9], strides = [1, 1]} : vector<8x17xf32> to vector<8x9xf32>
    %3118 = arith.maximumf %3116, %3117 : vector<8x9xf32>
    %c716 = arith.constant 716 : index
    %3119 = memref.load %arg2[%c716] : memref<720xf32, #tpu.memory_space<smem>>
    %3120 = vector.broadcast %3119 : f32 to vector<8x17xf32>
    %3121 = arith.addf %3074, %3120 : vector<8x17xf32>
    %cst_317 = arith.constant 0.000000e+00 : f32
    %3122 = vector.broadcast %cst_317 : f32 to vector<8x17xf32>
    %3123 = arith.maximumf %3121, %3122 : vector<8x17xf32>
    %3124 = vector.extract_strided_slice %3123 {offsets = [0, 0], sizes = [8, 9], strides = [1, 1]} : vector<8x17xf32> to vector<8x9xf32>
    %3125 = vector.extract_strided_slice %3123 {offsets = [0, 4], sizes = [8, 9], strides = [1, 1]} : vector<8x17xf32> to vector<8x9xf32>
    %3126 = arith.maximumf %3124, %3125 : vector<8x9xf32>
    %c717 = arith.constant 717 : index
    %3127 = memref.load %arg2[%c717] : memref<720xf32, #tpu.memory_space<smem>>
    %3128 = vector.broadcast %3127 : f32 to vector<8x17xf32>
    %3129 = arith.addf %3078, %3128 : vector<8x17xf32>
    %cst_318 = arith.constant 0.000000e+00 : f32
    %3130 = vector.broadcast %cst_318 : f32 to vector<8x17xf32>
    %3131 = arith.maximumf %3129, %3130 : vector<8x17xf32>
    %3132 = vector.extract_strided_slice %3131 {offsets = [0, 0], sizes = [8, 9], strides = [1, 1]} : vector<8x17xf32> to vector<8x9xf32>
    %3133 = vector.extract_strided_slice %3131 {offsets = [0, 4], sizes = [8, 9], strides = [1, 1]} : vector<8x17xf32> to vector<8x9xf32>
    %3134 = arith.maximumf %3132, %3133 : vector<8x9xf32>
    %c718 = arith.constant 718 : index
    %3135 = memref.load %arg2[%c718] : memref<720xf32, #tpu.memory_space<smem>>
    %3136 = vector.broadcast %3135 : f32 to vector<8x17xf32>
    %3137 = arith.addf %3082, %3136 : vector<8x17xf32>
    %cst_319 = arith.constant 0.000000e+00 : f32
    %3138 = vector.broadcast %cst_319 : f32 to vector<8x17xf32>
    %3139 = arith.maximumf %3137, %3138 : vector<8x17xf32>
    %3140 = vector.extract_strided_slice %3139 {offsets = [0, 0], sizes = [8, 9], strides = [1, 1]} : vector<8x17xf32> to vector<8x9xf32>
    %3141 = vector.extract_strided_slice %3139 {offsets = [0, 4], sizes = [8, 9], strides = [1, 1]} : vector<8x17xf32> to vector<8x9xf32>
    %3142 = arith.maximumf %3140, %3141 : vector<8x9xf32>
    %c719 = arith.constant 719 : index
    %3143 = memref.load %arg2[%c719] : memref<720xf32, #tpu.memory_space<smem>>
    %3144 = vector.broadcast %3143 : f32 to vector<8x17xf32>
    %3145 = arith.addf %3086, %3144 : vector<8x17xf32>
    %cst_320 = arith.constant 0.000000e+00 : f32
    %3146 = vector.broadcast %cst_320 : f32 to vector<8x17xf32>
    %3147 = arith.maximumf %3145, %3146 : vector<8x17xf32>
    %3148 = vector.extract_strided_slice %3147 {offsets = [0, 0], sizes = [8, 9], strides = [1, 1]} : vector<8x17xf32> to vector<8x9xf32>
    %3149 = vector.extract_strided_slice %3147 {offsets = [0, 4], sizes = [8, 9], strides = [1, 1]} : vector<8x17xf32> to vector<8x9xf32>
    %3150 = arith.maximumf %3148, %3149 : vector<8x9xf32>
    %3151 = vector.extract_strided_slice %3094 {offsets = [0, 0], sizes = [8, 1], strides = [1, 1]} : vector<8x9xf32> to vector<8x1xf32>
    %3152 = vector.extract_strided_slice %3094 {offsets = [0, 8], sizes = [8, 1], strides = [1, 1]} : vector<8x9xf32> to vector<8x1xf32>
    %3153 = vector.extract_strided_slice %3102 {offsets = [0, 0], sizes = [8, 1], strides = [1, 1]} : vector<8x9xf32> to vector<8x1xf32>
    %3154 = vector.extract_strided_slice %3102 {offsets = [0, 8], sizes = [8, 1], strides = [1, 1]} : vector<8x9xf32> to vector<8x1xf32>
    %3155 = vector.extract_strided_slice %3110 {offsets = [0, 0], sizes = [8, 1], strides = [1, 1]} : vector<8x9xf32> to vector<8x1xf32>
    %3156 = vector.extract_strided_slice %3110 {offsets = [0, 8], sizes = [8, 1], strides = [1, 1]} : vector<8x9xf32> to vector<8x1xf32>
    %3157 = vector.extract_strided_slice %3118 {offsets = [0, 0], sizes = [8, 1], strides = [1, 1]} : vector<8x9xf32> to vector<8x1xf32>
    %3158 = vector.extract_strided_slice %3118 {offsets = [0, 8], sizes = [8, 1], strides = [1, 1]} : vector<8x9xf32> to vector<8x1xf32>
    %3159 = vector.extract_strided_slice %3126 {offsets = [0, 0], sizes = [8, 1], strides = [1, 1]} : vector<8x9xf32> to vector<8x1xf32>
    %3160 = vector.extract_strided_slice %3126 {offsets = [0, 8], sizes = [8, 1], strides = [1, 1]} : vector<8x9xf32> to vector<8x1xf32>
    %3161 = vector.extract_strided_slice %3134 {offsets = [0, 0], sizes = [8, 1], strides = [1, 1]} : vector<8x9xf32> to vector<8x1xf32>
    %3162 = vector.extract_strided_slice %3134 {offsets = [0, 8], sizes = [8, 1], strides = [1, 1]} : vector<8x9xf32> to vector<8x1xf32>
    %3163 = vector.extract_strided_slice %3142 {offsets = [0, 0], sizes = [8, 1], strides = [1, 1]} : vector<8x9xf32> to vector<8x1xf32>
    %3164 = vector.extract_strided_slice %3142 {offsets = [0, 8], sizes = [8, 1], strides = [1, 1]} : vector<8x9xf32> to vector<8x1xf32>
    %3165 = vector.extract_strided_slice %3150 {offsets = [0, 0], sizes = [8, 1], strides = [1, 1]} : vector<8x9xf32> to vector<8x1xf32>
    %3166 = vector.extract_strided_slice %3150 {offsets = [0, 8], sizes = [8, 1], strides = [1, 1]} : vector<8x9xf32> to vector<8x1xf32>
    %3167 = tpu.concatenate %3151, %3152, %3153, %3154, %3155, %3156, %3157, %3158, %3159, %3160, %3161, %3162, %3163, %3164, %3165, %3166 in 1 : vector<8x1xf32>, vector<8x1xf32>, vector<8x1xf32>, vector<8x1xf32>, vector<8x1xf32>, vector<8x1xf32>, vector<8x1xf32>, vector<8x1xf32>, vector<8x1xf32>, vector<8x1xf32>, vector<8x1xf32>, vector<8x1xf32>, vector<8x1xf32>, vector<8x1xf32>, vector<8x1xf32>, vector<8x1xf32> -> vector<8x16xf32>
    %c0_321 = arith.constant 0 : index
    %c0_322 = arith.constant 0 : index
    %3168 = vector.load %arg3[%c0_321, %c0_322] : memref<17x32xf32, #tpu.memory_space<vmem>>, vector<16x32xf32>
    %c16_323 = arith.constant 16 : index
    %c0_324 = arith.constant 0 : index
    %3169 = vector.load %arg3[%c16_323, %c0_324] : memref<17x32xf32, #tpu.memory_space<vmem>>, vector<1x32xf32>
    %cst_325 = arith.constant dense<0.000000e+00> : vector<8x32xf32>
    %3170 = tpu.matmul %3167, %3168, %cst_325 {dimension_numbers = #tpu.dot_dimension_numbers<[1], [0], [0], [1], [0, 0, 1, 1], [], []>} : vector<8x16xf32>, vector<16x32xf32>, vector<8x32xf32> -> vector<8x32xf32>
    %3171 = vector.broadcast %3169 : vector<1x32xf32> to vector<8x32xf32>
    %3172 = arith.addf %3170, %3171 : vector<8x32xf32>
    %c0_326 = arith.constant 0 : index
    %c0_327 = arith.constant 0 : index
    %3173 = vector.load %arg4[%c0_326, %c0_327] : memref<8x32xf32, #tpu.memory_space<vmem>>, vector<8x32xf32>
    tpu.vector_store %arg4[%c0_326, %c0_327], %3172 {strides = array<i32>} : memref<8x32xf32, #tpu.memory_space<vmem>>, vector<8x32xf32>,
    return
  }
  func.func @transform_0(%arg0: i32) -> (i32, i32) {
    %c0_i32 = arith.constant 0 : i32
    %c0_i32_0 = arith.constant 0 : i32
    return %arg0, %c0_i32 : i32, i32
  }
  func.func @transform_1(%arg0: i32) -> i32 {
    %c0_i32 = arith.constant 0 : i32
    %c0_i32_0 = arith.constant 0 : i32
    return %c0_i32 : i32
  }
  func.func @transform_2(%arg0: i32) -> (i32, i32) {
    %c0_i32 = arith.constant 0 : i32
    %c0_i32_0 = arith.constant 0 : i32
    %c0_i32_1 = arith.constant 0 : i32
    return %c0_i32, %c0_i32_0 : i32, i32
  }
  func.func @transform_3(%arg0: i32) -> (i32, i32) {
    %c0_i32 = arith.constant 0 : i32
    %c0_i32_0 = arith.constant 0 : i32
    return %arg0, %c0_i32 : i32, i32
  }
}

</mosaic_0001>

<llo_original>
// kernel: cell_forward.1
$region0: #{cell_forward.1}
  #allocation0 [shape = 'u32[]', space=smem, size = 0x4, offset = 0x4, fixed_abs, tag = 'smem constant byte address 0x4 - core index']
  #allocation1 [shape = 'u32[144,128]{1,0:T(1,128)}', space=vmem, size = 0x12000, scoped, tag = 'internal scratch']
  #allocation2 [shape = 'f32[4,8,128]{2,1,0:T(8,128)}', space=vmem, size = 0x4000, scoped, tag = 'scratch operand']
  #allocation3 [shape = 'f32[8,8,128]{2,1,0:T(8,128)}', space=vmem, size = 0x8000, scoped, tag = 'scratch operand']
  %s0 = inlined_call_operand.hbm [shape: f32[16,64], index: 0, kind: input, shape index: {}]
  %s1 = inlined_call_operand.hbm [shape: f32[720], index: 1, kind: input, shape index: {}]
  %s2 = inlined_call_operand.hbm [shape: f32[17,32], index: 2, kind: input, shape index: {}]
  %s3 = inlined_call_operand.hbm [shape: f32[16,32], index: 3, kind: output, shape index: {}]
  %s4 = sld [smem:[#allocation0]]
  $region57: #{cell_forward.1} parent=0
    _
  %s6 = ssub.s32 1, %s4
  %s7 = scalar_select 0, %s6, %s4
  $region1: #{cell_forward.1} parent=0
    #allocation4 [shape = 'u8[8192]{0}', space=vmem, size = 0x2000, scoped, tag = 'input window, operand 0']
    #allocation5 [shape = 's32[2]{0}', space=sflag, size = 0x8, scoped, tag = 'scoped memory for cell_forward.1']
    #allocation6 [shape = 's32[2]{0}', space=sflag, size = 0x8, scoped, tag = 'scoped memory for cell_forward.1']
    #allocation7 [shape = 's32[2]{0}', space=sflag, size = 0x8, scoped, tag = 'scoped memory for cell_forward.1']
    #allocation8 [shape = 'u8[3072]{0}', space=smem, size = 0xc00, scoped, tag = 'input window, operand 1, single buffered']
    #allocation9 [shape = 'u8[12288]{0}', space=vmem, size = 0x3000, scoped, tag = 'input window, operand 2, single buffered']
    #allocation10 [shape = 's32[1]{0}', space=sflag, size = 0x4, scoped, tag = 'scoped memory for cell_forward.1']
    #allocation11 [shape = 'u8[8192]{0}', space=vmem, size = 0x2000, scoped, tag = 'output window, operand 0']
    %8 = vsyncpa [#allocation5], 0
    %s9 = scalar_lea.sflag [#allocation5], 1
    %10 = vsyncpa %s9, 0
    %11 = vsyncpa [#allocation7], 0
    %12 = vsyncpa [#allocation10], 0
    %13 = vsyncpa [#allocation6], 0
    %s14 = scalar_lea.sflag [#allocation6], 1
    %15 = vsyncpa %s14, 0
    loop: start=0, step=1, limit=4
    $region2: #{cell_forward.1} parent=1 // loop_pre_header
      _
    $region3: #{cell_forward.1} parent=1 // loop_header
      %s17 = sphi 0, %s21
      %p18 = scmp.ge.s32.totalorder %s17, 4
      %s27 = sphi 0, %s29
      %s30 = sphi 0, %s27
      %s31 = sphi 0, %s30
      %s47 = sphi 0, %s31
      %s51 = sphi 0, %s51
      %s53 = sphi 0, %s51
      %s54 = sphi 0, %s53
      %s68 = sphi 0, %s54
      %s72 = sphi 0, %s72
      %s74 = sphi 0, %s72
      %s75 = sphi 0, %s74
      %s89 = sphi 0, %s75
      %s95 = sphi 0, %s97
      %s98 = sphi 0, %s95
      %s99 = sphi 0, %s98
      %s115 = sphi 0, %s99
    $region4: #{cell_forward.1} parent=1 // loop_header_branch
      %20 = sbr.rel (%p18) target = $region8
    $region5: #{cell_forward.1} parent=1 // loop_body
      %s22 = ssub.s32 %s17, 1
      %s23 = ssub.s32 %s17, 2
      %s24 = sadd.s32 %s17, 1
      %s25 = ssub.s32 %s17, %s24
      %p26 = scmp.eq.s32.totalorder %s25, 0
      %s28 = sadd.s32 %s27, 1
      %s29 = scalar_select %p26, %s27, %s28
      %p32 = pneg %p26
      %p33 = scmp.eq.s32.totalorder %s17, 1
      %p34 = por %p32, %p33
      %p35 = scmp.ne.s32.totalorder %s27, %s30
      %p36 = scmp.eq.s32.totalorder %s17, 0
      %p37 = por %p35, %p36
      %p38 = scmp.ne.s32.totalorder %s27, %s30
      %p39 = scmp.eq.s32.totalorder %s22, 1
      %p40 = por %p38, %p39
      %p41 = scmp.ne.s32.totalorder %s30, %s31
      %p42 = scmp.eq.s32.totalorder %s22, 0
      %p43 = por %p41, %p42
      %p44 = scmp.ne.s32.totalorder %s30, %s31
      %p45 = scmp.eq.s32.totalorder %s23, 1
      %p46 = por %p44, %p45
      %p48 = scmp.ne.s32.totalorder %s31, %s47
      %p49 = scmp.eq.s32.totalorder %s23, 0
      %p50 = por %p48, %p49
      %s52 = sadd.s32 %s51, 1
      %p55 = scmp.eq.s32.totalorder %s17, 1
      %p56 = scmp.ne.s32.totalorder %s51, %s53
      %p57 = scmp.eq.s32.totalorder %s17, 0
      %p58 = por %p56, %p57
      %p59 = scmp.ne.s32.totalorder %s51, %s53
      %p60 = scmp.eq.s32.totalorder %s22, 1
      %p61 = por %p59, %p60
      %p62 = scmp.ne.s32.totalorder %s53, %s54
      %p63 = scmp.eq.s32.totalorder %s22, 0
      %p64 = por %p62, %p63
      %p65 = scmp.ne.s32.totalorder %s53, %s54
      %p66 = scmp.eq.s32.totalorder %s23, 1
      %p67 = por %p65, %p66
      %p69 = scmp.ne.s32.totalorder %s54, %s68
      %p70 = scmp.eq.s32.totalorder %s23, 0
      %p71 = por %p69, %p70
      %s73 = sadd.s32 %s72, 1
      %p76 = scmp.eq.s32.totalorder %s17, 1
      %p77 = scmp.ne.s32.totalorder %s72, %s74
      %p78 = scmp.eq.s32.totalorder %s17, 0
      %p79 = por %p77, %p78
      %p80 = scmp.ne.s32.totalorder %s72, %s74
      %p81 = scmp.eq.s32.totalorder %s22, 1
      %p82 = por %p80, %p81
      %p83 = scmp.ne.s32.totalorder %s74, %s75
      %p84 = scmp.eq.s32.totalorder %s22, 0
      %p85 = por %p83, %p84
      %p86 = scmp.ne.s32.totalorder %s74, %s75
      %p87 = scmp.eq.s32.totalorder %s23, 1
      %p88 = por %p86, %p87
      %p90 = scmp.ne.s32.totalorder %s75, %s89
      %p91 = scmp.eq.s32.totalorder %s23, 0
      %p92 = por %p90, %p91
      %s93 = ssub.s32 %s17, %s24
      %p94 = scmp.eq.s32.totalorder %s93, 0
      %s96 = sadd.s32 %s95, 1
      %s97 = scalar_select %p94, %s95, %s96
      %p100 = pneg %p94
      %p101 = scmp.eq.s32.totalorder %s17, 1
      %p102 = por %p100, %p101
      %p103 = scmp.ne.s32.totalorder %s95, %s98
      %p104 = scmp.eq.s32.totalorder %s17, 0
      %p105 = por %p103, %p104
      %p106 = scmp.ne.s32.totalorder %s95, %s98
      %p107 = scmp.eq.s32.totalorder %s22, 1
      %p108 = por %p106, %p107
      %p109 = scmp.ne.s32.totalorder %s98, %s99
      %p110 = scmp.eq.s32.totalorder %s22, 0
      %p111 = por %p109, %p110
      %p112 = scmp.ne.s32.totalorder %s98, %s99
      %p113 = scmp.eq.s32.totalorder %s23, 1
      %p114 = por %p112, %p113
      %p116 = scmp.ne.s32.totalorder %s99, %s115
      %p117 = scmp.eq.s32.totalorder %s23, 0
      %p118 = por %p116, %p117
      %p119 = scmp.le.s32.totalorder 1, %s17
      %p120 = scmp.lt.s32.totalorder %s17, 3
      %p121 = pnand %p119, %p120
      %p122 = pneg %p121
      // Predicated region
      $region9: #{cell_forward.1} parent=5 // pred_check
        _
      $region10: #{cell_forward.1} parent=5 // pred_check_branch
        %124 = sbr.rel (%p121) target = $region12
      $region11: #{cell_forward.1} parent=5 // pred_region
        %s125 = ssub.s32 %s17, 1
        // Predicated region
        $region13: #{cell_forward.1} parent=11 // pred_check
          %p126 = pneg %p64
        $region14: #{cell_forward.1} parent=11 // pred_check_branch
          %128 = sbr.rel (%p126) target = $region16
        $region15: #{cell_forward.1} parent=11 // pred_region
          %s130 = ssub.s32 96, 96
          %131 = vsyncadd [#allocation7], %s130
          %134 = dma.hbm_to_smem %s1, 96, [#allocation8], [#allocation7]
        $region16: #{cell_forward.1} parent=11 // pred_fallthru
          _
        // Predicated region
        $region17: #{cell_forward.1} parent=11 // pred_check
          %p135 = pneg %p85
        $region18: #{cell_forward.1} parent=11 // pred_check_branch
          %137 = sbr.rel (%p135) target = $region20
        $region19: #{cell_forward.1} parent=11 // pred_region
          %s139 = ssub.s32 384, 384
          %140 = vsyncadd [#allocation10], %s139
          %s141 = sshll.u32 [#allocation9], 4
          %s142 = int_to_ptr.vmem [resolvable:$true] %s141
          %147 = dma.hbm_to_vmem [thread:$0]  %s2, 384, %s142, [#allocation10], 128, 128, 8
        $region20: #{cell_forward.1} parent=11 // pred_fallthru
          _
      $region12: #{cell_forward.1} parent=5 // pred_fallthru
        _
      %p148 = scmp.lt.s32.totalorder %s17, 2
      // Predicated region
      $region21: #{cell_forward.1} parent=5 // pred_check
        %p149 = pneg %p148
      $region22: #{cell_forward.1} parent=5 // pred_check_branch
        %151 = sbr.rel (%p149) target = $region24
      $region23: #{cell_forward.1} parent=5 // pred_region
        // Predicated region
        $region25: #{cell_forward.1} parent=23 // pred_check
          %p152 = pneg %p37
        $region26: #{cell_forward.1} parent=23 // pred_check_branch
          %154 = sbr.rel (%p152) target = $region28
        $region27: #{cell_forward.1} parent=23 // pred_region
          %s155 = sand.u32 %s27, 1
          %s156 = scalar_lea.sflag [#allocation5], %s155
          %s157 = sand.u32 %s27, 1
          %s158 = smul.addr %s157, 8
          %s159 = scalar_lea.vmem [#allocation4], %s158
          %s161 = ssub.s32 128, 128
          %162 = vsyncadd %s156, %s161
          %s163 = smul.addr %s17, 128
          %s164 = scalar_lea.hbm %s0, %s163
          %s166 = sshll.u32 %s159, 4
          %s167 = int_to_ptr.vmem [resolvable:$true] %s166
          %169 = dma.hbm_to_vmem [thread:$0]  %s164, 128, %s167, %s156
        $region28: #{cell_forward.1} parent=23 // pred_fallthru
          _
      $region24: #{cell_forward.1} parent=5 // pred_fallthru
        _
      %p170 = scmp.le.s32.totalorder 1, %s17
      %p171 = scmp.lt.s32.totalorder %s17, 3
      %p172 = pnand %p170, %p171
      %p173 = pneg %p172
      // Predicated region
      $region29: #{cell_forward.1} parent=5 // pred_check
        _
      $region30: #{cell_forward.1} parent=5 // pred_check_branch
        %175 = sbr.rel (%p172) target = $region32
      $region31: #{cell_forward.1} parent=5 // pred_region
        %s176 = ssub.s32 %s17, 1
        %s177 = sand.u32 %s30, 1
        %s178 = scalar_lea.sflag [#allocation5], %s177
        %s179 = sand.u32 %s30, 1
        %s180 = smul.addr %s179, 8
        %s181 = scalar_lea.vmem [#allocation4], %s180
        // Predicated region
        $region33: #{cell_forward.1} parent=31 // pred_check
          %p182 = pneg %p43
        $region34: #{cell_forward.1} parent=31 // pred_check_branch
          %184 = sbr.rel (%p182) target = $region36
        $region35: #{cell_forward.1} parent=31 // pred_region
          %185 = dma.done %s178, 128
        $region36: #{cell_forward.1} parent=31 // pred_fallthru
          _
        // Predicated region
        $region37: #{cell_forward.1} parent=31 // pred_check
          %p186 = pneg %p64
        $region38: #{cell_forward.1} parent=31 // pred_check_branch
          %188 = sbr.rel (%p186) target = $region40
        $region39: #{cell_forward.1} parent=31 // pred_region
          %189 = dma.done [#allocation7], 96
        $region40: #{cell_forward.1} parent=31 // pred_fallthru
          _
        // Predicated region
        $region41: #{cell_forward.1} parent=31 // pred_check
          %p190 = pneg %p85
        $region42: #{cell_forward.1} parent=31 // pred_check_branch
          %192 = sbr.rel (%p190) target = $region44
        $region43: #{cell_forward.1} parent=31 // pred_region
          %193 = dma.done [#allocation10], 384
        $region44: #{cell_forward.1} parent=31 // pred_fallthru
          _
        %194 = sfence
        %s195 = sand.u32 %s30, 1
        %s196 = scalar_lea.sflag [#allocation5], %s195
        %s197 = sand.u32 %s30, 1
        %s198 = smul.addr %s197, 8
        %s199 = scalar_lea.vmem [#allocation4], %s198
        %p200 = pneg %p43
        %p201 = pneg %p40
        %p202 = pneg %p64
        %p203 = pneg %p61
        %p204 = pneg %p85
        %p205 = pneg %p82
        %p206 = pneg %p111
        %p207 = pneg %p108
        %s208 = sand.u32 %s98, 1
        %s209 = scalar_lea.sflag [#allocation6], %s208
        %s210 = sand.u32 %s98, 1
        %s211 = smul.addr %s210, 8
        %s212 = scalar_lea.vmem [#allocation11], %s211
        %v213 = vld [vmem:[%s181] sm:$0xff]
        %s214 = sld [smem:[#allocation8]]
        %v215 = vstv %s214
        %v216 = vmul.f32 %v215, %v213
        %s217 = sld [smem:[#allocation8 + $0x7]]
        %v218 = vstv %s217
        %v219 = vmul.f32 %v218, %v213
        %s220 = sld [smem:[#allocation8 + $0xe]]
        %v221 = vstv %s220
        %v222 = vmul.f32 %v221, %v213
        %s223 = sld [smem:[#allocation8 + $0x15]]
        %v224 = vstv %s223
        %v225 = vmul.f32 %v224, %v213
        %s226 = sld [smem:[#allocation8 + $0x1]]
        %v227 = vstv %s226
        %v228 = vmul.f32 %v227, %v213
        %230 = vrot.lane.b32.xlu0 %v228, 127
        %v231 = vpop.permute.xlu0 %230
        %v233 = vadd.f32 %v216, %v231
        %s234 = sld [smem:[#allocation8 + $0x8]]
        %v235 = vstv %s234
        %v236 = vmul.f32 %v235, %v213
        %238 = vrot.lane.b32.xlu0 %v236, 127
        %v239 = vpop.permute.xlu0 %238
        %v241 = vadd.f32 %v219, %v239
        %s242 = sld [smem:[#allocation8 + $0xf]]
        %v243 = vstv %s242
        %v244 = vmul.f32 %v243, %v213
        %246 = vrot.lane.b32.xlu0 %v244, 127
        %v247 = vpop.permute.xlu0 %246
        %v249 = vadd.f32 %v222, %v247
        %s250 = sld [smem:[#allocation8 + $0x16]]
        %v251 = vstv %s250
        %v252 = vmul.f32 %v251, %v213
        %254 = vrot.lane.b32.xlu0 %v252, 127
        %v255 = vpop.permute.xlu0 %254
        %v257 = vadd.f32 %v225, %v255
        %s258 = sld [smem:[#allocation8 + $0x2]]
        %v259 = vstv %s258
        %v260 = vmul.f32 %v259, %v213
        %262 = vrot.lane.b32.xlu0 %v260, 126
        %v263 = vpop.permute.xlu0 %262
        %v265 = vadd.f32 %v233, %v263
        %s266 = sld [smem:[#allocation8 + $0x9]]
        %v267 = vstv %s266
        %v268 = vmul.f32 %v267, %v213
        %270 = vrot.lane.b32.xlu0 %v268, 126
        %v271 = vpop.permute.xlu0 %270
        %v273 = vadd.f32 %v241, %v271
        %s274 = sld [smem:[#allocation8 + $0x10]]
        %v275 = vstv %s274
        %v276 = vmul.f32 %v275, %v213
        %278 = vrot.lane.b32.xlu0 %v276, 126
        %v279 = vpop.permute.xlu0 %278
        %v281 = vadd.f32 %v249, %v279
        %s282 = sld [smem:[#allocation8 + $0x17]]
        %v283 = vstv %s282
        %v284 = vmul.f32 %v283, %v213
        %286 = vrot.lane.b32.xlu0 %v284, 126
        %v287 = vpop.permute.xlu0 %286
        %v289 = vadd.f32 %v257, %v287
        %s290 = sld [smem:[#allocation8 + $0x3]]
        %v291 = vstv %s290
        %v292 = vmul.f32 %v291, %v213
        %294 = vrot.lane.b32.xlu0 %v292, 125
        %v295 = vpop.permute.xlu0 %294
        %v297 = vadd.f32 %v265, %v295
        %s298 = sld [smem:[#allocation8 + $0xa]]
        %v299 = vstv %s298
        %v300 = vmul.f32 %v299, %v213
        %302 = vrot.lane.b32.xlu0 %v300, 125
        %v303 = vpop.permute.xlu0 %302
        %v305 = vadd.f32 %v273, %v303
        %s306 = sld [smem:[#allocation8 + $0x11]]
        %v307 = vstv %s306
        %v308 = vmul.f32 %v307, %v213
        %310 = vrot.lane.b32.xlu0 %v308, 125
        %v311 = vpop.permute.xlu0 %310
        %v313 = vadd.f32 %v281, %v311
        %s314 = sld [smem:[#allocation8 + $0x18]]
        %v315 = vstv %s314
        %v316 = vmul.f32 %v315, %v213
        %318 = vrot.lane.b32.xlu0 %v316, 125
        %v319 = vpop.permute.xlu0 %318
        %v321 = vadd.f32 %v289, %v319
        %s322 = sld [smem:[#allocation8 + $0x4]]
        %v323 = vstv %s322
        %v324 = vmul.f32 %v323, %v213
        %326 = vrot.lane.b32.xlu0 %v324, 124
        %v327 = vpop.permute.xlu0 %326
        %v329 = vadd.f32 %v297, %v327
        %s330 = sld [smem:[#allocation8 + $0xb]]
        %v331 = vstv %s330
        %v332 = vmul.f32 %v331, %v213
        %334 = vrot.lane.b32.xlu0 %v332, 124
        %v335 = vpop.permute.xlu0 %334
        %v337 = vadd.f32 %v305, %v335
        %s338 = sld [smem:[#allocation8 + $0x12]]
        %v339 = vstv %s338
        %v340 = vmul.f32 %v339, %v213
        %342 = vrot.lane.b32.xlu0 %v340, 124
        %v343 = vpop.permute.xlu0 %342
        %v345 = vadd.f32 %v313, %v343
        %s346 = sld [smem:[#allocation8 + $0x19]]
        %v347 = vstv %s346
        %v348 = vmul.f32 %v347, %v213
        %350 = vrot.lane.b32.xlu0 %v348, 124
        %v351 = vpop.permute.xlu0 %350
        %v353 = vadd.f32 %v321, %v351
        %s354 = sld [smem:[#allocation8 + $0x5]]
        %v355 = vstv %s354
        %v356 = vmul.f32 %v355, %v213
        %358 = vrot.lane.b32.xlu0 %v356, 123
        %v359 = vpop.permute.xlu0 %358
        %v361 = vadd.f32 %v329, %v359
        %s362 = sld [smem:[#allocation8 + $0xc]]
        %v363 = vstv %s362
        %v364 = vmul.f32 %v363, %v213
        %366 = vrot.lane.b32.xlu0 %v364, 123
        %v367 = vpop.permute.xlu0 %366
        %v369 = vadd.f32 %v337, %v367
        %s370 = sld [smem:[#allocation8 + $0x13]]
        %v371 = vstv %s370
        %v372 = vmul.f32 %v371, %v213
        %374 = vrot.lane.b32.xlu0 %v372, 123
        %v375 = vpop.permute.xlu0 %374
        %v377 = vadd.f32 %v345, %v375
        %s378 = sld [smem:[#allocation8 + $0x1a]]
        %v379 = vstv %s378
        %v380 = vmul.f32 %v379, %v213
        %382 = vrot.lane.b32.xlu0 %v380, 123
        %v383 = vpop.permute.xlu0 %382
        %v385 = vadd.f32 %v353, %v383
        %s386 = sld [smem:[#allocation8 + $0x6]]
        %v387 = vstv %s386
        %v388 = vmul.f32 %v387, %v213
        %390 = vrot.lane.b32.xlu0 %v388, 122
        %v391 = vpop.permute.xlu0 %390
        %v393 = vadd.f32 %v361, %v391
        %s394 = sld [smem:[#allocation8 + $0xd]]
        %v395 = vstv %s394
        %v396 = vmul.f32 %v395, %v213
        %398 = vrot.lane.b32.xlu0 %v396, 122
        %v399 = vpop.permute.xlu0 %398
        %v401 = vadd.f32 %v369, %v399
        %s402 = sld [smem:[#allocation8 + $0x14]]
        %v403 = vstv %s402
        %v404 = vmul.f32 %v403, %v213
        %406 = vrot.lane.b32.xlu0 %v404, 122
        %v407 = vpop.permute.xlu0 %406
        %v409 = vadd.f32 %v377, %v407
        %s410 = sld [smem:[#allocation8 + $0x1b]]
        %v411 = vstv %s410
        %v412 = vmul.f32 %v411, %v213
        %414 = vrot.lane.b32.xlu0 %v412, 122
        %v415 = vpop.permute.xlu0 %414
        %v417 = vadd.f32 %v385, %v415
        %s418 = sld [smem:[#allocation8 + $0x1c]]
        %v419 = vstv %s418
        %v420 = vadd.f32 %v393, %v419
        %v421 = vmax.f32 %v420, 0.0
        %423 = vrot.lane.b32.xlu0 %v421, 127
        %v424 = vpop.permute.xlu0 %423
        %v426 = vmax.f32 %v421, %v424
        %s427 = sld [smem:[#allocation8 + $0x1d]]
        %v428 = vstv %s427
        %v429 = vadd.f32 %v401, %v428
        %v430 = vmax.f32 %v429, 0.0
        %432 = vrot.lane.b32.xlu0 %v430, 127
        %v433 = vpop.permute.xlu0 %432
        %v435 = vmax.f32 %v430, %v433
        %s436 = sld [smem:[#allocation8 + $0x1e]]
        %v437 = vstv %s436
        %v438 = vadd.f32 %v409, %v437
        %v439 = vmax.f32 %v438, 0.0
        %441 = vrot.lane.b32.xlu0 %v439, 127
        %v442 = vpop.permute.xlu0 %441
        %v444 = vmax.f32 %v439, %v442
        %s445 = sld [smem:[#allocation8 + $0x1f]]
        %v446 = vstv %s445
        %v447 = vadd.f32 %v417, %v446
        %v448 = vmax.f32 %v447, 0.0
        %450 = vrot.lane.b32.xlu0 %v448, 127
        %v451 = vpop.permute.xlu0 %450
        %v453 = vmax.f32 %v448, %v451
        %vm454 = vcmask 465920
        %455 = vst.msk [vmem:[#allocation2] sm:$0xff] %vm454, %v426
        %s456 = scalar_lea.vmem [#allocation2], 8
        %457 = vst.msk [vmem:[%s456] sm:$0xff] %vm454, %v435
        %s458 = scalar_lea.vmem [#allocation2], 16
        %459 = vst.msk [vmem:[%s458] sm:$0xff] %vm454, %v444
        %s460 = scalar_lea.vmem [#allocation2], 24
        %461 = vst.msk [vmem:[%s460] sm:$0xff] %vm454, %v453
        %v462 = vld [vmem:[#allocation2] sm:$0xff]
        %s463 = sld [smem:[#allocation8 + $0x20]]
        %v464 = vstv %s463
        %v465 = vmul.f32 %v464, %v462
        %s466 = sld [smem:[#allocation8 + $0x3c]]
        %v467 = vstv %s466
        %v468 = vmul.f32 %v467, %v462
        %s469 = sld [smem:[#allocation8 + $0x58]]
        %v470 = vstv %s469
        %v471 = vmul.f32 %v470, %v462
        %s472 = sld [smem:[#allocation8 + $0x74]]
        %v473 = vstv %s472
        %v474 = vmul.f32 %v473, %v462
        %s475 = sld [smem:[#allocation8 + $0x90]]
        %v476 = vstv %s475
        %v477 = vmul.f32 %v476, %v462
        %s478 = sld [smem:[#allocation8 + $0xac]]
        %v479 = vstv %s478
        %v480 = vmul.f32 %v479, %v462
        %s481 = sld [smem:[#allocation8 + $0xc8]]
        %v482 = vstv %s481
        %v483 = vmul.f32 %v482, %v462
        %s484 = sld [smem:[#allocation8 + $0xe4]]
        %v485 = vstv %s484
        %v486 = vmul.f32 %v485, %v462
        %s487 = sld [smem:[#allocation8 + $0x21]]
        %v488 = vstv %s487
        %v489 = vmul.f32 %v488, %v462
        %491 = vrot.lane.b32.xlu0 %v489, 126
        %v492 = vpop.permute.xlu0 %491
        %v494 = vadd.f32 %v465, %v492
        %s495 = sld [smem:[#allocation8 + $0x3d]]
        %v496 = vstv %s495
        %v497 = vmul.f32 %v496, %v462
        %499 = vrot.lane.b32.xlu0 %v497, 126
        %v500 = vpop.permute.xlu0 %499
        %v502 = vadd.f32 %v468, %v500
        %s503 = sld [smem:[#allocation8 + $0x59]]
        %v504 = vstv %s503
        %v505 = vmul.f32 %v504, %v462
        %507 = vrot.lane.b32.xlu0 %v505, 126
        %v508 = vpop.permute.xlu0 %507
        %v510 = vadd.f32 %v471, %v508
        %s511 = sld [smem:[#allocation8 + $0x75]]
        %v512 = vstv %s511
        %v513 = vmul.f32 %v512, %v462
        %515 = vrot.lane.b32.xlu0 %v513, 126
        %v516 = vpop.permute.xlu0 %515
        %v518 = vadd.f32 %v474, %v516
        %s519 = sld [smem:[#allocation8 + $0x91]]
        %v520 = vstv %s519
        %v521 = vmul.f32 %v520, %v462
        %523 = vrot.lane.b32.xlu0 %v521, 126
        %v524 = vpop.permute.xlu0 %523
        %v526 = vadd.f32 %v477, %v524
        %s527 = sld [smem:[#allocation8 + $0xad]]
        %v528 = vstv %s527
        %v529 = vmul.f32 %v528, %v462
        %531 = vrot.lane.b32.xlu0 %v529, 126
        %v532 = vpop.permute.xlu0 %531
        %v534 = vadd.f32 %v480, %v532
        %s535 = sld [smem:[#allocation8 + $0xc9]]
        %v536 = vstv %s535
        %v537 = vmul.f32 %v536, %v462
        %539 = vrot.lane.b32.xlu0 %v537, 126
        %v540 = vpop.permute.xlu0 %539
        %v542 = vadd.f32 %v483, %v540
        %s543 = sld [smem:[#allocation8 + $0xe5]]
        %v544 = vstv %s543
        %v545 = vmul.f32 %v544, %v462
        %547 = vrot.lane.b32.xlu0 %v545, 126
        %v548 = vpop.permute.xlu0 %547
        %v550 = vadd.f32 %v486, %v548
        %s551 = sld [smem:[#allocation8 + $0x22]]
        %v552 = vstv %s551
        %v553 = vmul.f32 %v552, %v462
        %555 = vrot.lane.b32.xlu0 %v553, 124
        %v556 = vpop.permute.xlu0 %555
        %v558 = vadd.f32 %v494, %v556
        %s559 = sld [smem:[#allocation8 + $0x3e]]
        %v560 = vstv %s559
        %v561 = vmul.f32 %v560, %v462
        %563 = vrot.lane.b32.xlu0 %v561, 124
        %v564 = vpop.permute.xlu0 %563
        %v566 = vadd.f32 %v502, %v564
        %s567 = sld [smem:[#allocation8 + $0x5a]]
        %v568 = vstv %s567
        %v569 = vmul.f32 %v568, %v462
        %571 = vrot.lane.b32.xlu0 %v569, 124
        %v572 = vpop.permute.xlu0 %571
        %v574 = vadd.f32 %v510, %v572
        %s575 = sld [smem:[#allocation8 + $0x76]]
        %v576 = vstv %s575
        %v577 = vmul.f32 %v576, %v462
        %579 = vrot.lane.b32.xlu0 %v577, 124
        %v580 = vpop.permute.xlu0 %579
        %v582 = vadd.f32 %v518, %v580
        %s583 = sld [smem:[#allocation8 + $0x92]]
        %v584 = vstv %s583
        %v585 = vmul.f32 %v584, %v462
        %587 = vrot.lane.b32.xlu0 %v585, 124
        %v588 = vpop.permute.xlu0 %587
        %v590 = vadd.f32 %v526, %v588
        %s591 = sld [smem:[#allocation8 + $0xae]]
        %v592 = vstv %s591
        %v593 = vmul.f32 %v592, %v462
        %595 = vrot.lane.b32.xlu0 %v593, 124
        %v596 = vpop.permute.xlu0 %595
        %v598 = vadd.f32 %v534, %v596
        %s599 = sld [smem:[#allocation8 + $0xca]]
        %v600 = vstv %s599
        %v601 = vmul.f32 %v600, %v462
        %603 = vrot.lane.b32.xlu0 %v601, 124
        %v604 = vpop.permute.xlu0 %603
        %v606 = vadd.f32 %v542, %v604
        %s607 = sld [smem:[#allocation8 + $0xe6]]
        %v608 = vstv %s607
        %v609 = vmul.f32 %v608, %v462
        %611 = vrot.lane.b32.xlu0 %v609, 124
        %v612 = vpop.permute.xlu0 %611
        %v614 = vadd.f32 %v550, %v612
        %s615 = sld [smem:[#allocation8 + $0x23]]
        %v616 = vstv %s615
        %v617 = vmul.f32 %v616, %v462
        %619 = vrot.lane.b32.xlu0 %v617, 122
        %v620 = vpop.permute.xlu0 %619
        %v622 = vadd.f32 %v558, %v620
        %s623 = sld [smem:[#allocation8 + $0x3f]]
        %v624 = vstv %s623
        %v625 = vmul.f32 %v624, %v462
        %627 = vrot.lane.b32.xlu0 %v625, 122
        %v628 = vpop.permute.xlu0 %627
        %v630 = vadd.f32 %v566, %v628
        %s631 = sld [smem:[#allocation8 + $0x5b]]
        %v632 = vstv %s631
        %v633 = vmul.f32 %v632, %v462
        %635 = vrot.lane.b32.xlu0 %v633, 122
        %v636 = vpop.permute.xlu0 %635
        %v638 = vadd.f32 %v574, %v636
        %s639 = sld [smem:[#allocation8 + $0x77]]
        %v640 = vstv %s639
        %v641 = vmul.f32 %v640, %v462
        %643 = vrot.lane.b32.xlu0 %v641, 122
        %v644 = vpop.permute.xlu0 %643
        %v646 = vadd.f32 %v582, %v644
        %s647 = sld [smem:[#allocation8 + $0x93]]
        %v648 = vstv %s647
        %v649 = vmul.f32 %v648, %v462
        %651 = vrot.lane.b32.xlu0 %v649, 122
        %v652 = vpop.permute.xlu0 %651
        %v654 = vadd.f32 %v590, %v652
        %s655 = sld [smem:[#allocation8 + $0xaf]]
        %v656 = vstv %s655
        %v657 = vmul.f32 %v656, %v462
        %659 = vrot.lane.b32.xlu0 %v657, 122
        %v660 = vpop.permute.xlu0 %659
        %v662 = vadd.f32 %v598, %v660
        %s663 = sld [smem:[#allocation8 + $0xcb]]
        %v664 = vstv %s663
        %v665 = vmul.f32 %v664, %v462
        %667 = vrot.lane.b32.xlu0 %v665, 122
        %v668 = vpop.permute.xlu0 %667
        %v670 = vadd.f32 %v606, %v668
        %s671 = sld [smem:[#allocation8 + $0xe7]]
        %v672 = vstv %s671
        %v673 = vmul.f32 %v672, %v462
        %675 = vrot.lane.b32.xlu0 %v673, 122
        %v676 = vpop.permute.xlu0 %675
        %v678 = vadd.f32 %v614, %v676
        %s679 = sld [smem:[#allocation8 + $0x24]]
        %v680 = vstv %s679
        %v681 = vmul.f32 %v680, %v462
        %683 = vrot.lane.b32.xlu0 %v681, 120
        %v684 = vpop.permute.xlu0 %683
        %v686 = vadd.f32 %v622, %v684
        %s687 = sld [smem:[#allocation8 + $0x40]]
        %v688 = vstv %s687
        %v689 = vmul.f32 %v688, %v462
        %691 = vrot.lane.b32.xlu0 %v689, 120
        %v692 = vpop.permute.xlu0 %691
        %v694 = vadd.f32 %v630, %v692
        %s695 = sld [smem:[#allocation8 + $0x5c]]
        %v696 = vstv %s695
        %v697 = vmul.f32 %v696, %v462
        %699 = vrot.lane.b32.xlu0 %v697, 120
        %v700 = vpop.permute.xlu0 %699
        %v702 = vadd.f32 %v638, %v700
        %s703 = sld [smem:[#allocation8 + $0x78]]
        %v704 = vstv %s703
        %v705 = vmul.f32 %v704, %v462
        %707 = vrot.lane.b32.xlu0 %v705, 120
        %v708 = vpop.permute.xlu0 %707
        %v710 = vadd.f32 %v646, %v708
        %s711 = sld [smem:[#allocation8 + $0x94]]
        %v712 = vstv %s711
        %v713 = vmul.f32 %v712, %v462
        %715 = vrot.lane.b32.xlu0 %v713, 120
        %v716 = vpop.permute.xlu0 %715
        %v718 = vadd.f32 %v654, %v716
        %s719 = sld [smem:[#allocation8 + $0xb0]]
        %v720 = vstv %s719
        %v721 = vmul.f32 %v720, %v462
        %723 = vrot.lane.b32.xlu0 %v721, 120
        %v724 = vpop.permute.xlu0 %723
        %v726 = vadd.f32 %v662, %v724
        %s727 = sld [smem:[#allocation8 + $0xcc]]
        %v728 = vstv %s727
        %v729 = vmul.f32 %v728, %v462
        %731 = vrot.lane.b32.xlu0 %v729, 120
        %v732 = vpop.permute.xlu0 %731
        %v734 = vadd.f32 %v670, %v732
        %s735 = sld [smem:[#allocation8 + $0xe8]]
        %v736 = vstv %s735
        %v737 = vmul.f32 %v736, %v462
        %739 = vrot.lane.b32.xlu0 %v737, 120
        %v740 = vpop.permute.xlu0 %739
        %v742 = vadd.f32 %v678, %v740
        %s743 = sld [smem:[#allocation8 + $0x25]]
        %v744 = vstv %s743
        %v745 = vmul.f32 %v744, %v462
        %747 = vrot.lane.b32.xlu0 %v745, 118
        %v748 = vpop.permute.xlu0 %747
        %v750 = vadd.f32 %v686, %v748
        %s751 = sld [smem:[#allocation8 + $0x41]]
        %v752 = vstv %s751
        %v753 = vmul.f32 %v752, %v462
        %755 = vrot.lane.b32.xlu0 %v753, 118
        %v756 = vpop.permute.xlu0 %755
        %v758 = vadd.f32 %v694, %v756
        %s759 = sld [smem:[#allocation8 + $0x5d]]
        %v760 = vstv %s759
        %v761 = vmul.f32 %v760, %v462
        %763 = vrot.lane.b32.xlu0 %v761, 118
        %v764 = vpop.permute.xlu0 %763
        %v766 = vadd.f32 %v702, %v764
        %s767 = sld [smem:[#allocation8 + $0x79]]
        %v768 = vstv %s767
        %v769 = vmul.f32 %v768, %v462
        %771 = vrot.lane.b32.xlu0 %v769, 118
        %v772 = vpop.permute.xlu0 %771
        %v774 = vadd.f32 %v710, %v772
        %s775 = sld [smem:[#allocation8 + $0x95]]
        %v776 = vstv %s775
        %v777 = vmul.f32 %v776, %v462
        %779 = vrot.lane.b32.xlu0 %v777, 118
        %v780 = vpop.permute.xlu0 %779
        %v782 = vadd.f32 %v718, %v780
        %s783 = sld [smem:[#allocation8 + $0xb1]]
        %v784 = vstv %s783
        %v785 = vmul.f32 %v784, %v462
        %787 = vrot.lane.b32.xlu0 %v785, 118
        %v788 = vpop.permute.xlu0 %787
        %v790 = vadd.f32 %v726, %v788
        %s791 = sld [smem:[#allocation8 + $0xcd]]
        %v792 = vstv %s791
        %v793 = vmul.f32 %v792, %v462
        %795 = vrot.lane.b32.xlu0 %v793, 118
        %v796 = vpop.permute.xlu0 %795
        %v798 = vadd.f32 %v734, %v796
        %s799 = sld [smem:[#allocation8 + $0xe9]]
        %v800 = vstv %s799
        %v801 = vmul.f32 %v800, %v462
        %803 = vrot.lane.b32.xlu0 %v801, 118
        %v804 = vpop.permute.xlu0 %803
        %v806 = vadd.f32 %v742, %v804
        %s807 = sld [smem:[#allocation8 + $0x26]]
        %v808 = vstv %s807
        %v809 = vmul.f32 %v808, %v462
        %811 = vrot.lane.b32.xlu0 %v809, 116
        %v812 = vpop.permute.xlu0 %811
        %v814 = vadd.f32 %v750, %v812
        %s815 = sld [smem:[#allocation8 + $0x42]]
        %v816 = vstv %s815
        %v817 = vmul.f32 %v816, %v462
        %819 = vrot.lane.b32.xlu0 %v817, 116
        %v820 = vpop.permute.xlu0 %819
        %v822 = vadd.f32 %v758, %v820
        %s823 = sld [smem:[#allocation8 + $0x5e]]
        %v824 = vstv %s823
        %v825 = vmul.f32 %v824, %v462
        %827 = vrot.lane.b32.xlu0 %v825, 116
        %v828 = vpop.permute.xlu0 %827
        %v830 = vadd.f32 %v766, %v828
        %s831 = sld [smem:[#allocation8 + $0x7a]]
        %v832 = vstv %s831
        %v833 = vmul.f32 %v832, %v462
        %835 = vrot.lane.b32.xlu0 %v833, 116
        %v836 = vpop.permute.xlu0 %835
        %v838 = vadd.f32 %v774, %v836
        %s839 = sld [smem:[#allocation8 + $0x96]]
        %v840 = vstv %s839
        %v841 = vmul.f32 %v840, %v462
        %843 = vrot.lane.b32.xlu0 %v841, 116
        %v844 = vpop.permute.xlu0 %843
        %v846 = vadd.f32 %v782, %v844
        %s847 = sld [smem:[#allocation8 + $0xb2]]
        %v848 = vstv %s847
        %v849 = vmul.f32 %v848, %v462
        %851 = vrot.lane.b32.xlu0 %v849, 116
        %v852 = vpop.permute.xlu0 %851
        %v854 = vadd.f32 %v790, %v852
        %s855 = sld [smem:[#allocation8 + $0xce]]
        %v856 = vstv %s855
        %v857 = vmul.f32 %v856, %v462
        %859 = vrot.lane.b32.xlu0 %v857, 116
        %v860 = vpop.permute.xlu0 %859
        %v862 = vadd.f32 %v798, %v860
        %s863 = sld [smem:[#allocation8 + $0xea]]
        %v864 = vstv %s863
        %v865 = vmul.f32 %v864, %v462
        %867 = vrot.lane.b32.xlu0 %v865, 116
        %v868 = vpop.permute.xlu0 %867
        %v870 = vadd.f32 %v806, %v868
        %v871 = vld [vmem:[%s456] sm:$0xff]
        %s872 = sld [smem:[#allocation8 + $0x27]]
        %v873 = vstv %s872
        %v874 = vmul.f32 %v873, %v871
        %v875 = vadd.f32 %v814, %v874
        %s876 = sld [smem:[#allocation8 + $0x43]]
        %v877 = vstv %s876
        %v878 = vmul.f32 %v877, %v871
        %v879 = vadd.f32 %v822, %v878
        %s880 = sld [smem:[#allocation8 + $0x5f]]
        %v881 = vstv %s880
        %v882 = vmul.f32 %v881, %v871
        %v883 = vadd.f32 %v830, %v882
        %s884 = sld [smem:[#allocation8 + $0x7b]]
        %v885 = vstv %s884
        %v886 = vmul.f32 %v885, %v871
        %v887 = vadd.f32 %v838, %v886
        %s888 = sld [smem:[#allocation8 + $0x97]]
        %v889 = vstv %s888
        %v890 = vmul.f32 %v889, %v871
        %v891 = vadd.f32 %v846, %v890
        %s892 = sld [smem:[#allocation8 + $0xb3]]
        %v893 = vstv %s892
        %v894 = vmul.f32 %v893, %v871
        %v895 = vadd.f32 %v854, %v894
        %s896 = sld [smem:[#allocation8 + $0xcf]]
        %v897 = vstv %s896
        %v898 = vmul.f32 %v897, %v871
        %v899 = vadd.f32 %v862, %v898
        %s900 = sld [smem:[#allocation8 + $0xeb]]
        %v901 = vstv %s900
        %v902 = vmul.f32 %v901, %v871
        %v903 = vadd.f32 %v870, %v902
        %s904 = sld [smem:[#allocation8 + $0x28]]
        %v905 = vstv %s904
        %v906 = vmul.f32 %v905, %v871
        %908 = vrot.lane.b32.xlu0 %v906, 126
        %v909 = vpop.permute.xlu0 %908
        %v911 = vadd.f32 %v875, %v909
        %s912 = sld [smem:[#allocation8 + $0x44]]
        %v913 = vstv %s912
        %v914 = vmul.f32 %v913, %v871
        %916 = vrot.lane.b32.xlu0 %v914, 126
        %v917 = vpop.permute.xlu0 %916
        %v919 = vadd.f32 %v879, %v917
        %s920 = sld [smem:[#allocation8 + $0x60]]
        %v921 = vstv %s920
        %v922 = vmul.f32 %v921, %v871
        %924 = vrot.lane.b32.xlu0 %v922, 126
        %v925 = vpop.permute.xlu0 %924
        %v927 = vadd.f32 %v883, %v925
        %s928 = sld [smem:[#allocation8 + $0x7c]]
        %v929 = vstv %s928
        %v930 = vmul.f32 %v929, %v871
        %932 = vrot.lane.b32.xlu0 %v930, 126
        %v933 = vpop.permute.xlu0 %932
        %v935 = vadd.f32 %v887, %v933
        %s936 = sld [smem:[#allocation8 + $0x98]]
        %v937 = vstv %s936
        %v938 = vmul.f32 %v937, %v871
        %940 = vrot.lane.b32.xlu0 %v938, 126
        %v941 = vpop.permute.xlu0 %940
        %v943 = vadd.f32 %v891, %v941
        %s944 = sld [smem:[#allocation8 + $0xb4]]
        %v945 = vstv %s944
        %v946 = vmul.f32 %v945, %v871
        %948 = vrot.lane.b32.xlu0 %v946, 126
        %v949 = vpop.permute.xlu0 %948
        %v951 = vadd.f32 %v895, %v949
        %s952 = sld [smem:[#allocation8 + $0xd0]]
        %v953 = vstv %s952
        %v954 = vmul.f32 %v953, %v871
        %956 = vrot.lane.b32.xlu0 %v954, 126
        %v957 = vpop.permute.xlu0 %956
        %v959 = vadd.f32 %v899, %v957
        %s960 = sld [smem:[#allocation8 + $0xec]]
        %v961 = vstv %s960
        %v962 = vmul.f32 %v961, %v871
        %964 = vrot.lane.b32.xlu0 %v962, 126
        %v965 = vpop.permute.xlu0 %964
        %v967 = vadd.f32 %v903, %v965
        %s968 = sld [smem:[#allocation8 + $0x29]]
        %v969 = vstv %s968
        %v970 = vmul.f32 %v969, %v871
        %972 = vrot.lane.b32.xlu0 %v970, 124
        %v973 = vpop.permute.xlu0 %972
        %v975 = vadd.f32 %v911, %v973
        %s976 = sld [smem:[#allocation8 + $0x45]]
        %v977 = vstv %s976
        %v978 = vmul.f32 %v977, %v871
        %980 = vrot.lane.b32.xlu0 %v978, 124
        %v981 = vpop.permute.xlu0 %980
        %v983 = vadd.f32 %v919, %v981
        %s984 = sld [smem:[#allocation8 + $0x61]]
        %v985 = vstv %s984
        %v986 = vmul.f32 %v985, %v871
        %988 = vrot.lane.b32.xlu0 %v986, 124
        %v989 = vpop.permute.xlu0 %988
        %v991 = vadd.f32 %v927, %v989
        %s992 = sld [smem:[#allocation8 + $0x7d]]
        %v993 = vstv %s992
        %v994 = vmul.f32 %v993, %v871
        %996 = vrot.lane.b32.xlu0 %v994, 124
        %v997 = vpop.permute.xlu0 %996
        %v999 = vadd.f32 %v935, %v997
        %s1000 = sld [smem:[#allocation8 + $0x99]]
        %v1001 = vstv %s1000
        %v1002 = vmul.f32 %v1001, %v871
        %1004 = vrot.lane.b32.xlu0 %v1002, 124
        %v1005 = vpop.permute.xlu0 %1004
        %v1007 = vadd.f32 %v943, %v1005
        %s1008 = sld [smem:[#allocation8 + $0xb5]]
        %v1009 = vstv %s1008
        %v1010 = vmul.f32 %v1009, %v871
        %1012 = vrot.lane.b32.xlu0 %v1010, 124
        %v1013 = vpop.permute.xlu0 %1012
        %v1015 = vadd.f32 %v951, %v1013
        %s1016 = sld [smem:[#allocation8 + $0xd1]]
        %v1017 = vstv %s1016
        %v1018 = vmul.f32 %v1017, %v871
        %1020 = vrot.lane.b32.xlu0 %v1018, 124
        %v1021 = vpop.permute.xlu0 %1020
        %v1023 = vadd.f32 %v959, %v1021
        %s1024 = sld [smem:[#allocation8 + $0xed]]
        %v1025 = vstv %s1024
        %v1026 = vmul.f32 %v1025, %v871
        %1028 = vrot.lane.b32.xlu0 %v1026, 124
        %v1029 = vpop.permute.xlu0 %1028
        %v1031 = vadd.f32 %v967, %v1029
        %s1032 = sld [smem:[#allocation8 + $0x2a]]
        %v1033 = vstv %s1032
        %v1034 = vmul.f32 %v1033, %v871
        %1036 = vrot.lane.b32.xlu0 %v1034, 122
        %v1037 = vpop.permute.xlu0 %1036
        %v1039 = vadd.f32 %v975, %v1037
        %s1040 = sld [smem:[#allocation8 + $0x46]]
        %v1041 = vstv %s1040
        %v1042 = vmul.f32 %v1041, %v871
        %1044 = vrot.lane.b32.xlu0 %v1042, 122
        %v1045 = vpop.permute.xlu0 %1044
        %v1047 = vadd.f32 %v983, %v1045
        %s1048 = sld [smem:[#allocation8 + $0x62]]
        %v1049 = vstv %s1048
        %v1050 = vmul.f32 %v1049, %v871
        %1052 = vrot.lane.b32.xlu0 %v1050, 122
        %v1053 = vpop.permute.xlu0 %1052
        %v1055 = vadd.f32 %v991, %v1053
        %s1056 = sld [smem:[#allocation8 + $0x7e]]
        %v1057 = vstv %s1056
        %v1058 = vmul.f32 %v1057, %v871
        %1060 = vrot.lane.b32.xlu0 %v1058, 122
        %v1061 = vpop.permute.xlu0 %1060
        %v1063 = vadd.f32 %v999, %v1061
        %s1064 = sld [smem:[#allocation8 + $0x9a]]
        %v1065 = vstv %s1064
        %v1066 = vmul.f32 %v1065, %v871
        %1068 = vrot.lane.b32.xlu0 %v1066, 122
        %v1069 = vpop.permute.xlu0 %1068
        %v1071 = vadd.f32 %v1007, %v1069
        %s1072 = sld [smem:[#allocation8 + $0xb6]]
        %v1073 = vstv %s1072
        %v1074 = vmul.f32 %v1073, %v871
        %1076 = vrot.lane.b32.xlu0 %v1074, 122
        %v1077 = vpop.permute.xlu0 %1076
        %v1079 = vadd.f32 %v1015, %v1077
        %s1080 = sld [smem:[#allocation8 + $0xd2]]
        %v1081 = vstv %s1080
        %v1082 = vmul.f32 %v1081, %v871
        %1084 = vrot.lane.b32.xlu0 %v1082, 122
        %v1085 = vpop.permute.xlu0 %1084
        %v1087 = vadd.f32 %v1023, %v1085
        %s1088 = sld [smem:[#allocation8 + $0xee]]
        %v1089 = vstv %s1088
        %v1090 = vmul.f32 %v1089, %v871
        %1092 = vrot.lane.b32.xlu0 %v1090, 122
        %v1093 = vpop.permute.xlu0 %1092
        %v1095 = vadd.f32 %v1031, %v1093
        %s1096 = sld [smem:[#allocation8 + $0x2b]]
        %v1097 = vstv %s1096
        %v1098 = vmul.f32 %v1097, %v871
        %1100 = vrot.lane.b32.xlu0 %v1098, 120
        %v1101 = vpop.permute.xlu0 %1100
        %v1103 = vadd.f32 %v1039, %v1101
        %s1104 = sld [smem:[#allocation8 + $0x47]]
        %v1105 = vstv %s1104
        %v1106 = vmul.f32 %v1105, %v871
        %1108 = vrot.lane.b32.xlu0 %v1106, 120
        %v1109 = vpop.permute.xlu0 %1108
        %v1111 = vadd.f32 %v1047, %v1109
        %s1112 = sld [smem:[#allocation8 + $0x63]]
        %v1113 = vstv %s1112
        %v1114 = vmul.f32 %v1113, %v871
        %1116 = vrot.lane.b32.xlu0 %v1114, 120
        %v1117 = vpop.permute.xlu0 %1116
        %v1119 = vadd.f32 %v1055, %v1117
        %s1120 = sld [smem:[#allocation8 + $0x7f]]
        %v1121 = vstv %s1120
        %v1122 = vmul.f32 %v1121, %v871
        %1124 = vrot.lane.b32.xlu0 %v1122, 120
        %v1125 = vpop.permute.xlu0 %1124
        %v1127 = vadd.f32 %v1063, %v1125
        %s1128 = sld [smem:[#allocation8 + $0x9b]]
        %v1129 = vstv %s1128
        %v1130 = vmul.f32 %v1129, %v871
        %1132 = vrot.lane.b32.xlu0 %v1130, 120
        %v1133 = vpop.permute.xlu0 %1132
        %v1135 = vadd.f32 %v1071, %v1133
        %s1136 = sld [smem:[#allocation8 + $0xb7]]
        %v1137 = vstv %s1136
        %v1138 = vmul.f32 %v1137, %v871
        %1140 = vrot.lane.b32.xlu0 %v1138, 120
        %v1141 = vpop.permute.xlu0 %1140
        %v1143 = vadd.f32 %v1079, %v1141
        %s1144 = sld [smem:[#allocation8 + $0xd3]]
        %v1145 = vstv %s1144
        %v1146 = vmul.f32 %v1145, %v871
        %1148 = vrot.lane.b32.xlu0 %v1146, 120
        %v1149 = vpop.permute.xlu0 %1148
        %v1151 = vadd.f32 %v1087, %v1149
        %s1152 = sld [smem:[#allocation8 + $0xef]]
        %v1153 = vstv %s1152
        %v1154 = vmul.f32 %v1153, %v871
        %1156 = vrot.lane.b32.xlu0 %v1154, 120
        %v1157 = vpop.permute.xlu0 %1156
        %v1159 = vadd.f32 %v1095, %v1157
        %s1160 = sld [smem:[#allocation8 + $0x2c]]
        %v1161 = vstv %s1160
        %v1162 = vmul.f32 %v1161, %v871
        %1164 = vrot.lane.b32.xlu0 %v1162, 118
        %v1165 = vpop.permute.xlu0 %1164
        %v1167 = vadd.f32 %v1103, %v1165
        %s1168 = sld [smem:[#allocation8 + $0x48]]
        %v1169 = vstv %s1168
        %v1170 = vmul.f32 %v1169, %v871
        %1172 = vrot.lane.b32.xlu0 %v1170, 118
        %v1173 = vpop.permute.xlu0 %1172
        %v1175 = vadd.f32 %v1111, %v1173
        %s1176 = sld [smem:[#allocation8 + $0x64]]
        %v1177 = vstv %s1176
        %v1178 = vmul.f32 %v1177, %v871
        %1180 = vrot.lane.b32.xlu0 %v1178, 118
        %v1181 = vpop.permute.xlu0 %1180
        %v1183 = vadd.f32 %v1119, %v1181
        %s1184 = sld [smem:[#allocation8 + $0x80]]
        %v1185 = vstv %s1184
        %v1186 = vmul.f32 %v1185, %v871
        %1188 = vrot.lane.b32.xlu0 %v1186, 118
        %v1189 = vpop.permute.xlu0 %1188
        %v1191 = vadd.f32 %v1127, %v1189
        %s1192 = sld [smem:[#allocation8 + $0x9c]]
        %v1193 = vstv %s1192
        %v1194 = vmul.f32 %v1193, %v871
        %1196 = vrot.lane.b32.xlu0 %v1194, 118
        %v1197 = vpop.permute.xlu0 %1196
        %v1199 = vadd.f32 %v1135, %v1197
        %s1200 = sld [smem:[#allocation8 + $0xb8]]
        %v1201 = vstv %s1200
        %v1202 = vmul.f32 %v1201, %v871
        %1204 = vrot.lane.b32.xlu0 %v1202, 118
        %v1205 = vpop.permute.xlu0 %1204
        %v1207 = vadd.f32 %v1143, %v1205
        %s1208 = sld [smem:[#allocation8 + $0xd4]]
        %v1209 = vstv %s1208
        %v1210 = vmul.f32 %v1209, %v871
        %1212 = vrot.lane.b32.xlu0 %v1210, 118
        %v1213 = vpop.permute.xlu0 %1212
        %v1215 = vadd.f32 %v1151, %v1213
        %s1216 = sld [smem:[#allocation8 + $0xf0]]
        %v1217 = vstv %s1216
        %v1218 = vmul.f32 %v1217, %v871
        %1220 = vrot.lane.b32.xlu0 %v1218, 118
        %v1221 = vpop.permute.xlu0 %1220
        %v1223 = vadd.f32 %v1159, %v1221
        %s1224 = sld [smem:[#allocation8 + $0x2d]]
        %v1225 = vstv %s1224
        %v1226 = vmul.f32 %v1225, %v871
        %1228 = vrot.lane.b32.xlu0 %v1226, 116
        %v1229 = vpop.permute.xlu0 %1228
        %v1231 = vadd.f32 %v1167, %v1229
        %s1232 = sld [smem:[#allocation8 + $0x49]]
        %v1233 = vstv %s1232
        %v1234 = vmul.f32 %v1233, %v871
        %1236 = vrot.lane.b32.xlu0 %v1234, 116
        %v1237 = vpop.permute.xlu0 %1236
        %v1239 = vadd.f32 %v1175, %v1237
        %s1240 = sld [smem:[#allocation8 + $0x65]]
        %v1241 = vstv %s1240
        %v1242 = vmul.f32 %v1241, %v871
        %1244 = vrot.lane.b32.xlu0 %v1242, 116
        %v1245 = vpop.permute.xlu0 %1244
        %v1247 = vadd.f32 %v1183, %v1245
        %s1248 = sld [smem:[#allocation8 + $0x81]]
        %v1249 = vstv %s1248
        %v1250 = vmul.f32 %v1249, %v871
        %1252 = vrot.lane.b32.xlu0 %v1250, 116
        %v1253 = vpop.permute.xlu0 %1252
        %v1255 = vadd.f32 %v1191, %v1253
        %s1256 = sld [smem:[#allocation8 + $0x9d]]
        %v1257 = vstv %s1256
        %v1258 = vmul.f32 %v1257, %v871
        %1260 = vrot.lane.b32.xlu0 %v1258, 116
        %v1261 = vpop.permute.xlu0 %1260
        %v1263 = vadd.f32 %v1199, %v1261
        %s1264 = sld [smem:[#allocation8 + $0xb9]]
        %v1265 = vstv %s1264
        %v1266 = vmul.f32 %v1265, %v871
        %1268 = vrot.lane.b32.xlu0 %v1266, 116
        %v1269 = vpop.permute.xlu0 %1268
        %v1271 = vadd.f32 %v1207, %v1269
        %s1272 = sld [smem:[#allocation8 + $0xd5]]
        %v1273 = vstv %s1272
        %v1274 = vmul.f32 %v1273, %v871
        %1276 = vrot.lane.b32.xlu0 %v1274, 116
        %v1277 = vpop.permute.xlu0 %1276
        %v1279 = vadd.f32 %v1215, %v1277
        %s1280 = sld [smem:[#allocation8 + $0xf1]]
        %v1281 = vstv %s1280
        %v1282 = vmul.f32 %v1281, %v871
        %1284 = vrot.lane.b32.xlu0 %v1282, 116
        %v1285 = vpop.permute.xlu0 %1284
        %v1287 = vadd.f32 %v1223, %v1285
        %v1288 = vld [vmem:[%s458] sm:$0xff]
        %s1289 = sld [smem:[#allocation8 + $0x2e]]
        %v1290 = vstv %s1289
        %v1291 = vmul.f32 %v1290, %v1288
        %v1292 = vadd.f32 %v1231, %v1291
        %s1293 = sld [smem:[#allocation8 + $0x4a]]
        %v1294 = vstv %s1293
        %v1295 = vmul.f32 %v1294, %v1288
        %v1296 = vadd.f32 %v1239, %v1295
        %s1297 = sld [smem:[#allocation8 + $0x66]]
        %v1298 = vstv %s1297
        %v1299 = vmul.f32 %v1298, %v1288
        %v1300 = vadd.f32 %v1247, %v1299
        %s1301 = sld [smem:[#allocation8 + $0x82]]
        %v1302 = vstv %s1301
        %v1303 = vmul.f32 %v1302, %v1288
        %v1304 = vadd.f32 %v1255, %v1303
        %s1305 = sld [smem:[#allocation8 + $0x9e]]
        %v1306 = vstv %s1305
        %v1307 = vmul.f32 %v1306, %v1288
        %v1308 = vadd.f32 %v1263, %v1307
        %s1309 = sld [smem:[#allocation8 + $0xba]]
        %v1310 = vstv %s1309
        %v1311 = vmul.f32 %v1310, %v1288
        %v1312 = vadd.f32 %v1271, %v1311
        %s1313 = sld [smem:[#allocation8 + $0xd6]]
        %v1314 = vstv %s1313
        %v1315 = vmul.f32 %v1314, %v1288
        %v1316 = vadd.f32 %v1279, %v1315
        %s1317 = sld [smem:[#allocation8 + $0xf2]]
        %v1318 = vstv %s1317
        %v1319 = vmul.f32 %v1318, %v1288
        %v1320 = vadd.f32 %v1287, %v1319
        %s1321 = sld [smem:[#allocation8 + $0x2f]]
        %v1322 = vstv %s1321
        %v1323 = vmul.f32 %v1322, %v1288
        %1325 = vrot.lane.b32.xlu0 %v1323, 126
        %v1326 = vpop.permute.xlu0 %1325
        %v1328 = vadd.f32 %v1292, %v1326
        %s1329 = sld [smem:[#allocation8 + $0x4b]]
        %v1330 = vstv %s1329
        %v1331 = vmul.f32 %v1330, %v1288
        %1333 = vrot.lane.b32.xlu0 %v1331, 126
        %v1334 = vpop.permute.xlu0 %1333
        %v1336 = vadd.f32 %v1296, %v1334
        %s1337 = sld [smem:[#allocation8 + $0x67]]
        %v1338 = vstv %s1337
        %v1339 = vmul.f32 %v1338, %v1288
        %1341 = vrot.lane.b32.xlu0 %v1339, 126
        %v1342 = vpop.permute.xlu0 %1341
        %v1344 = vadd.f32 %v1300, %v1342
        %s1345 = sld [smem:[#allocation8 + $0x83]]
        %v1346 = vstv %s1345
        %v1347 = vmul.f32 %v1346, %v1288
        %1349 = vrot.lane.b32.xlu0 %v1347, 126
        %v1350 = vpop.permute.xlu0 %1349
        %v1352 = vadd.f32 %v1304, %v1350
        %s1353 = sld [smem:[#allocation8 + $0x9f]]
        %v1354 = vstv %s1353
        %v1355 = vmul.f32 %v1354, %v1288
        %1357 = vrot.lane.b32.xlu0 %v1355, 126
        %v1358 = vpop.permute.xlu0 %1357
        %v1360 = vadd.f32 %v1308, %v1358
        %s1361 = sld [smem:[#allocation8 + $0xbb]]
        %v1362 = vstv %s1361
        %v1363 = vmul.f32 %v1362, %v1288
        %1365 = vrot.lane.b32.xlu0 %v1363, 126
        %v1366 = vpop.permute.xlu0 %1365
        %v1368 = vadd.f32 %v1312, %v1366
        %s1369 = sld [smem:[#allocation8 + $0xd7]]
        %v1370 = vstv %s1369
        %v1371 = vmul.f32 %v1370, %v1288
        %1373 = vrot.lane.b32.xlu0 %v1371, 126
        %v1374 = vpop.permute.xlu0 %1373
        %v1376 = vadd.f32 %v1316, %v1374
        %s1377 = sld [smem:[#allocation8 + $0xf3]]
        %v1378 = vstv %s1377
        %v1379 = vmul.f32 %v1378, %v1288
        %1381 = vrot.lane.b32.xlu0 %v1379, 126
        %v1382 = vpop.permute.xlu0 %1381
        %v1384 = vadd.f32 %v1320, %v1382
        %s1385 = sld [smem:[#allocation8 + $0x30]]
        %v1386 = vstv %s1385
        %v1387 = vmul.f32 %v1386, %v1288
        %1389 = vrot.lane.b32.xlu0 %v1387, 124
        %v1390 = vpop.permute.xlu0 %1389
        %v1392 = vadd.f32 %v1328, %v1390
        %s1393 = sld [smem:[#allocation8 + $0x4c]]
        %v1394 = vstv %s1393
        %v1395 = vmul.f32 %v1394, %v1288
        %1397 = vrot.lane.b32.xlu0 %v1395, 124
        %v1398 = vpop.permute.xlu0 %1397
        %v1400 = vadd.f32 %v1336, %v1398
        %s1401 = sld [smem:[#allocation8 + $0x68]]
        %v1402 = vstv %s1401
        %v1403 = vmul.f32 %v1402, %v1288
        %1405 = vrot.lane.b32.xlu0 %v1403, 124
        %v1406 = vpop.permute.xlu0 %1405
        %v1408 = vadd.f32 %v1344, %v1406
        %s1409 = sld [smem:[#allocation8 + $0x84]]
        %v1410 = vstv %s1409
        %v1411 = vmul.f32 %v1410, %v1288
        %1413 = vrot.lane.b32.xlu0 %v1411, 124
        %v1414 = vpop.permute.xlu0 %1413
        %v1416 = vadd.f32 %v1352, %v1414
        %s1417 = sld [smem:[#allocation8 + $0xa0]]
        %v1418 = vstv %s1417
        %v1419 = vmul.f32 %v1418, %v1288
        %1421 = vrot.lane.b32.xlu0 %v1419, 124
        %v1422 = vpop.permute.xlu0 %1421
        %v1424 = vadd.f32 %v1360, %v1422
        %s1425 = sld [smem:[#allocation8 + $0xbc]]
        %v1426 = vstv %s1425
        %v1427 = vmul.f32 %v1426, %v1288
        %1429 = vrot.lane.b32.xlu0 %v1427, 124
        %v1430 = vpop.permute.xlu0 %1429
        %v1432 = vadd.f32 %v1368, %v1430
        %s1433 = sld [smem:[#allocation8 + $0xd8]]
        %v1434 = vstv %s1433
        %v1435 = vmul.f32 %v1434, %v1288
        %1437 = vrot.lane.b32.xlu0 %v1435, 124
        %v1438 = vpop.permute.xlu0 %1437
        %v1440 = vadd.f32 %v1376, %v1438
        %s1441 = sld [smem:[#allocation8 + $0xf4]]
        %v1442 = vstv %s1441
        %v1443 = vmul.f32 %v1442, %v1288
        %1445 = vrot.lane.b32.xlu0 %v1443, 124
        %v1446 = vpop.permute.xlu0 %1445
        %v1448 = vadd.f32 %v1384, %v1446
        %s1449 = sld [smem:[#allocation8 + $0x31]]
        %v1450 = vstv %s1449
        %v1451 = vmul.f32 %v1450, %v1288
        %1453 = vrot.lane.b32.xlu0 %v1451, 122
        %v1454 = vpop.permute.xlu0 %1453
        %v1456 = vadd.f32 %v1392, %v1454
        %s1457 = sld [smem:[#allocation8 + $0x4d]]
        %v1458 = vstv %s1457
        %v1459 = vmul.f32 %v1458, %v1288
        %1461 = vrot.lane.b32.xlu0 %v1459, 122
        %v1462 = vpop.permute.xlu0 %1461
        %v1464 = vadd.f32 %v1400, %v1462
        %s1465 = sld [smem:[#allocation8 + $0x69]]
        %v1466 = vstv %s1465
        %v1467 = vmul.f32 %v1466, %v1288
        %1469 = vrot.lane.b32.xlu0 %v1467, 122
        %v1470 = vpop.permute.xlu0 %1469
        %v1472 = vadd.f32 %v1408, %v1470
        %s1473 = sld [smem:[#allocation8 + $0x85]]
        %v1474 = vstv %s1473
        %v1475 = vmul.f32 %v1474, %v1288
        %1477 = vrot.lane.b32.xlu0 %v1475, 122
        %v1478 = vpop.permute.xlu0 %1477
        %v1480 = vadd.f32 %v1416, %v1478
        %s1481 = sld [smem:[#allocation8 + $0xa1]]
        %v1482 = vstv %s1481
        %v1483 = vmul.f32 %v1482, %v1288
        %1485 = vrot.lane.b32.xlu0 %v1483, 122
        %v1486 = vpop.permute.xlu0 %1485
        %v1488 = vadd.f32 %v1424, %v1486
        %s1489 = sld [smem:[#allocation8 + $0xbd]]
        %v1490 = vstv %s1489
        %v1491 = vmul.f32 %v1490, %v1288
        %1493 = vrot.lane.b32.xlu0 %v1491, 122
        %v1494 = vpop.permute.xlu0 %1493
        %v1496 = vadd.f32 %v1432, %v1494
        %s1497 = sld [smem:[#allocation8 + $0xd9]]
        %v1498 = vstv %s1497
        %v1499 = vmul.f32 %v1498, %v1288
        %1501 = vrot.lane.b32.xlu0 %v1499, 122
        %v1502 = vpop.permute.xlu0 %1501
        %v1504 = vadd.f32 %v1440, %v1502
        %s1505 = sld [smem:[#allocation8 + $0xf5]]
        %v1506 = vstv %s1505
        %v1507 = vmul.f32 %v1506, %v1288
        %1509 = vrot.lane.b32.xlu0 %v1507, 122
        %v1510 = vpop.permute.xlu0 %1509
        %v1512 = vadd.f32 %v1448, %v1510
        %s1513 = sld [smem:[#allocation8 + $0x32]]
        %v1514 = vstv %s1513
        %v1515 = vmul.f32 %v1514, %v1288
        %1517 = vrot.lane.b32.xlu0 %v1515, 120
        %v1518 = vpop.permute.xlu0 %1517
        %v1520 = vadd.f32 %v1456, %v1518
        %s1521 = sld [smem:[#allocation8 + $0x4e]]
        %v1522 = vstv %s1521
        %v1523 = vmul.f32 %v1522, %v1288
        %1525 = vrot.lane.b32.xlu0 %v1523, 120
        %v1526 = vpop.permute.xlu0 %1525
        %v1528 = vadd.f32 %v1464, %v1526
        %s1529 = sld [smem:[#allocation8 + $0x6a]]
        %v1530 = vstv %s1529
        %v1531 = vmul.f32 %v1530, %v1288
        %1533 = vrot.lane.b32.xlu0 %v1531, 120
        %v1534 = vpop.permute.xlu0 %1533
        %v1536 = vadd.f32 %v1472, %v1534
        %s1537 = sld [smem:[#allocation8 + $0x86]]
        %v1538 = vstv %s1537
        %v1539 = vmul.f32 %v1538, %v1288
        %1541 = vrot.lane.b32.xlu0 %v1539, 120
        %v1542 = vpop.permute.xlu0 %1541
        %v1544 = vadd.f32 %v1480, %v1542
        %s1545 = sld [smem:[#allocation8 + $0xa2]]
        %v1546 = vstv %s1545
        %v1547 = vmul.f32 %v1546, %v1288
        %1549 = vrot.lane.b32.xlu0 %v1547, 120
        %v1550 = vpop.permute.xlu0 %1549
        %v1552 = vadd.f32 %v1488, %v1550
        %s1553 = sld [smem:[#allocation8 + $0xbe]]
        %v1554 = vstv %s1553
        %v1555 = vmul.f32 %v1554, %v1288
        %1557 = vrot.lane.b32.xlu0 %v1555, 120
        %v1558 = vpop.permute.xlu0 %1557
        %v1560 = vadd.f32 %v1496, %v1558
        %s1561 = sld [smem:[#allocation8 + $0xda]]
        %v1562 = vstv %s1561
        %v1563 = vmul.f32 %v1562, %v1288
        %1565 = vrot.lane.b32.xlu0 %v1563, 120
        %v1566 = vpop.permute.xlu0 %1565
        %v1568 = vadd.f32 %v1504, %v1566
        %s1569 = sld [smem:[#allocation8 + $0xf6]]
        %v1570 = vstv %s1569
        %v1571 = vmul.f32 %v1570, %v1288
        %1573 = vrot.lane.b32.xlu0 %v1571, 120
        %v1574 = vpop.permute.xlu0 %1573
        %v1576 = vadd.f32 %v1512, %v1574
        %s1577 = sld [smem:[#allocation8 + $0x33]]
        %v1578 = vstv %s1577
        %v1579 = vmul.f32 %v1578, %v1288
        %1581 = vrot.lane.b32.xlu0 %v1579, 118
        %v1582 = vpop.permute.xlu0 %1581
        %v1584 = vadd.f32 %v1520, %v1582
        %s1585 = sld [smem:[#allocation8 + $0x4f]]
        %v1586 = vstv %s1585
        %v1587 = vmul.f32 %v1586, %v1288
        %1589 = vrot.lane.b32.xlu0 %v1587, 118
        %v1590 = vpop.permute.xlu0 %1589
        %v1592 = vadd.f32 %v1528, %v1590
        %s1593 = sld [smem:[#allocation8 + $0x6b]]
        %v1594 = vstv %s1593
        %v1595 = vmul.f32 %v1594, %v1288
        %1597 = vrot.lane.b32.xlu0 %v1595, 118
        %v1598 = vpop.permute.xlu0 %1597
        %v1600 = vadd.f32 %v1536, %v1598
        %s1601 = sld [smem:[#allocation8 + $0x87]]
        %v1602 = vstv %s1601
        %v1603 = vmul.f32 %v1602, %v1288
        %1605 = vrot.lane.b32.xlu0 %v1603, 118
        %v1606 = vpop.permute.xlu0 %1605
        %v1608 = vadd.f32 %v1544, %v1606
        %s1609 = sld [smem:[#allocation8 + $0xa3]]
        %v1610 = vstv %s1609
        %v1611 = vmul.f32 %v1610, %v1288
        %1613 = vrot.lane.b32.xlu0 %v1611, 118
        %v1614 = vpop.permute.xlu0 %1613
        %v1616 = vadd.f32 %v1552, %v1614
        %s1617 = sld [smem:[#allocation8 + $0xbf]]
        %v1618 = vstv %s1617
        %v1619 = vmul.f32 %v1618, %v1288
        %1621 = vrot.lane.b32.xlu0 %v1619, 118
        %v1622 = vpop.permute.xlu0 %1621
        %v1624 = vadd.f32 %v1560, %v1622
        %s1625 = sld [smem:[#allocation8 + $0xdb]]
        %v1626 = vstv %s1625
        %v1627 = vmul.f32 %v1626, %v1288
        %1629 = vrot.lane.b32.xlu0 %v1627, 118
        %v1630 = vpop.permute.xlu0 %1629
        %v1632 = vadd.f32 %v1568, %v1630
        %s1633 = sld [smem:[#allocation8 + $0xf7]]
        %v1634 = vstv %s1633
        %v1635 = vmul.f32 %v1634, %v1288
        %1637 = vrot.lane.b32.xlu0 %v1635, 118
        %v1638 = vpop.permute.xlu0 %1637
        %v1640 = vadd.f32 %v1576, %v1638
        %s1641 = sld [smem:[#allocation8 + $0x34]]
        %v1642 = vstv %s1641
        %v1643 = vmul.f32 %v1642, %v1288
        %1645 = vrot.lane.b32.xlu0 %v1643, 116
        %v1646 = vpop.permute.xlu0 %1645
        %v1648 = vadd.f32 %v1584, %v1646
        %s1649 = sld [smem:[#allocation8 + $0x50]]
        %v1650 = vstv %s1649
        %v1651 = vmul.f32 %v1650, %v1288
        %1653 = vrot.lane.b32.xlu0 %v1651, 116
        %v1654 = vpop.permute.xlu0 %1653
        %v1656 = vadd.f32 %v1592, %v1654
        %s1657 = sld [smem:[#allocation8 + $0x6c]]
        %v1658 = vstv %s1657
        %v1659 = vmul.f32 %v1658, %v1288
        %1661 = vrot.lane.b32.xlu0 %v1659, 116
        %v1662 = vpop.permute.xlu0 %1661
        %v1664 = vadd.f32 %v1600, %v1662
        %s1665 = sld [smem:[#allocation8 + $0x88]]
        %v1666 = vstv %s1665
        %v1667 = vmul.f32 %v1666, %v1288
        %1669 = vrot.lane.b32.xlu0 %v1667, 116
        %v1670 = vpop.permute.xlu0 %1669
        %v1672 = vadd.f32 %v1608, %v1670
        %s1673 = sld [smem:[#allocation8 + $0xa4]]
        %v1674 = vstv %s1673
        %v1675 = vmul.f32 %v1674, %v1288
        %1677 = vrot.lane.b32.xlu0 %v1675, 116
        %v1678 = vpop.permute.xlu0 %1677
        %v1680 = vadd.f32 %v1616, %v1678
        %s1681 = sld [smem:[#allocation8 + $0xc0]]
        %v1682 = vstv %s1681
        %v1683 = vmul.f32 %v1682, %v1288
        %1685 = vrot.lane.b32.xlu0 %v1683, 116
        %v1686 = vpop.permute.xlu0 %1685
        %v1688 = vadd.f32 %v1624, %v1686
        %s1689 = sld [smem:[#allocation8 + $0xdc]]
        %v1690 = vstv %s1689
        %v1691 = vmul.f32 %v1690, %v1288
        %1693 = vrot.lane.b32.xlu0 %v1691, 116
        %v1694 = vpop.permute.xlu0 %1693
        %v1696 = vadd.f32 %v1632, %v1694
        %s1697 = sld [smem:[#allocation8 + $0xf8]]
        %v1698 = vstv %s1697
        %v1699 = vmul.f32 %v1698, %v1288
        %1701 = vrot.lane.b32.xlu0 %v1699, 116
        %v1702 = vpop.permute.xlu0 %1701
        %v1704 = vadd.f32 %v1640, %v1702
        %v1705 = vld [vmem:[%s460] sm:$0xff]
        %s1706 = sld [smem:[#allocation8 + $0x35]]
        %v1707 = vstv %s1706
        %v1708 = vmul.f32 %v1707, %v1705
        %v1709 = vadd.f32 %v1648, %v1708
        %s1710 = sld [smem:[#allocation8 + $0x51]]
        %v1711 = vstv %s1710
        %v1712 = vmul.f32 %v1711, %v1705
        %v1713 = vadd.f32 %v1656, %v1712
        %s1714 = sld [smem:[#allocation8 + $0x6d]]
        %v1715 = vstv %s1714
        %v1716 = vmul.f32 %v1715, %v1705
        %v1717 = vadd.f32 %v1664, %v1716
        %s1718 = sld [smem:[#allocation8 + $0x89]]
        %v1719 = vstv %s1718
        %v1720 = vmul.f32 %v1719, %v1705
        %v1721 = vadd.f32 %v1672, %v1720
        %s1722 = sld [smem:[#allocation8 + $0xa5]]
        %v1723 = vstv %s1722
        %v1724 = vmul.f32 %v1723, %v1705
        %v1725 = vadd.f32 %v1680, %v1724
        %s1726 = sld [smem:[#allocation8 + $0xc1]]
        %v1727 = vstv %s1726
        %v1728 = vmul.f32 %v1727, %v1705
        %v1729 = vadd.f32 %v1688, %v1728
        %s1730 = sld [smem:[#allocation8 + $0xdd]]
        %v1731 = vstv %s1730
        %v1732 = vmul.f32 %v1731, %v1705
        %v1733 = vadd.f32 %v1696, %v1732
        %s1734 = sld [smem:[#allocation8 + $0xf9]]
        %v1735 = vstv %s1734
        %v1736 = vmul.f32 %v1735, %v1705
        %v1737 = vadd.f32 %v1704, %v1736
        %s1738 = sld [smem:[#allocation8 + $0x36]]
        %v1739 = vstv %s1738
        %v1740 = vmul.f32 %v1739, %v1705
        %1742 = vrot.lane.b32.xlu0 %v1740, 126
        %v1743 = vpop.permute.xlu0 %1742
        %v1745 = vadd.f32 %v1709, %v1743
        %s1746 = sld [smem:[#allocation8 + $0x52]]
        %v1747 = vstv %s1746
        %v1748 = vmul.f32 %v1747, %v1705
        %1750 = vrot.lane.b32.xlu0 %v1748, 126
        %v1751 = vpop.permute.xlu0 %1750
        %v1753 = vadd.f32 %v1713, %v1751
        %s1754 = sld [smem:[#allocation8 + $0x6e]]
        %v1755 = vstv %s1754
        %v1756 = vmul.f32 %v1755, %v1705
        %1758 = vrot.lane.b32.xlu0 %v1756, 126
        %v1759 = vpop.permute.xlu0 %1758
        %v1761 = vadd.f32 %v1717, %v1759
        %s1762 = sld [smem:[#allocation8 + $0x8a]]
        %v1763 = vstv %s1762
        %v1764 = vmul.f32 %v1763, %v1705
        %1766 = vrot.lane.b32.xlu0 %v1764, 126
        %v1767 = vpop.permute.xlu0 %1766
        %v1769 = vadd.f32 %v1721, %v1767
        %s1770 = sld [smem:[#allocation8 + $0xa6]]
        %v1771 = vstv %s1770
        %v1772 = vmul.f32 %v1771, %v1705
        %1774 = vrot.lane.b32.xlu0 %v1772, 126
        %v1775 = vpop.permute.xlu0 %1774
        %v1777 = vadd.f32 %v1725, %v1775
        %s1778 = sld [smem:[#allocation8 + $0xc2]]
        %v1779 = vstv %s1778
        %v1780 = vmul.f32 %v1779, %v1705
        %1782 = vrot.lane.b32.xlu0 %v1780, 126
        %v1783 = vpop.permute.xlu0 %1782
        %v1785 = vadd.f32 %v1729, %v1783
        %s1786 = sld [smem:[#allocation8 + $0xde]]
        %v1787 = vstv %s1786
        %v1788 = vmul.f32 %v1787, %v1705
        %1790 = vrot.lane.b32.xlu0 %v1788, 126
        %v1791 = vpop.permute.xlu0 %1790
        %v1793 = vadd.f32 %v1733, %v1791
        %s1794 = sld [smem:[#allocation8 + $0xfa]]
        %v1795 = vstv %s1794
        %v1796 = vmul.f32 %v1795, %v1705
        %1798 = vrot.lane.b32.xlu0 %v1796, 126
        %v1799 = vpop.permute.xlu0 %1798
        %v1801 = vadd.f32 %v1737, %v1799
        %s1802 = sld [smem:[#allocation8 + $0x37]]
        %v1803 = vstv %s1802
        %v1804 = vmul.f32 %v1803, %v1705
        %1806 = vrot.lane.b32.xlu0 %v1804, 124
        %v1807 = vpop.permute.xlu0 %1806
        %v1809 = vadd.f32 %v1745, %v1807
        %s1810 = sld [smem:[#allocation8 + $0x53]]
        %v1811 = vstv %s1810
        %v1812 = vmul.f32 %v1811, %v1705
        %1814 = vrot.lane.b32.xlu0 %v1812, 124
        %v1815 = vpop.permute.xlu0 %1814
        %v1817 = vadd.f32 %v1753, %v1815
        %s1818 = sld [smem:[#allocation8 + $0x6f]]
        %v1819 = vstv %s1818
        %v1820 = vmul.f32 %v1819, %v1705
        %1822 = vrot.lane.b32.xlu0 %v1820, 124
        %v1823 = vpop.permute.xlu0 %1822
        %v1825 = vadd.f32 %v1761, %v1823
        %s1826 = sld [smem:[#allocation8 + $0x8b]]
        %v1827 = vstv %s1826
        %v1828 = vmul.f32 %v1827, %v1705
        %1830 = vrot.lane.b32.xlu0 %v1828, 124
        %v1831 = vpop.permute.xlu0 %1830
        %v1833 = vadd.f32 %v1769, %v1831
        %s1834 = sld [smem:[#allocation8 + $0xa7]]
        %v1835 = vstv %s1834
        %v1836 = vmul.f32 %v1835, %v1705
        %1838 = vrot.lane.b32.xlu0 %v1836, 124
        %v1839 = vpop.permute.xlu0 %1838
        %v1841 = vadd.f32 %v1777, %v1839
        %s1842 = sld [smem:[#allocation8 + $0xc3]]
        %v1843 = vstv %s1842
        %v1844 = vmul.f32 %v1843, %v1705
        %1846 = vrot.lane.b32.xlu0 %v1844, 124
        %v1847 = vpop.permute.xlu0 %1846
        %v1849 = vadd.f32 %v1785, %v1847
        %s1850 = sld [smem:[#allocation8 + $0xdf]]
        %v1851 = vstv %s1850
        %v1852 = vmul.f32 %v1851, %v1705
        %1854 = vrot.lane.b32.xlu0 %v1852, 124
        %v1855 = vpop.permute.xlu0 %1854
        %v1857 = vadd.f32 %v1793, %v1855
        %s1858 = sld [smem:[#allocation8 + $0xfb]]
        %v1859 = vstv %s1858
        %v1860 = vmul.f32 %v1859, %v1705
        %1862 = vrot.lane.b32.xlu0 %v1860, 124
        %v1863 = vpop.permute.xlu0 %1862
        %v1865 = vadd.f32 %v1801, %v1863
        %s1866 = sld [smem:[#allocation8 + $0x38]]
        %v1867 = vstv %s1866
        %v1868 = vmul.f32 %v1867, %v1705
        %1870 = vrot.lane.b32.xlu0 %v1868, 122
        %v1871 = vpop.permute.xlu0 %1870
        %v1873 = vadd.f32 %v1809, %v1871
        %s1874 = sld [smem:[#allocation8 + $0x54]]
        %v1875 = vstv %s1874
        %v1876 = vmul.f32 %v1875, %v1705
        %1878 = vrot.lane.b32.xlu0 %v1876, 122
        %v1879 = vpop.permute.xlu0 %1878
        %v1881 = vadd.f32 %v1817, %v1879
        %s1882 = sld [smem:[#allocation8 + $0x70]]
        %v1883 = vstv %s1882
        %v1884 = vmul.f32 %v1883, %v1705
        %1886 = vrot.lane.b32.xlu0 %v1884, 122
        %v1887 = vpop.permute.xlu0 %1886
        %v1889 = vadd.f32 %v1825, %v1887
        %s1890 = sld [smem:[#allocation8 + $0x8c]]
        %v1891 = vstv %s1890
        %v1892 = vmul.f32 %v1891, %v1705
        %1894 = vrot.lane.b32.xlu0 %v1892, 122
        %v1895 = vpop.permute.xlu0 %1894
        %v1897 = vadd.f32 %v1833, %v1895
        %s1898 = sld [smem:[#allocation8 + $0xa8]]
        %v1899 = vstv %s1898
        %v1900 = vmul.f32 %v1899, %v1705
        %1902 = vrot.lane.b32.xlu0 %v1900, 122
        %v1903 = vpop.permute.xlu0 %1902
        %v1905 = vadd.f32 %v1841, %v1903
        %s1906 = sld [smem:[#allocation8 + $0xc4]]
        %v1907 = vstv %s1906
        %v1908 = vmul.f32 %v1907, %v1705
        %1910 = vrot.lane.b32.xlu0 %v1908, 122
        %v1911 = vpop.permute.xlu0 %1910
        %v1913 = vadd.f32 %v1849, %v1911
        %s1914 = sld [smem:[#allocation8 + $0xe0]]
        %v1915 = vstv %s1914
        %v1916 = vmul.f32 %v1915, %v1705
        %1918 = vrot.lane.b32.xlu0 %v1916, 122
        %v1919 = vpop.permute.xlu0 %1918
        %v1921 = vadd.f32 %v1857, %v1919
        %s1922 = sld [smem:[#allocation8 + $0xfc]]
        %v1923 = vstv %s1922
        %v1924 = vmul.f32 %v1923, %v1705
        %1926 = vrot.lane.b32.xlu0 %v1924, 122
        %v1927 = vpop.permute.xlu0 %1926
        %v1929 = vadd.f32 %v1865, %v1927
        %s1930 = sld [smem:[#allocation8 + $0x39]]
        %v1931 = vstv %s1930
        %v1932 = vmul.f32 %v1931, %v1705
        %1934 = vrot.lane.b32.xlu0 %v1932, 120
        %v1935 = vpop.permute.xlu0 %1934
        %v1937 = vadd.f32 %v1873, %v1935
        %s1938 = sld [smem:[#allocation8 + $0x55]]
        %v1939 = vstv %s1938
        %v1940 = vmul.f32 %v1939, %v1705
        %1942 = vrot.lane.b32.xlu0 %v1940, 120
        %v1943 = vpop.permute.xlu0 %1942
        %v1945 = vadd.f32 %v1881, %v1943
        %s1946 = sld [smem:[#allocation8 + $0x71]]
        %v1947 = vstv %s1946
        %v1948 = vmul.f32 %v1947, %v1705
        %1950 = vrot.lane.b32.xlu0 %v1948, 120
        %v1951 = vpop.permute.xlu0 %1950
        %v1953 = vadd.f32 %v1889, %v1951
        %s1954 = sld [smem:[#allocation8 + $0x8d]]
        %v1955 = vstv %s1954
        %v1956 = vmul.f32 %v1955, %v1705
        %1958 = vrot.lane.b32.xlu0 %v1956, 120
        %v1959 = vpop.permute.xlu0 %1958
        %v1961 = vadd.f32 %v1897, %v1959
        %s1962 = sld [smem:[#allocation8 + $0xa9]]
        %v1963 = vstv %s1962
        %v1964 = vmul.f32 %v1963, %v1705
        %1966 = vrot.lane.b32.xlu0 %v1964, 120
        %v1967 = vpop.permute.xlu0 %1966
        %v1969 = vadd.f32 %v1905, %v1967
        %s1970 = sld [smem:[#allocation8 + $0xc5]]
        %v1971 = vstv %s1970
        %v1972 = vmul.f32 %v1971, %v1705
        %1974 = vrot.lane.b32.xlu0 %v1972, 120
        %v1975 = vpop.permute.xlu0 %1974
        %v1977 = vadd.f32 %v1913, %v1975
        %s1978 = sld [smem:[#allocation8 + $0xe1]]
        %v1979 = vstv %s1978
        %v1980 = vmul.f32 %v1979, %v1705
        %1982 = vrot.lane.b32.xlu0 %v1980, 120
        %v1983 = vpop.permute.xlu0 %1982
        %v1985 = vadd.f32 %v1921, %v1983
        %s1986 = sld [smem:[#allocation8 + $0xfd]]
        %v1987 = vstv %s1986
        %v1988 = vmul.f32 %v1987, %v1705
        %1990 = vrot.lane.b32.xlu0 %v1988, 120
        %v1991 = vpop.permute.xlu0 %1990
        %v1993 = vadd.f32 %v1929, %v1991
        %s1994 = sld [smem:[#allocation8 + $0x3a]]
        %v1995 = vstv %s1994
        %v1996 = vmul.f32 %v1995, %v1705
        %1998 = vrot.lane.b32.xlu0 %v1996, 118
        %v1999 = vpop.permute.xlu0 %1998
        %v2001 = vadd.f32 %v1937, %v1999
        %s2002 = sld [smem:[#allocation8 + $0x56]]
        %v2003 = vstv %s2002
        %v2004 = vmul.f32 %v2003, %v1705
        %2006 = vrot.lane.b32.xlu0 %v2004, 118
        %v2007 = vpop.permute.xlu0 %2006
        %v2009 = vadd.f32 %v1945, %v2007
        %s2010 = sld [smem:[#allocation8 + $0x72]]
        %v2011 = vstv %s2010
        %v2012 = vmul.f32 %v2011, %v1705
        %2014 = vrot.lane.b32.xlu0 %v2012, 118
        %v2015 = vpop.permute.xlu0 %2014
        %v2017 = vadd.f32 %v1953, %v2015
        %s2018 = sld [smem:[#allocation8 + $0x8e]]
        %v2019 = vstv %s2018
        %v2020 = vmul.f32 %v2019, %v1705
        %2022 = vrot.lane.b32.xlu0 %v2020, 118
        %v2023 = vpop.permute.xlu0 %2022
        %v2025 = vadd.f32 %v1961, %v2023
        %s2026 = sld [smem:[#allocation8 + $0xaa]]
        %v2027 = vstv %s2026
        %v2028 = vmul.f32 %v2027, %v1705
        %2030 = vrot.lane.b32.xlu0 %v2028, 118
        %v2031 = vpop.permute.xlu0 %2030
        %v2033 = vadd.f32 %v1969, %v2031
        %s2034 = sld [smem:[#allocation8 + $0xc6]]
        %v2035 = vstv %s2034
        %v2036 = vmul.f32 %v2035, %v1705
        %2038 = vrot.lane.b32.xlu0 %v2036, 118
        %v2039 = vpop.permute.xlu0 %2038
        %v2041 = vadd.f32 %v1977, %v2039
        %s2042 = sld [smem:[#allocation8 + $0xe2]]
        %v2043 = vstv %s2042
        %v2044 = vmul.f32 %v2043, %v1705
        %2046 = vrot.lane.b32.xlu0 %v2044, 118
        %v2047 = vpop.permute.xlu0 %2046
        %v2049 = vadd.f32 %v1985, %v2047
        %s2050 = sld [smem:[#allocation8 + $0xfe]]
        %v2051 = vstv %s2050
        %v2052 = vmul.f32 %v2051, %v1705
        %2054 = vrot.lane.b32.xlu0 %v2052, 118
        %v2055 = vpop.permute.xlu0 %2054
        %v2057 = vadd.f32 %v1993, %v2055
        %s2058 = sld [smem:[#allocation8 + $0x3b]]
        %v2059 = vstv %s2058
        %v2060 = vmul.f32 %v2059, %v1705
        %2062 = vrot.lane.b32.xlu0 %v2060, 116
        %v2063 = vpop.permute.xlu0 %2062
        %v2065 = vadd.f32 %v2001, %v2063
        %s2066 = sld [smem:[#allocation8 + $0x57]]
        %v2067 = vstv %s2066
        %v2068 = vmul.f32 %v2067, %v1705
        %2070 = vrot.lane.b32.xlu0 %v2068, 116
        %v2071 = vpop.permute.xlu0 %2070
        %v2073 = vadd.f32 %v2009, %v2071
        %s2074 = sld [smem:[#allocation8 + $0x73]]
        %v2075 = vstv %s2074
        %v2076 = vmul.f32 %v2075, %v1705
        %2078 = vrot.lane.b32.xlu0 %v2076, 116
        %v2079 = vpop.permute.xlu0 %2078
        %v2081 = vadd.f32 %v2017, %v2079
        %s2082 = sld [smem:[#allocation8 + $0x8f]]
        %v2083 = vstv %s2082
        %v2084 = vmul.f32 %v2083, %v1705
        %2086 = vrot.lane.b32.xlu0 %v2084, 116
        %v2087 = vpop.permute.xlu0 %2086
        %v2089 = vadd.f32 %v2025, %v2087
        %s2090 = sld [smem:[#allocation8 + $0xab]]
        %v2091 = vstv %s2090
        %v2092 = vmul.f32 %v2091, %v1705
        %2094 = vrot.lane.b32.xlu0 %v2092, 116
        %v2095 = vpop.permute.xlu0 %2094
        %v2097 = vadd.f32 %v2033, %v2095
        %s2098 = sld [smem:[#allocation8 + $0xc7]]
        %v2099 = vstv %s2098
        %v2100 = vmul.f32 %v2099, %v1705
        %2102 = vrot.lane.b32.xlu0 %v2100, 116
        %v2103 = vpop.permute.xlu0 %2102
        %v2105 = vadd.f32 %v2041, %v2103
        %s2106 = sld [smem:[#allocation8 + $0xe3]]
        %v2107 = vstv %s2106
        %v2108 = vmul.f32 %v2107, %v1705
        %2110 = vrot.lane.b32.xlu0 %v2108, 116
        %v2111 = vpop.permute.xlu0 %2110
        %v2113 = vadd.f32 %v2049, %v2111
        %s2114 = sld [smem:[#allocation8 + $0xff]]
        %v2115 = vstv %s2114
        %v2116 = vmul.f32 %v2115, %v1705
        %2118 = vrot.lane.b32.xlu0 %v2116, 116
        %v2119 = vpop.permute.xlu0 %2118
        %v2121 = vadd.f32 %v2057, %v2119
        %s2122 = sld [smem:[#allocation8 + $0x100]]
        %v2123 = vstv %s2122
        %v2124 = vadd.f32 %v2065, %v2123
        %v2125 = vmax.f32 %v2124, 0.0
        %2127 = vrot.lane.b32.xlu0 %v2125, 126
        %v2128 = vpop.permute.xlu0 %2127
        %v2130 = vmax.f32 %v2125, %v2128
        %s2131 = sld [smem:[#allocation8 + $0x101]]
        %v2132 = vstv %s2131
        %v2133 = vadd.f32 %v2073, %v2132
        %v2134 = vmax.f32 %v2133, 0.0
        %2136 = vrot.lane.b32.xlu0 %v2134, 126
        %v2137 = vpop.permute.xlu0 %2136
        %v2139 = vmax.f32 %v2134, %v2137
        %s2140 = sld [smem:[#allocation8 + $0x102]]
        %v2141 = vstv %s2140
        %v2142 = vadd.f32 %v2081, %v2141
        %v2143 = vmax.f32 %v2142, 0.0
        %2145 = vrot.lane.b32.xlu0 %v2143, 126
        %v2146 = vpop.permute.xlu0 %2145
        %v2148 = vmax.f32 %v2143, %v2146
        %s2149 = sld [smem:[#allocation8 + $0x103]]
        %v2150 = vstv %s2149
        %v2151 = vadd.f32 %v2089, %v2150
        %v2152 = vmax.f32 %v2151, 0.0
        %2154 = vrot.lane.b32.xlu0 %v2152, 126
        %v2155 = vpop.permute.xlu0 %2154
        %v2157 = vmax.f32 %v2152, %v2155
        %s2158 = sld [smem:[#allocation8 + $0x104]]
        %v2159 = vstv %s2158
        %v2160 = vadd.f32 %v2097, %v2159
        %v2161 = vmax.f32 %v2160, 0.0
        %2163 = vrot.lane.b32.xlu0 %v2161, 126
        %v2164 = vpop.permute.xlu0 %2163
        %v2166 = vmax.f32 %v2161, %v2164
        %s2167 = sld [smem:[#allocation8 + $0x105]]
        %v2168 = vstv %s2167
        %v2169 = vadd.f32 %v2105, %v2168
        %v2170 = vmax.f32 %v2169, 0.0
        %2172 = vrot.lane.b32.xlu0 %v2170, 126
        %v2173 = vpop.permute.xlu0 %2172
        %v2175 = vmax.f32 %v2170, %v2173
        %s2176 = sld [smem:[#allocation8 + $0x106]]
        %v2177 = vstv %s2176
        %v2178 = vadd.f32 %v2113, %v2177
        %v2179 = vmax.f32 %v2178, 0.0
        %2181 = vrot.lane.b32.xlu0 %v2179, 126
        %v2182 = vpop.permute.xlu0 %2181
        %v2184 = vmax.f32 %v2179, %v2182
        %s2185 = sld [smem:[#allocation8 + $0x107]]
        %v2186 = vstv %s2185
        %v2187 = vadd.f32 %v2121, %v2186
        %v2188 = vmax.f32 %v2187, 0.0
        %2190 = vrot.lane.b32.xlu0 %v2188, 126
        %v2191 = vpop.permute.xlu0 %2190
        %v2193 = vmax.f32 %v2188, %v2191
        %vm2194 = vcmask 334848
        %2195 = vst.msk [vmem:[#allocation3] sm:$0xff] %vm2194, %v2130
        %s2196 = scalar_lea.vmem [#allocation3], 8
        %2197 = vst.msk [vmem:[%s2196] sm:$0xff] %vm2194, %v2139
        %s2198 = scalar_lea.vmem [#allocation3], 16
        %2199 = vst.msk [vmem:[%s2198] sm:$0xff] %vm2194, %v2148
        %s2200 = scalar_lea.vmem [#allocation3], 24
        %2201 = vst.msk [vmem:[%s2200] sm:$0xff] %vm2194, %v2157
        %s2202 = scalar_lea.vmem [#allocation3], 32
        %2203 = vst.msk [vmem:[%s2202] sm:$0xff] %vm2194, %v2166
        %s2204 = scalar_lea.vmem [#allocation3], 40
        %2205 = vst.msk [vmem:[%s2204] sm:$0xff] %vm2194, %v2175
        %s2206 = scalar_lea.vmem [#allocation3], 48
        %2207 = vst.msk [vmem:[%s2206] sm:$0xff] %vm2194, %v2184
        %s2208 = scalar_lea.vmem [#allocation3], 56
        %2209 = vst.msk [vmem:[%s2208] sm:$0xff] %vm2194, %v2193
        %v2210 = vld [vmem:[#allocation3] sm:$0xff]
        %s2211 = sld [smem:[#allocation8 + $0x108]]
        %v2212 = vstv %s2211
        %v2213 = vmul.f32 %v2212, %v2210
        %s2214 = sld [smem:[#allocation8 + $0x140]]
        %v2215 = vstv %s2214
        %v2216 = vmul.f32 %v2215, %v2210
        %s2217 = sld [smem:[#allocation8 + $0x178]]
        %v2218 = vstv %s2217
        %v2219 = vmul.f32 %v2218, %v2210
        %s2220 = sld [smem:[#allocation8 + $0x1b0]]
        %v2221 = vstv %s2220
        %v2222 = vmul.f32 %v2221, %v2210
        %s2223 = sld [smem:[#allocation8 + $0x1e8]]
        %v2224 = vstv %s2223
        %v2225 = vmul.f32 %v2224, %v2210
        %s2226 = sld [smem:[#allocation8 + $0x220]]
        %v2227 = vstv %s2226
        %v2228 = vmul.f32 %v2227, %v2210
        %s2229 = sld [smem:[#allocation8 + $0x258]]
        %v2230 = vstv %s2229
        %v2231 = vmul.f32 %v2230, %v2210
        %s2232 = sld [smem:[#allocation8 + $0x290]]
        %v2233 = vstv %s2232
        %v2234 = vmul.f32 %v2233, %v2210
        %s2235 = sld [smem:[#allocation8 + $0x109]]
        %v2236 = vstv %s2235
        %v2237 = vmul.f32 %v2236, %v2210
        %2239 = vrot.lane.b32.xlu0 %v2237, 124
        %v2240 = vpop.permute.xlu0 %2239
        %v2242 = vadd.f32 %v2213, %v2240
        %s2243 = sld [smem:[#allocation8 + $0x141]]
        %v2244 = vstv %s2243
        %v2245 = vmul.f32 %v2244, %v2210
        %2247 = vrot.lane.b32.xlu0 %v2245, 124
        %v2248 = vpop.permute.xlu0 %2247
        %v2250 = vadd.f32 %v2216, %v2248
        %s2251 = sld [smem:[#allocation8 + $0x179]]
        %v2252 = vstv %s2251
        %v2253 = vmul.f32 %v2252, %v2210
        %2255 = vrot.lane.b32.xlu0 %v2253, 124
        %v2256 = vpop.permute.xlu0 %2255
        %v2258 = vadd.f32 %v2219, %v2256
        %s2259 = sld [smem:[#allocation8 + $0x1b1]]
        %v2260 = vstv %s2259
        %v2261 = vmul.f32 %v2260, %v2210
        %2263 = vrot.lane.b32.xlu0 %v2261, 124
        %v2264 = vpop.permute.xlu0 %2263
        %v2266 = vadd.f32 %v2222, %v2264
        %s2267 = sld [smem:[#allocation8 + $0x1e9]]
        %v2268 = vstv %s2267
        %v2269 = vmul.f32 %v2268, %v2210
        %2271 = vrot.lane.b32.xlu0 %v2269, 124
        %v2272 = vpop.permute.xlu0 %2271
        %v2274 = vadd.f32 %v2225, %v2272
        %s2275 = sld [smem:[#allocation8 + $0x221]]
        %v2276 = vstv %s2275
        %v2277 = vmul.f32 %v2276, %v2210
        %2279 = vrot.lane.b32.xlu0 %v2277, 124
        %v2280 = vpop.permute.xlu0 %2279
        %v2282 = vadd.f32 %v2228, %v2280
        %s2283 = sld [smem:[#allocation8 + $0x259]]
        %v2284 = vstv %s2283
        %v2285 = vmul.f32 %v2284, %v2210
        %2287 = vrot.lane.b32.xlu0 %v2285, 124
        %v2288 = vpop.permute.xlu0 %2287
        %v2290 = vadd.f32 %v2231, %v2288
        %s2291 = sld [smem:[#allocation8 + $0x291]]
        %v2292 = vstv %s2291
        %v2293 = vmul.f32 %v2292, %v2210
        %2295 = vrot.lane.b32.xlu0 %v2293, 124
        %v2296 = vpop.permute.xlu0 %2295
        %v2298 = vadd.f32 %v2234, %v2296
        %s2299 = sld [smem:[#allocation8 + $0x10a]]
        %v2300 = vstv %s2299
        %v2301 = vmul.f32 %v2300, %v2210
        %2303 = vrot.lane.b32.xlu0 %v2301, 120
        %v2304 = vpop.permute.xlu0 %2303
        %v2306 = vadd.f32 %v2242, %v2304
        %s2307 = sld [smem:[#allocation8 + $0x142]]
        %v2308 = vstv %s2307
        %v2309 = vmul.f32 %v2308, %v2210
        %2311 = vrot.lane.b32.xlu0 %v2309, 120
        %v2312 = vpop.permute.xlu0 %2311
        %v2314 = vadd.f32 %v2250, %v2312
        %s2315 = sld [smem:[#allocation8 + $0x17a]]
        %v2316 = vstv %s2315
        %v2317 = vmul.f32 %v2316, %v2210
        %2319 = vrot.lane.b32.xlu0 %v2317, 120
        %v2320 = vpop.permute.xlu0 %2319
        %v2322 = vadd.f32 %v2258, %v2320
        %s2323 = sld [smem:[#allocation8 + $0x1b2]]
        %v2324 = vstv %s2323
        %v2325 = vmul.f32 %v2324, %v2210
        %2327 = vrot.lane.b32.xlu0 %v2325, 120
        %v2328 = vpop.permute.xlu0 %2327
        %v2330 = vadd.f32 %v2266, %v2328
        %s2331 = sld [smem:[#allocation8 + $0x1ea]]
        %v2332 = vstv %s2331
        %v2333 = vmul.f32 %v2332, %v2210
        %2335 = vrot.lane.b32.xlu0 %v2333, 120
        %v2336 = vpop.permute.xlu0 %2335
        %v2338 = vadd.f32 %v2274, %v2336
        %s2339 = sld [smem:[#allocation8 + $0x222]]
        %v2340 = vstv %s2339
        %v2341 = vmul.f32 %v2340, %v2210
        %2343 = vrot.lane.b32.xlu0 %v2341, 120
        %v2344 = vpop.permute.xlu0 %2343
        %v2346 = vadd.f32 %v2282, %v2344
        %s2347 = sld [smem:[#allocation8 + $0x25a]]
        %v2348 = vstv %s2347
        %v2349 = vmul.f32 %v2348, %v2210
        %2351 = vrot.lane.b32.xlu0 %v2349, 120
        %v2352 = vpop.permute.xlu0 %2351
        %v2354 = vadd.f32 %v2290, %v2352
        %s2355 = sld [smem:[#allocation8 + $0x292]]
        %v2356 = vstv %s2355
        %v2357 = vmul.f32 %v2356, %v2210
        %2359 = vrot.lane.b32.xlu0 %v2357, 120
        %v2360 = vpop.permute.xlu0 %2359
        %v2362 = vadd.f32 %v2298, %v2360
        %s2363 = sld [smem:[#allocation8 + $0x10b]]
        %v2364 = vstv %s2363
        %v2365 = vmul.f32 %v2364, %v2210
        %2367 = vrot.lane.b32.xlu0 %v2365, 116
        %v2368 = vpop.permute.xlu0 %2367
        %v2370 = vadd.f32 %v2306, %v2368
        %s2371 = sld [smem:[#allocation8 + $0x143]]
        %v2372 = vstv %s2371
        %v2373 = vmul.f32 %v2372, %v2210
        %2375 = vrot.lane.b32.xlu0 %v2373, 116
        %v2376 = vpop.permute.xlu0 %2375
        %v2378 = vadd.f32 %v2314, %v2376
        %s2379 = sld [smem:[#allocation8 + $0x17b]]
        %v2380 = vstv %s2379
        %v2381 = vmul.f32 %v2380, %v2210
        %2383 = vrot.lane.b32.xlu0 %v2381, 116
        %v2384 = vpop.permute.xlu0 %2383
        %v2386 = vadd.f32 %v2322, %v2384
        %s2387 = sld [smem:[#allocation8 + $0x1b3]]
        %v2388 = vstv %s2387
        %v2389 = vmul.f32 %v2388, %v2210
        %2391 = vrot.lane.b32.xlu0 %v2389, 116
        %v2392 = vpop.permute.xlu0 %2391
        %v2394 = vadd.f32 %v2330, %v2392
        %s2395 = sld [smem:[#allocation8 + $0x1eb]]
        %v2396 = vstv %s2395
        %v2397 = vmul.f32 %v2396, %v2210
        %2399 = vrot.lane.b32.xlu0 %v2397, 116
        %v2400 = vpop.permute.xlu0 %2399
        %v2402 = vadd.f32 %v2338, %v2400
        %s2403 = sld [smem:[#allocation8 + $0x223]]
        %v2404 = vstv %s2403
        %v2405 = vmul.f32 %v2404, %v2210
        %2407 = vrot.lane.b32.xlu0 %v2405, 116
        %v2408 = vpop.permute.xlu0 %2407
        %v2410 = vadd.f32 %v2346, %v2408
        %s2411 = sld [smem:[#allocation8 + $0x25b]]
        %v2412 = vstv %s2411
        %v2413 = vmul.f32 %v2412, %v2210
        %2415 = vrot.lane.b32.xlu0 %v2413, 116
        %v2416 = vpop.permute.xlu0 %2415
        %v2418 = vadd.f32 %v2354, %v2416
        %s2419 = sld [smem:[#allocation8 + $0x293]]
        %v2420 = vstv %s2419
        %v2421 = vmul.f32 %v2420, %v2210
        %2423 = vrot.lane.b32.xlu0 %v2421, 116
        %v2424 = vpop.permute.xlu0 %2423
        %v2426 = vadd.f32 %v2362, %v2424
        %s2427 = sld [smem:[#allocation8 + $0x10c]]
        %v2428 = vstv %s2427
        %v2429 = vmul.f32 %v2428, %v2210
        %2431 = vrot.lane.b32.xlu0 %v2429, 112
        %v2432 = vpop.permute.xlu0 %2431
        %v2434 = vadd.f32 %v2370, %v2432
        %s2435 = sld [smem:[#allocation8 + $0x144]]
        %v2436 = vstv %s2435
        %v2437 = vmul.f32 %v2436, %v2210
        %2439 = vrot.lane.b32.xlu0 %v2437, 112
        %v2440 = vpop.permute.xlu0 %2439
        %v2442 = vadd.f32 %v2378, %v2440
        %s2443 = sld [smem:[#allocation8 + $0x17c]]
        %v2444 = vstv %s2443
        %v2445 = vmul.f32 %v2444, %v2210
        %2447 = vrot.lane.b32.xlu0 %v2445, 112
        %v2448 = vpop.permute.xlu0 %2447
        %v2450 = vadd.f32 %v2386, %v2448
        %s2451 = sld [smem:[#allocation8 + $0x1b4]]
        %v2452 = vstv %s2451
        %v2453 = vmul.f32 %v2452, %v2210
        %2455 = vrot.lane.b32.xlu0 %v2453, 112
        %v2456 = vpop.permute.xlu0 %2455
        %v2458 = vadd.f32 %v2394, %v2456
        %s2459 = sld [smem:[#allocation8 + $0x1ec]]
        %v2460 = vstv %s2459
        %v2461 = vmul.f32 %v2460, %v2210
        %2463 = vrot.lane.b32.xlu0 %v2461, 112
        %v2464 = vpop.permute.xlu0 %2463
        %v2466 = vadd.f32 %v2402, %v2464
        %s2467 = sld [smem:[#allocation8 + $0x224]]
        %v2468 = vstv %s2467
        %v2469 = vmul.f32 %v2468, %v2210
        %2471 = vrot.lane.b32.xlu0 %v2469, 112
        %v2472 = vpop.permute.xlu0 %2471
        %v2474 = vadd.f32 %v2410, %v2472
        %s2475 = sld [smem:[#allocation8 + $0x25c]]
        %v2476 = vstv %s2475
        %v2477 = vmul.f32 %v2476, %v2210
        %2479 = vrot.lane.b32.xlu0 %v2477, 112
        %v2480 = vpop.permute.xlu0 %2479
        %v2482 = vadd.f32 %v2418, %v2480
        %s2483 = sld [smem:[#allocation8 + $0x294]]
        %v2484 = vstv %s2483
        %v2485 = vmul.f32 %v2484, %v2210
        %2487 = vrot.lane.b32.xlu0 %v2485, 112
        %v2488 = vpop.permute.xlu0 %2487
        %v2490 = vadd.f32 %v2426, %v2488
        %s2491 = sld [smem:[#allocation8 + $0x10d]]
        %v2492 = vstv %s2491
        %v2493 = vmul.f32 %v2492, %v2210
        %2495 = vrot.lane.b32.xlu0 %v2493, 108
        %v2496 = vpop.permute.xlu0 %2495
        %v2498 = vadd.f32 %v2434, %v2496
        %s2499 = sld [smem:[#allocation8 + $0x145]]
        %v2500 = vstv %s2499
        %v2501 = vmul.f32 %v2500, %v2210
        %2503 = vrot.lane.b32.xlu0 %v2501, 108
        %v2504 = vpop.permute.xlu0 %2503
        %v2506 = vadd.f32 %v2442, %v2504
        %s2507 = sld [smem:[#allocation8 + $0x17d]]
        %v2508 = vstv %s2507
        %v2509 = vmul.f32 %v2508, %v2210
        %2511 = vrot.lane.b32.xlu0 %v2509, 108
        %v2512 = vpop.permute.xlu0 %2511
        %v2514 = vadd.f32 %v2450, %v2512
        %s2515 = sld [smem:[#allocation8 + $0x1b5]]
        %v2516 = vstv %s2515
        %v2517 = vmul.f32 %v2516, %v2210
        %2519 = vrot.lane.b32.xlu0 %v2517, 108
        %v2520 = vpop.permute.xlu0 %2519
        %v2522 = vadd.f32 %v2458, %v2520
        %s2523 = sld [smem:[#allocation8 + $0x1ed]]
        %v2524 = vstv %s2523
        %v2525 = vmul.f32 %v2524, %v2210
        %2527 = vrot.lane.b32.xlu0 %v2525, 108
        %v2528 = vpop.permute.xlu0 %2527
        %v2530 = vadd.f32 %v2466, %v2528
        %s2531 = sld [smem:[#allocation8 + $0x225]]
        %v2532 = vstv %s2531
        %v2533 = vmul.f32 %v2532, %v2210
        %2535 = vrot.lane.b32.xlu0 %v2533, 108
        %v2536 = vpop.permute.xlu0 %2535
        %v2538 = vadd.f32 %v2474, %v2536
        %s2539 = sld [smem:[#allocation8 + $0x25d]]
        %v2540 = vstv %s2539
        %v2541 = vmul.f32 %v2540, %v2210
        %2543 = vrot.lane.b32.xlu0 %v2541, 108
        %v2544 = vpop.permute.xlu0 %2543
        %v2546 = vadd.f32 %v2482, %v2544
        %s2547 = sld [smem:[#allocation8 + $0x295]]
        %v2548 = vstv %s2547
        %v2549 = vmul.f32 %v2548, %v2210
        %2551 = vrot.lane.b32.xlu0 %v2549, 108
        %v2552 = vpop.permute.xlu0 %2551
        %v2554 = vadd.f32 %v2490, %v2552
        %s2555 = sld [smem:[#allocation8 + $0x10e]]
        %v2556 = vstv %s2555
        %v2557 = vmul.f32 %v2556, %v2210
        %2559 = vrot.lane.b32.xlu0 %v2557, 104
        %v2560 = vpop.permute.xlu0 %2559
        %v2562 = vadd.f32 %v2498, %v2560
        %s2563 = sld [smem:[#allocation8 + $0x146]]
        %v2564 = vstv %s2563
        %v2565 = vmul.f32 %v2564, %v2210
        %2567 = vrot.lane.b32.xlu0 %v2565, 104
        %v2568 = vpop.permute.xlu0 %2567
        %v2570 = vadd.f32 %v2506, %v2568
        %s2571 = sld [smem:[#allocation8 + $0x17e]]
        %v2572 = vstv %s2571
        %v2573 = vmul.f32 %v2572, %v2210
        %2575 = vrot.lane.b32.xlu0 %v2573, 104
        %v2576 = vpop.permute.xlu0 %2575
        %v2578 = vadd.f32 %v2514, %v2576
        %s2579 = sld [smem:[#allocation8 + $0x1b6]]
        %v2580 = vstv %s2579
        %v2581 = vmul.f32 %v2580, %v2210
        %2583 = vrot.lane.b32.xlu0 %v2581, 104
        %v2584 = vpop.permute.xlu0 %2583
        %v2586 = vadd.f32 %v2522, %v2584
        %s2587 = sld [smem:[#allocation8 + $0x1ee]]
        %v2588 = vstv %s2587
        %v2589 = vmul.f32 %v2588, %v2210
        %2591 = vrot.lane.b32.xlu0 %v2589, 104
        %v2592 = vpop.permute.xlu0 %2591
        %v2594 = vadd.f32 %v2530, %v2592
        %s2595 = sld [smem:[#allocation8 + $0x226]]
        %v2596 = vstv %s2595
        %v2597 = vmul.f32 %v2596, %v2210
        %2599 = vrot.lane.b32.xlu0 %v2597, 104
        %v2600 = vpop.permute.xlu0 %2599
        %v2602 = vadd.f32 %v2538, %v2600
        %s2603 = sld [smem:[#allocation8 + $0x25e]]
        %v2604 = vstv %s2603
        %v2605 = vmul.f32 %v2604, %v2210
        %2607 = vrot.lane.b32.xlu0 %v2605, 104
        %v2608 = vpop.permute.xlu0 %2607
        %v2610 = vadd.f32 %v2546, %v2608
        %s2611 = sld [smem:[#allocation8 + $0x296]]
        %v2612 = vstv %s2611
        %v2613 = vmul.f32 %v2612, %v2210
        %2615 = vrot.lane.b32.xlu0 %v2613, 104
        %v2616 = vpop.permute.xlu0 %2615
        %v2618 = vadd.f32 %v2554, %v2616
        %v2619 = vld [vmem:[%s2196] sm:$0xff]
        %s2620 = sld [smem:[#allocation8 + $0x10f]]
        %v2621 = vstv %s2620
        %v2622 = vmul.f32 %v2621, %v2619
        %v2623 = vadd.f32 %v2562, %v2622
        %s2624 = sld [smem:[#allocation8 + $0x147]]
        %v2625 = vstv %s2624
        %v2626 = vmul.f32 %v2625, %v2619
        %v2627 = vadd.f32 %v2570, %v2626
        %s2628 = sld [smem:[#allocation8 + $0x17f]]
        %v2629 = vstv %s2628
        %v2630 = vmul.f32 %v2629, %v2619
        %v2631 = vadd.f32 %v2578, %v2630
        %s2632 = sld [smem:[#allocation8 + $0x1b7]]
        %v2633 = vstv %s2632
        %v2634 = vmul.f32 %v2633, %v2619
        %v2635 = vadd.f32 %v2586, %v2634
        %s2636 = sld [smem:[#allocation8 + $0x1ef]]
        %v2637 = vstv %s2636
        %v2638 = vmul.f32 %v2637, %v2619
        %v2639 = vadd.f32 %v2594, %v2638
        %s2640 = sld [smem:[#allocation8 + $0x227]]
        %v2641 = vstv %s2640
        %v2642 = vmul.f32 %v2641, %v2619
        %v2643 = vadd.f32 %v2602, %v2642
        %s2644 = sld [smem:[#allocation8 + $0x25f]]
        %v2645 = vstv %s2644
        %v2646 = vmul.f32 %v2645, %v2619
        %v2647 = vadd.f32 %v2610, %v2646
        %s2648 = sld [smem:[#allocation8 + $0x297]]
        %v2649 = vstv %s2648
        %v2650 = vmul.f32 %v2649, %v2619
        %v2651 = vadd.f32 %v2618, %v2650
        %s2652 = sld [smem:[#allocation8 + $0x110]]
        %v2653 = vstv %s2652
        %v2654 = vmul.f32 %v2653, %v2619
        %2656 = vrot.lane.b32.xlu0 %v2654, 124
        %v2657 = vpop.permute.xlu0 %2656
        %v2659 = vadd.f32 %v2623, %v2657
        %s2660 = sld [smem:[#allocation8 + $0x148]]
        %v2661 = vstv %s2660
        %v2662 = vmul.f32 %v2661, %v2619
        %2664 = vrot.lane.b32.xlu0 %v2662, 124
        %v2665 = vpop.permute.xlu0 %2664
        %v2667 = vadd.f32 %v2627, %v2665
        %s2668 = sld [smem:[#allocation8 + $0x180]]
        %v2669 = vstv %s2668
        %v2670 = vmul.f32 %v2669, %v2619
        %2672 = vrot.lane.b32.xlu0 %v2670, 124
        %v2673 = vpop.permute.xlu0 %2672
        %v2675 = vadd.f32 %v2631, %v2673
        %s2676 = sld [smem:[#allocation8 + $0x1b8]]
        %v2677 = vstv %s2676
        %v2678 = vmul.f32 %v2677, %v2619
        %2680 = vrot.lane.b32.xlu0 %v2678, 124
        %v2681 = vpop.permute.xlu0 %2680
        %v2683 = vadd.f32 %v2635, %v2681
        %s2684 = sld [smem:[#allocation8 + $0x1f0]]
        %v2685 = vstv %s2684
        %v2686 = vmul.f32 %v2685, %v2619
        %2688 = vrot.lane.b32.xlu0 %v2686, 124
        %v2689 = vpop.permute.xlu0 %2688
        %v2691 = vadd.f32 %v2639, %v2689
        %s2692 = sld [smem:[#allocation8 + $0x228]]
        %v2693 = vstv %s2692
        %v2694 = vmul.f32 %v2693, %v2619
        %2696 = vrot.lane.b32.xlu0 %v2694, 124
        %v2697 = vpop.permute.xlu0 %2696
        %v2699 = vadd.f32 %v2643, %v2697
        %s2700 = sld [smem:[#allocation8 + $0x260]]
        %v2701 = vstv %s2700
        %v2702 = vmul.f32 %v2701, %v2619
        %2704 = vrot.lane.b32.xlu0 %v2702, 124
        %v2705 = vpop.permute.xlu0 %2704
        %v2707 = vadd.f32 %v2647, %v2705
        %s2708 = sld [smem:[#allocation8 + $0x298]]
        %v2709 = vstv %s2708
        %v2710 = vmul.f32 %v2709, %v2619
        %2712 = vrot.lane.b32.xlu0 %v2710, 124
        %v2713 = vpop.permute.xlu0 %2712
        %v2715 = vadd.f32 %v2651, %v2713
        %s2716 = sld [smem:[#allocation8 + $0x111]]
        %v2717 = vstv %s2716
        %v2718 = vmul.f32 %v2717, %v2619
        %2720 = vrot.lane.b32.xlu0 %v2718, 120
        %v2721 = vpop.permute.xlu0 %2720
        %v2723 = vadd.f32 %v2659, %v2721
        %s2724 = sld [smem:[#allocation8 + $0x149]]
        %v2725 = vstv %s2724
        %v2726 = vmul.f32 %v2725, %v2619
        %2728 = vrot.lane.b32.xlu0 %v2726, 120
        %v2729 = vpop.permute.xlu0 %2728
        %v2731 = vadd.f32 %v2667, %v2729
        %s2732 = sld [smem:[#allocation8 + $0x181]]
        %v2733 = vstv %s2732
        %v2734 = vmul.f32 %v2733, %v2619
        %2736 = vrot.lane.b32.xlu0 %v2734, 120
        %v2737 = vpop.permute.xlu0 %2736
        %v2739 = vadd.f32 %v2675, %v2737
        %s2740 = sld [smem:[#allocation8 + $0x1b9]]
        %v2741 = vstv %s2740
        %v2742 = vmul.f32 %v2741, %v2619
        %2744 = vrot.lane.b32.xlu0 %v2742, 120
        %v2745 = vpop.permute.xlu0 %2744
        %v2747 = vadd.f32 %v2683, %v2745
        %s2748 = sld [smem:[#allocation8 + $0x1f1]]
        %v2749 = vstv %s2748
        %v2750 = vmul.f32 %v2749, %v2619
        %2752 = vrot.lane.b32.xlu0 %v2750, 120
        %v2753 = vpop.permute.xlu0 %2752
        %v2755 = vadd.f32 %v2691, %v2753
        %s2756 = sld [smem:[#allocation8 + $0x229]]
        %v2757 = vstv %s2756
        %v2758 = vmul.f32 %v2757, %v2619
        %2760 = vrot.lane.b32.xlu0 %v2758, 120
        %v2761 = vpop.permute.xlu0 %2760
        %v2763 = vadd.f32 %v2699, %v2761
        %s2764 = sld [smem:[#allocation8 + $0x261]]
        %v2765 = vstv %s2764
        %v2766 = vmul.f32 %v2765, %v2619
        %2768 = vrot.lane.b32.xlu0 %v2766, 120
        %v2769 = vpop.permute.xlu0 %2768
        %v2771 = vadd.f32 %v2707, %v2769
        %s2772 = sld [smem:[#allocation8 + $0x299]]
        %v2773 = vstv %s2772
        %v2774 = vmul.f32 %v2773, %v2619
        %2776 = vrot.lane.b32.xlu0 %v2774, 120
        %v2777 = vpop.permute.xlu0 %2776
        %v2779 = vadd.f32 %v2715, %v2777
        %s2780 = sld [smem:[#allocation8 + $0x112]]
        %v2781 = vstv %s2780
        %v2782 = vmul.f32 %v2781, %v2619
        %2784 = vrot.lane.b32.xlu0 %v2782, 116
        %v2785 = vpop.permute.xlu0 %2784
        %v2787 = vadd.f32 %v2723, %v2785
        %s2788 = sld [smem:[#allocation8 + $0x14a]]
        %v2789 = vstv %s2788
        %v2790 = vmul.f32 %v2789, %v2619
        %2792 = vrot.lane.b32.xlu0 %v2790, 116
        %v2793 = vpop.permute.xlu0 %2792
        %v2795 = vadd.f32 %v2731, %v2793
        %s2796 = sld [smem:[#allocation8 + $0x182]]
        %v2797 = vstv %s2796
        %v2798 = vmul.f32 %v2797, %v2619
        %2800 = vrot.lane.b32.xlu0 %v2798, 116
        %v2801 = vpop.permute.xlu0 %2800
        %v2803 = vadd.f32 %v2739, %v2801
        %s2804 = sld [smem:[#allocation8 + $0x1ba]]
        %v2805 = vstv %s2804
        %v2806 = vmul.f32 %v2805, %v2619
        %2808 = vrot.lane.b32.xlu0 %v2806, 116
        %v2809 = vpop.permute.xlu0 %2808
        %v2811 = vadd.f32 %v2747, %v2809
        %s2812 = sld [smem:[#allocation8 + $0x1f2]]
        %v2813 = vstv %s2812
        %v2814 = vmul.f32 %v2813, %v2619
        %2816 = vrot.lane.b32.xlu0 %v2814, 116
        %v2817 = vpop.permute.xlu0 %2816
        %v2819 = vadd.f32 %v2755, %v2817
        %s2820 = sld [smem:[#allocation8 + $0x22a]]
        %v2821 = vstv %s2820
        %v2822 = vmul.f32 %v2821, %v2619
        %2824 = vrot.lane.b32.xlu0 %v2822, 116
        %v2825 = vpop.permute.xlu0 %2824
        %v2827 = vadd.f32 %v2763, %v2825
        %s2828 = sld [smem:[#allocation8 + $0x262]]
        %v2829 = vstv %s2828
        %v2830 = vmul.f32 %v2829, %v2619
        %2832 = vrot.lane.b32.xlu0 %v2830, 116
        %v2833 = vpop.permute.xlu0 %2832
        %v2835 = vadd.f32 %v2771, %v2833
        %s2836 = sld [smem:[#allocation8 + $0x29a]]
        %v2837 = vstv %s2836
        %v2838 = vmul.f32 %v2837, %v2619
        %2840 = vrot.lane.b32.xlu0 %v2838, 116
        %v2841 = vpop.permute.xlu0 %2840
        %v2843 = vadd.f32 %v2779, %v2841
        %s2844 = sld [smem:[#allocation8 + $0x113]]
        %v2845 = vstv %s2844
        %v2846 = vmul.f32 %v2845, %v2619
        %2848 = vrot.lane.b32.xlu0 %v2846, 112
        %v2849 = vpop.permute.xlu0 %2848
        %v2851 = vadd.f32 %v2787, %v2849
        %s2852 = sld [smem:[#allocation8 + $0x14b]]
        %v2853 = vstv %s2852
        %v2854 = vmul.f32 %v2853, %v2619
        %2856 = vrot.lane.b32.xlu0 %v2854, 112
        %v2857 = vpop.permute.xlu0 %2856
        %v2859 = vadd.f32 %v2795, %v2857
        %s2860 = sld [smem:[#allocation8 + $0x183]]
        %v2861 = vstv %s2860
        %v2862 = vmul.f32 %v2861, %v2619
        %2864 = vrot.lane.b32.xlu0 %v2862, 112
        %v2865 = vpop.permute.xlu0 %2864
        %v2867 = vadd.f32 %v2803, %v2865
        %s2868 = sld [smem:[#allocation8 + $0x1bb]]
        %v2869 = vstv %s2868
        %v2870 = vmul.f32 %v2869, %v2619
        %2872 = vrot.lane.b32.xlu0 %v2870, 112
        %v2873 = vpop.permute.xlu0 %2872
        %v2875 = vadd.f32 %v2811, %v2873
        %s2876 = sld [smem:[#allocation8 + $0x1f3]]
        %v2877 = vstv %s2876
        %v2878 = vmul.f32 %v2877, %v2619
        %2880 = vrot.lane.b32.xlu0 %v2878, 112
        %v2881 = vpop.permute.xlu0 %2880
        %v2883 = vadd.f32 %v2819, %v2881
        %s2884 = sld [smem:[#allocation8 + $0x22b]]
        %v2885 = vstv %s2884
        %v2886 = vmul.f32 %v2885, %v2619
        %2888 = vrot.lane.b32.xlu0 %v2886, 112
        %v2889 = vpop.permute.xlu0 %2888
        %v2891 = vadd.f32 %v2827, %v2889
        %s2892 = sld [smem:[#allocation8 + $0x263]]
        %v2893 = vstv %s2892
        %v2894 = vmul.f32 %v2893, %v2619
        %2896 = vrot.lane.b32.xlu0 %v2894, 112
        %v2897 = vpop.permute.xlu0 %2896
        %v2899 = vadd.f32 %v2835, %v2897
        %s2900 = sld [smem:[#allocation8 + $0x29b]]
        %v2901 = vstv %s2900
        %v2902 = vmul.f32 %v2901, %v2619
        %2904 = vrot.lane.b32.xlu0 %v2902, 112
        %v2905 = vpop.permute.xlu0 %2904
        %v2907 = vadd.f32 %v2843, %v2905
        %s2908 = sld [smem:[#allocation8 + $0x114]]
        %v2909 = vstv %s2908
        %v2910 = vmul.f32 %v2909, %v2619
        %2912 = vrot.lane.b32.xlu0 %v2910, 108
        %v2913 = vpop.permute.xlu0 %2912
        %v2915 = vadd.f32 %v2851, %v2913
        %s2916 = sld [smem:[#allocation8 + $0x14c]]
        %v2917 = vstv %s2916
        %v2918 = vmul.f32 %v2917, %v2619
        %2920 = vrot.lane.b32.xlu0 %v2918, 108
        %v2921 = vpop.permute.xlu0 %2920
        %v2923 = vadd.f32 %v2859, %v2921
        %s2924 = sld [smem:[#allocation8 + $0x184]]
        %v2925 = vstv %s2924
        %v2926 = vmul.f32 %v2925, %v2619
        %2928 = vrot.lane.b32.xlu0 %v2926, 108
        %v2929 = vpop.permute.xlu0 %2928
        %v2931 = vadd.f32 %v2867, %v2929
        %s2932 = sld [smem:[#allocation8 + $0x1bc]]
        %v2933 = vstv %s2932
        %v2934 = vmul.f32 %v2933, %v2619
        %2936 = vrot.lane.b32.xlu0 %v2934, 108
        %v2937 = vpop.permute.xlu0 %2936
        %v2939 = vadd.f32 %v2875, %v2937
        %s2940 = sld [smem:[#allocation8 + $0x1f4]]
        %v2941 = vstv %s2940
        %v2942 = vmul.f32 %v2941, %v2619
        %2944 = vrot.lane.b32.xlu0 %v2942, 108
        %v2945 = vpop.permute.xlu0 %2944
        %v2947 = vadd.f32 %v2883, %v2945
        %s2948 = sld [smem:[#allocation8 + $0x22c]]
        %v2949 = vstv %s2948
        %v2950 = vmul.f32 %v2949, %v2619
        %2952 = vrot.lane.b32.xlu0 %v2950, 108
        %v2953 = vpop.permute.xlu0 %2952
        %v2955 = vadd.f32 %v2891, %v2953
        %s2956 = sld [smem:[#allocation8 + $0x264]]
        %v2957 = vstv %s2956
        %v2958 = vmul.f32 %v2957, %v2619
        %2960 = vrot.lane.b32.xlu0 %v2958, 108
        %v2961 = vpop.permute.xlu0 %2960
        %v2963 = vadd.f32 %v2899, %v2961
        %s2964 = sld [smem:[#allocation8 + $0x29c]]
        %v2965 = vstv %s2964
        %v2966 = vmul.f32 %v2965, %v2619
        %2968 = vrot.lane.b32.xlu0 %v2966, 108
        %v2969 = vpop.permute.xlu0 %2968
        %v2971 = vadd.f32 %v2907, %v2969
        %s2972 = sld [smem:[#allocation8 + $0x115]]
        %v2973 = vstv %s2972
        %v2974 = vmul.f32 %v2973, %v2619
        %2976 = vrot.lane.b32.xlu0 %v2974, 104
        %v2977 = vpop.permute.xlu0 %2976
        %v2979 = vadd.f32 %v2915, %v2977
        %s2980 = sld [smem:[#allocation8 + $0x14d]]
        %v2981 = vstv %s2980
        %v2982 = vmul.f32 %v2981, %v2619
        %2984 = vrot.lane.b32.xlu0 %v2982, 104
        %v2985 = vpop.permute.xlu0 %2984
        %v2987 = vadd.f32 %v2923, %v2985
        %s2988 = sld [smem:[#allocation8 + $0x185]]
        %v2989 = vstv %s2988
        %v2990 = vmul.f32 %v2989, %v2619
        %2992 = vrot.lane.b32.xlu0 %v2990, 104
        %v2993 = vpop.permute.xlu0 %2992
        %v2995 = vadd.f32 %v2931, %v2993
        %s2996 = sld [smem:[#allocation8 + $0x1bd]]
        %v2997 = vstv %s2996
        %v2998 = vmul.f32 %v2997, %v2619
        %3000 = vrot.lane.b32.xlu0 %v2998, 104
        %v3001 = vpop.permute.xlu0 %3000
        %v3003 = vadd.f32 %v2939, %v3001
        %s3004 = sld [smem:[#allocation8 + $0x1f5]]
        %v3005 = vstv %s3004
        %v3006 = vmul.f32 %v3005, %v2619
        %3008 = vrot.lane.b32.xlu0 %v3006, 104
        %v3009 = vpop.permute.xlu0 %3008
        %v3011 = vadd.f32 %v2947, %v3009
        %s3012 = sld [smem:[#allocation8 + $0x22d]]
        %v3013 = vstv %s3012
        %v3014 = vmul.f32 %v3013, %v2619
        %3016 = vrot.lane.b32.xlu0 %v3014, 104
        %v3017 = vpop.permute.xlu0 %3016
        %v3019 = vadd.f32 %v2955, %v3017
        %s3020 = sld [smem:[#allocation8 + $0x265]]
        %v3021 = vstv %s3020
        %v3022 = vmul.f32 %v3021, %v2619
        %3024 = vrot.lane.b32.xlu0 %v3022, 104
        %v3025 = vpop.permute.xlu0 %3024
        %v3027 = vadd.f32 %v2963, %v3025
        %s3028 = sld [smem:[#allocation8 + $0x29d]]
        %v3029 = vstv %s3028
        %v3030 = vmul.f32 %v3029, %v2619
        %3032 = vrot.lane.b32.xlu0 %v3030, 104
        %v3033 = vpop.permute.xlu0 %3032
        %v3035 = vadd.f32 %v2971, %v3033
        %v3036 = vld [vmem:[%s2198] sm:$0xff]
        %s3037 = sld [smem:[#allocation8 + $0x116]]
        %v3038 = vstv %s3037
        %v3039 = vmul.f32 %v3038, %v3036
        %v3040 = vadd.f32 %v2979, %v3039
        %s3041 = sld [smem:[#allocation8 + $0x14e]]
        %v3042 = vstv %s3041
        %v3043 = vmul.f32 %v3042, %v3036
        %v3044 = vadd.f32 %v2987, %v3043
        %s3045 = sld [smem:[#allocation8 + $0x186]]
        %v3046 = vstv %s3045
        %v3047 = vmul.f32 %v3046, %v3036
        %v3048 = vadd.f32 %v2995, %v3047
        %s3049 = sld [smem:[#allocation8 + $0x1be]]
        %v3050 = vstv %s3049
        %v3051 = vmul.f32 %v3050, %v3036
        %v3052 = vadd.f32 %v3003, %v3051
        %s3053 = sld [smem:[#allocation8 + $0x1f6]]
        %v3054 = vstv %s3053
        %v3055 = vmul.f32 %v3054, %v3036
        %v3056 = vadd.f32 %v3011, %v3055
        %s3057 = sld [smem:[#allocation8 + $0x22e]]
        %v3058 = vstv %s3057
        %v3059 = vmul.f32 %v3058, %v3036
        %v3060 = vadd.f32 %v3019, %v3059
        %s3061 = sld [smem:[#allocation8 + $0x266]]
        %v3062 = vstv %s3061
        %v3063 = vmul.f32 %v3062, %v3036
        %v3064 = vadd.f32 %v3027, %v3063
        %s3065 = sld [smem:[#allocation8 + $0x29e]]
        %v3066 = vstv %s3065
        %v3067 = vmul.f32 %v3066, %v3036
        %v3068 = vadd.f32 %v3035, %v3067
        %s3069 = sld [smem:[#allocation8 + $0x117]]
        %v3070 = vstv %s3069
        %v3071 = vmul.f32 %v3070, %v3036
        %3073 = vrot.lane.b32.xlu0 %v3071, 124
        %v3074 = vpop.permute.xlu0 %3073
        %v3076 = vadd.f32 %v3040, %v3074
        %s3077 = sld [smem:[#allocation8 + $0x14f]]
        %v3078 = vstv %s3077
        %v3079 = vmul.f32 %v3078, %v3036
        %3081 = vrot.lane.b32.xlu0 %v3079, 124
        %v3082 = vpop.permute.xlu0 %3081
        %v3084 = vadd.f32 %v3044, %v3082
        %s3085 = sld [smem:[#allocation8 + $0x187]]
        %v3086 = vstv %s3085
        %v3087 = vmul.f32 %v3086, %v3036
        %3089 = vrot.lane.b32.xlu0 %v3087, 124
        %v3090 = vpop.permute.xlu0 %3089
        %v3092 = vadd.f32 %v3048, %v3090
        %s3093 = sld [smem:[#allocation8 + $0x1bf]]
        %v3094 = vstv %s3093
        %v3095 = vmul.f32 %v3094, %v3036
        %3097 = vrot.lane.b32.xlu0 %v3095, 124
        %v3098 = vpop.permute.xlu0 %3097
        %v3100 = vadd.f32 %v3052, %v3098
        %s3101 = sld [smem:[#allocation8 + $0x1f7]]
        %v3102 = vstv %s3101
        %v3103 = vmul.f32 %v3102, %v3036
        %3105 = vrot.lane.b32.xlu0 %v3103, 124
        %v3106 = vpop.permute.xlu0 %3105
        %v3108 = vadd.f32 %v3056, %v3106
        %s3109 = sld [smem:[#allocation8 + $0x22f]]
        %v3110 = vstv %s3109
        %v3111 = vmul.f32 %v3110, %v3036
        %3113 = vrot.lane.b32.xlu0 %v3111, 124
        %v3114 = vpop.permute.xlu0 %3113
        %v3116 = vadd.f32 %v3060, %v3114
        %s3117 = sld [smem:[#allocation8 + $0x267]]
        %v3118 = vstv %s3117
        %v3119 = vmul.f32 %v3118, %v3036
        %3121 = vrot.lane.b32.xlu0 %v3119, 124
        %v3122 = vpop.permute.xlu0 %3121
        %v3124 = vadd.f32 %v3064, %v3122
        %s3125 = sld [smem:[#allocation8 + $0x29f]]
        %v3126 = vstv %s3125
        %v3127 = vmul.f32 %v3126, %v3036
        %3129 = vrot.lane.b32.xlu0 %v3127, 124
        %v3130 = vpop.permute.xlu0 %3129
        %v3132 = vadd.f32 %v3068, %v3130
        %s3133 = sld [smem:[#allocation8 + $0x118]]
        %v3134 = vstv %s3133
        %v3135 = vmul.f32 %v3134, %v3036
        %3137 = vrot.lane.b32.xlu0 %v3135, 120
        %v3138 = vpop.permute.xlu0 %3137
        %v3140 = vadd.f32 %v3076, %v3138
        %s3141 = sld [smem:[#allocation8 + $0x150]]
        %v3142 = vstv %s3141
        %v3143 = vmul.f32 %v3142, %v3036
        %3145 = vrot.lane.b32.xlu0 %v3143, 120
        %v3146 = vpop.permute.xlu0 %3145
        %v3148 = vadd.f32 %v3084, %v3146
        %s3149 = sld [smem:[#allocation8 + $0x188]]
        %v3150 = vstv %s3149
        %v3151 = vmul.f32 %v3150, %v3036
        %3153 = vrot.lane.b32.xlu0 %v3151, 120
        %v3154 = vpop.permute.xlu0 %3153
        %v3156 = vadd.f32 %v3092, %v3154
        %s3157 = sld [smem:[#allocation8 + $0x1c0]]
        %v3158 = vstv %s3157
        %v3159 = vmul.f32 %v3158, %v3036
        %3161 = vrot.lane.b32.xlu0 %v3159, 120
        %v3162 = vpop.permute.xlu0 %3161
        %v3164 = vadd.f32 %v3100, %v3162
        %s3165 = sld [smem:[#allocation8 + $0x1f8]]
        %v3166 = vstv %s3165
        %v3167 = vmul.f32 %v3166, %v3036
        %3169 = vrot.lane.b32.xlu0 %v3167, 120
        %v3170 = vpop.permute.xlu0 %3169
        %v3172 = vadd.f32 %v3108, %v3170
        %s3173 = sld [smem:[#allocation8 + $0x230]]
        %v3174 = vstv %s3173
        %v3175 = vmul.f32 %v3174, %v3036
        %3177 = vrot.lane.b32.xlu0 %v3175, 120
        %v3178 = vpop.permute.xlu0 %3177
        %v3180 = vadd.f32 %v3116, %v3178
        %s3181 = sld [smem:[#allocation8 + $0x268]]
        %v3182 = vstv %s3181
        %v3183 = vmul.f32 %v3182, %v3036
        %3185 = vrot.lane.b32.xlu0 %v3183, 120
        %v3186 = vpop.permute.xlu0 %3185
        %v3188 = vadd.f32 %v3124, %v3186
        %s3189 = sld [smem:[#allocation8 + $0x2a0]]
        %v3190 = vstv %s3189
        %v3191 = vmul.f32 %v3190, %v3036
        %3193 = vrot.lane.b32.xlu0 %v3191, 120
        %v3194 = vpop.permute.xlu0 %3193
        %v3196 = vadd.f32 %v3132, %v3194
        %s3197 = sld [smem:[#allocation8 + $0x119]]
        %v3198 = vstv %s3197
        %v3199 = vmul.f32 %v3198, %v3036
        %3201 = vrot.lane.b32.xlu0 %v3199, 116
        %v3202 = vpop.permute.xlu0 %3201
        %v3204 = vadd.f32 %v3140, %v3202
        %s3205 = sld [smem:[#allocation8 + $0x151]]
        %v3206 = vstv %s3205
        %v3207 = vmul.f32 %v3206, %v3036
        %3209 = vrot.lane.b32.xlu0 %v3207, 116
        %v3210 = vpop.permute.xlu0 %3209
        %v3212 = vadd.f32 %v3148, %v3210
        %s3213 = sld [smem:[#allocation8 + $0x189]]
        %v3214 = vstv %s3213
        %v3215 = vmul.f32 %v3214, %v3036
        %3217 = vrot.lane.b32.xlu0 %v3215, 116
        %v3218 = vpop.permute.xlu0 %3217
        %v3220 = vadd.f32 %v3156, %v3218
        %s3221 = sld [smem:[#allocation8 + $0x1c1]]
        %v3222 = vstv %s3221
        %v3223 = vmul.f32 %v3222, %v3036
        %3225 = vrot.lane.b32.xlu0 %v3223, 116
        %v3226 = vpop.permute.xlu0 %3225
        %v3228 = vadd.f32 %v3164, %v3226
        %s3229 = sld [smem:[#allocation8 + $0x1f9]]
        %v3230 = vstv %s3229
        %v3231 = vmul.f32 %v3230, %v3036
        %3233 = vrot.lane.b32.xlu0 %v3231, 116
        %v3234 = vpop.permute.xlu0 %3233
        %v3236 = vadd.f32 %v3172, %v3234
        %s3237 = sld [smem:[#allocation8 + $0x231]]
        %v3238 = vstv %s3237
        %v3239 = vmul.f32 %v3238, %v3036
        %3241 = vrot.lane.b32.xlu0 %v3239, 116
        %v3242 = vpop.permute.xlu0 %3241
        %v3244 = vadd.f32 %v3180, %v3242
        %s3245 = sld [smem:[#allocation8 + $0x269]]
        %v3246 = vstv %s3245
        %v3247 = vmul.f32 %v3246, %v3036
        %3249 = vrot.lane.b32.xlu0 %v3247, 116
        %v3250 = vpop.permute.xlu0 %3249
        %v3252 = vadd.f32 %v3188, %v3250
        %s3253 = sld [smem:[#allocation8 + $0x2a1]]
        %v3254 = vstv %s3253
        %v3255 = vmul.f32 %v3254, %v3036
        %3257 = vrot.lane.b32.xlu0 %v3255, 116
        %v3258 = vpop.permute.xlu0 %3257
        %v3260 = vadd.f32 %v3196, %v3258
        %s3261 = sld [smem:[#allocation8 + $0x11a]]
        %v3262 = vstv %s3261
        %v3263 = vmul.f32 %v3262, %v3036
        %3265 = vrot.lane.b32.xlu0 %v3263, 112
        %v3266 = vpop.permute.xlu0 %3265
        %v3268 = vadd.f32 %v3204, %v3266
        %s3269 = sld [smem:[#allocation8 + $0x152]]
        %v3270 = vstv %s3269
        %v3271 = vmul.f32 %v3270, %v3036
        %3273 = vrot.lane.b32.xlu0 %v3271, 112
        %v3274 = vpop.permute.xlu0 %3273
        %v3276 = vadd.f32 %v3212, %v3274
        %s3277 = sld [smem:[#allocation8 + $0x18a]]
        %v3278 = vstv %s3277
        %v3279 = vmul.f32 %v3278, %v3036
        %3281 = vrot.lane.b32.xlu0 %v3279, 112
        %v3282 = vpop.permute.xlu0 %3281
        %v3284 = vadd.f32 %v3220, %v3282
        %s3285 = sld [smem:[#allocation8 + $0x1c2]]
        %v3286 = vstv %s3285
        %v3287 = vmul.f32 %v3286, %v3036
        %3289 = vrot.lane.b32.xlu0 %v3287, 112
        %v3290 = vpop.permute.xlu0 %3289
        %v3292 = vadd.f32 %v3228, %v3290
        %s3293 = sld [smem:[#allocation8 + $0x1fa]]
        %v3294 = vstv %s3293
        %v3295 = vmul.f32 %v3294, %v3036
        %3297 = vrot.lane.b32.xlu0 %v3295, 112
        %v3298 = vpop.permute.xlu0 %3297
        %v3300 = vadd.f32 %v3236, %v3298
        %s3301 = sld [smem:[#allocation8 + $0x232]]
        %v3302 = vstv %s3301
        %v3303 = vmul.f32 %v3302, %v3036
        %3305 = vrot.lane.b32.xlu0 %v3303, 112
        %v3306 = vpop.permute.xlu0 %3305
        %v3308 = vadd.f32 %v3244, %v3306
        %s3309 = sld [smem:[#allocation8 + $0x26a]]
        %v3310 = vstv %s3309
        %v3311 = vmul.f32 %v3310, %v3036
        %3313 = vrot.lane.b32.xlu0 %v3311, 112
        %v3314 = vpop.permute.xlu0 %3313
        %v3316 = vadd.f32 %v3252, %v3314
        %s3317 = sld [smem:[#allocation8 + $0x2a2]]
        %v3318 = vstv %s3317
        %v3319 = vmul.f32 %v3318, %v3036
        %3321 = vrot.lane.b32.xlu0 %v3319, 112
        %v3322 = vpop.permute.xlu0 %3321
        %v3324 = vadd.f32 %v3260, %v3322
        %s3325 = sld [smem:[#allocation8 + $0x11b]]
        %v3326 = vstv %s3325
        %v3327 = vmul.f32 %v3326, %v3036
        %3329 = vrot.lane.b32.xlu0 %v3327, 108
        %v3330 = vpop.permute.xlu0 %3329
        %v3332 = vadd.f32 %v3268, %v3330
        %s3333 = sld [smem:[#allocation8 + $0x153]]
        %v3334 = vstv %s3333
        %v3335 = vmul.f32 %v3334, %v3036
        %3337 = vrot.lane.b32.xlu0 %v3335, 108
        %v3338 = vpop.permute.xlu0 %3337
        %v3340 = vadd.f32 %v3276, %v3338
        %s3341 = sld [smem:[#allocation8 + $0x18b]]
        %v3342 = vstv %s3341
        %v3343 = vmul.f32 %v3342, %v3036
        %3345 = vrot.lane.b32.xlu0 %v3343, 108
        %v3346 = vpop.permute.xlu0 %3345
        %v3348 = vadd.f32 %v3284, %v3346
        %s3349 = sld [smem:[#allocation8 + $0x1c3]]
        %v3350 = vstv %s3349
        %v3351 = vmul.f32 %v3350, %v3036
        %3353 = vrot.lane.b32.xlu0 %v3351, 108
        %v3354 = vpop.permute.xlu0 %3353
        %v3356 = vadd.f32 %v3292, %v3354
        %s3357 = sld [smem:[#allocation8 + $0x1fb]]
        %v3358 = vstv %s3357
        %v3359 = vmul.f32 %v3358, %v3036
        %3361 = vrot.lane.b32.xlu0 %v3359, 108
        %v3362 = vpop.permute.xlu0 %3361
        %v3364 = vadd.f32 %v3300, %v3362
        %s3365 = sld [smem:[#allocation8 + $0x233]]
        %v3366 = vstv %s3365
        %v3367 = vmul.f32 %v3366, %v3036
        %3369 = vrot.lane.b32.xlu0 %v3367, 108
        %v3370 = vpop.permute.xlu0 %3369
        %v3372 = vadd.f32 %v3308, %v3370
        %s3373 = sld [smem:[#allocation8 + $0x26b]]
        %v3374 = vstv %s3373
        %v3375 = vmul.f32 %v3374, %v3036
        %3377 = vrot.lane.b32.xlu0 %v3375, 108
        %v3378 = vpop.permute.xlu0 %3377
        %v3380 = vadd.f32 %v3316, %v3378
        %s3381 = sld [smem:[#allocation8 + $0x2a3]]
        %v3382 = vstv %s3381
        %v3383 = vmul.f32 %v3382, %v3036
        %3385 = vrot.lane.b32.xlu0 %v3383, 108
        %v3386 = vpop.permute.xlu0 %3385
        %v3388 = vadd.f32 %v3324, %v3386
        %s3389 = sld [smem:[#allocation8 + $0x11c]]
        %v3390 = vstv %s3389
        %v3391 = vmul.f32 %v3390, %v3036
        %3393 = vrot.lane.b32.xlu0 %v3391, 104
        %v3394 = vpop.permute.xlu0 %3393
        %v3396 = vadd.f32 %v3332, %v3394
        %s3397 = sld [smem:[#allocation8 + $0x154]]
        %v3398 = vstv %s3397
        %v3399 = vmul.f32 %v3398, %v3036
        %3401 = vrot.lane.b32.xlu0 %v3399, 104
        %v3402 = vpop.permute.xlu0 %3401
        %v3404 = vadd.f32 %v3340, %v3402
        %s3405 = sld [smem:[#allocation8 + $0x18c]]
        %v3406 = vstv %s3405
        %v3407 = vmul.f32 %v3406, %v3036
        %3409 = vrot.lane.b32.xlu0 %v3407, 104
        %v3410 = vpop.permute.xlu0 %3409
        %v3412 = vadd.f32 %v3348, %v3410
        %s3413 = sld [smem:[#allocation8 + $0x1c4]]
        %v3414 = vstv %s3413
        %v3415 = vmul.f32 %v3414, %v3036
        %3417 = vrot.lane.b32.xlu0 %v3415, 104
        %v3418 = vpop.permute.xlu0 %3417
        %v3420 = vadd.f32 %v3356, %v3418
        %s3421 = sld [smem:[#allocation8 + $0x1fc]]
        %v3422 = vstv %s3421
        %v3423 = vmul.f32 %v3422, %v3036
        %3425 = vrot.lane.b32.xlu0 %v3423, 104
        %v3426 = vpop.permute.xlu0 %3425
        %v3428 = vadd.f32 %v3364, %v3426
        %s3429 = sld [smem:[#allocation8 + $0x234]]
        %v3430 = vstv %s3429
        %v3431 = vmul.f32 %v3430, %v3036
        %3433 = vrot.lane.b32.xlu0 %v3431, 104
        %v3434 = vpop.permute.xlu0 %3433
        %v3436 = vadd.f32 %v3372, %v3434
        %s3437 = sld [smem:[#allocation8 + $0x26c]]
        %v3438 = vstv %s3437
        %v3439 = vmul.f32 %v3438, %v3036
        %3441 = vrot.lane.b32.xlu0 %v3439, 104
        %v3442 = vpop.permute.xlu0 %3441
        %v3444 = vadd.f32 %v3380, %v3442
        %s3445 = sld [smem:[#allocation8 + $0x2a4]]
        %v3446 = vstv %s3445
        %v3447 = vmul.f32 %v3446, %v3036
        %3449 = vrot.lane.b32.xlu0 %v3447, 104
        %v3450 = vpop.permute.xlu0 %3449
        %v3452 = vadd.f32 %v3388, %v3450
        %v3453 = vld [vmem:[%s2200] sm:$0xff]
        %s3454 = sld [smem:[#allocation8 + $0x11d]]
        %v3455 = vstv %s3454
        %v3456 = vmul.f32 %v3455, %v3453
        %v3457 = vadd.f32 %v3396, %v3456
        %s3458 = sld [smem:[#allocation8 + $0x155]]
        %v3459 = vstv %s3458
        %v3460 = vmul.f32 %v3459, %v3453
        %v3461 = vadd.f32 %v3404, %v3460
        %s3462 = sld [smem:[#allocation8 + $0x18d]]
        %v3463 = vstv %s3462
        %v3464 = vmul.f32 %v3463, %v3453
        %v3465 = vadd.f32 %v3412, %v3464
        %s3466 = sld [smem:[#allocation8 + $0x1c5]]
        %v3467 = vstv %s3466
        %v3468 = vmul.f32 %v3467, %v3453
        %v3469 = vadd.f32 %v3420, %v3468
        %s3470 = sld [smem:[#allocation8 + $0x1fd]]
        %v3471 = vstv %s3470
        %v3472 = vmul.f32 %v3471, %v3453
        %v3473 = vadd.f32 %v3428, %v3472
        %s3474 = sld [smem:[#allocation8 + $0x235]]
        %v3475 = vstv %s3474
        %v3476 = vmul.f32 %v3475, %v3453
        %v3477 = vadd.f32 %v3436, %v3476
        %s3478 = sld [smem:[#allocation8 + $0x26d]]
        %v3479 = vstv %s3478
        %v3480 = vmul.f32 %v3479, %v3453
        %v3481 = vadd.f32 %v3444, %v3480
        %s3482 = sld [smem:[#allocation8 + $0x2a5]]
        %v3483 = vstv %s3482
        %v3484 = vmul.f32 %v3483, %v3453
        %v3485 = vadd.f32 %v3452, %v3484
        %s3486 = sld [smem:[#allocation8 + $0x11e]]
        %v3487 = vstv %s3486
        %v3488 = vmul.f32 %v3487, %v3453
        %3490 = vrot.lane.b32.xlu0 %v3488, 124
        %v3491 = vpop.permute.xlu0 %3490
        %v3493 = vadd.f32 %v3457, %v3491
        %s3494 = sld [smem:[#allocation8 + $0x156]]
        %v3495 = vstv %s3494
        %v3496 = vmul.f32 %v3495, %v3453
        %3498 = vrot.lane.b32.xlu0 %v3496, 124
        %v3499 = vpop.permute.xlu0 %3498
        %v3501 = vadd.f32 %v3461, %v3499
        %s3502 = sld [smem:[#allocation8 + $0x18e]]
        %v3503 = vstv %s3502
        %v3504 = vmul.f32 %v3503, %v3453
        %3506 = vrot.lane.b32.xlu0 %v3504, 124
        %v3507 = vpop.permute.xlu0 %3506
        %v3509 = vadd.f32 %v3465, %v3507
        %s3510 = sld [smem:[#allocation8 + $0x1c6]]
        %v3511 = vstv %s3510
        %v3512 = vmul.f32 %v3511, %v3453
        %3514 = vrot.lane.b32.xlu0 %v3512, 124
        %v3515 = vpop.permute.xlu0 %3514
        %v3517 = vadd.f32 %v3469, %v3515
        %s3518 = sld [smem:[#allocation8 + $0x1fe]]
        %v3519 = vstv %s3518
        %v3520 = vmul.f32 %v3519, %v3453
        %3522 = vrot.lane.b32.xlu0 %v3520, 124
        %v3523 = vpop.permute.xlu0 %3522
        %v3525 = vadd.f32 %v3473, %v3523
        %s3526 = sld [smem:[#allocation8 + $0x236]]
        %v3527 = vstv %s3526
        %v3528 = vmul.f32 %v3527, %v3453
        %3530 = vrot.lane.b32.xlu0 %v3528, 124
        %v3531 = vpop.permute.xlu0 %3530
        %v3533 = vadd.f32 %v3477, %v3531
        %s3534 = sld [smem:[#allocation8 + $0x26e]]
        %v3535 = vstv %s3534
        %v3536 = vmul.f32 %v3535, %v3453
        %3538 = vrot.lane.b32.xlu0 %v3536, 124
        %v3539 = vpop.permute.xlu0 %3538
        %v3541 = vadd.f32 %v3481, %v3539
        %s3542 = sld [smem:[#allocation8 + $0x2a6]]
        %v3543 = vstv %s3542
        %v3544 = vmul.f32 %v3543, %v3453
        %3546 = vrot.lane.b32.xlu0 %v3544, 124
        %v3547 = vpop.permute.xlu0 %3546
        %v3549 = vadd.f32 %v3485, %v3547
        %s3550 = sld [smem:[#allocation8 + $0x11f]]
        %v3551 = vstv %s3550
        %v3552 = vmul.f32 %v3551, %v3453
        %3554 = vrot.lane.b32.xlu0 %v3552, 120
        %v3555 = vpop.permute.xlu0 %3554
        %v3557 = vadd.f32 %v3493, %v3555
        %s3558 = sld [smem:[#allocation8 + $0x157]]
        %v3559 = vstv %s3558
        %v3560 = vmul.f32 %v3559, %v3453
        %3562 = vrot.lane.b32.xlu0 %v3560, 120
        %v3563 = vpop.permute.xlu0 %3562
        %v3565 = vadd.f32 %v3501, %v3563
        %s3566 = sld [smem:[#allocation8 + $0x18f]]
        %v3567 = vstv %s3566
        %v3568 = vmul.f32 %v3567, %v3453
        %3570 = vrot.lane.b32.xlu0 %v3568, 120
        %v3571 = vpop.permute.xlu0 %3570
        %v3573 = vadd.f32 %v3509, %v3571
        %s3574 = sld [smem:[#allocation8 + $0x1c7]]
        %v3575 = vstv %s3574
        %v3576 = vmul.f32 %v3575, %v3453
        %3578 = vrot.lane.b32.xlu0 %v3576, 120
        %v3579 = vpop.permute.xlu0 %3578
        %v3581 = vadd.f32 %v3517, %v3579
        %s3582 = sld [smem:[#allocation8 + $0x1ff]]
        %v3583 = vstv %s3582
        %v3584 = vmul.f32 %v3583, %v3453
        %3586 = vrot.lane.b32.xlu0 %v3584, 120
        %v3587 = vpop.permute.xlu0 %3586
        %v3589 = vadd.f32 %v3525, %v3587
        %s3590 = sld [smem:[#allocation8 + $0x237]]
        %v3591 = vstv %s3590
        %v3592 = vmul.f32 %v3591, %v3453
        %3594 = vrot.lane.b32.xlu0 %v3592, 120
        %v3595 = vpop.permute.xlu0 %3594
        %v3597 = vadd.f32 %v3533, %v3595
        %s3598 = sld [smem:[#allocation8 + $0x26f]]
        %v3599 = vstv %s3598
        %v3600 = vmul.f32 %v3599, %v3453
        %3602 = vrot.lane.b32.xlu0 %v3600, 120
        %v3603 = vpop.permute.xlu0 %3602
        %v3605 = vadd.f32 %v3541, %v3603
        %s3606 = sld [smem:[#allocation8 + $0x2a7]]
        %v3607 = vstv %s3606
        %v3608 = vmul.f32 %v3607, %v3453
        %3610 = vrot.lane.b32.xlu0 %v3608, 120
        %v3611 = vpop.permute.xlu0 %3610
        %v3613 = vadd.f32 %v3549, %v3611
        %s3614 = sld [smem:[#allocation8 + $0x120]]
        %v3615 = vstv %s3614
        %v3616 = vmul.f32 %v3615, %v3453
        %3618 = vrot.lane.b32.xlu0 %v3616, 116
        %v3619 = vpop.permute.xlu0 %3618
        %v3621 = vadd.f32 %v3557, %v3619
        %s3622 = sld [smem:[#allocation8 + $0x158]]
        %v3623 = vstv %s3622
        %v3624 = vmul.f32 %v3623, %v3453
        %3626 = vrot.lane.b32.xlu0 %v3624, 116
        %v3627 = vpop.permute.xlu0 %3626
        %v3629 = vadd.f32 %v3565, %v3627
        %s3630 = sld [smem:[#allocation8 + $0x190]]
        %v3631 = vstv %s3630
        %v3632 = vmul.f32 %v3631, %v3453
        %3634 = vrot.lane.b32.xlu0 %v3632, 116
        %v3635 = vpop.permute.xlu0 %3634
        %v3637 = vadd.f32 %v3573, %v3635
        %s3638 = sld [smem:[#allocation8 + $0x1c8]]
        %v3639 = vstv %s3638
        %v3640 = vmul.f32 %v3639, %v3453
        %3642 = vrot.lane.b32.xlu0 %v3640, 116
        %v3643 = vpop.permute.xlu0 %3642
        %v3645 = vadd.f32 %v3581, %v3643
        %s3646 = sld [smem:[#allocation8 + $0x200]]
        %v3647 = vstv %s3646
        %v3648 = vmul.f32 %v3647, %v3453
        %3650 = vrot.lane.b32.xlu0 %v3648, 116
        %v3651 = vpop.permute.xlu0 %3650
        %v3653 = vadd.f32 %v3589, %v3651
        %s3654 = sld [smem:[#allocation8 + $0x238]]
        %v3655 = vstv %s3654
        %v3656 = vmul.f32 %v3655, %v3453
        %3658 = vrot.lane.b32.xlu0 %v3656, 116
        %v3659 = vpop.permute.xlu0 %3658
        %v3661 = vadd.f32 %v3597, %v3659
        %s3662 = sld [smem:[#allocation8 + $0x270]]
        %v3663 = vstv %s3662
        %v3664 = vmul.f32 %v3663, %v3453
        %3666 = vrot.lane.b32.xlu0 %v3664, 116
        %v3667 = vpop.permute.xlu0 %3666
        %v3669 = vadd.f32 %v3605, %v3667
        %s3670 = sld [smem:[#allocation8 + $0x2a8]]
        %v3671 = vstv %s3670
        %v3672 = vmul.f32 %v3671, %v3453
        %3674 = vrot.lane.b32.xlu0 %v3672, 116
        %v3675 = vpop.permute.xlu0 %3674
        %v3677 = vadd.f32 %v3613, %v3675
        %s3678 = sld [smem:[#allocation8 + $0x121]]
        %v3679 = vstv %s3678
        %v3680 = vmul.f32 %v3679, %v3453
        %3682 = vrot.lane.b32.xlu0 %v3680, 112
        %v3683 = vpop.permute.xlu0 %3682
        %v3685 = vadd.f32 %v3621, %v3683
        %s3686 = sld [smem:[#allocation8 + $0x159]]
        %v3687 = vstv %s3686
        %v3688 = vmul.f32 %v3687, %v3453
        %3690 = vrot.lane.b32.xlu0 %v3688, 112
        %v3691 = vpop.permute.xlu0 %3690
        %v3693 = vadd.f32 %v3629, %v3691
        %s3694 = sld [smem:[#allocation8 + $0x191]]
        %v3695 = vstv %s3694
        %v3696 = vmul.f32 %v3695, %v3453
        %3698 = vrot.lane.b32.xlu0 %v3696, 112
        %v3699 = vpop.permute.xlu0 %3698
        %v3701 = vadd.f32 %v3637, %v3699
        %s3702 = sld [smem:[#allocation8 + $0x1c9]]
        %v3703 = vstv %s3702
        %v3704 = vmul.f32 %v3703, %v3453
        %3706 = vrot.lane.b32.xlu0 %v3704, 112
        %v3707 = vpop.permute.xlu0 %3706
        %v3709 = vadd.f32 %v3645, %v3707
        %s3710 = sld [smem:[#allocation8 + $0x201]]
        %v3711 = vstv %s3710
        %v3712 = vmul.f32 %v3711, %v3453
        %3714 = vrot.lane.b32.xlu0 %v3712, 112
        %v3715 = vpop.permute.xlu0 %3714
        %v3717 = vadd.f32 %v3653, %v3715
        %s3718 = sld [smem:[#allocation8 + $0x239]]
        %v3719 = vstv %s3718
        %v3720 = vmul.f32 %v3719, %v3453
        %3722 = vrot.lane.b32.xlu0 %v3720, 112
        %v3723 = vpop.permute.xlu0 %3722
        %v3725 = vadd.f32 %v3661, %v3723
        %s3726 = sld [smem:[#allocation8 + $0x271]]
        %v3727 = vstv %s3726
        %v3728 = vmul.f32 %v3727, %v3453
        %3730 = vrot.lane.b32.xlu0 %v3728, 112
        %v3731 = vpop.permute.xlu0 %3730
        %v3733 = vadd.f32 %v3669, %v3731
        %s3734 = sld [smem:[#allocation8 + $0x2a9]]
        %v3735 = vstv %s3734
        %v3736 = vmul.f32 %v3735, %v3453
        %3738 = vrot.lane.b32.xlu0 %v3736, 112
        %v3739 = vpop.permute.xlu0 %3738
        %v3741 = vadd.f32 %v3677, %v3739
        %s3742 = sld [smem:[#allocation8 + $0x122]]
        %v3743 = vstv %s3742
        %v3744 = vmul.f32 %v3743, %v3453
        %3746 = vrot.lane.b32.xlu0 %v3744, 108
        %v3747 = vpop.permute.xlu0 %3746
        %v3749 = vadd.f32 %v3685, %v3747
        %s3750 = sld [smem:[#allocation8 + $0x15a]]
        %v3751 = vstv %s3750
        %v3752 = vmul.f32 %v3751, %v3453
        %3754 = vrot.lane.b32.xlu0 %v3752, 108
        %v3755 = vpop.permute.xlu0 %3754
        %v3757 = vadd.f32 %v3693, %v3755
        %s3758 = sld [smem:[#allocation8 + $0x192]]
        %v3759 = vstv %s3758
        %v3760 = vmul.f32 %v3759, %v3453
        %3762 = vrot.lane.b32.xlu0 %v3760, 108
        %v3763 = vpop.permute.xlu0 %3762
        %v3765 = vadd.f32 %v3701, %v3763
        %s3766 = sld [smem:[#allocation8 + $0x1ca]]
        %v3767 = vstv %s3766
        %v3768 = vmul.f32 %v3767, %v3453
        %3770 = vrot.lane.b32.xlu0 %v3768, 108
        %v3771 = vpop.permute.xlu0 %3770
        %v3773 = vadd.f32 %v3709, %v3771
        %s3774 = sld [smem:[#allocation8 + $0x202]]
        %v3775 = vstv %s3774
        %v3776 = vmul.f32 %v3775, %v3453
        %3778 = vrot.lane.b32.xlu0 %v3776, 108
        %v3779 = vpop.permute.xlu0 %3778
        %v3781 = vadd.f32 %v3717, %v3779
        %s3782 = sld [smem:[#allocation8 + $0x23a]]
        %v3783 = vstv %s3782
        %v3784 = vmul.f32 %v3783, %v3453
        %3786 = vrot.lane.b32.xlu0 %v3784, 108
        %v3787 = vpop.permute.xlu0 %3786
        %v3789 = vadd.f32 %v3725, %v3787
        %s3790 = sld [smem:[#allocation8 + $0x272]]
        %v3791 = vstv %s3790
        %v3792 = vmul.f32 %v3791, %v3453
        %3794 = vrot.lane.b32.xlu0 %v3792, 108
        %v3795 = vpop.permute.xlu0 %3794
        %v3797 = vadd.f32 %v3733, %v3795
        %s3798 = sld [smem:[#allocation8 + $0x2aa]]
        %v3799 = vstv %s3798
        %v3800 = vmul.f32 %v3799, %v3453
        %3802 = vrot.lane.b32.xlu0 %v3800, 108
        %v3803 = vpop.permute.xlu0 %3802
        %v3805 = vadd.f32 %v3741, %v3803
        %s3806 = sld [smem:[#allocation8 + $0x123]]
        %v3807 = vstv %s3806
        %v3808 = vmul.f32 %v3807, %v3453
        %3810 = vrot.lane.b32.xlu0 %v3808, 104
        %v3811 = vpop.permute.xlu0 %3810
        %v3813 = vadd.f32 %v3749, %v3811
        %s3814 = sld [smem:[#allocation8 + $0x15b]]
        %v3815 = vstv %s3814
        %v3816 = vmul.f32 %v3815, %v3453
        %3818 = vrot.lane.b32.xlu0 %v3816, 104
        %v3819 = vpop.permute.xlu0 %3818
        %v3821 = vadd.f32 %v3757, %v3819
        %s3822 = sld [smem:[#allocation8 + $0x193]]
        %v3823 = vstv %s3822
        %v3824 = vmul.f32 %v3823, %v3453
        %3826 = vrot.lane.b32.xlu0 %v3824, 104
        %v3827 = vpop.permute.xlu0 %3826
        %v3829 = vadd.f32 %v3765, %v3827
        %s3830 = sld [smem:[#allocation8 + $0x1cb]]
        %v3831 = vstv %s3830
        %v3832 = vmul.f32 %v3831, %v3453
        %3834 = vrot.lane.b32.xlu0 %v3832, 104
        %v3835 = vpop.permute.xlu0 %3834
        %v3837 = vadd.f32 %v3773, %v3835
        %s3838 = sld [smem:[#allocation8 + $0x203]]
        %v3839 = vstv %s3838
        %v3840 = vmul.f32 %v3839, %v3453
        %3842 = vrot.lane.b32.xlu0 %v3840, 104
        %v3843 = vpop.permute.xlu0 %3842
        %v3845 = vadd.f32 %v3781, %v3843
        %s3846 = sld [smem:[#allocation8 + $0x23b]]
        %v3847 = vstv %s3846
        %v3848 = vmul.f32 %v3847, %v3453
        %3850 = vrot.lane.b32.xlu0 %v3848, 104
        %v3851 = vpop.permute.xlu0 %3850
        %v3853 = vadd.f32 %v3789, %v3851
        %s3854 = sld [smem:[#allocation8 + $0x273]]
        %v3855 = vstv %s3854
        %v3856 = vmul.f32 %v3855, %v3453
        %3858 = vrot.lane.b32.xlu0 %v3856, 104
        %v3859 = vpop.permute.xlu0 %3858
        %v3861 = vadd.f32 %v3797, %v3859
        %s3862 = sld [smem:[#allocation8 + $0x2ab]]
        %v3863 = vstv %s3862
        %v3864 = vmul.f32 %v3863, %v3453
        %3866 = vrot.lane.b32.xlu0 %v3864, 104
        %v3867 = vpop.permute.xlu0 %3866
        %v3869 = vadd.f32 %v3805, %v3867
        %v3870 = vld [vmem:[%s2202] sm:$0xff]
        %s3871 = sld [smem:[#allocation8 + $0x124]]
        %v3872 = vstv %s3871
        %v3873 = vmul.f32 %v3872, %v3870
        %v3874 = vadd.f32 %v3813, %v3873
        %s3875 = sld [smem:[#allocation8 + $0x15c]]
        %v3876 = vstv %s3875
        %v3877 = vmul.f32 %v3876, %v3870
        %v3878 = vadd.f32 %v3821, %v3877
        %s3879 = sld [smem:[#allocation8 + $0x194]]
        %v3880 = vstv %s3879
        %v3881 = vmul.f32 %v3880, %v3870
        %v3882 = vadd.f32 %v3829, %v3881
        %s3883 = sld [smem:[#allocation8 + $0x1cc]]
        %v3884 = vstv %s3883
        %v3885 = vmul.f32 %v3884, %v3870
        %v3886 = vadd.f32 %v3837, %v3885
        %s3887 = sld [smem:[#allocation8 + $0x204]]
        %v3888 = vstv %s3887
        %v3889 = vmul.f32 %v3888, %v3870
        %v3890 = vadd.f32 %v3845, %v3889
        %s3891 = sld [smem:[#allocation8 + $0x23c]]
        %v3892 = vstv %s3891
        %v3893 = vmul.f32 %v3892, %v3870
        %v3894 = vadd.f32 %v3853, %v3893
        %s3895 = sld [smem:[#allocation8 + $0x274]]
        %v3896 = vstv %s3895
        %v3897 = vmul.f32 %v3896, %v3870
        %v3898 = vadd.f32 %v3861, %v3897
        %s3899 = sld [smem:[#allocation8 + $0x2ac]]
        %v3900 = vstv %s3899
        %v3901 = vmul.f32 %v3900, %v3870
        %v3902 = vadd.f32 %v3869, %v3901
        %s3903 = sld [smem:[#allocation8 + $0x125]]
        %v3904 = vstv %s3903
        %v3905 = vmul.f32 %v3904, %v3870
        %3907 = vrot.lane.b32.xlu0 %v3905, 124
        %v3908 = vpop.permute.xlu0 %3907
        %v3910 = vadd.f32 %v3874, %v3908
        %s3911 = sld [smem:[#allocation8 + $0x15d]]
        %v3912 = vstv %s3911
        %v3913 = vmul.f32 %v3912, %v3870
        %3915 = vrot.lane.b32.xlu0 %v3913, 124
        %v3916 = vpop.permute.xlu0 %3915
        %v3918 = vadd.f32 %v3878, %v3916
        %s3919 = sld [smem:[#allocation8 + $0x195]]
        %v3920 = vstv %s3919
        %v3921 = vmul.f32 %v3920, %v3870
        %3923 = vrot.lane.b32.xlu0 %v3921, 124
        %v3924 = vpop.permute.xlu0 %3923
        %v3926 = vadd.f32 %v3882, %v3924
        %s3927 = sld [smem:[#allocation8 + $0x1cd]]
        %v3928 = vstv %s3927
        %v3929 = vmul.f32 %v3928, %v3870
        %3931 = vrot.lane.b32.xlu0 %v3929, 124
        %v3932 = vpop.permute.xlu0 %3931
        %v3934 = vadd.f32 %v3886, %v3932
        %s3935 = sld [smem:[#allocation8 + $0x205]]
        %v3936 = vstv %s3935
        %v3937 = vmul.f32 %v3936, %v3870
        %3939 = vrot.lane.b32.xlu0 %v3937, 124
        %v3940 = vpop.permute.xlu0 %3939
        %v3942 = vadd.f32 %v3890, %v3940
        %s3943 = sld [smem:[#allocation8 + $0x23d]]
        %v3944 = vstv %s3943
        %v3945 = vmul.f32 %v3944, %v3870
        %3947 = vrot.lane.b32.xlu0 %v3945, 124
        %v3948 = vpop.permute.xlu0 %3947
        %v3950 = vadd.f32 %v3894, %v3948
        %s3951 = sld [smem:[#allocation8 + $0x275]]
        %v3952 = vstv %s3951
        %v3953 = vmul.f32 %v3952, %v3870
        %3955 = vrot.lane.b32.xlu0 %v3953, 124
        %v3956 = vpop.permute.xlu0 %3955
        %v3958 = vadd.f32 %v3898, %v3956
        %s3959 = sld [smem:[#allocation8 + $0x2ad]]
        %v3960 = vstv %s3959
        %v3961 = vmul.f32 %v3960, %v3870
        %3963 = vrot.lane.b32.xlu0 %v3961, 124
        %v3964 = vpop.permute.xlu0 %3963
        %v3966 = vadd.f32 %v3902, %v3964
        %s3967 = sld [smem:[#allocation8 + $0x126]]
        %v3968 = vstv %s3967
        %v3969 = vmul.f32 %v3968, %v3870
        %3971 = vrot.lane.b32.xlu0 %v3969, 120
        %v3972 = vpop.permute.xlu0 %3971
        %v3974 = vadd.f32 %v3910, %v3972
        %s3975 = sld [smem:[#allocation8 + $0x15e]]
        %v3976 = vstv %s3975
        %v3977 = vmul.f32 %v3976, %v3870
        %3979 = vrot.lane.b32.xlu0 %v3977, 120
        %v3980 = vpop.permute.xlu0 %3979
        %v3982 = vadd.f32 %v3918, %v3980
        %s3983 = sld [smem:[#allocation8 + $0x196]]
        %v3984 = vstv %s3983
        %v3985 = vmul.f32 %v3984, %v3870
        %3987 = vrot.lane.b32.xlu0 %v3985, 120
        %v3988 = vpop.permute.xlu0 %3987
        %v3990 = vadd.f32 %v3926, %v3988
        %s3991 = sld [smem:[#allocation8 + $0x1ce]]
        %v3992 = vstv %s3991
        %v3993 = vmul.f32 %v3992, %v3870
        %3995 = vrot.lane.b32.xlu0 %v3993, 120
        %v3996 = vpop.permute.xlu0 %3995
        %v3998 = vadd.f32 %v3934, %v3996
        %s3999 = sld [smem:[#allocation8 + $0x206]]
        %v4000 = vstv %s3999
        %v4001 = vmul.f32 %v4000, %v3870
        %4003 = vrot.lane.b32.xlu0 %v4001, 120
        %v4004 = vpop.permute.xlu0 %4003
        %v4006 = vadd.f32 %v3942, %v4004
        %s4007 = sld [smem:[#allocation8 + $0x23e]]
        %v4008 = vstv %s4007
        %v4009 = vmul.f32 %v4008, %v3870
        %4011 = vrot.lane.b32.xlu0 %v4009, 120
        %v4012 = vpop.permute.xlu0 %4011
        %v4014 = vadd.f32 %v3950, %v4012
        %s4015 = sld [smem:[#allocation8 + $0x276]]
        %v4016 = vstv %s4015
        %v4017 = vmul.f32 %v4016, %v3870
        %4019 = vrot.lane.b32.xlu0 %v4017, 120
        %v4020 = vpop.permute.xlu0 %4019
        %v4022 = vadd.f32 %v3958, %v4020
        %s4023 = sld [smem:[#allocation8 + $0x2ae]]
        %v4024 = vstv %s4023
        %v4025 = vmul.f32 %v4024, %v3870
        %4027 = vrot.lane.b32.xlu0 %v4025, 120
        %v4028 = vpop.permute.xlu0 %4027
        %v4030 = vadd.f32 %v3966, %v4028
        %s4031 = sld [smem:[#allocation8 + $0x127]]
        %v4032 = vstv %s4031
        %v4033 = vmul.f32 %v4032, %v3870
        %4035 = vrot.lane.b32.xlu0 %v4033, 116
        %v4036 = vpop.permute.xlu0 %4035
        %v4038 = vadd.f32 %v3974, %v4036
        %s4039 = sld [smem:[#allocation8 + $0x15f]]
        %v4040 = vstv %s4039
        %v4041 = vmul.f32 %v4040, %v3870
        %4043 = vrot.lane.b32.xlu0 %v4041, 116
        %v4044 = vpop.permute.xlu0 %4043
        %v4046 = vadd.f32 %v3982, %v4044
        %s4047 = sld [smem:[#allocation8 + $0x197]]
        %v4048 = vstv %s4047
        %v4049 = vmul.f32 %v4048, %v3870
        %4051 = vrot.lane.b32.xlu0 %v4049, 116
        %v4052 = vpop.permute.xlu0 %4051
        %v4054 = vadd.f32 %v3990, %v4052
        %s4055 = sld [smem:[#allocation8 + $0x1cf]]
        %v4056 = vstv %s4055
        %v4057 = vmul.f32 %v4056, %v3870
        %4059 = vrot.lane.b32.xlu0 %v4057, 116
        %v4060 = vpop.permute.xlu0 %4059
        %v4062 = vadd.f32 %v3998, %v4060
        %s4063 = sld [smem:[#allocation8 + $0x207]]
        %v4064 = vstv %s4063
        %v4065 = vmul.f32 %v4064, %v3870
        %4067 = vrot.lane.b32.xlu0 %v4065, 116
        %v4068 = vpop.permute.xlu0 %4067
        %v4070 = vadd.f32 %v4006, %v4068
        %s4071 = sld [smem:[#allocation8 + $0x23f]]
        %v4072 = vstv %s4071
        %v4073 = vmul.f32 %v4072, %v3870
        %4075 = vrot.lane.b32.xlu0 %v4073, 116
        %v4076 = vpop.permute.xlu0 %4075
        %v4078 = vadd.f32 %v4014, %v4076
        %s4079 = sld [smem:[#allocation8 + $0x277]]
        %v4080 = vstv %s4079
        %v4081 = vmul.f32 %v4080, %v3870
        %4083 = vrot.lane.b32.xlu0 %v4081, 116
        %v4084 = vpop.permute.xlu0 %4083
        %v4086 = vadd.f32 %v4022, %v4084
        %s4087 = sld [smem:[#allocation8 + $0x2af]]
        %v4088 = vstv %s4087
        %v4089 = vmul.f32 %v4088, %v3870
        %4091 = vrot.lane.b32.xlu0 %v4089, 116
        %v4092 = vpop.permute.xlu0 %4091
        %v4094 = vadd.f32 %v4030, %v4092
        %s4095 = sld [smem:[#allocation8 + $0x128]]
        %v4096 = vstv %s4095
        %v4097 = vmul.f32 %v4096, %v3870
        %4099 = vrot.lane.b32.xlu0 %v4097, 112
        %v4100 = vpop.permute.xlu0 %4099
        %v4102 = vadd.f32 %v4038, %v4100
        %s4103 = sld [smem:[#allocation8 + $0x160]]
        %v4104 = vstv %s4103
        %v4105 = vmul.f32 %v4104, %v3870
        %4107 = vrot.lane.b32.xlu0 %v4105, 112
        %v4108 = vpop.permute.xlu0 %4107
        %v4110 = vadd.f32 %v4046, %v4108
        %s4111 = sld [smem:[#allocation8 + $0x198]]
        %v4112 = vstv %s4111
        %v4113 = vmul.f32 %v4112, %v3870
        %4115 = vrot.lane.b32.xlu0 %v4113, 112
        %v4116 = vpop.permute.xlu0 %4115
        %v4118 = vadd.f32 %v4054, %v4116
        %s4119 = sld [smem:[#allocation8 + $0x1d0]]
        %v4120 = vstv %s4119
        %v4121 = vmul.f32 %v4120, %v3870
        %4123 = vrot.lane.b32.xlu0 %v4121, 112
        %v4124 = vpop.permute.xlu0 %4123
        %v4126 = vadd.f32 %v4062, %v4124
        %s4127 = sld [smem:[#allocation8 + $0x208]]
        %v4128 = vstv %s4127
        %v4129 = vmul.f32 %v4128, %v3870
        %4131 = vrot.lane.b32.xlu0 %v4129, 112
        %v4132 = vpop.permute.xlu0 %4131
        %v4134 = vadd.f32 %v4070, %v4132
        %s4135 = sld [smem:[#allocation8 + $0x240]]
        %v4136 = vstv %s4135
        %v4137 = vmul.f32 %v4136, %v3870
        %4139 = vrot.lane.b32.xlu0 %v4137, 112
        %v4140 = vpop.permute.xlu0 %4139
        %v4142 = vadd.f32 %v4078, %v4140
        %s4143 = sld [smem:[#allocation8 + $0x278]]
        %v4144 = vstv %s4143
        %v4145 = vmul.f32 %v4144, %v3870
        %4147 = vrot.lane.b32.xlu0 %v4145, 112
        %v4148 = vpop.permute.xlu0 %4147
        %v4150 = vadd.f32 %v4086, %v4148
        %s4151 = sld [smem:[#allocation8 + $0x2b0]]
        %v4152 = vstv %s4151
        %v4153 = vmul.f32 %v4152, %v3870
        %4155 = vrot.lane.b32.xlu0 %v4153, 112
        %v4156 = vpop.permute.xlu0 %4155
        %v4158 = vadd.f32 %v4094, %v4156
        %s4159 = sld [smem:[#allocation8 + $0x129]]
        %v4160 = vstv %s4159
        %v4161 = vmul.f32 %v4160, %v3870
        %4163 = vrot.lane.b32.xlu0 %v4161, 108
        %v4164 = vpop.permute.xlu0 %4163
        %v4166 = vadd.f32 %v4102, %v4164
        %s4167 = sld [smem:[#allocation8 + $0x161]]
        %v4168 = vstv %s4167
        %v4169 = vmul.f32 %v4168, %v3870
        %4171 = vrot.lane.b32.xlu0 %v4169, 108
        %v4172 = vpop.permute.xlu0 %4171
        %v4174 = vadd.f32 %v4110, %v4172
        %s4175 = sld [smem:[#allocation8 + $0x199]]
        %v4176 = vstv %s4175
        %v4177 = vmul.f32 %v4176, %v3870
        %4179 = vrot.lane.b32.xlu0 %v4177, 108
        %v4180 = vpop.permute.xlu0 %4179
        %v4182 = vadd.f32 %v4118, %v4180
        %s4183 = sld [smem:[#allocation8 + $0x1d1]]
        %v4184 = vstv %s4183
        %v4185 = vmul.f32 %v4184, %v3870
        %4187 = vrot.lane.b32.xlu0 %v4185, 108
        %v4188 = vpop.permute.xlu0 %4187
        %v4190 = vadd.f32 %v4126, %v4188
        %s4191 = sld [smem:[#allocation8 + $0x209]]
        %v4192 = vstv %s4191
        %v4193 = vmul.f32 %v4192, %v3870
        %4195 = vrot.lane.b32.xlu0 %v4193, 108
        %v4196 = vpop.permute.xlu0 %4195
        %v4198 = vadd.f32 %v4134, %v4196
        %s4199 = sld [smem:[#allocation8 + $0x241]]
        %v4200 = vstv %s4199
        %v4201 = vmul.f32 %v4200, %v3870
        %4203 = vrot.lane.b32.xlu0 %v4201, 108
        %v4204 = vpop.permute.xlu0 %4203
        %v4206 = vadd.f32 %v4142, %v4204
        %s4207 = sld [smem:[#allocation8 + $0x279]]
        %v4208 = vstv %s4207
        %v4209 = vmul.f32 %v4208, %v3870
        %4211 = vrot.lane.b32.xlu0 %v4209, 108
        %v4212 = vpop.permute.xlu0 %4211
        %v4214 = vadd.f32 %v4150, %v4212
        %s4215 = sld [smem:[#allocation8 + $0x2b1]]
        %v4216 = vstv %s4215
        %v4217 = vmul.f32 %v4216, %v3870
        %4219 = vrot.lane.b32.xlu0 %v4217, 108
        %v4220 = vpop.permute.xlu0 %4219
        %v4222 = vadd.f32 %v4158, %v4220
        %s4223 = sld [smem:[#allocation8 + $0x12a]]
        %v4224 = vstv %s4223
        %v4225 = vmul.f32 %v4224, %v3870
        %4227 = vrot.lane.b32.xlu0 %v4225, 104
        %v4228 = vpop.permute.xlu0 %4227
        %v4230 = vadd.f32 %v4166, %v4228
        %s4231 = sld [smem:[#allocation8 + $0x162]]
        %v4232 = vstv %s4231
        %v4233 = vmul.f32 %v4232, %v3870
        %4235 = vrot.lane.b32.xlu0 %v4233, 104
        %v4236 = vpop.permute.xlu0 %4235
        %v4238 = vadd.f32 %v4174, %v4236
        %s4239 = sld [smem:[#allocation8 + $0x19a]]
        %v4240 = vstv %s4239
        %v4241 = vmul.f32 %v4240, %v3870
        %4243 = vrot.lane.b32.xlu0 %v4241, 104
        %v4244 = vpop.permute.xlu0 %4243
        %v4246 = vadd.f32 %v4182, %v4244
        %s4247 = sld [smem:[#allocation8 + $0x1d2]]
        %v4248 = vstv %s4247
        %v4249 = vmul.f32 %v4248, %v3870
        %4251 = vrot.lane.b32.xlu0 %v4249, 104
        %v4252 = vpop.permute.xlu0 %4251
        %v4254 = vadd.f32 %v4190, %v4252
        %s4255 = sld [smem:[#allocation8 + $0x20a]]
        %v4256 = vstv %s4255
        %v4257 = vmul.f32 %v4256, %v3870
        %4259 = vrot.lane.b32.xlu0 %v4257, 104
        %v4260 = vpop.permute.xlu0 %4259
        %v4262 = vadd.f32 %v4198, %v4260
        %s4263 = sld [smem:[#allocation8 + $0x242]]
        %v4264 = vstv %s4263
        %v4265 = vmul.f32 %v4264, %v3870
        %4267 = vrot.lane.b32.xlu0 %v4265, 104
        %v4268 = vpop.permute.xlu0 %4267
        %v4270 = vadd.f32 %v4206, %v4268
        %s4271 = sld [smem:[#allocation8 + $0x27a]]
        %v4272 = vstv %s4271
        %v4273 = vmul.f32 %v4272, %v3870
        %4275 = vrot.lane.b32.xlu0 %v4273, 104
        %v4276 = vpop.permute.xlu0 %4275
        %v4278 = vadd.f32 %v4214, %v4276
        %s4279 = sld [smem:[#allocation8 + $0x2b2]]
        %v4280 = vstv %s4279
        %v4281 = vmul.f32 %v4280, %v3870
        %4283 = vrot.lane.b32.xlu0 %v4281, 104
        %v4284 = vpop.permute.xlu0 %4283
        %v4286 = vadd.f32 %v4222, %v4284
        %v4287 = vld [vmem:[%s2204] sm:$0xff]
        %s4288 = sld [smem:[#allocation8 + $0x12b]]
        %v4289 = vstv %s4288
        %v4290 = vmul.f32 %v4289, %v4287
        %v4291 = vadd.f32 %v4230, %v4290
        %s4292 = sld [smem:[#allocation8 + $0x163]]
        %v4293 = vstv %s4292
        %v4294 = vmul.f32 %v4293, %v4287
        %v4295 = vadd.f32 %v4238, %v4294
        %s4296 = sld [smem:[#allocation8 + $0x19b]]
        %v4297 = vstv %s4296
        %v4298 = vmul.f32 %v4297, %v4287
        %v4299 = vadd.f32 %v4246, %v4298
        %s4300 = sld [smem:[#allocation8 + $0x1d3]]
        %v4301 = vstv %s4300
        %v4302 = vmul.f32 %v4301, %v4287
        %v4303 = vadd.f32 %v4254, %v4302
        %s4304 = sld [smem:[#allocation8 + $0x20b]]
        %v4305 = vstv %s4304
        %v4306 = vmul.f32 %v4305, %v4287
        %v4307 = vadd.f32 %v4262, %v4306
        %s4308 = sld [smem:[#allocation8 + $0x243]]
        %v4309 = vstv %s4308
        %v4310 = vmul.f32 %v4309, %v4287
        %v4311 = vadd.f32 %v4270, %v4310
        %s4312 = sld [smem:[#allocation8 + $0x27b]]
        %v4313 = vstv %s4312
        %v4314 = vmul.f32 %v4313, %v4287
        %v4315 = vadd.f32 %v4278, %v4314
        %s4316 = sld [smem:[#allocation8 + $0x2b3]]
        %v4317 = vstv %s4316
        %v4318 = vmul.f32 %v4317, %v4287
        %v4319 = vadd.f32 %v4286, %v4318
        %s4320 = sld [smem:[#allocation8 + $0x12c]]
        %v4321 = vstv %s4320
        %v4322 = vmul.f32 %v4321, %v4287
        %4324 = vrot.lane.b32.xlu0 %v4322, 124
        %v4325 = vpop.permute.xlu0 %4324
        %v4327 = vadd.f32 %v4291, %v4325
        %s4328 = sld [smem:[#allocation8 + $0x164]]
        %v4329 = vstv %s4328
        %v4330 = vmul.f32 %v4329, %v4287
        %4332 = vrot.lane.b32.xlu0 %v4330, 124
        %v4333 = vpop.permute.xlu0 %4332
        %v4335 = vadd.f32 %v4295, %v4333
        %s4336 = sld [smem:[#allocation8 + $0x19c]]
        %v4337 = vstv %s4336
        %v4338 = vmul.f32 %v4337, %v4287
        %4340 = vrot.lane.b32.xlu0 %v4338, 124
        %v4341 = vpop.permute.xlu0 %4340
        %v4343 = vadd.f32 %v4299, %v4341
        %s4344 = sld [smem:[#allocation8 + $0x1d4]]
        %v4345 = vstv %s4344
        %v4346 = vmul.f32 %v4345, %v4287
        %4348 = vrot.lane.b32.xlu0 %v4346, 124
        %v4349 = vpop.permute.xlu0 %4348
        %v4351 = vadd.f32 %v4303, %v4349
        %s4352 = sld [smem:[#allocation8 + $0x20c]]
        %v4353 = vstv %s4352
        %v4354 = vmul.f32 %v4353, %v4287
        %4356 = vrot.lane.b32.xlu0 %v4354, 124
        %v4357 = vpop.permute.xlu0 %4356
        %v4359 = vadd.f32 %v4307, %v4357
        %s4360 = sld [smem:[#allocation8 + $0x244]]
        %v4361 = vstv %s4360
        %v4362 = vmul.f32 %v4361, %v4287
        %4364 = vrot.lane.b32.xlu0 %v4362, 124
        %v4365 = vpop.permute.xlu0 %4364
        %v4367 = vadd.f32 %v4311, %v4365
        %s4368 = sld [smem:[#allocation8 + $0x27c]]
        %v4369 = vstv %s4368
        %v4370 = vmul.f32 %v4369, %v4287
        %4372 = vrot.lane.b32.xlu0 %v4370, 124
        %v4373 = vpop.permute.xlu0 %4372
        %v4375 = vadd.f32 %v4315, %v4373
        %s4376 = sld [smem:[#allocation8 + $0x2b4]]
        %v4377 = vstv %s4376
        %v4378 = vmul.f32 %v4377, %v4287
        %4380 = vrot.lane.b32.xlu0 %v4378, 124
        %v4381 = vpop.permute.xlu0 %4380
        %v4383 = vadd.f32 %v4319, %v4381
        %s4384 = sld [smem:[#allocation8 + $0x12d]]
        %v4385 = vstv %s4384
        %v4386 = vmul.f32 %v4385, %v4287
        %4388 = vrot.lane.b32.xlu0 %v4386, 120
        %v4389 = vpop.permute.xlu0 %4388
        %v4391 = vadd.f32 %v4327, %v4389
        %s4392 = sld [smem:[#allocation8 + $0x165]]
        %v4393 = vstv %s4392
        %v4394 = vmul.f32 %v4393, %v4287
        %4396 = vrot.lane.b32.xlu0 %v4394, 120
        %v4397 = vpop.permute.xlu0 %4396
        %v4399 = vadd.f32 %v4335, %v4397
        %s4400 = sld [smem:[#allocation8 + $0x19d]]
        %v4401 = vstv %s4400
        %v4402 = vmul.f32 %v4401, %v4287
        %4404 = vrot.lane.b32.xlu0 %v4402, 120
        %v4405 = vpop.permute.xlu0 %4404
        %v4407 = vadd.f32 %v4343, %v4405
        %s4408 = sld [smem:[#allocation8 + $0x1d5]]
        %v4409 = vstv %s4408
        %v4410 = vmul.f32 %v4409, %v4287
        %4412 = vrot.lane.b32.xlu0 %v4410, 120
        %v4413 = vpop.permute.xlu0 %4412
        %v4415 = vadd.f32 %v4351, %v4413
        %s4416 = sld [smem:[#allocation8 + $0x20d]]
        %v4417 = vstv %s4416
        %v4418 = vmul.f32 %v4417, %v4287
        %4420 = vrot.lane.b32.xlu0 %v4418, 120
        %v4421 = vpop.permute.xlu0 %4420
        %v4423 = vadd.f32 %v4359, %v4421
        %s4424 = sld [smem:[#allocation8 + $0x245]]
        %v4425 = vstv %s4424
        %v4426 = vmul.f32 %v4425, %v4287
        %4428 = vrot.lane.b32.xlu0 %v4426, 120
        %v4429 = vpop.permute.xlu0 %4428
        %v4431 = vadd.f32 %v4367, %v4429
        %s4432 = sld [smem:[#allocation8 + $0x27d]]
        %v4433 = vstv %s4432
        %v4434 = vmul.f32 %v4433, %v4287
        %4436 = vrot.lane.b32.xlu0 %v4434, 120
        %v4437 = vpop.permute.xlu0 %4436
        %v4439 = vadd.f32 %v4375, %v4437
        %s4440 = sld [smem:[#allocation8 + $0x2b5]]
        %v4441 = vstv %s4440
        %v4442 = vmul.f32 %v4441, %v4287
        %4444 = vrot.lane.b32.xlu0 %v4442, 120
        %v4445 = vpop.permute.xlu0 %4444
        %v4447 = vadd.f32 %v4383, %v4445
        %s4448 = sld [smem:[#allocation8 + $0x12e]]
        %v4449 = vstv %s4448
        %v4450 = vmul.f32 %v4449, %v4287
        %4452 = vrot.lane.b32.xlu0 %v4450, 116
        %v4453 = vpop.permute.xlu0 %4452
        %v4455 = vadd.f32 %v4391, %v4453
        %s4456 = sld [smem:[#allocation8 + $0x166]]
        %v4457 = vstv %s4456
        %v4458 = vmul.f32 %v4457, %v4287
        %4460 = vrot.lane.b32.xlu0 %v4458, 116
        %v4461 = vpop.permute.xlu0 %4460
        %v4463 = vadd.f32 %v4399, %v4461
        %s4464 = sld [smem:[#allocation8 + $0x19e]]
        %v4465 = vstv %s4464
        %v4466 = vmul.f32 %v4465, %v4287
        %4468 = vrot.lane.b32.xlu0 %v4466, 116
        %v4469 = vpop.permute.xlu0 %4468
        %v4471 = vadd.f32 %v4407, %v4469
        %s4472 = sld [smem:[#allocation8 + $0x1d6]]
        %v4473 = vstv %s4472
        %v4474 = vmul.f32 %v4473, %v4287
        %4476 = vrot.lane.b32.xlu0 %v4474, 116
        %v4477 = vpop.permute.xlu0 %4476
        %v4479 = vadd.f32 %v4415, %v4477
        %s4480 = sld [smem:[#allocation8 + $0x20e]]
        %v4481 = vstv %s4480
        %v4482 = vmul.f32 %v4481, %v4287
        %4484 = vrot.lane.b32.xlu0 %v4482, 116
        %v4485 = vpop.permute.xlu0 %4484
        %v4487 = vadd.f32 %v4423, %v4485
        %s4488 = sld [smem:[#allocation8 + $0x246]]
        %v4489 = vstv %s4488
        %v4490 = vmul.f32 %v4489, %v4287
        %4492 = vrot.lane.b32.xlu0 %v4490, 116
        %v4493 = vpop.permute.xlu0 %4492
        %v4495 = vadd.f32 %v4431, %v4493
        %s4496 = sld [smem:[#allocation8 + $0x27e]]
        %v4497 = vstv %s4496
        %v4498 = vmul.f32 %v4497, %v4287
        %4500 = vrot.lane.b32.xlu0 %v4498, 116
        %v4501 = vpop.permute.xlu0 %4500
        %v4503 = vadd.f32 %v4439, %v4501
        %s4504 = sld [smem:[#allocation8 + $0x2b6]]
        %v4505 = vstv %s4504
        %v4506 = vmul.f32 %v4505, %v4287
        %4508 = vrot.lane.b32.xlu0 %v4506, 116
        %v4509 = vpop.permute.xlu0 %4508
        %v4511 = vadd.f32 %v4447, %v4509
        %s4512 = sld [smem:[#allocation8 + $0x12f]]
        %v4513 = vstv %s4512
        %v4514 = vmul.f32 %v4513, %v4287
        %4516 = vrot.lane.b32.xlu0 %v4514, 112
        %v4517 = vpop.permute.xlu0 %4516
        %v4519 = vadd.f32 %v4455, %v4517
        %s4520 = sld [smem:[#allocation8 + $0x167]]
        %v4521 = vstv %s4520
        %v4522 = vmul.f32 %v4521, %v4287
        %4524 = vrot.lane.b32.xlu0 %v4522, 112
        %v4525 = vpop.permute.xlu0 %4524
        %v4527 = vadd.f32 %v4463, %v4525
        %s4528 = sld [smem:[#allocation8 + $0x19f]]
        %v4529 = vstv %s4528
        %v4530 = vmul.f32 %v4529, %v4287
        %4532 = vrot.lane.b32.xlu0 %v4530, 112
        %v4533 = vpop.permute.xlu0 %4532
        %v4535 = vadd.f32 %v4471, %v4533
        %s4536 = sld [smem:[#allocation8 + $0x1d7]]
        %v4537 = vstv %s4536
        %v4538 = vmul.f32 %v4537, %v4287
        %4540 = vrot.lane.b32.xlu0 %v4538, 112
        %v4541 = vpop.permute.xlu0 %4540
        %v4543 = vadd.f32 %v4479, %v4541
        %s4544 = sld [smem:[#allocation8 + $0x20f]]
        %v4545 = vstv %s4544
        %v4546 = vmul.f32 %v4545, %v4287
        %4548 = vrot.lane.b32.xlu0 %v4546, 112
        %v4549 = vpop.permute.xlu0 %4548
        %v4551 = vadd.f32 %v4487, %v4549
        %s4552 = sld [smem:[#allocation8 + $0x247]]
        %v4553 = vstv %s4552
        %v4554 = vmul.f32 %v4553, %v4287
        %4556 = vrot.lane.b32.xlu0 %v4554, 112
        %v4557 = vpop.permute.xlu0 %4556
        %v4559 = vadd.f32 %v4495, %v4557
        %s4560 = sld [smem:[#allocation8 + $0x27f]]
        %v4561 = vstv %s4560
        %v4562 = vmul.f32 %v4561, %v4287
        %4564 = vrot.lane.b32.xlu0 %v4562, 112
        %v4565 = vpop.permute.xlu0 %4564
        %v4567 = vadd.f32 %v4503, %v4565
        %s4568 = sld [smem:[#allocation8 + $0x2b7]]
        %v4569 = vstv %s4568
        %v4570 = vmul.f32 %v4569, %v4287
        %4572 = vrot.lane.b32.xlu0 %v4570, 112
        %v4573 = vpop.permute.xlu0 %4572
        %v4575 = vadd.f32 %v4511, %v4573
        %s4576 = sld [smem:[#allocation8 + $0x130]]
        %v4577 = vstv %s4576
        %v4578 = vmul.f32 %v4577, %v4287
        %4580 = vrot.lane.b32.xlu0 %v4578, 108
        %v4581 = vpop.permute.xlu0 %4580
        %v4583 = vadd.f32 %v4519, %v4581
        %s4584 = sld [smem:[#allocation8 + $0x168]]
        %v4585 = vstv %s4584
        %v4586 = vmul.f32 %v4585, %v4287
        %4588 = vrot.lane.b32.xlu0 %v4586, 108
        %v4589 = vpop.permute.xlu0 %4588
        %v4591 = vadd.f32 %v4527, %v4589
        %s4592 = sld [smem:[#allocation8 + $0x1a0]]
        %v4593 = vstv %s4592
        %v4594 = vmul.f32 %v4593, %v4287
        %4596 = vrot.lane.b32.xlu0 %v4594, 108
        %v4597 = vpop.permute.xlu0 %4596
        %v4599 = vadd.f32 %v4535, %v4597
        %s4600 = sld [smem:[#allocation8 + $0x1d8]]
        %v4601 = vstv %s4600
        %v4602 = vmul.f32 %v4601, %v4287
        %4604 = vrot.lane.b32.xlu0 %v4602, 108
        %v4605 = vpop.permute.xlu0 %4604
        %v4607 = vadd.f32 %v4543, %v4605
        %s4608 = sld [smem:[#allocation8 + $0x210]]
        %v4609 = vstv %s4608
        %v4610 = vmul.f32 %v4609, %v4287
        %4612 = vrot.lane.b32.xlu0 %v4610, 108
        %v4613 = vpop.permute.xlu0 %4612
        %v4615 = vadd.f32 %v4551, %v4613
        %s4616 = sld [smem:[#allocation8 + $0x248]]
        %v4617 = vstv %s4616
        %v4618 = vmul.f32 %v4617, %v4287
        %4620 = vrot.lane.b32.xlu0 %v4618, 108
        %v4621 = vpop.permute.xlu0 %4620
        %v4623 = vadd.f32 %v4559, %v4621
        %s4624 = sld [smem:[#allocation8 + $0x280]]
        %v4625 = vstv %s4624
        %v4626 = vmul.f32 %v4625, %v4287
        %4628 = vrot.lane.b32.xlu0 %v4626, 108
        %v4629 = vpop.permute.xlu0 %4628
        %v4631 = vadd.f32 %v4567, %v4629
        %s4632 = sld [smem:[#allocation8 + $0x2b8]]
        %v4633 = vstv %s4632
        %v4634 = vmul.f32 %v4633, %v4287
        %4636 = vrot.lane.b32.xlu0 %v4634, 108
        %v4637 = vpop.permute.xlu0 %4636
        %v4639 = vadd.f32 %v4575, %v4637
        %s4640 = sld [smem:[#allocation8 + $0x131]]
        %v4641 = vstv %s4640
        %v4642 = vmul.f32 %v4641, %v4287
        %4644 = vrot.lane.b32.xlu0 %v4642, 104
        %v4645 = vpop.permute.xlu0 %4644
        %v4647 = vadd.f32 %v4583, %v4645
        %s4648 = sld [smem:[#allocation8 + $0x169]]
        %v4649 = vstv %s4648
        %v4650 = vmul.f32 %v4649, %v4287
        %4652 = vrot.lane.b32.xlu0 %v4650, 104
        %v4653 = vpop.permute.xlu0 %4652
        %v4655 = vadd.f32 %v4591, %v4653
        %s4656 = sld [smem:[#allocation8 + $0x1a1]]
        %v4657 = vstv %s4656
        %v4658 = vmul.f32 %v4657, %v4287
        %4660 = vrot.lane.b32.xlu0 %v4658, 104
        %v4661 = vpop.permute.xlu0 %4660
        %v4663 = vadd.f32 %v4599, %v4661
        %s4664 = sld [smem:[#allocation8 + $0x1d9]]
        %v4665 = vstv %s4664
        %v4666 = vmul.f32 %v4665, %v4287
        %4668 = vrot.lane.b32.xlu0 %v4666, 104
        %v4669 = vpop.permute.xlu0 %4668
        %v4671 = vadd.f32 %v4607, %v4669
        %s4672 = sld [smem:[#allocation8 + $0x211]]
        %v4673 = vstv %s4672
        %v4674 = vmul.f32 %v4673, %v4287
        %4676 = vrot.lane.b32.xlu0 %v4674, 104
        %v4677 = vpop.permute.xlu0 %4676
        %v4679 = vadd.f32 %v4615, %v4677
        %s4680 = sld [smem:[#allocation8 + $0x249]]
        %v4681 = vstv %s4680
        %v4682 = vmul.f32 %v4681, %v4287
        %4684 = vrot.lane.b32.xlu0 %v4682, 104
        %v4685 = vpop.permute.xlu0 %4684
        %v4687 = vadd.f32 %v4623, %v4685
        %s4688 = sld [smem:[#allocation8 + $0x281]]
        %v4689 = vstv %s4688
        %v4690 = vmul.f32 %v4689, %v4287
        %4692 = vrot.lane.b32.xlu0 %v4690, 104
        %v4693 = vpop.permute.xlu0 %4692
        %v4695 = vadd.f32 %v4631, %v4693
        %s4696 = sld [smem:[#allocation8 + $0x2b9]]
        %v4697 = vstv %s4696
        %v4698 = vmul.f32 %v4697, %v4287
        %4700 = vrot.lane.b32.xlu0 %v4698, 104
        %v4701 = vpop.permute.xlu0 %4700
        %v4703 = vadd.f32 %v4639, %v4701
        %v4704 = vld [vmem:[%s2206] sm:$0xff]
        %s4705 = sld [smem:[#allocation8 + $0x132]]
        %v4706 = vstv %s4705
        %v4707 = vmul.f32 %v4706, %v4704
        %v4708 = vadd.f32 %v4647, %v4707
        %s4709 = sld [smem:[#allocation8 + $0x16a]]
        %v4710 = vstv %s4709
        %v4711 = vmul.f32 %v4710, %v4704
        %v4712 = vadd.f32 %v4655, %v4711
        %s4713 = sld [smem:[#allocation8 + $0x1a2]]
        %v4714 = vstv %s4713
        %v4715 = vmul.f32 %v4714, %v4704
        %v4716 = vadd.f32 %v4663, %v4715
        %s4717 = sld [smem:[#allocation8 + $0x1da]]
        %v4718 = vstv %s4717
        %v4719 = vmul.f32 %v4718, %v4704
        %v4720 = vadd.f32 %v4671, %v4719
        %s4721 = sld [smem:[#allocation8 + $0x212]]
        %v4722 = vstv %s4721
        %v4723 = vmul.f32 %v4722, %v4704
        %v4724 = vadd.f32 %v4679, %v4723
        %s4725 = sld [smem:[#allocation8 + $0x24a]]
        %v4726 = vstv %s4725
        %v4727 = vmul.f32 %v4726, %v4704
        %v4728 = vadd.f32 %v4687, %v4727
        %s4729 = sld [smem:[#allocation8 + $0x282]]
        %v4730 = vstv %s4729
        %v4731 = vmul.f32 %v4730, %v4704
        %v4732 = vadd.f32 %v4695, %v4731
        %s4733 = sld [smem:[#allocation8 + $0x2ba]]
        %v4734 = vstv %s4733
        %v4735 = vmul.f32 %v4734, %v4704
        %v4736 = vadd.f32 %v4703, %v4735
        %s4737 = sld [smem:[#allocation8 + $0x133]]
        %v4738 = vstv %s4737
        %v4739 = vmul.f32 %v4738, %v4704
        %4741 = vrot.lane.b32.xlu0 %v4739, 124
        %v4742 = vpop.permute.xlu0 %4741
        %v4744 = vadd.f32 %v4708, %v4742
        %s4745 = sld [smem:[#allocation8 + $0x16b]]
        %v4746 = vstv %s4745
        %v4747 = vmul.f32 %v4746, %v4704
        %4749 = vrot.lane.b32.xlu0 %v4747, 124
        %v4750 = vpop.permute.xlu0 %4749
        %v4752 = vadd.f32 %v4712, %v4750
        %s4753 = sld [smem:[#allocation8 + $0x1a3]]
        %v4754 = vstv %s4753
        %v4755 = vmul.f32 %v4754, %v4704
        %4757 = vrot.lane.b32.xlu0 %v4755, 124
        %v4758 = vpop.permute.xlu0 %4757
        %v4760 = vadd.f32 %v4716, %v4758
        %s4761 = sld [smem:[#allocation8 + $0x1db]]
        %v4762 = vstv %s4761
        %v4763 = vmul.f32 %v4762, %v4704
        %4765 = vrot.lane.b32.xlu0 %v4763, 124
        %v4766 = vpop.permute.xlu0 %4765
        %v4768 = vadd.f32 %v4720, %v4766
        %s4769 = sld [smem:[#allocation8 + $0x213]]
        %v4770 = vstv %s4769
        %v4771 = vmul.f32 %v4770, %v4704
        %4773 = vrot.lane.b32.xlu0 %v4771, 124
        %v4774 = vpop.permute.xlu0 %4773
        %v4776 = vadd.f32 %v4724, %v4774
        %s4777 = sld [smem:[#allocation8 + $0x24b]]
        %v4778 = vstv %s4777
        %v4779 = vmul.f32 %v4778, %v4704
        %4781 = vrot.lane.b32.xlu0 %v4779, 124
        %v4782 = vpop.permute.xlu0 %4781
        %v4784 = vadd.f32 %v4728, %v4782
        %s4785 = sld [smem:[#allocation8 + $0x283]]
        %v4786 = vstv %s4785
        %v4787 = vmul.f32 %v4786, %v4704
        %4789 = vrot.lane.b32.xlu0 %v4787, 124
        %v4790 = vpop.permute.xlu0 %4789
        %v4792 = vadd.f32 %v4732, %v4790
        %s4793 = sld [smem:[#allocation8 + $0x2bb]]
        %v4794 = vstv %s4793
        %v4795 = vmul.f32 %v4794, %v4704
        %4797 = vrot.lane.b32.xlu0 %v4795, 124
        %v4798 = vpop.permute.xlu0 %4797
        %v4800 = vadd.f32 %v4736, %v4798
        %s4801 = sld [smem:[#allocation8 + $0x134]]
        %v4802 = vstv %s4801
        %v4803 = vmul.f32 %v4802, %v4704
        %4805 = vrot.lane.b32.xlu0 %v4803, 120
        %v4806 = vpop.permute.xlu0 %4805
        %v4808 = vadd.f32 %v4744, %v4806
        %s4809 = sld [smem:[#allocation8 + $0x16c]]
        %v4810 = vstv %s4809
        %v4811 = vmul.f32 %v4810, %v4704
        %4813 = vrot.lane.b32.xlu0 %v4811, 120
        %v4814 = vpop.permute.xlu0 %4813
        %v4816 = vadd.f32 %v4752, %v4814
        %s4817 = sld [smem:[#allocation8 + $0x1a4]]
        %v4818 = vstv %s4817
        %v4819 = vmul.f32 %v4818, %v4704
        %4821 = vrot.lane.b32.xlu0 %v4819, 120
        %v4822 = vpop.permute.xlu0 %4821
        %v4824 = vadd.f32 %v4760, %v4822
        %s4825 = sld [smem:[#allocation8 + $0x1dc]]
        %v4826 = vstv %s4825
        %v4827 = vmul.f32 %v4826, %v4704
        %4829 = vrot.lane.b32.xlu0 %v4827, 120
        %v4830 = vpop.permute.xlu0 %4829
        %v4832 = vadd.f32 %v4768, %v4830
        %s4833 = sld [smem:[#allocation8 + $0x214]]
        %v4834 = vstv %s4833
        %v4835 = vmul.f32 %v4834, %v4704
        %4837 = vrot.lane.b32.xlu0 %v4835, 120
        %v4838 = vpop.permute.xlu0 %4837
        %v4840 = vadd.f32 %v4776, %v4838
        %s4841 = sld [smem:[#allocation8 + $0x24c]]
        %v4842 = vstv %s4841
        %v4843 = vmul.f32 %v4842, %v4704
        %4845 = vrot.lane.b32.xlu0 %v4843, 120
        %v4846 = vpop.permute.xlu0 %4845
        %v4848 = vadd.f32 %v4784, %v4846
        %s4849 = sld [smem:[#allocation8 + $0x284]]
        %v4850 = vstv %s4849
        %v4851 = vmul.f32 %v4850, %v4704
        %4853 = vrot.lane.b32.xlu0 %v4851, 120
        %v4854 = vpop.permute.xlu0 %4853
        %v4856 = vadd.f32 %v4792, %v4854
        %s4857 = sld [smem:[#allocation8 + $0x2bc]]
        %v4858 = vstv %s4857
        %v4859 = vmul.f32 %v4858, %v4704
        %4861 = vrot.lane.b32.xlu0 %v4859, 120
        %v4862 = vpop.permute.xlu0 %4861
        %v4864 = vadd.f32 %v4800, %v4862
        %s4865 = sld [smem:[#allocation8 + $0x135]]
        %v4866 = vstv %s4865
        %v4867 = vmul.f32 %v4866, %v4704
        %4869 = vrot.lane.b32.xlu0 %v4867, 116
        %v4870 = vpop.permute.xlu0 %4869
        %v4872 = vadd.f32 %v4808, %v4870
        %s4873 = sld [smem:[#allocation8 + $0x16d]]
        %v4874 = vstv %s4873
        %v4875 = vmul.f32 %v4874, %v4704
        %4877 = vrot.lane.b32.xlu0 %v4875, 116
        %v4878 = vpop.permute.xlu0 %4877
        %v4880 = vadd.f32 %v4816, %v4878
        %s4881 = sld [smem:[#allocation8 + $0x1a5]]
        %v4882 = vstv %s4881
        %v4883 = vmul.f32 %v4882, %v4704
        %4885 = vrot.lane.b32.xlu0 %v4883, 116
        %v4886 = vpop.permute.xlu0 %4885
        %v4888 = vadd.f32 %v4824, %v4886
        %s4889 = sld [smem:[#allocation8 + $0x1dd]]
        %v4890 = vstv %s4889
        %v4891 = vmul.f32 %v4890, %v4704
        %4893 = vrot.lane.b32.xlu0 %v4891, 116
        %v4894 = vpop.permute.xlu0 %4893
        %v4896 = vadd.f32 %v4832, %v4894
        %s4897 = sld [smem:[#allocation8 + $0x215]]
        %v4898 = vstv %s4897
        %v4899 = vmul.f32 %v4898, %v4704
        %4901 = vrot.lane.b32.xlu0 %v4899, 116
        %v4902 = vpop.permute.xlu0 %4901
        %v4904 = vadd.f32 %v4840, %v4902
        %s4905 = sld [smem:[#allocation8 + $0x24d]]
        %v4906 = vstv %s4905
        %v4907 = vmul.f32 %v4906, %v4704
        %4909 = vrot.lane.b32.xlu0 %v4907, 116
        %v4910 = vpop.permute.xlu0 %4909
        %v4912 = vadd.f32 %v4848, %v4910
        %s4913 = sld [smem:[#allocation8 + $0x285]]
        %v4914 = vstv %s4913
        %v4915 = vmul.f32 %v4914, %v4704
        %4917 = vrot.lane.b32.xlu0 %v4915, 116
        %v4918 = vpop.permute.xlu0 %4917
        %v4920 = vadd.f32 %v4856, %v4918
        %s4921 = sld [smem:[#allocation8 + $0x2bd]]
        %v4922 = vstv %s4921
        %v4923 = vmul.f32 %v4922, %v4704
        %4925 = vrot.lane.b32.xlu0 %v4923, 116
        %v4926 = vpop.permute.xlu0 %4925
        %v4928 = vadd.f32 %v4864, %v4926
        %s4929 = sld [smem:[#allocation8 + $0x136]]
        %v4930 = vstv %s4929
        %v4931 = vmul.f32 %v4930, %v4704
        %4933 = vrot.lane.b32.xlu0 %v4931, 112
        %v4934 = vpop.permute.xlu0 %4933
        %v4936 = vadd.f32 %v4872, %v4934
        %s4937 = sld [smem:[#allocation8 + $0x16e]]
        %v4938 = vstv %s4937
        %v4939 = vmul.f32 %v4938, %v4704
        %4941 = vrot.lane.b32.xlu0 %v4939, 112
        %v4942 = vpop.permute.xlu0 %4941
        %v4944 = vadd.f32 %v4880, %v4942
        %s4945 = sld [smem:[#allocation8 + $0x1a6]]
        %v4946 = vstv %s4945
        %v4947 = vmul.f32 %v4946, %v4704
        %4949 = vrot.lane.b32.xlu0 %v4947, 112
        %v4950 = vpop.permute.xlu0 %4949
        %v4952 = vadd.f32 %v4888, %v4950
        %s4953 = sld [smem:[#allocation8 + $0x1de]]
        %v4954 = vstv %s4953
        %v4955 = vmul.f32 %v4954, %v4704
        %4957 = vrot.lane.b32.xlu0 %v4955, 112
        %v4958 = vpop.permute.xlu0 %4957
        %v4960 = vadd.f32 %v4896, %v4958
        %s4961 = sld [smem:[#allocation8 + $0x216]]
        %v4962 = vstv %s4961
        %v4963 = vmul.f32 %v4962, %v4704
        %4965 = vrot.lane.b32.xlu0 %v4963, 112
        %v4966 = vpop.permute.xlu0 %4965
        %v4968 = vadd.f32 %v4904, %v4966
        %s4969 = sld [smem:[#allocation8 + $0x24e]]
        %v4970 = vstv %s4969
        %v4971 = vmul.f32 %v4970, %v4704
        %4973 = vrot.lane.b32.xlu0 %v4971, 112
        %v4974 = vpop.permute.xlu0 %4973
        %v4976 = vadd.f32 %v4912, %v4974
        %s4977 = sld [smem:[#allocation8 + $0x286]]
        %v4978 = vstv %s4977
        %v4979 = vmul.f32 %v4978, %v4704
        %4981 = vrot.lane.b32.xlu0 %v4979, 112
        %v4982 = vpop.permute.xlu0 %4981
        %v4984 = vadd.f32 %v4920, %v4982
        %s4985 = sld [smem:[#allocation8 + $0x2be]]
        %v4986 = vstv %s4985
        %v4987 = vmul.f32 %v4986, %v4704
        %4989 = vrot.lane.b32.xlu0 %v4987, 112
        %v4990 = vpop.permute.xlu0 %4989
        %v4992 = vadd.f32 %v4928, %v4990
        %s4993 = sld [smem:[#allocation8 + $0x137]]
        %v4994 = vstv %s4993
        %v4995 = vmul.f32 %v4994, %v4704
        %4997 = vrot.lane.b32.xlu0 %v4995, 108
        %v4998 = vpop.permute.xlu0 %4997
        %v5000 = vadd.f32 %v4936, %v4998
        %s5001 = sld [smem:[#allocation8 + $0x16f]]
        %v5002 = vstv %s5001
        %v5003 = vmul.f32 %v5002, %v4704
        %5005 = vrot.lane.b32.xlu0 %v5003, 108
        %v5006 = vpop.permute.xlu0 %5005
        %v5008 = vadd.f32 %v4944, %v5006
        %s5009 = sld [smem:[#allocation8 + $0x1a7]]
        %v5010 = vstv %s5009
        %v5011 = vmul.f32 %v5010, %v4704
        %5013 = vrot.lane.b32.xlu0 %v5011, 108
        %v5014 = vpop.permute.xlu0 %5013
        %v5016 = vadd.f32 %v4952, %v5014
        %s5017 = sld [smem:[#allocation8 + $0x1df]]
        %v5018 = vstv %s5017
        %v5019 = vmul.f32 %v5018, %v4704
        %5021 = vrot.lane.b32.xlu0 %v5019, 108
        %v5022 = vpop.permute.xlu0 %5021
        %v5024 = vadd.f32 %v4960, %v5022
        %s5025 = sld [smem:[#allocation8 + $0x217]]
        %v5026 = vstv %s5025
        %v5027 = vmul.f32 %v5026, %v4704
        %5029 = vrot.lane.b32.xlu0 %v5027, 108
        %v5030 = vpop.permute.xlu0 %5029
        %v5032 = vadd.f32 %v4968, %v5030
        %s5033 = sld [smem:[#allocation8 + $0x24f]]
        %v5034 = vstv %s5033
        %v5035 = vmul.f32 %v5034, %v4704
        %5037 = vrot.lane.b32.xlu0 %v5035, 108
        %v5038 = vpop.permute.xlu0 %5037
        %v5040 = vadd.f32 %v4976, %v5038
        %s5041 = sld [smem:[#allocation8 + $0x287]]
        %v5042 = vstv %s5041
        %v5043 = vmul.f32 %v5042, %v4704
        %5045 = vrot.lane.b32.xlu0 %v5043, 108
        %v5046 = vpop.permute.xlu0 %5045
        %v5048 = vadd.f32 %v4984, %v5046
        %s5049 = sld [smem:[#allocation8 + $0x2bf]]
        %v5050 = vstv %s5049
        %v5051 = vmul.f32 %v5050, %v4704
        %5053 = vrot.lane.b32.xlu0 %v5051, 108
        %v5054 = vpop.permute.xlu0 %5053
        %v5056 = vadd.f32 %v4992, %v5054
        %s5057 = sld [smem:[#allocation8 + $0x138]]
        %v5058 = vstv %s5057
        %v5059 = vmul.f32 %v5058, %v4704
        %5061 = vrot.lane.b32.xlu0 %v5059, 104
        %v5062 = vpop.permute.xlu0 %5061
        %v5064 = vadd.f32 %v5000, %v5062
        %s5065 = sld [smem:[#allocation8 + $0x170]]
        %v5066 = vstv %s5065
        %v5067 = vmul.f32 %v5066, %v4704
        %5069 = vrot.lane.b32.xlu0 %v5067, 104
        %v5070 = vpop.permute.xlu0 %5069
        %v5072 = vadd.f32 %v5008, %v5070
        %s5073 = sld [smem:[#allocation8 + $0x1a8]]
        %v5074 = vstv %s5073
        %v5075 = vmul.f32 %v5074, %v4704
        %5077 = vrot.lane.b32.xlu0 %v5075, 104
        %v5078 = vpop.permute.xlu0 %5077
        %v5080 = vadd.f32 %v5016, %v5078
        %s5081 = sld [smem:[#allocation8 + $0x1e0]]
        %v5082 = vstv %s5081
        %v5083 = vmul.f32 %v5082, %v4704
        %5085 = vrot.lane.b32.xlu0 %v5083, 104
        %v5086 = vpop.permute.xlu0 %5085
        %v5088 = vadd.f32 %v5024, %v5086
        %s5089 = sld [smem:[#allocation8 + $0x218]]
        %v5090 = vstv %s5089
        %v5091 = vmul.f32 %v5090, %v4704
        %5093 = vrot.lane.b32.xlu0 %v5091, 104
        %v5094 = vpop.permute.xlu0 %5093
        %v5096 = vadd.f32 %v5032, %v5094
        %s5097 = sld [smem:[#allocation8 + $0x250]]
        %v5098 = vstv %s5097
        %v5099 = vmul.f32 %v5098, %v4704
        %5101 = vrot.lane.b32.xlu0 %v5099, 104
        %v5102 = vpop.permute.xlu0 %5101
        %v5104 = vadd.f32 %v5040, %v5102
        %s5105 = sld [smem:[#allocation8 + $0x288]]
        %v5106 = vstv %s5105
        %v5107 = vmul.f32 %v5106, %v4704
        %5109 = vrot.lane.b32.xlu0 %v5107, 104
        %v5110 = vpop.permute.xlu0 %5109
        %v5112 = vadd.f32 %v5048, %v5110
        %s5113 = sld [smem:[#allocation8 + $0x2c0]]
        %v5114 = vstv %s5113
        %v5115 = vmul.f32 %v5114, %v4704
        %5117 = vrot.lane.b32.xlu0 %v5115, 104
        %v5118 = vpop.permute.xlu0 %5117
        %v5120 = vadd.f32 %v5056, %v5118
        %v5121 = vld [vmem:[%s2208] sm:$0xff]
        %s5122 = sld [smem:[#allocation8 + $0x139]]
        %v5123 = vstv %s5122
        %v5124 = vmul.f32 %v5123, %v5121
        %v5125 = vadd.f32 %v5064, %v5124
        %s5126 = sld [smem:[#allocation8 + $0x171]]
        %v5127 = vstv %s5126
        %v5128 = vmul.f32 %v5127, %v5121
        %v5129 = vadd.f32 %v5072, %v5128
        %s5130 = sld [smem:[#allocation8 + $0x1a9]]
        %v5131 = vstv %s5130
        %v5132 = vmul.f32 %v5131, %v5121
        %v5133 = vadd.f32 %v5080, %v5132
        %s5134 = sld [smem:[#allocation8 + $0x1e1]]
        %v5135 = vstv %s5134
        %v5136 = vmul.f32 %v5135, %v5121
        %v5137 = vadd.f32 %v5088, %v5136
        %s5138 = sld [smem:[#allocation8 + $0x219]]
        %v5139 = vstv %s5138
        %v5140 = vmul.f32 %v5139, %v5121
        %v5141 = vadd.f32 %v5096, %v5140
        %s5142 = sld [smem:[#allocation8 + $0x251]]
        %v5143 = vstv %s5142
        %v5144 = vmul.f32 %v5143, %v5121
        %v5145 = vadd.f32 %v5104, %v5144
        %s5146 = sld [smem:[#allocation8 + $0x289]]
        %v5147 = vstv %s5146
        %v5148 = vmul.f32 %v5147, %v5121
        %v5149 = vadd.f32 %v5112, %v5148
        %s5150 = sld [smem:[#allocation8 + $0x2c1]]
        %v5151 = vstv %s5150
        %v5152 = vmul.f32 %v5151, %v5121
        %v5153 = vadd.f32 %v5120, %v5152
        %s5154 = sld [smem:[#allocation8 + $0x13a]]
        %v5155 = vstv %s5154
        %v5156 = vmul.f32 %v5155, %v5121
        %5158 = vrot.lane.b32.xlu0 %v5156, 124
        %v5159 = vpop.permute.xlu0 %5158
        %v5161 = vadd.f32 %v5125, %v5159
        %s5162 = sld [smem:[#allocation8 + $0x172]]
        %v5163 = vstv %s5162
        %v5164 = vmul.f32 %v5163, %v5121
        %5166 = vrot.lane.b32.xlu0 %v5164, 124
        %v5167 = vpop.permute.xlu0 %5166
        %v5169 = vadd.f32 %v5129, %v5167
        %s5170 = sld [smem:[#allocation8 + $0x1aa]]
        %v5171 = vstv %s5170
        %v5172 = vmul.f32 %v5171, %v5121
        %5174 = vrot.lane.b32.xlu0 %v5172, 124
        %v5175 = vpop.permute.xlu0 %5174
        %v5177 = vadd.f32 %v5133, %v5175
        %s5178 = sld [smem:[#allocation8 + $0x1e2]]
        %v5179 = vstv %s5178
        %v5180 = vmul.f32 %v5179, %v5121
        %5182 = vrot.lane.b32.xlu0 %v5180, 124
        %v5183 = vpop.permute.xlu0 %5182
        %v5185 = vadd.f32 %v5137, %v5183
        %s5186 = sld [smem:[#allocation8 + $0x21a]]
        %v5187 = vstv %s5186
        %v5188 = vmul.f32 %v5187, %v5121
        %5190 = vrot.lane.b32.xlu0 %v5188, 124
        %v5191 = vpop.permute.xlu0 %5190
        %v5193 = vadd.f32 %v5141, %v5191
        %s5194 = sld [smem:[#allocation8 + $0x252]]
        %v5195 = vstv %s5194
        %v5196 = vmul.f32 %v5195, %v5121
        %5198 = vrot.lane.b32.xlu0 %v5196, 124
        %v5199 = vpop.permute.xlu0 %5198
        %v5201 = vadd.f32 %v5145, %v5199
        %s5202 = sld [smem:[#allocation8 + $0x28a]]
        %v5203 = vstv %s5202
        %v5204 = vmul.f32 %v5203, %v5121
        %5206 = vrot.lane.b32.xlu0 %v5204, 124
        %v5207 = vpop.permute.xlu0 %5206
        %v5209 = vadd.f32 %v5149, %v5207
        %s5210 = sld [smem:[#allocation8 + $0x2c2]]
        %v5211 = vstv %s5210
        %v5212 = vmul.f32 %v5211, %v5121
        %5214 = vrot.lane.b32.xlu0 %v5212, 124
        %v5215 = vpop.permute.xlu0 %5214
        %v5217 = vadd.f32 %v5153, %v5215
        %s5218 = sld [smem:[#allocation8 + $0x13b]]
        %v5219 = vstv %s5218
        %v5220 = vmul.f32 %v5219, %v5121
        %5222 = vrot.lane.b32.xlu0 %v5220, 120
        %v5223 = vpop.permute.xlu0 %5222
        %v5225 = vadd.f32 %v5161, %v5223
        %s5226 = sld [smem:[#allocation8 + $0x173]]
        %v5227 = vstv %s5226
        %v5228 = vmul.f32 %v5227, %v5121
        %5230 = vrot.lane.b32.xlu0 %v5228, 120
        %v5231 = vpop.permute.xlu0 %5230
        %v5233 = vadd.f32 %v5169, %v5231
        %s5234 = sld [smem:[#allocation8 + $0x1ab]]
        %v5235 = vstv %s5234
        %v5236 = vmul.f32 %v5235, %v5121
        %5238 = vrot.lane.b32.xlu0 %v5236, 120
        %v5239 = vpop.permute.xlu0 %5238
        %v5241 = vadd.f32 %v5177, %v5239
        %s5242 = sld [smem:[#allocation8 + $0x1e3]]
        %v5243 = vstv %s5242
        %v5244 = vmul.f32 %v5243, %v5121
        %5246 = vrot.lane.b32.xlu0 %v5244, 120
        %v5247 = vpop.permute.xlu0 %5246
        %v5249 = vadd.f32 %v5185, %v5247
        %s5250 = sld [smem:[#allocation8 + $0x21b]]
        %v5251 = vstv %s5250
        %v5252 = vmul.f32 %v5251, %v5121
        %5254 = vrot.lane.b32.xlu0 %v5252, 120
        %v5255 = vpop.permute.xlu0 %5254
        %v5257 = vadd.f32 %v5193, %v5255
        %s5258 = sld [smem:[#allocation8 + $0x253]]
        %v5259 = vstv %s5258
        %v5260 = vmul.f32 %v5259, %v5121
        %5262 = vrot.lane.b32.xlu0 %v5260, 120
        %v5263 = vpop.permute.xlu0 %5262
        %v5265 = vadd.f32 %v5201, %v5263
        %s5266 = sld [smem:[#allocation8 + $0x28b]]
        %v5267 = vstv %s5266
        %v5268 = vmul.f32 %v5267, %v5121
        %5270 = vrot.lane.b32.xlu0 %v5268, 120
        %v5271 = vpop.permute.xlu0 %5270
        %v5273 = vadd.f32 %v5209, %v5271
        %s5274 = sld [smem:[#allocation8 + $0x2c3]]
        %v5275 = vstv %s5274
        %v5276 = vmul.f32 %v5275, %v5121
        %5278 = vrot.lane.b32.xlu0 %v5276, 120
        %v5279 = vpop.permute.xlu0 %5278
        %v5281 = vadd.f32 %v5217, %v5279
        %s5282 = sld [smem:[#allocation8 + $0x13c]]
        %v5283 = vstv %s5282
        %v5284 = vmul.f32 %v5283, %v5121
        %5286 = vrot.lane.b32.xlu0 %v5284, 116
        %v5287 = vpop.permute.xlu0 %5286
        %v5289 = vadd.f32 %v5225, %v5287
        %s5290 = sld [smem:[#allocation8 + $0x174]]
        %v5291 = vstv %s5290
        %v5292 = vmul.f32 %v5291, %v5121
        %5294 = vrot.lane.b32.xlu0 %v5292, 116
        %v5295 = vpop.permute.xlu0 %5294
        %v5297 = vadd.f32 %v5233, %v5295
        %s5298 = sld [smem:[#allocation8 + $0x1ac]]
        %v5299 = vstv %s5298
        %v5300 = vmul.f32 %v5299, %v5121
        %5302 = vrot.lane.b32.xlu0 %v5300, 116
        %v5303 = vpop.permute.xlu0 %5302
        %v5305 = vadd.f32 %v5241, %v5303
        %s5306 = sld [smem:[#allocation8 + $0x1e4]]
        %v5307 = vstv %s5306
        %v5308 = vmul.f32 %v5307, %v5121
        %5310 = vrot.lane.b32.xlu0 %v5308, 116
        %v5311 = vpop.permute.xlu0 %5310
        %v5313 = vadd.f32 %v5249, %v5311
        %s5314 = sld [smem:[#allocation8 + $0x21c]]
        %v5315 = vstv %s5314
        %v5316 = vmul.f32 %v5315, %v5121
        %5318 = vrot.lane.b32.xlu0 %v5316, 116
        %v5319 = vpop.permute.xlu0 %5318
        %v5321 = vadd.f32 %v5257, %v5319
        %s5322 = sld [smem:[#allocation8 + $0x254]]
        %v5323 = vstv %s5322
        %v5324 = vmul.f32 %v5323, %v5121
        %5326 = vrot.lane.b32.xlu0 %v5324, 116
        %v5327 = vpop.permute.xlu0 %5326
        %v5329 = vadd.f32 %v5265, %v5327
        %s5330 = sld [smem:[#allocation8 + $0x28c]]
        %v5331 = vstv %s5330
        %v5332 = vmul.f32 %v5331, %v5121
        %5334 = vrot.lane.b32.xlu0 %v5332, 116
        %v5335 = vpop.permute.xlu0 %5334
        %v5337 = vadd.f32 %v5273, %v5335
        %s5338 = sld [smem:[#allocation8 + $0x2c4]]
        %v5339 = vstv %s5338
        %v5340 = vmul.f32 %v5339, %v5121
        %5342 = vrot.lane.b32.xlu0 %v5340, 116
        %v5343 = vpop.permute.xlu0 %5342
        %v5345 = vadd.f32 %v5281, %v5343
        %s5346 = sld [smem:[#allocation8 + $0x13d]]
        %v5347 = vstv %s5346
        %v5348 = vmul.f32 %v5347, %v5121
        %5350 = vrot.lane.b32.xlu0 %v5348, 112
        %v5351 = vpop.permute.xlu0 %5350
        %v5353 = vadd.f32 %v5289, %v5351
        %s5354 = sld [smem:[#allocation8 + $0x175]]
        %v5355 = vstv %s5354
        %v5356 = vmul.f32 %v5355, %v5121
        %5358 = vrot.lane.b32.xlu0 %v5356, 112
        %v5359 = vpop.permute.xlu0 %5358
        %v5361 = vadd.f32 %v5297, %v5359
        %s5362 = sld [smem:[#allocation8 + $0x1ad]]
        %v5363 = vstv %s5362
        %v5364 = vmul.f32 %v5363, %v5121
        %5366 = vrot.lane.b32.xlu0 %v5364, 112
        %v5367 = vpop.permute.xlu0 %5366
        %v5369 = vadd.f32 %v5305, %v5367
        %s5370 = sld [smem:[#allocation8 + $0x1e5]]
        %v5371 = vstv %s5370
        %v5372 = vmul.f32 %v5371, %v5121
        %5374 = vrot.lane.b32.xlu0 %v5372, 112
        %v5375 = vpop.permute.xlu0 %5374
        %v5377 = vadd.f32 %v5313, %v5375
        %s5378 = sld [smem:[#allocation8 + $0x21d]]
        %v5379 = vstv %s5378
        %v5380 = vmul.f32 %v5379, %v5121
        %5382 = vrot.lane.b32.xlu0 %v5380, 112
        %v5383 = vpop.permute.xlu0 %5382
        %v5385 = vadd.f32 %v5321, %v5383
        %s5386 = sld [smem:[#allocation8 + $0x255]]
        %v5387 = vstv %s5386
        %v5388 = vmul.f32 %v5387, %v5121
        %5390 = vrot.lane.b32.xlu0 %v5388, 112
        %v5391 = vpop.permute.xlu0 %5390
        %v5393 = vadd.f32 %v5329, %v5391
        %s5394 = sld [smem:[#allocation8 + $0x28d]]
        %v5395 = vstv %s5394
        %v5396 = vmul.f32 %v5395, %v5121
        %5398 = vrot.lane.b32.xlu0 %v5396, 112
        %v5399 = vpop.permute.xlu0 %5398
        %v5401 = vadd.f32 %v5337, %v5399
        %s5402 = sld [smem:[#allocation8 + $0x2c5]]
        %v5403 = vstv %s5402
        %v5404 = vmul.f32 %v5403, %v5121
        %5406 = vrot.lane.b32.xlu0 %v5404, 112
        %v5407 = vpop.permute.xlu0 %5406
        %v5409 = vadd.f32 %v5345, %v5407
        %s5410 = sld [smem:[#allocation8 + $0x13e]]
        %v5411 = vstv %s5410
        %v5412 = vmul.f32 %v5411, %v5121
        %5414 = vrot.lane.b32.xlu0 %v5412, 108
        %v5415 = vpop.permute.xlu0 %5414
        %v5417 = vadd.f32 %v5353, %v5415
        %s5418 = sld [smem:[#allocation8 + $0x176]]
        %v5419 = vstv %s5418
        %v5420 = vmul.f32 %v5419, %v5121
        %5422 = vrot.lane.b32.xlu0 %v5420, 108
        %v5423 = vpop.permute.xlu0 %5422
        %v5425 = vadd.f32 %v5361, %v5423
        %s5426 = sld [smem:[#allocation8 + $0x1ae]]
        %v5427 = vstv %s5426
        %v5428 = vmul.f32 %v5427, %v5121
        %5430 = vrot.lane.b32.xlu0 %v5428, 108
        %v5431 = vpop.permute.xlu0 %5430
        %v5433 = vadd.f32 %v5369, %v5431
        %s5434 = sld [smem:[#allocation8 + $0x1e6]]
        %v5435 = vstv %s5434
        %v5436 = vmul.f32 %v5435, %v5121
        %5438 = vrot.lane.b32.xlu0 %v5436, 108
        %v5439 = vpop.permute.xlu0 %5438
        %v5441 = vadd.f32 %v5377, %v5439
        %s5442 = sld [smem:[#allocation8 + $0x21e]]
        %v5443 = vstv %s5442
        %v5444 = vmul.f32 %v5443, %v5121
        %5446 = vrot.lane.b32.xlu0 %v5444, 108
        %v5447 = vpop.permute.xlu0 %5446
        %v5449 = vadd.f32 %v5385, %v5447
        %s5450 = sld [smem:[#allocation8 + $0x256]]
        %v5451 = vstv %s5450
        %v5452 = vmul.f32 %v5451, %v5121
        %5454 = vrot.lane.b32.xlu0 %v5452, 108
        %v5455 = vpop.permute.xlu0 %5454
        %v5457 = vadd.f32 %v5393, %v5455
        %s5458 = sld [smem:[#allocation8 + $0x28e]]
        %v5459 = vstv %s5458
        %v5460 = vmul.f32 %v5459, %v5121
        %5462 = vrot.lane.b32.xlu0 %v5460, 108
        %v5463 = vpop.permute.xlu0 %5462
        %v5465 = vadd.f32 %v5401, %v5463
        %s5466 = sld [smem:[#allocation8 + $0x2c6]]
        %v5467 = vstv %s5466
        %v5468 = vmul.f32 %v5467, %v5121
        %5470 = vrot.lane.b32.xlu0 %v5468, 108
        %v5471 = vpop.permute.xlu0 %5470
        %v5473 = vadd.f32 %v5409, %v5471
        %s5474 = sld [smem:[#allocation8 + $0x13f]]
        %v5475 = vstv %s5474
        %v5476 = vmul.f32 %v5475, %v5121
        %5478 = vrot.lane.b32.xlu0 %v5476, 104
        %v5479 = vpop.permute.xlu0 %5478
        %v5481 = vadd.f32 %v5417, %v5479
        %s5482 = sld [smem:[#allocation8 + $0x177]]
        %v5483 = vstv %s5482
        %v5484 = vmul.f32 %v5483, %v5121
        %5486 = vrot.lane.b32.xlu0 %v5484, 104
        %v5487 = vpop.permute.xlu0 %5486
        %v5489 = vadd.f32 %v5425, %v5487
        %s5490 = sld [smem:[#allocation8 + $0x1af]]
        %v5491 = vstv %s5490
        %v5492 = vmul.f32 %v5491, %v5121
        %5494 = vrot.lane.b32.xlu0 %v5492, 104
        %v5495 = vpop.permute.xlu0 %5494
        %v5497 = vadd.f32 %v5433, %v5495
        %s5498 = sld [smem:[#allocation8 + $0x1e7]]
        %v5499 = vstv %s5498
        %v5500 = vmul.f32 %v5499, %v5121
        %5502 = vrot.lane.b32.xlu0 %v5500, 104
        %v5503 = vpop.permute.xlu0 %5502
        %v5505 = vadd.f32 %v5441, %v5503
        %s5506 = sld [smem:[#allocation8 + $0x21f]]
        %v5507 = vstv %s5506
        %v5508 = vmul.f32 %v5507, %v5121
        %5510 = vrot.lane.b32.xlu0 %v5508, 104
        %v5511 = vpop.permute.xlu0 %5510
        %v5513 = vadd.f32 %v5449, %v5511
        %s5514 = sld [smem:[#allocation8 + $0x257]]
        %v5515 = vstv %s5514
        %v5516 = vmul.f32 %v5515, %v5121
        %5518 = vrot.lane.b32.xlu0 %v5516, 104
        %v5519 = vpop.permute.xlu0 %5518
        %v5521 = vadd.f32 %v5457, %v5519
        %s5522 = sld [smem:[#allocation8 + $0x28f]]
        %v5523 = vstv %s5522
        %v5524 = vmul.f32 %v5523, %v5121
        %5526 = vrot.lane.b32.xlu0 %v5524, 104
        %v5527 = vpop.permute.xlu0 %5526
        %v5529 = vadd.f32 %v5465, %v5527
        %s5530 = sld [smem:[#allocation8 + $0x2c7]]
        %v5531 = vstv %s5530
        %v5532 = vmul.f32 %v5531, %v5121
        %5534 = vrot.lane.b32.xlu0 %v5532, 104
        %v5535 = vpop.permute.xlu0 %5534
        %v5537 = vadd.f32 %v5473, %v5535
        %s5538 = sld [smem:[#allocation8 + $0x2c8]]
        %v5539 = vstv %s5538
        %v5540 = vadd.f32 %v5481, %v5539
        %v5541 = vmax.f32 %v5540, 0.0
        %5543 = vrot.lane.b32.xlu0 %v5541, 124
        %v5544 = vpop.permute.xlu0 %5543
        %v5546 = vmax.f32 %v5541, %v5544
        %s5547 = sld [smem:[#allocation8 + $0x2c9]]
        %v5548 = vstv %s5547
        %v5549 = vadd.f32 %v5489, %v5548
        %v5550 = vmax.f32 %v5549, 0.0
        %5552 = vrot.lane.b32.xlu0 %v5550, 124
        %v5553 = vpop.permute.xlu0 %5552
        %v5555 = vmax.f32 %v5550, %v5553
        %s5556 = sld [smem:[#allocation8 + $0x2ca]]
        %v5557 = vstv %s5556
        %v5558 = vadd.f32 %v5497, %v5557
        %v5559 = vmax.f32 %v5558, 0.0
        %5561 = vrot.lane.b32.xlu0 %v5559, 124
        %v5562 = vpop.permute.xlu0 %5561
        %v5564 = vmax.f32 %v5559, %v5562
        %s5565 = sld [smem:[#allocation8 + $0x2cb]]
        %v5566 = vstv %s5565
        %v5567 = vadd.f32 %v5505, %v5566
        %v5568 = vmax.f32 %v5567, 0.0
        %5570 = vrot.lane.b32.xlu0 %v5568, 124
        %v5571 = vpop.permute.xlu0 %5570
        %v5573 = vmax.f32 %v5568, %v5571
        %s5574 = sld [smem:[#allocation8 + $0x2cc]]
        %v5575 = vstv %s5574
        %v5576 = vadd.f32 %v5513, %v5575
        %v5577 = vmax.f32 %v5576, 0.0
        %5579 = vrot.lane.b32.xlu0 %v5577, 124
        %v5580 = vpop.permute.xlu0 %5579
        %v5582 = vmax.f32 %v5577, %v5580
        %s5583 = sld [smem:[#allocation8 + $0x2cd]]
        %v5584 = vstv %s5583
        %v5585 = vadd.f32 %v5521, %v5584
        %v5586 = vmax.f32 %v5585, 0.0
        %5588 = vrot.lane.b32.xlu0 %v5586, 124
        %v5589 = vpop.permute.xlu0 %5588
        %v5591 = vmax.f32 %v5586, %v5589
        %s5592 = sld [smem:[#allocation8 + $0x2ce]]
        %v5593 = vstv %s5592
        %v5594 = vadd.f32 %v5529, %v5593
        %v5595 = vmax.f32 %v5594, 0.0
        %5597 = vrot.lane.b32.xlu0 %v5595, 124
        %v5598 = vpop.permute.xlu0 %5597
        %v5600 = vmax.f32 %v5595, %v5598
        %s5601 = sld [smem:[#allocation8 + $0x2cf]]
        %v5602 = vstv %s5601
        %v5603 = vadd.f32 %v5537, %v5602
        %v5604 = vmax.f32 %v5603, 0.0
        %5606 = vrot.lane.b32.xlu0 %v5604, 124
        %v5607 = vpop.permute.xlu0 %5606
        %v5609 = vmax.f32 %v5604, %v5607
        %5611 = vrot.lane.b32.xlu0 %v5546, 121
        %v5612 = vpop.permute.xlu0 %5611
        %5615 = vrot.lane.b32.xlu0 %v5555, 2
        %v5616 = vpop.permute.xlu0 %5615
        %5618 = vrot.lane.b32.xlu0 %v5555, 123
        %v5619 = vpop.permute.xlu0 %5618
        %5622 = vrot.lane.b32.xlu0 %v5564, 4
        %v5623 = vpop.permute.xlu0 %5622
        %5625 = vrot.lane.b32.xlu0 %v5564, 125
        %v5626 = vpop.permute.xlu0 %5625
        %5629 = vrot.lane.b32.xlu0 %v5573, 6
        %v5630 = vpop.permute.xlu0 %5629
        %5632 = vrot.lane.b32.xlu0 %v5573, 127
        %v5633 = vpop.permute.xlu0 %5632
        %5636 = vrot.lane.b32.xlu0 %v5582, 8
        %v5637 = vpop.permute.xlu0 %5636
        %5639 = vrot.lane.b32.xlu0 %v5582, 1
        %v5640 = vpop.permute.xlu0 %5639
        %5643 = vrot.lane.b32.xlu0 %v5591, 10
        %v5644 = vpop.permute.xlu0 %5643
        %5646 = vrot.lane.b32.xlu0 %v5591, 3
        %v5647 = vpop.permute.xlu0 %5646
        %5650 = vrot.lane.b32.xlu0 %v5600, 12
        %v5651 = vpop.permute.xlu0 %5650
        %5653 = vrot.lane.b32.xlu0 %v5600, 5
        %v5654 = vpop.permute.xlu0 %5653
        %5657 = vrot.lane.b32.xlu0 %v5609, 14
        %v5658 = vpop.permute.xlu0 %5657
        %5660 = vrot.lane.b32.xlu0 %v5609, 7
        %v5661 = vpop.permute.xlu0 %5660
        %vm5663 = vcmask 7168
        %v5664 = vsel %vm5663, %v5546, %v5612
        %vm5665 = vcmask 15360
        %v5666 = vsel %vm5665, %v5664, %v5616
        %vm5667 = vcmask 23552
        %v5668 = vsel %vm5667, %v5666, %v5619
        %vm5669 = vcmask 31744
        %v5670 = vsel %vm5669, %v5668, %v5623
        %vm5671 = vcmask 39936
        %v5672 = vsel %vm5671, %v5670, %v5626
        %vm5673 = vcmask 48128
        %v5674 = vsel %vm5673, %v5672, %v5630
        %vm5675 = vcmask 56320
        %v5676 = vsel %vm5675, %v5674, %v5633
        %vm5677 = vcmask 64512
        %v5678 = vsel %vm5677, %v5676, %v5637
        %vm5679 = vcmask 72704
        %v5680 = vsel %vm5679, %v5678, %v5640
        %vm5681 = vcmask 80896
        %v5682 = vsel %vm5681, %v5680, %v5644
        %vm5683 = vcmask 89088
        %v5684 = vsel %vm5683, %v5682, %v5647
        %vm5685 = vcmask 97280
        %v5686 = vsel %vm5685, %v5684, %v5651
        %vm5687 = vcmask 105472
        %v5688 = vsel %vm5687, %v5686, %v5654
        %vm5689 = vcmask 113664
        %v5690 = vsel %vm5689, %v5688, %v5658
        %vm5691 = vcmask 121856
        %v5692 = vsel %vm5691, %v5690, %v5661
        %v5693 = vld [vmem:[#allocation9] sm:$0xff]
        %v5694 = vld [vmem:[#allocation9 + $0x8] sm:$0xff]
        %v5695 = vld [vmem:[#allocation9 + $0x10] sm:$0x1]
        %v5696 = vlaneseq
        %v5697 = vshrl.u32 %v5696, 7
        %v5698 = vsub.s32 0, %v5697
        %v5699 = vrot.slane %v5695, %v5698
        %vm5700 = vcmask 130048
        %v5702 = vsel %vm5700, %v5692, 0
        %5704 = vmatprep.subr.mxu0 0.0
        %5705 = vmatpush1.msra.mxu0 0.0
        %5706 = vmatprep.subr.mxu0 0.0
        %5707 = vmatpush1.msra.mxu0 0.0
        %5708 = vmatprep.subr.mxu0 0.0
        %5709 = vmatpush1.msra.mxu0 0.0
        %5710 = vmatprep.subr.mxu0 0.0
        %5711 = vmatpush1.msra.mxu0 0.0
        %5712 = vmatprep.subr.mxu0 0.0
        %5713 = vmatpush1.msra.mxu0 0.0
        %5714 = vmatprep.subr.mxu0 0.0
        %5715 = vmatpush1.msra.mxu0 0.0
        %5716 = vmatprep.subr.mxu0 0.0
        %5717 = vmatpush1.msra.mxu0 0.0
        %5718 = vmatprep.subr.mxu0 0.0
        %5719 = vmatpush1.msra.mxu0 0.0
        %5720 = vmatprep.subr.mxu0 0.0
        %5721 = vmatpush1.msra.mxu0 0.0
        %5722 = vmatprep.subr.mxu0 0.0
        %5723 = vmatpush1.msra.mxu0 0.0
        %5724 = vmatprep.subr.mxu0 0.0
        %5725 = vmatpush1.msra.mxu0 0.0
        %5726 = vmatprep.subr.mxu0 0.0
        %5727 = vmatpush1.msra.mxu0 0.0
        %5728 = vmatprep.subr.mxu0 0.0
        %5729 = vmatpush1.msra.mxu0 0.0
        %5730 = vmatprep.subr.mxu0 0.0
        %5731 = vmatpush1.msra.mxu0 0.0
        %5732 = vmatprep.subr.mxu0 0.0
        %5733 = vmatpush1.msra.mxu0 %v5694
        %5734 = vmatprep.subr.mxu0 0.0
        %5735 = vmatpush1.msra.mxu0 %v5693
        %5736 = vmatprep.subr.mxu0 0.0
        %5737 = vmatpush2.msra.mxu0 0.0
        %5738 = vmatprep.subr.mxu0 0.0
        %5739 = vmatpush2.msra.mxu0 0.0
        %5740 = vmatprep.subr.mxu0 0.0
        %5741 = vmatpush2.msra.mxu0 0.0
        %5742 = vmatprep.subr.mxu0 0.0
        %5743 = vmatpush2.msra.mxu0 0.0
        %5744 = vmatprep.subr.mxu0 0.0
        %5745 = vmatpush2.msra.mxu0 0.0
        %5746 = vmatprep.subr.mxu0 0.0
        %5747 = vmatpush2.msra.mxu0 0.0
        %5748 = vmatprep.subr.mxu0 0.0
        %5749 = vmatpush2.msra.mxu0 0.0
        %5750 = vmatprep.subr.mxu0 0.0
        %5751 = vmatpush2.msra.mxu0 0.0
        %5752 = vmatprep.subr.mxu0 0.0
        %5753 = vmatpush2.msra.mxu0 0.0
        %5754 = vmatprep.subr.mxu0 0.0
        %5755 = vmatpush2.msra.mxu0 0.0
        %5756 = vmatprep.subr.mxu0 0.0
        %5757 = vmatpush2.msra.mxu0 0.0
        %5758 = vmatprep.subr.mxu0 0.0
        %5759 = vmatpush2.msra.mxu0 0.0
        %5760 = vmatprep.subr.mxu0 0.0
        %5761 = vmatpush2.msra.mxu0 0.0
        %5762 = vmatprep.subr.mxu0 0.0
        %5763 = vmatpush2.msra.mxu0 0.0
        %5764 = vmatprep.subr.mxu0 0.0
        %5765 = vmatpush2.msra.mxu0 0.0
        %5766 = vmatprep.subr.mxu0 0.0
        %5767 = vmatpush2.msra.mxu0 0.0
        %5768 = vmatprep.mubr.f32.mxu0 0.0
        %5769 = vmatmul.mubr.f32.gmra.mxu0 %v5702
        %v5770 = vpop.f32.mrf.mxu0
        %v5771 = vadd.f32 %v5699, %v5770
        %v5772 = vpop.f32.mrf.mxu0
        %5773 = vdwg.mxu0
        %vm5774 = vcmask 261120
        %5775 = vst.msk [vmem:[%s212] sm:$0xff] %vm5774, %v5771
        %s5776 = sand.u32 %s98, 1
        %s5777 = scalar_lea.sflag [#allocation6], %s5776
        %s5778 = sand.u32 %s98, 1
        %s5779 = smul.addr %s5778, 8
        %s5780 = scalar_lea.vmem [#allocation11], %s5779
        // Predicated region
        $region45: #{cell_forward.1} parent=31 // pred_check
          %p5781 = pneg %p108
        $region46: #{cell_forward.1} parent=31 // pred_check_branch
          %5783 = sbr.rel (%p5781) target = $region48
        $region47: #{cell_forward.1} parent=31 // pred_region
          %s5785 = ssub.s32 128, 128
          %5786 = vsyncadd %s5777, %s5785
          %s5787 = smul.addr %s22, 128
          %s5788 = scalar_lea.hbm %s3, %s5787
          %s5790 = sshll.u32 %s5780, 4
          %s5791 = int_to_ptr.vmem [resolvable:$true] %s5790
          %5793 = dma.vmem_to_hbm [thread:$0]  %s5791, 128, %s5788, %s5777
        $region48: #{cell_forward.1} parent=31 // pred_fallthru
          _
      $region32: #{cell_forward.1} parent=5 // pred_fallthru
        _
      %p5794 = scmp.le.s32.totalorder 2, %s17
      // Predicated region
      $region49: #{cell_forward.1} parent=5 // pred_check
        %p5795 = pneg %p5794
      $region50: #{cell_forward.1} parent=5 // pred_check_branch
        %5797 = sbr.rel (%p5795) target = $region52
      $region51: #{cell_forward.1} parent=5 // pred_region
        %s5798 = ssub.s32 %s17, 2
        // Predicated region
        $region53: #{cell_forward.1} parent=51 // pred_check
          %p5799 = pneg %p114
        $region54: #{cell_forward.1} parent=51 // pred_check_branch
          %5801 = sbr.rel (%p5799) target = $region56
        $region55: #{cell_forward.1} parent=51 // pred_region
          %s5802 = sand.u32 %s99, 1
          %s5803 = scalar_lea.sflag [#allocation6], %s5802
          %s5804 = sand.u32 %s99, 1
          %s5805 = smul.addr %s5804, 8
          %s5806 = scalar_lea.vmem [#allocation11], %s5805
          %5807 = dma.done %s5803, 128
        $region56: #{cell_forward.1} parent=51 // pred_fallthru
          _
      $region52: #{cell_forward.1} parent=5 // pred_fallthru
        _
    $region6: #{cell_forward.1} parent=1 // loop_footer
      %s21 = sadd.s32 1, %s17
    $region7: #{cell_forward.1} parent=1 // loop_footer_branch
      %16 = sbr.rel target = $region3
    $region8: #{cell_forward.1} parent=1 // loop_exit
      _
    %5808 = vsyncpa [#allocation5], 1
    %s5809 = scalar_lea.sflag [#allocation5], 1
    %5810 = vsyncpa %s5809, 1
    %5811 = vsyncpa [#allocation10], 1
    %5812 = vsyncpa [#allocation6], 1
    %s5813 = scalar_lea.sflag [#allocation6], 1
    %5814 = vsyncpa %s5813, 1
    %5815 = vsyncpa [#allocation7], 1
    %s5816 = scalar_lea.sflag [#allocation7], 1
    %5817 = vsyncpa %s5816, 1

</llo_original>
